<compile_context>
chip_gen: v6e
topology: v6e:2x2x1
jax: 0.10.0
libtpu: 0.0.40
codegen_flags: <defaults>
</compile_context>

<pallas_src>
import functools

import jax
import jax.numpy as jnp
from jax import lax
from jax.experimental import pallas as pl
from jax.experimental.pallas import tpu as pltpu


def _round_up(x, m):
    return ((x + m - 1) // m) * m


# ----------------------------------------------------------------------------
# Fused kernel: one batch block of B samples per grid step
#   conv(as matmul) -> ReLU -> FC1(+ReLU, channel-blocked K) -> FC2 + dueling
# ----------------------------------------------------------------------------
def _fused_dueling_kernel(p_ref, wc_ref, w1_ref, b1_ref, w2_ref, b2_ref,
                          q_ref, feat_ref, acc_ref, *, conv_out):
    B = p_ref.shape[0]

    # Conv as a batched MXU matmul: per sample (Cout, K1p) @ (K1p, Pp), f32
    # accumulation.  The conv bias rides on the ones row of the patch matrix.
    patches = p_ref[...]                                       # (B, K1p, Pp) bf16
    wc = jnp.broadcast_to(wc_ref[...], (B,) + wc_ref.shape)    # (B, Cout, K1p)
    feat = jnp.einsum("bck,bkp->bcp", wc, patches,
                      preferred_element_type=jnp.float32)      # (B, Cout, Pp) f32
    # ReLU + ONE bf16 cast for the whole block, staged in VMEM scratch.
    feat_ref[...] = jnp.maximum(feat, 0.0).astype(jnp.bfloat16)

    # FC1 of both streams fused: h = flatten(feat) @ W1 + b1.  Single
    # conceptual (B, D) @ (D, 2*512) contraction, split into conv_out
    # channel-blocks of K (each an M=B MXU matmul), accumulated into an f32
    # VMEM scratch.
    acc_ref[...] = jnp.broadcast_to(b1_ref[...], acc_ref.shape)
    for c in range(conv_out):                                  # static, unrolled
        acc_ref[...] += jnp.dot(feat_ref[:, c, :], w1_ref[c],
                                preferred_element_type=jnp.float32)
    h = jnp.maximum(acc_ref[...], 0.0)                         # (B, 2*hidden) f32

    # FC2 with the dueling combine folded into f32 weights/bias (value column
    # + mean-centered advantage columns), padded to 128 lanes so the output
    # store is lane-dense / unmasked.
    q_ref[...] = (jnp.dot(h, w2_ref[...], preferred_element_type=jnp.float32)
                  + b2_ref[...])


# ----------------------------------------------------------------------------
# Wrapper: im2col glue, padding, batch blocking, pallas_call
# ----------------------------------------------------------------------------
def _im2col(x, kh, kw):
    # (N, C, H, W) -> (N, C*kh*kw, Ho*Wo); row k = c*(kh*kw) + i*kw + j,
    # matching PyTorch's conv-weight flatten order (Cin major, (kh, kw) minor).
    N, C, H, W = x.shape
    Ho, Wo = H - kh + 1, W - kw + 1
    cols = [x[:, :, i:i + Ho, j:j + Wo].reshape(N, C, Ho * Wo)
            for i in range(kh) for j in range(kw)]
    cols = jnp.stack(cols, axis=2)                 # (N, C, kh*kw, Ho*Wo)
    return cols.reshape(N, C * kh * kw, Ho * Wo)


@functools.partial(
    jax.jit,
    static_argnames=("conv_out", "ksize", "hidden", "action_size", "batch_block"))
def dueling_dqn_forward(x, kp, *, conv_out, ksize, hidden, action_size,
                        batch_block=128):
    N, C, H, W = x.shape
    Ho, Wo = H - ksize + 1, W - ksize + 1
    P = Ho * Wo
    K1 = C * ksize * ksize + 1            # +1 ones row for the folded conv bias
    H2 = 2 * hidden
    A = action_size
    P_pad = _round_up(P, 128)             # lane-aligned conv-output positions
    K1_pad = _round_up(K1, 8)             # sublane-aligned conv contraction
    OUT = _round_up(max(A, 1), 128)       # lane-dense output width

    # Wrapper-side im2col + bias-ones row, zero-padded, cast to bf16 once.
    patches = _im2col(x, ksize, ksize)                         # (N, K, P)
    ones = jnp.ones((N, 1, P), patches.dtype)
    patches = jnp.concatenate([patches, ones], axis=1)         # (N, K1, P)
    patches = jnp.pad(patches, ((0, 0), (0, K1_pad - K1), (0, P_pad - P)))
    patches = patches.astype(jnp.bfloat16)

    # Batch blocking: B samples per grid step (B a multiple of 8).
    # (v5e: 128, v6e/v7x: up to 256 is a good choice for large N.)
    B = _round_up(min(batch_block, _round_up(N, 8)), 8)
    N_pad = _round_up(N, B)
    patches = jnp.pad(patches, ((0, N_pad - N), (0, 0), (0, 0)))
    nblk = N_pad // B

    kernel = functools.partial(_fused_dueling_kernel, conv_out=conv_out)
    q = pl.pallas_call(
        kernel,
        out_shape=jax.ShapeDtypeStruct((N_pad, OUT), jnp.float32),
        grid=(nblk,),
        in_specs=[
            pl.BlockSpec((B, K1_pad, P_pad), lambda n: (n, 0, 0)),    # patches
            pl.BlockSpec((conv_out, K1_pad), lambda n: (0, 0)),       # conv w+b
            pl.BlockSpec((conv_out, P_pad, H2), lambda n: (0, 0, 0)), # fused FC1 w
            pl.BlockSpec((1, H2), lambda n: (0, 0)),                  # FC1 bias
            pl.BlockSpec((H2, OUT), lambda n: (0, 0)),                # FC2+duel w
            pl.BlockSpec((1, OUT), lambda n: (0, 0)),                 # FC2+duel b
        ],
        out_specs=pl.BlockSpec((B, OUT), lambda n: (n, 0)),
        scratch_shapes=[
            pltpu.VMEM((B, conv_out, P_pad), jnp.bfloat16),           # conv feats
            pltpu.VMEM((B, H2), jnp.float32),                         # FC1 acc
        ],
        compiler_params=pltpu.CompilerParams(
            dimension_semantics=("parallel",)),
    )(patches, kp["wc"], kp["w1"], kp["b1"], kp["w2"], kp["b2"])
    return q[:N, :A]


# ----------------------------------------------------------------------------
# Parameter setup
# ----------------------------------------------------------------------------
def init_raw_params(key, c, h, w, conv_out, ksize, hidden, action_size):
    kh = kw = ksize
    Ho, Wo = h - kh + 1, w - kw + 1
    D = conv_out * Ho * Wo
    ks = jax.random.split(key, 10)

    def u(k, shape, fan_in):
        bound = float(fan_in) ** -0.5
        return jax.random.uniform(k, shape, jnp.float32, -bound, bound)

    return {
        "wconv": u(ks[0], (conv_out, c, kh, kw), c * kh * kw),   # OIHW
        "bconv": u(ks[1], (conv_out,), c * kh * kw),
        "w1v": u(ks[2], (D, hidden), D),
        "b1v": u(ks[3], (1, hidden), D),
        "w2v": u(ks[4], (hidden, 1), hidden),
        "b2v": u(ks[5], (1, 1), hidden),
        "w1a": u(ks[6], (D, hidden), D),
        "b1a": u(ks[7], (1, hidden), D),
        "w2a": u(ks[8], (hidden, action_size), hidden),
        "b2a": u(ks[9], (1, action_size), hidden),
    }


def pack_params(raw, c, h, w, conv_out, ksize, hidden, action_size):
    """Fold / fuse the raw f32 params into the layout the fused kernel uses."""
    kh = kw = ksize
    Ho, Wo = h - kh + 1, w - kw + 1
    P = Ho * Wo
    K = c * kh * kw
    A = action_size
    H2 = 2 * hidden
    P_pad = _round_up(P, 128)
    K1_pad = _round_up(K + 1, 8)
    OUT = _round_up(max(A, 1), 128)

    # Conv weight flattened (Cout, Cin*kh*kw); bias folded as an extra column;
    # zero-padded to the sublane-aligned contraction depth.
    wc = raw["wconv"].reshape(conv_out, K)
    wc = jnp.concatenate([wc, raw["bconv"][:, None]], axis=1)       # (Cout, K+1)
    wc = jnp.pad(wc, ((0, 0), (0, K1_pad - (K + 1))))

    # Concatenated FC1 weight (value | advantage), reshaped so the channel-
    # major flatten order of the conv output is baked into the leading axis;
    # rows for zero-padded conv-output positions are zero (padding is inert).
    w1 = jnp.concatenate([raw["w1v"], raw["w1a"]], axis=1)          # (D, 2h)
    w1 = w1.reshape(conv_out, P, H2)
    w1 = jnp.pad(w1, ((0, 0), (0, P_pad - P), (0, 0)))              # (Cout, Pp, 2h)
    b1 = jnp.concatenate([raw["b1v"], raw["b1a"]], axis=1)          # (1, 2h)

    # FC2 with the dueling combine folded in, kept float32, 128-lane padded:
    #   q = [hv|ha] @ [[w2v ... w2v], [w2a - mean(w2a)]] + (b2v + b2a - mean(b2a))
    w2a_c = raw["w2a"] - raw["w2a"].mean(axis=1, keepdims=True)     # (hidden, A)
    w2 = jnp.zeros((H2, OUT), jnp.float32)
    w2 = w2.at[:hidden, :A].set(jnp.broadcast_to(raw["w2v"], (hidden, A)))
    w2 = w2.at[hidden:, :A].set(w2a_c)
    b2 = jnp.zeros((1, OUT), jnp.float32)
    b2 = b2.at[:, :A].set(raw["b2v"] + raw["b2a"]
                          - raw["b2a"].mean(axis=1, keepdims=True))

    return {"wc": wc.astype(jnp.bfloat16),
            "w1": w1.astype(jnp.bfloat16),
            "b1": b1.astype(jnp.float32),
            "w2": w2,
            "b2": b2}


# ----------------------------------------------------------------------------
# Pure-JAX f32 reference (true conv, separate streams) for correctness check
# ----------------------------------------------------------------------------
def dueling_dqn_reference(x, raw):
    feat = lax.conv_general_dilated(
        x, raw["wconv"], window_strides=(1, 1), padding="VALID",
        dimension_numbers=("NCHW", "OIHW", "NCHW"))
    feat = jnp.maximum(feat + raw["bconv"][None, :, None, None], 0.0)
    f = feat.reshape(x.shape[0], -1)                 # channel-major flatten
    hv = jnp.maximum(f @ raw["w1v"] + raw["b1v"], 0.0)
    v = hv @ raw["w2v"] + raw["b2v"]
    ha = jnp.maximum(f @ raw["w1a"] + raw["b1a"], 0.0)
    a = ha @ raw["w2a"] + raw["b2a"]
    return v + a - a.mean(axis=1, keepdims=True)


if __name__ == "__main__":
    # small shapes: batch=2, channels=4, spatial=16x16, conv_out=8, hidden=512, actions=6
    N, C, H, W = 2, 4, 16, 16
    CONV_OUT, KSIZE, HIDDEN, ACTIONS = 8, 3, 512, 6

    key = jax.random.PRNGKey(0)
    kx, kw_key = jax.random.split(key)
    x = jax.random.normal(kx, (N, C, H, W), jnp.float32)

    raw = init_raw_params(kw_key, C, H, W, CONV_OUT, KSIZE, HIDDEN, ACTIONS)
    kparams = pack_params(raw, C, H, W, CONV_OUT, KSIZE, HIDDEN, ACTIONS)

    q = dueling_dqn_forward(x, kparams, conv_out=CONV_OUT, ksize=KSIZE,
                            hidden=HIDDEN, action_size=ACTIONS,
                            batch_block=128)
    q = jax.block_until_ready(q)

    q_ref = dueling_dqn_reference(x, raw)
    assert q.shape == (N, ACTIONS)
    max_err = float(jnp.max(jnp.abs(q - q_ref)))
    assert jnp.allclose(q, q_ref, atol=2e-2, rtol=2e-2), (
        f"mismatch vs reference, max abs err {max_err}")

    print("KERNEL_OK")
</pallas_src>

<mosaic_0001>
module attributes {stable_mosaic.version = 11 : i64} {
  func.func @_fused_dueling_kernel(%arg0: i32, %arg1: memref<8x40x256xbf16, #tpu.memory_space<vmem>>, %arg2: memref<8x40xbf16, #tpu.memory_space<vmem>>, %arg3: memref<8x256x1024xbf16, #tpu.memory_space<vmem>>, %arg4: memref<1x1024xf32, #tpu.memory_space<vmem>>, %arg5: memref<1024x128xf32, #tpu.memory_space<vmem>>, %arg6: memref<1x128xf32, #tpu.memory_space<vmem>>, %arg7: memref<8x128xf32, #tpu.memory_space<vmem>>, %arg8: memref<8x8x256xbf16, #tpu.memory_space<vmem>>, %arg9: memref<8x1024xf32, #tpu.memory_space<vmem>>) attributes {dimension_semantics = [#tpu.dimension_semantics<parallel>], iteration_bounds = array<i64: 1>, scalar_prefetch = 0 : i64, scratch_operands = 2 : i64, tpu.core_type = #tpu.core_type<tc>, window_params = [{transform_indices = @transform_0, window_bounds = array<i64: 8, 40, 256>}, {pipeline_mode = #tpu.pipeline_mode<synchronous>, transform_indices = @transform_1, window_bounds = array<i64: 8, 40>}, {pipeline_mode = #tpu.pipeline_mode<synchronous>, transform_indices = @transform_2, window_bounds = array<i64: 8, 256, 1024>}, {pipeline_mode = #tpu.pipeline_mode<synchronous>, transform_indices = @transform_3, window_bounds = array<i64: 1, 1024>}, {pipeline_mode = #tpu.pipeline_mode<synchronous>, transform_indices = @transform_4, window_bounds = array<i64: 1024, 128>}, {pipeline_mode = #tpu.pipeline_mode<synchronous>, transform_indices = @transform_5, window_bounds = array<i64: 1, 128>}, {transform_indices = @transform_6, window_bounds = array<i64: 8, 128>}]} {
    %c0 = arith.constant 0 : index
    %c0_0 = arith.constant 0 : index
    %c0_1 = arith.constant 0 : index
    %0 = vector.load %arg1[%c0, %c0_0, %c0_1] : memref<8x40x256xbf16, #tpu.memory_space<vmem>>, vector<8x40x256xbf16>
    %c0_2 = arith.constant 0 : index
    %c0_3 = arith.constant 0 : index
    %1 = vector.load %arg2[%c0_2, %c0_3] : memref<8x40xbf16, #tpu.memory_space<vmem>>, vector<8x40xbf16>
    %2 = vector.shape_cast %1 : vector<8x40xbf16> to vector<1x8x40xbf16>
    %3 = vector.broadcast %2 : vector<1x8x40xbf16> to vector<8x8x40xbf16>
    "tpu.trace_start"() <{level = 10 : i32, message = "bck,bkp->bcp"}> : () -> ()
    %cst = arith.constant dense<0.000000e+00> : vector<8x8x256xf32>
    %4 = tpu.matmul %3, %0, %cst {dimension_numbers = #tpu.dot_dimension_numbers<[2], [1], [1], [2], [0, 0, 0, 1, 1, 2], [0], [0]>} : vector<8x8x40xbf16>, vector<8x40x256xbf16>, vector<8x8x256xf32> -> vector<8x8x256xf32>
    "tpu.trace_stop"() : () -> ()
    %cst_4 = arith.constant 0.000000e+00 : f32
    %5 = vector.broadcast %cst_4 : f32 to vector<8x8x256xf32>
    %6 = arith.maximumf %4, %5 : vector<8x8x256xf32>
    %7 = arith.truncf %6 : vector<8x8x256xf32> to vector<8x8x256xbf16>
    %c0_5 = arith.constant 0 : index
    %c0_6 = arith.constant 0 : index
    %c0_7 = arith.constant 0 : index
    %8 = vector.load %arg8[%c0_5, %c0_6, %c0_7] : memref<8x8x256xbf16, #tpu.memory_space<vmem>>, vector<8x8x256xbf16>
    tpu.vector_store %arg8[%c0_5, %c0_6, %c0_7], %7 {strides = array<i32>} : memref<8x8x256xbf16, #tpu.memory_space<vmem>>, vector<8x8x256xbf16>,
    %c0_8 = arith.constant 0 : index
    %c0_9 = arith.constant 0 : index
    %9 = vector.load %arg4[%c0_8, %c0_9] : memref<1x1024xf32, #tpu.memory_space<vmem>>, vector<1x1024xf32>
    %10 = vector.shape_cast %9 : vector<1x1024xf32> to vector<1x1024xf32>
    %11 = vector.broadcast %10 : vector<1x1024xf32> to vector<8x1024xf32>
    %c0_10 = arith.constant 0 : index
    %c0_11 = arith.constant 0 : index
    %12 = vector.load %arg9[%c0_10, %c0_11] : memref<8x1024xf32, #tpu.memory_space<vmem>>, vector<8x1024xf32>
    tpu.vector_store %arg9[%c0_10, %c0_11], %11 {strides = array<i32>} : memref<8x1024xf32, #tpu.memory_space<vmem>>, vector<8x1024xf32>,
    %c0_12 = arith.constant 0 : index
    %c0_13 = arith.constant 0 : index
    %13 = vector.load %arg9[%c0_12, %c0_13] : memref<8x1024xf32, #tpu.memory_space<vmem>>, vector<8x1024xf32>
    %c0_14 = arith.constant 0 : index
    %c0_15 = arith.constant 0 : index
    %c0_16 = arith.constant 0 : index
    %14 = vector.load %arg8[%c0_14, %c0_15, %c0_16] : memref<8x8x256xbf16, #tpu.memory_space<vmem>>, vector<8x1x256xbf16>
    %15 = vector.shape_cast %14 : vector<8x1x256xbf16> to vector<8x256xbf16>
    %c0_17 = arith.constant 0 : index
    %c0_18 = arith.constant 0 : index
    %c0_19 = arith.constant 0 : index
    %16 = vector.load %arg3[%c0_17, %c0_18, %c0_19] : memref<8x256x1024xbf16, #tpu.memory_space<vmem>>, vector<1x256x1024xbf16>
    %17 = vector.shape_cast %16 : vector<1x256x1024xbf16> to vector<256x1024xbf16>
    %cst_20 = arith.constant dense<0.000000e+00> : vector<8x1024xf32>
    %18 = tpu.matmul %15, %17, %cst_20 {dimension_numbers = #tpu.dot_dimension_numbers<[1], [0], [0], [1], [0, 0, 1, 1], [], []>} : vector<8x256xbf16>, vector<256x1024xbf16>, vector<8x1024xf32> -> vector<8x1024xf32>
    %19 = arith.addf %13, %18 : vector<8x1024xf32>
    %c0_21 = arith.constant 0 : index
    %c0_22 = arith.constant 0 : index
    %20 = vector.load %arg9[%c0_21, %c0_22] : memref<8x1024xf32, #tpu.memory_space<vmem>>, vector<8x1024xf32>
    tpu.vector_store %arg9[%c0_21, %c0_22], %19 {strides = array<i32>} : memref<8x1024xf32, #tpu.memory_space<vmem>>, vector<8x1024xf32>,
    %c0_23 = arith.constant 0 : index
    %c0_24 = arith.constant 0 : index
    %21 = vector.load %arg9[%c0_23, %c0_24] : memref<8x1024xf32, #tpu.memory_space<vmem>>, vector<8x1024xf32>
    %c0_25 = arith.constant 0 : index
    %c1 = arith.constant 1 : index
    %c0_26 = arith.constant 0 : index
    %22 = vector.load %arg8[%c0_25, %c1, %c0_26] : memref<8x8x256xbf16, #tpu.memory_space<vmem>>, vector<8x1x256xbf16>
    %23 = vector.shape_cast %22 : vector<8x1x256xbf16> to vector<8x256xbf16>
    %c1_27 = arith.constant 1 : index
    %c0_28 = arith.constant 0 : index
    %c0_29 = arith.constant 0 : index
    %24 = vector.load %arg3[%c1_27, %c0_28, %c0_29] : memref<8x256x1024xbf16, #tpu.memory_space<vmem>>, vector<1x256x1024xbf16>
    %25 = vector.shape_cast %24 : vector<1x256x1024xbf16> to vector<256x1024xbf16>
    %cst_30 = arith.constant dense<0.000000e+00> : vector<8x1024xf32>
    %26 = tpu.matmul %23, %25, %cst_30 {dimension_numbers = #tpu.dot_dimension_numbers<[1], [0], [0], [1], [0, 0, 1, 1], [], []>} : vector<8x256xbf16>, vector<256x1024xbf16>, vector<8x1024xf32> -> vector<8x1024xf32>
    %27 = arith.addf %21, %26 : vector<8x1024xf32>
    %c0_31 = arith.constant 0 : index
    %c0_32 = arith.constant 0 : index
    %28 = vector.load %arg9[%c0_31, %c0_32] : memref<8x1024xf32, #tpu.memory_space<vmem>>, vector<8x1024xf32>
    tpu.vector_store %arg9[%c0_31, %c0_32], %27 {strides = array<i32>} : memref<8x1024xf32, #tpu.memory_space<vmem>>, vector<8x1024xf32>,
    %c0_33 = arith.constant 0 : index
    %c0_34 = arith.constant 0 : index
    %29 = vector.load %arg9[%c0_33, %c0_34] : memref<8x1024xf32, #tpu.memory_space<vmem>>, vector<8x1024xf32>
    %c0_35 = arith.constant 0 : index
    %c2 = arith.constant 2 : index
    %c0_36 = arith.constant 0 : index
    %30 = vector.load %arg8[%c0_35, %c2, %c0_36] : memref<8x8x256xbf16, #tpu.memory_space<vmem>>, vector<8x1x256xbf16>
    %31 = vector.shape_cast %30 : vector<8x1x256xbf16> to vector<8x256xbf16>
    %c2_37 = arith.constant 2 : index
    %c0_38 = arith.constant 0 : index
    %c0_39 = arith.constant 0 : index
    %32 = vector.load %arg3[%c2_37, %c0_38, %c0_39] : memref<8x256x1024xbf16, #tpu.memory_space<vmem>>, vector<1x256x1024xbf16>
    %33 = vector.shape_cast %32 : vector<1x256x1024xbf16> to vector<256x1024xbf16>
    %cst_40 = arith.constant dense<0.000000e+00> : vector<8x1024xf32>
    %34 = tpu.matmul %31, %33, %cst_40 {dimension_numbers = #tpu.dot_dimension_numbers<[1], [0], [0], [1], [0, 0, 1, 1], [], []>} : vector<8x256xbf16>, vector<256x1024xbf16>, vector<8x1024xf32> -> vector<8x1024xf32>
    %35 = arith.addf %29, %34 : vector<8x1024xf32>
    %c0_41 = arith.constant 0 : index
    %c0_42 = arith.constant 0 : index
    %36 = vector.load %arg9[%c0_41, %c0_42] : memref<8x1024xf32, #tpu.memory_space<vmem>>, vector<8x1024xf32>
    tpu.vector_store %arg9[%c0_41, %c0_42], %35 {strides = array<i32>} : memref<8x1024xf32, #tpu.memory_space<vmem>>, vector<8x1024xf32>,
    %c0_43 = arith.constant 0 : index
    %c0_44 = arith.constant 0 : index
    %37 = vector.load %arg9[%c0_43, %c0_44] : memref<8x1024xf32, #tpu.memory_space<vmem>>, vector<8x1024xf32>
    %c0_45 = arith.constant 0 : index
    %c3 = arith.constant 3 : index
    %c0_46 = arith.constant 0 : index
    %38 = vector.load %arg8[%c0_45, %c3, %c0_46] : memref<8x8x256xbf16, #tpu.memory_space<vmem>>, vector<8x1x256xbf16>
    %39 = vector.shape_cast %38 : vector<8x1x256xbf16> to vector<8x256xbf16>
    %c3_47 = arith.constant 3 : index
    %c0_48 = arith.constant 0 : index
    %c0_49 = arith.constant 0 : index
    %40 = vector.load %arg3[%c3_47, %c0_48, %c0_49] : memref<8x256x1024xbf16, #tpu.memory_space<vmem>>, vector<1x256x1024xbf16>
    %41 = vector.shape_cast %40 : vector<1x256x1024xbf16> to vector<256x1024xbf16>
    %cst_50 = arith.constant dense<0.000000e+00> : vector<8x1024xf32>
    %42 = tpu.matmul %39, %41, %cst_50 {dimension_numbers = #tpu.dot_dimension_numbers<[1], [0], [0], [1], [0, 0, 1, 1], [], []>} : vector<8x256xbf16>, vector<256x1024xbf16>, vector<8x1024xf32> -> vector<8x1024xf32>
    %43 = arith.addf %37, %42 : vector<8x1024xf32>
    %c0_51 = arith.constant 0 : index
    %c0_52 = arith.constant 0 : index
    %44 = vector.load %arg9[%c0_51, %c0_52] : memref<8x1024xf32, #tpu.memory_space<vmem>>, vector<8x1024xf32>
    tpu.vector_store %arg9[%c0_51, %c0_52], %43 {strides = array<i32>} : memref<8x1024xf32, #tpu.memory_space<vmem>>, vector<8x1024xf32>,
    %c0_53 = arith.constant 0 : index
    %c0_54 = arith.constant 0 : index
    %45 = vector.load %arg9[%c0_53, %c0_54] : memref<8x1024xf32, #tpu.memory_space<vmem>>, vector<8x1024xf32>
    %c0_55 = arith.constant 0 : index
    %c4 = arith.constant 4 : index
    %c0_56 = arith.constant 0 : index
    %46 = vector.load %arg8[%c0_55, %c4, %c0_56] : memref<8x8x256xbf16, #tpu.memory_space<vmem>>, vector<8x1x256xbf16>
    %47 = vector.shape_cast %46 : vector<8x1x256xbf16> to vector<8x256xbf16>
    %c4_57 = arith.constant 4 : index
    %c0_58 = arith.constant 0 : index
    %c0_59 = arith.constant 0 : index
    %48 = vector.load %arg3[%c4_57, %c0_58, %c0_59] : memref<8x256x1024xbf16, #tpu.memory_space<vmem>>, vector<1x256x1024xbf16>
    %49 = vector.shape_cast %48 : vector<1x256x1024xbf16> to vector<256x1024xbf16>
    %cst_60 = arith.constant dense<0.000000e+00> : vector<8x1024xf32>
    %50 = tpu.matmul %47, %49, %cst_60 {dimension_numbers = #tpu.dot_dimension_numbers<[1], [0], [0], [1], [0, 0, 1, 1], [], []>} : vector<8x256xbf16>, vector<256x1024xbf16>, vector<8x1024xf32> -> vector<8x1024xf32>
    %51 = arith.addf %45, %50 : vector<8x1024xf32>
    %c0_61 = arith.constant 0 : index
    %c0_62 = arith.constant 0 : index
    %52 = vector.load %arg9[%c0_61, %c0_62] : memref<8x1024xf32, #tpu.memory_space<vmem>>, vector<8x1024xf32>
    tpu.vector_store %arg9[%c0_61, %c0_62], %51 {strides = array<i32>} : memref<8x1024xf32, #tpu.memory_space<vmem>>, vector<8x1024xf32>,
    %c0_63 = arith.constant 0 : index
    %c0_64 = arith.constant 0 : index
    %53 = vector.load %arg9[%c0_63, %c0_64] : memref<8x1024xf32, #tpu.memory_space<vmem>>, vector<8x1024xf32>
    %c0_65 = arith.constant 0 : index
    %c5 = arith.constant 5 : index
    %c0_66 = arith.constant 0 : index
    %54 = vector.load %arg8[%c0_65, %c5, %c0_66] : memref<8x8x256xbf16, #tpu.memory_space<vmem>>, vector<8x1x256xbf16>
    %55 = vector.shape_cast %54 : vector<8x1x256xbf16> to vector<8x256xbf16>
    %c5_67 = arith.constant 5 : index
    %c0_68 = arith.constant 0 : index
    %c0_69 = arith.constant 0 : index
    %56 = vector.load %arg3[%c5_67, %c0_68, %c0_69] : memref<8x256x1024xbf16, #tpu.memory_space<vmem>>, vector<1x256x1024xbf16>
    %57 = vector.shape_cast %56 : vector<1x256x1024xbf16> to vector<256x1024xbf16>
    %cst_70 = arith.constant dense<0.000000e+00> : vector<8x1024xf32>
    %58 = tpu.matmul %55, %57, %cst_70 {dimension_numbers = #tpu.dot_dimension_numbers<[1], [0], [0], [1], [0, 0, 1, 1], [], []>} : vector<8x256xbf16>, vector<256x1024xbf16>, vector<8x1024xf32> -> vector<8x1024xf32>
    %59 = arith.addf %53, %58 : vector<8x1024xf32>
    %c0_71 = arith.constant 0 : index
    %c0_72 = arith.constant 0 : index
    %60 = vector.load %arg9[%c0_71, %c0_72] : memref<8x1024xf32, #tpu.memory_space<vmem>>, vector<8x1024xf32>
    tpu.vector_store %arg9[%c0_71, %c0_72], %59 {strides = array<i32>} : memref<8x1024xf32, #tpu.memory_space<vmem>>, vector<8x1024xf32>,
    %c0_73 = arith.constant 0 : index
    %c0_74 = arith.constant 0 : index
    %61 = vector.load %arg9[%c0_73, %c0_74] : memref<8x1024xf32, #tpu.memory_space<vmem>>, vector<8x1024xf32>
    %c0_75 = arith.constant 0 : index
    %c6 = arith.constant 6 : index
    %c0_76 = arith.constant 0 : index
    %62 = vector.load %arg8[%c0_75, %c6, %c0_76] : memref<8x8x256xbf16, #tpu.memory_space<vmem>>, vector<8x1x256xbf16>
    %63 = vector.shape_cast %62 : vector<8x1x256xbf16> to vector<8x256xbf16>
    %c6_77 = arith.constant 6 : index
    %c0_78 = arith.constant 0 : index
    %c0_79 = arith.constant 0 : index
    %64 = vector.load %arg3[%c6_77, %c0_78, %c0_79] : memref<8x256x1024xbf16, #tpu.memory_space<vmem>>, vector<1x256x1024xbf16>
    %65 = vector.shape_cast %64 : vector<1x256x1024xbf16> to vector<256x1024xbf16>
    %cst_80 = arith.constant dense<0.000000e+00> : vector<8x1024xf32>
    %66 = tpu.matmul %63, %65, %cst_80 {dimension_numbers = #tpu.dot_dimension_numbers<[1], [0], [0], [1], [0, 0, 1, 1], [], []>} : vector<8x256xbf16>, vector<256x1024xbf16>, vector<8x1024xf32> -> vector<8x1024xf32>
    %67 = arith.addf %61, %66 : vector<8x1024xf32>
    %c0_81 = arith.constant 0 : index
    %c0_82 = arith.constant 0 : index
    %68 = vector.load %arg9[%c0_81, %c0_82] : memref<8x1024xf32, #tpu.memory_space<vmem>>, vector<8x1024xf32>
    tpu.vector_store %arg9[%c0_81, %c0_82], %67 {strides = array<i32>} : memref<8x1024xf32, #tpu.memory_space<vmem>>, vector<8x1024xf32>,
    %c0_83 = arith.constant 0 : index
    %c0_84 = arith.constant 0 : index
    %69 = vector.load %arg9[%c0_83, %c0_84] : memref<8x1024xf32, #tpu.memory_space<vmem>>, vector<8x1024xf32>
    %c0_85 = arith.constant 0 : index
    %c7 = arith.constant 7 : index
    %c0_86 = arith.constant 0 : index
    %70 = vector.load %arg8[%c0_85, %c7, %c0_86] : memref<8x8x256xbf16, #tpu.memory_space<vmem>>, vector<8x1x256xbf16>
    %71 = vector.shape_cast %70 : vector<8x1x256xbf16> to vector<8x256xbf16>
    %c7_87 = arith.constant 7 : index
    %c0_88 = arith.constant 0 : index
    %c0_89 = arith.constant 0 : index
    %72 = vector.load %arg3[%c7_87, %c0_88, %c0_89] : memref<8x256x1024xbf16, #tpu.memory_space<vmem>>, vector<1x256x1024xbf16>
    %73 = vector.shape_cast %72 : vector<1x256x1024xbf16> to vector<256x1024xbf16>
    %cst_90 = arith.constant dense<0.000000e+00> : vector<8x1024xf32>
    %74 = tpu.matmul %71, %73, %cst_90 {dimension_numbers = #tpu.dot_dimension_numbers<[1], [0], [0], [1], [0, 0, 1, 1], [], []>} : vector<8x256xbf16>, vector<256x1024xbf16>, vector<8x1024xf32> -> vector<8x1024xf32>
    %75 = arith.addf %69, %74 : vector<8x1024xf32>
    %c0_91 = arith.constant 0 : index
    %c0_92 = arith.constant 0 : index
    %76 = vector.load %arg9[%c0_91, %c0_92] : memref<8x1024xf32, #tpu.memory_space<vmem>>, vector<8x1024xf32>
    tpu.vector_store %arg9[%c0_91, %c0_92], %75 {strides = array<i32>} : memref<8x1024xf32, #tpu.memory_space<vmem>>, vector<8x1024xf32>,
    %c0_93 = arith.constant 0 : index
    %c0_94 = arith.constant 0 : index
    %77 = vector.load %arg9[%c0_93, %c0_94] : memref<8x1024xf32, #tpu.memory_space<vmem>>, vector<8x1024xf32>
    %cst_95 = arith.constant 0.000000e+00 : f32
    %78 = vector.broadcast %cst_95 : f32 to vector<8x1024xf32>
    %79 = arith.maximumf %77, %78 : vector<8x1024xf32>
    %c0_96 = arith.constant 0 : index
    %c0_97 = arith.constant 0 : index
    %80 = vector.load %arg5[%c0_96, %c0_97] : memref<1024x128xf32, #tpu.memory_space<vmem>>, vector<1024x128xf32>
    %cst_98 = arith.constant dense<0.000000e+00> : vector<8x128xf32>
    %81 = tpu.matmul %79, %80, %cst_98 {dimension_numbers = #tpu.dot_dimension_numbers<[1], [0], [0], [1], [0, 0, 1, 1], [], []>} : vector<8x1024xf32>, vector<1024x128xf32>, vector<8x128xf32> -> vector<8x128xf32>
    %c0_99 = arith.constant 0 : index
    %c0_100 = arith.constant 0 : index
    %82 = vector.load %arg6[%c0_99, %c0_100] : memref<1x128xf32, #tpu.memory_space<vmem>>, vector<1x128xf32>
    %83 = vector.broadcast %82 : vector<1x128xf32> to vector<8x128xf32>
    %84 = arith.addf %81, %83 : vector<8x128xf32>
    %c0_101 = arith.constant 0 : index
    %c0_102 = arith.constant 0 : index
    %85 = vector.load %arg7[%c0_101, %c0_102] : memref<8x128xf32, #tpu.memory_space<vmem>>, vector<8x128xf32>
    tpu.vector_store %arg7[%c0_101, %c0_102], %84 {strides = array<i32>} : memref<8x128xf32, #tpu.memory_space<vmem>>, vector<8x128xf32>,
    return
  }
  func.func @transform_0(%arg0: i32) -> (i32, i32, i32) {
    %c0_i32 = arith.constant 0 : i32
    %c0_i32_0 = arith.constant 0 : i32
    %c0_i32_1 = arith.constant 0 : i32
    return %arg0, %c0_i32, %c0_i32_0 : i32, i32, i32
  }
  func.func @transform_1(%arg0: i32) -> (i32, i32) {
    %c0_i32 = arith.constant 0 : i32
    %c0_i32_0 = arith.constant 0 : i32
    %c0_i32_1 = arith.constant 0 : i32
    return %c0_i32, %c0_i32_0 : i32, i32
  }
  func.func @transform_2(%arg0: i32) -> (i32, i32, i32) {
    %c0_i32 = arith.constant 0 : i32
    %c0_i32_0 = arith.constant 0 : i32
    %c0_i32_1 = arith.constant 0 : i32
    %c0_i32_2 = arith.constant 0 : i32
    return %c0_i32, %c0_i32_0, %c0_i32_1 : i32, i32, i32
  }
  func.func @transform_3(%arg0: i32) -> (i32, i32) {
    %c0_i32 = arith.constant 0 : i32
    %c0_i32_0 = arith.constant 0 : i32
    %c0_i32_1 = arith.constant 0 : i32
    return %c0_i32, %c0_i32_0 : i32, i32
  }
  func.func @transform_4(%arg0: i32) -> (i32, i32) {
    %c0_i32 = arith.constant 0 : i32
    %c0_i32_0 = arith.constant 0 : i32
    %c0_i32_1 = arith.constant 0 : i32
    return %c0_i32, %c0_i32_0 : i32, i32
  }
  func.func @transform_5(%arg0: i32) -> (i32, i32) {
    %c0_i32 = arith.constant 0 : i32
    %c0_i32_0 = arith.constant 0 : i32
    %c0_i32_1 = arith.constant 0 : i32
    return %c0_i32, %c0_i32_0 : i32, i32
  }
  func.func @transform_6(%arg0: i32) -> (i32, i32) {
    %c0_i32 = arith.constant 0 : i32
    %c0_i32_0 = arith.constant 0 : i32
    return %arg0, %c0_i32 : i32, i32
  }
}

</mosaic_0001>

<llo_original>
// kernel: dueling_dqn_forward.1
$region0: #{dueling_dqn_forward.1}
  #allocation0 [shape = 'u32[]', space=smem, size = 0x4, offset = 0x4, fixed_abs, tag = 'smem constant byte address 0x4 - core index']
  #allocation1 [shape = 'u32[144,128]{1,0:T(1,128)}', space=vmem, size = 0x12000, scoped, tag = 'internal scratch']
  #allocation2 [shape = 'bf16[8,8,256]{2,1,0:T(8,128)(2,1)}', space=vmem, size = 0x8000, scoped, tag = 'scratch operand']
  #allocation3 [shape = 'f32[8,1024]{1,0:T(8,128)}', space=vmem, size = 0x8000, scoped, tag = 'scratch operand']
  %s0 = inlined_call_operand.vmem [shape: bf16[8,40,256], index: 0, kind: input, shape index: {}]
  %s1 = inlined_call_operand.hbm [shape: bf16[8,40], index: 1, kind: input, shape index: {}]
  %s2 = inlined_call_operand.hbm [shape: bf16[8,256,1024], index: 2, kind: input, shape index: {}]
  %s3 = inlined_call_operand.hbm [shape: f32[1,1024], index: 3, kind: input, shape index: {}]
  %s4 = inlined_call_operand.hbm [shape: f32[1024,128], index: 4, kind: input, shape index: {}]
  %s5 = inlined_call_operand.hbm [shape: f32[1,128], index: 5, kind: input, shape index: {}]
  %s6 = inlined_call_operand.vmem [shape: f32[8,128], index: 6, kind: output, shape index: {}]
  %s7 = sld [smem:[#allocation0]]
  $region54: #{dueling_dqn_forward.1} parent=0
    _
  %s9 = ssub.s32 1, %s7
  %s10 = scalar_select 0, %s9, %s7
  $region1: #{dueling_dqn_forward.1} parent=0
    #allocation4 [shape = 'u8[2048]{0}', space=vmem, size = 0x800, scoped, tag = 'input window, operand 1, single buffered']
    #allocation5 [shape = 's32[1]{0}', space=sflag, size = 0x4, scoped, tag = 'scoped memory for dueling_dqn_forward.1']
    #allocation6 [shape = 'u8[4194304]{0}', space=vmem, size = 0x400000, scoped, tag = 'input window, operand 2, single buffered']
    #allocation7 [shape = 's32[1]{0}', space=sflag, size = 0x4, scoped, tag = 'scoped memory for dueling_dqn_forward.1']
    #allocation8 [shape = 'u8[4096]{0}', space=vmem, size = 0x1000, scoped, tag = 'input window, operand 3, single buffered']
    #allocation9 [shape = 'u8[524288]{0}', space=vmem, size = 0x80000, scoped, tag = 'input window, operand 4, single buffered']
    #allocation10 [shape = 's32[1]{0}', space=sflag, size = 0x4, scoped, tag = 'scoped memory for dueling_dqn_forward.1']
    #allocation11 [shape = 'u8[512]{0}', space=vmem, size = 0x400, scoped, tag = 'input window, operand 5, single buffered']
    %11 = vsyncpa [#allocation5], 0
    %12 = vsyncpa [#allocation7], 0
    %13 = vsyncpa [#allocation10], 0
    // Predicated region
    $region2: #{dueling_dqn_forward.1} parent=1 // pred_check
      _
    $region3: #{dueling_dqn_forward.1} parent=1 // pred_check_branch
      %15 = sbr.rel (0) target = $region5
    $region4: #{dueling_dqn_forward.1} parent=1 // pred_region
      _
    $region5: #{dueling_dqn_forward.1} parent=1 // pred_fallthru
      _
    // Predicated region
    $region6: #{dueling_dqn_forward.1} parent=1 // pred_check
      _
    $region7: #{dueling_dqn_forward.1} parent=1 // pred_check_branch
      %17 = sbr.rel (0) target = $region9
    $region8: #{dueling_dqn_forward.1} parent=1 // pred_region
      %s19 = ssub.s32 64, 64
      %20 = vsyncadd [#allocation5], %s19
      %s22 = sshll.u32 [#allocation4], 4
      %s23 = int_to_ptr.vmem [resolvable:$true] %s22
      %25 = dma.hbm_to_vmem [thread:$0]  %s1, 64, %s23, [#allocation5]
    $region9: #{dueling_dqn_forward.1} parent=1 // pred_fallthru
      _
    // Predicated region
    $region10: #{dueling_dqn_forward.1} parent=1 // pred_check
      _
    $region11: #{dueling_dqn_forward.1} parent=1 // pred_check_branch
      %27 = sbr.rel (0) target = $region13
    $region12: #{dueling_dqn_forward.1} parent=1 // pred_region
      %s29 = ssub.s32 131072, 131072
      %30 = vsyncadd [#allocation7], %s29
      %s31 = sshll.u32 [#allocation6], 4
      %s32 = int_to_ptr.vmem [resolvable:$true] %s31
      %37 = dma.hbm_to_vmem [thread:$0]  %s2, 131072, %s32, [#allocation7], 512, 512, 32
    $region13: #{dueling_dqn_forward.1} parent=1 // pred_fallthru
      _
    // Predicated region
    $region14: #{dueling_dqn_forward.1} parent=1 // pred_check
      _
    $region15: #{dueling_dqn_forward.1} parent=1 // pred_check_branch
      %39 = sbr.rel (0) target = $region17
    $region16: #{dueling_dqn_forward.1} parent=1 // pred_region
      %s41 = ssub.s32 128, 128
      %42 = vsyncadd [#allocation7], %s41
      %s44 = sshll.u32 [#allocation8], 4
      %s45 = int_to_ptr.vmem [resolvable:$true] %s44
      %47 = dma.hbm_to_vmem [thread:$0]  %s3, 128, %s45, [#allocation7]
    $region17: #{dueling_dqn_forward.1} parent=1 // pred_fallthru
      _
    // Predicated region
    $region18: #{dueling_dqn_forward.1} parent=1 // pred_check
      _
    $region19: #{dueling_dqn_forward.1} parent=1 // pred_check_branch
      %49 = sbr.rel (0) target = $region21
    $region20: #{dueling_dqn_forward.1} parent=1 // pred_region
      %s51 = ssub.s32 16384, 16384
      %52 = vsyncadd [#allocation10], %s51
      %s53 = sshll.u32 [#allocation9], 4
      %s54 = int_to_ptr.vmem [resolvable:$true] %s53
      %59 = dma.hbm_to_vmem [thread:$0]  %s4, 16384, %s54, [#allocation10], 128, 128, 8
    $region21: #{dueling_dqn_forward.1} parent=1 // pred_fallthru
      _
    // Predicated region
    $region22: #{dueling_dqn_forward.1} parent=1 // pred_check
      _
    $region23: #{dueling_dqn_forward.1} parent=1 // pred_check_branch
      %61 = sbr.rel (0) target = $region25
    $region24: #{dueling_dqn_forward.1} parent=1 // pred_region
      %s63 = ssub.s32 16, 16
      %64 = vsyncadd [#allocation10], %s63
      %s66 = sshll.u32 [#allocation11], 4
      %s67 = int_to_ptr.vmem [resolvable:$true] %s66
      %69 = dma.hbm_to_vmem [thread:$0]  %s5, 16, %s67, [#allocation10]
    $region25: #{dueling_dqn_forward.1} parent=1 // pred_fallthru
      _
    // Predicated region
    $region26: #{dueling_dqn_forward.1} parent=1 // pred_check
      _
    $region27: #{dueling_dqn_forward.1} parent=1 // pred_check_branch
      %71 = sbr.rel (0) target = $region29
    $region28: #{dueling_dqn_forward.1} parent=1 // pred_region
      %72 = dma.done [#allocation5], 64
    $region29: #{dueling_dqn_forward.1} parent=1 // pred_fallthru
      _
    // Predicated region
    $region30: #{dueling_dqn_forward.1} parent=1 // pred_check
      _
    $region31: #{dueling_dqn_forward.1} parent=1 // pred_check_branch
      %74 = sbr.rel (0) target = $region33
    $region32: #{dueling_dqn_forward.1} parent=1 // pred_region
      %75 = dma.done [#allocation7], 131072
    $region33: #{dueling_dqn_forward.1} parent=1 // pred_fallthru
      _
    // Predicated region
    $region34: #{dueling_dqn_forward.1} parent=1 // pred_check
      _
    $region35: #{dueling_dqn_forward.1} parent=1 // pred_check_branch
      %77 = sbr.rel (0) target = $region37
    $region36: #{dueling_dqn_forward.1} parent=1 // pred_region
      %78 = dma.done [#allocation7], 128
    $region37: #{dueling_dqn_forward.1} parent=1 // pred_fallthru
      _
    // Predicated region
    $region38: #{dueling_dqn_forward.1} parent=1 // pred_check
      _
    $region39: #{dueling_dqn_forward.1} parent=1 // pred_check_branch
      %80 = sbr.rel (0) target = $region41
    $region40: #{dueling_dqn_forward.1} parent=1 // pred_region
      %81 = dma.done [#allocation10], 16384
    $region41: #{dueling_dqn_forward.1} parent=1 // pred_fallthru
      _
    // Predicated region
    $region42: #{dueling_dqn_forward.1} parent=1 // pred_check
      _
    $region43: #{dueling_dqn_forward.1} parent=1 // pred_check_branch
      %83 = sbr.rel (0) target = $region45
    $region44: #{dueling_dqn_forward.1} parent=1 // pred_region
      %84 = dma.done [#allocation10], 16
    $region45: #{dueling_dqn_forward.1} parent=1 // pred_fallthru
      _
    %v86 = vld [vmem:[%s0] sm:$0xff]
    %v87 = vld [vmem:[%s0 + $0x8] sm:$0xff]
    %v88 = vld [vmem:[%s0 + $0x10] sm:$0xff]
    %v89 = vld [vmem:[%s0 + $0x18] sm:$0xff]
    %v90 = vld [vmem:[%s0 + $0x20] sm:$0xff]
    %v91 = vld [vmem:[%s0 + $0x28] sm:$0xff]
    %v92 = vld [vmem:[%s0 + $0x30] sm:$0xff]
    %v93 = vld [vmem:[%s0 + $0x38] sm:$0xff]
    %v94 = vld [vmem:[%s0 + $0x40] sm:$0xff]
    %v95 = vld [vmem:[%s0 + $0x48] sm:$0xff]
    %v96 = vld [vmem:[%s0 + $0x50] sm:$0xff]
    %v97 = vld [vmem:[%s0 + $0x58] sm:$0xff]
    %v98 = vld [vmem:[%s0 + $0x60] sm:$0xff]
    %v99 = vld [vmem:[%s0 + $0x68] sm:$0xff]
    %v100 = vld [vmem:[%s0 + $0x70] sm:$0xff]
    %v101 = vld [vmem:[%s0 + $0x78] sm:$0xff]
    %v102 = vld [vmem:[%s0 + $0x80] sm:$0xff]
    %v103 = vld [vmem:[%s0 + $0x88] sm:$0xff]
    %v104 = vld [vmem:[%s0 + $0x90] sm:$0xff]
    %v105 = vld [vmem:[%s0 + $0x98] sm:$0xff]
    %v106 = vld [vmem:[%s0 + $0xa0] sm:$0xff]
    %v107 = vld [vmem:[%s0 + $0xa8] sm:$0xff]
    %v108 = vld [vmem:[%s0 + $0xb0] sm:$0xff]
    %v109 = vld [vmem:[%s0 + $0xb8] sm:$0xff]
    %v110 = vld [vmem:[%s0 + $0xc0] sm:$0xff]
    %v111 = vld [vmem:[%s0 + $0xc8] sm:$0xff]
    %v112 = vld [vmem:[%s0 + $0xd0] sm:$0xff]
    %v113 = vld [vmem:[%s0 + $0xd8] sm:$0xff]
    %v114 = vld [vmem:[%s0 + $0xe0] sm:$0xff]
    %v115 = vld [vmem:[%s0 + $0xe8] sm:$0xff]
    %v116 = vld [vmem:[%s0 + $0xf0] sm:$0xff]
    %v117 = vld [vmem:[%s0 + $0xf8] sm:$0xff]
    %v118 = vld [vmem:[%s0 + $0x100] sm:$0xff]
    %v119 = vld [vmem:[%s0 + $0x108] sm:$0xff]
    %v120 = vld [vmem:[%s0 + $0x110] sm:$0xff]
    %v121 = vld [vmem:[%s0 + $0x118] sm:$0xff]
    %v122 = vld [vmem:[%s0 + $0x120] sm:$0xff]
    %v123 = vld [vmem:[%s0 + $0x128] sm:$0xff]
    %v124 = vld [vmem:[%s0 + $0x130] sm:$0xff]
    %v125 = vld [vmem:[%s0 + $0x138] sm:$0xff]
    %v126 = vld [vmem:[#allocation4] sm:$0xf]
    %v132 = vunpack.c.l.b16 %v86
    %v133 = vunpack.c.h.b16 %v86
    %v134 = vunpack.c.l.b16 %v87
    %v135 = vunpack.c.h.b16 %v87
    %v136 = vunpack.c.l.b16 %v88
    %v137 = vunpack.c.h.b16 %v88
    %v138 = vunpack.c.l.b16 %v89
    %v139 = vunpack.c.h.b16 %v89
    %v140 = vunpack.c.l.b16 %v90
    %v141 = vunpack.c.h.b16 %v90
    %v142 = vpack.c.b16 %v134, %v132
    %v143 = vpack.c.b16 %v135, %v133
    %v144 = vpack.c.b16 %v138, %v136
    %v145 = vpack.c.b16 %v139, %v137
    %v146 = vpack.c.b16 %v140, %v140
    %v147 = vpack.c.b16 %v141, %v141
    %vm152 = vcmask 326656
    %v154 = vsel %vm152, %v126, 0
    %vm156 = vcmask 1043456
    %v158 = vsel %vm156, %v146, 0
    %v161 = vsel %vm156, %v147, 0
    %163 = vmatprep.subr.bf16.mxu0 0
    %164 = vmatpush1.bf16.msra.mxu0 0
    %165 = vmatprep.subr.bf16.mxu0 0
    %166 = vmatpush1.bf16.msra.mxu0 0
    %167 = vmatprep.subr.bf16.mxu0 0
    %168 = vmatpush1.bf16.msra.mxu0 0
    %169 = vmatprep.subr.bf16.mxu0 0
    %170 = vmatpush1.bf16.msra.mxu0 0
    %171 = vmatprep.subr.bf16.mxu0 0
    %172 = vmatpush1.bf16.msra.mxu0 0
    %173 = vmatprep.subr.bf16.mxu0 %v161
    %174 = vmatpush1.bf16.msra.mxu0 %v158
    %175 = vmatprep.subr.bf16.mxu0 %v145
    %176 = vmatpush1.bf16.msra.mxu0 %v144
    %177 = vmatprep.subr.bf16.mxu0 %v143
    %178 = vmatpush1.bf16.msra.mxu0 %v142
    %179 = vmatprep.subr.bf16.mxu0 0
    %180 = vmatpush2.bf16.msra.mxu0 0
    %181 = vmatprep.subr.bf16.mxu0 0
    %182 = vmatpush2.bf16.msra.mxu0 0
    %183 = vmatprep.subr.bf16.mxu0 0
    %184 = vmatpush2.bf16.msra.mxu0 0
    %185 = vmatprep.subr.bf16.mxu0 0
    %186 = vmatpush2.bf16.msra.mxu0 0
    %187 = vmatprep.subr.bf16.mxu0 0
    %188 = vmatpush2.bf16.msra.mxu0 0
    %189 = vmatprep.subr.bf16.mxu0 0
    %190 = vmatpush2.bf16.msra.mxu0 0
    %191 = vmatprep.subr.bf16.mxu0 0
    %192 = vmatpush2.bf16.msra.mxu0 0
    %193 = vmatprep.subr.bf16.mxu0 0
    %194 = vmatpush2.bf16.msra.mxu0 0
    %195 = vmatprep.mubr.bf16.mxu0 0
    %196 = vmatmul.mubr.bf16.gmra.mxu0 %v154
    %v197 = vpop.f32.mrf.mxu0
    %v198 = vadd.f32 0.0, %v197
    %v199 = vpop.f32.mrf.mxu0
    %v200 = vadd.f32 0.0, %v199
    %v201 = vpop.f32.mrf.mxu0
    %v202 = vpop.f32.mrf.mxu0
    %203 = vdwg.mxu0
    %v209 = vunpack.c.l.b16 %v91
    %v210 = vunpack.c.h.b16 %v91
    %v211 = vunpack.c.l.b16 %v92
    %v212 = vunpack.c.h.b16 %v92
    %v213 = vunpack.c.l.b16 %v93
    %v214 = vunpack.c.h.b16 %v93
    %v215 = vunpack.c.l.b16 %v94
    %v216 = vunpack.c.h.b16 %v94
    %v217 = vunpack.c.l.b16 %v95
    %v218 = vunpack.c.h.b16 %v95
    %v219 = vpack.c.b16 %v211, %v209
    %v220 = vpack.c.b16 %v212, %v210
    %v221 = vpack.c.b16 %v215, %v213
    %v222 = vpack.c.b16 %v216, %v214
    %v223 = vpack.c.b16 %v217, %v217
    %v224 = vpack.c.b16 %v218, %v218
    %v230 = vsel %vm156, %v223, 0
    %v233 = vsel %vm156, %v224, 0
    %235 = vmatprep.subr.bf16.mxu0 0
    %236 = vmatpush1.bf16.msra.mxu0 0
    %237 = vmatprep.subr.bf16.mxu0 0
    %238 = vmatpush1.bf16.msra.mxu0 0
    %239 = vmatprep.subr.bf16.mxu0 0
    %240 = vmatpush1.bf16.msra.mxu0 0
    %241 = vmatprep.subr.bf16.mxu0 0
    %242 = vmatpush1.bf16.msra.mxu0 0
    %243 = vmatprep.subr.bf16.mxu0 0
    %244 = vmatpush1.bf16.msra.mxu0 0
    %245 = vmatprep.subr.bf16.mxu0 %v233
    %246 = vmatpush1.bf16.msra.mxu0 %v230
    %247 = vmatprep.subr.bf16.mxu0 %v222
    %248 = vmatpush1.bf16.msra.mxu0 %v221
    %249 = vmatprep.subr.bf16.mxu0 %v220
    %250 = vmatpush1.bf16.msra.mxu0 %v219
    %251 = vmatprep.subr.bf16.mxu0 0
    %252 = vmatpush2.bf16.msra.mxu0 0
    %253 = vmatprep.subr.bf16.mxu0 0
    %254 = vmatpush2.bf16.msra.mxu0 0
    %255 = vmatprep.subr.bf16.mxu0 0
    %256 = vmatpush2.bf16.msra.mxu0 0
    %257 = vmatprep.subr.bf16.mxu0 0
    %258 = vmatpush2.bf16.msra.mxu0 0
    %259 = vmatprep.subr.bf16.mxu0 0
    %260 = vmatpush2.bf16.msra.mxu0 0
    %261 = vmatprep.subr.bf16.mxu0 0
    %262 = vmatpush2.bf16.msra.mxu0 0
    %263 = vmatprep.subr.bf16.mxu0 0
    %264 = vmatpush2.bf16.msra.mxu0 0
    %265 = vmatprep.subr.bf16.mxu0 0
    %266 = vmatpush2.bf16.msra.mxu0 0
    %267 = vmatprep.mubr.bf16.mxu0 0
    %268 = vmatmul.mubr.bf16.gmra.mxu0 %v154
    %v269 = vpop.f32.mrf.mxu0
    %v270 = vadd.f32 0.0, %v269
    %v271 = vpop.f32.mrf.mxu0
    %v272 = vadd.f32 0.0, %v271
    %v273 = vpop.f32.mrf.mxu0
    %v274 = vpop.f32.mrf.mxu0
    %275 = vdwg.mxu0
    %v281 = vunpack.c.l.b16 %v96
    %v282 = vunpack.c.h.b16 %v96
    %v283 = vunpack.c.l.b16 %v97
    %v284 = vunpack.c.h.b16 %v97
    %v285 = vunpack.c.l.b16 %v98
    %v286 = vunpack.c.h.b16 %v98
    %v287 = vunpack.c.l.b16 %v99
    %v288 = vunpack.c.h.b16 %v99
    %v289 = vunpack.c.l.b16 %v100
    %v290 = vunpack.c.h.b16 %v100
    %v291 = vpack.c.b16 %v283, %v281
    %v292 = vpack.c.b16 %v284, %v282
    %v293 = vpack.c.b16 %v287, %v285
    %v294 = vpack.c.b16 %v288, %v286
    %v295 = vpack.c.b16 %v289, %v289
    %v296 = vpack.c.b16 %v290, %v290
    %v302 = vsel %vm156, %v295, 0
    %v305 = vsel %vm156, %v296, 0
    %307 = vmatprep.subr.bf16.mxu0 0
    %308 = vmatpush1.bf16.msra.mxu0 0
    %309 = vmatprep.subr.bf16.mxu0 0
    %310 = vmatpush1.bf16.msra.mxu0 0
    %311 = vmatprep.subr.bf16.mxu0 0
    %312 = vmatpush1.bf16.msra.mxu0 0
    %313 = vmatprep.subr.bf16.mxu0 0
    %314 = vmatpush1.bf16.msra.mxu0 0
    %315 = vmatprep.subr.bf16.mxu0 0
    %316 = vmatpush1.bf16.msra.mxu0 0
    %317 = vmatprep.subr.bf16.mxu0 %v305
    %318 = vmatpush1.bf16.msra.mxu0 %v302
    %319 = vmatprep.subr.bf16.mxu0 %v294
    %320 = vmatpush1.bf16.msra.mxu0 %v293
    %321 = vmatprep.subr.bf16.mxu0 %v292
    %322 = vmatpush1.bf16.msra.mxu0 %v291
    %323 = vmatprep.subr.bf16.mxu0 0
    %324 = vmatpush2.bf16.msra.mxu0 0
    %325 = vmatprep.subr.bf16.mxu0 0
    %326 = vmatpush2.bf16.msra.mxu0 0
    %327 = vmatprep.subr.bf16.mxu0 0
    %328 = vmatpush2.bf16.msra.mxu0 0
    %329 = vmatprep.subr.bf16.mxu0 0
    %330 = vmatpush2.bf16.msra.mxu0 0
    %331 = vmatprep.subr.bf16.mxu0 0
    %332 = vmatpush2.bf16.msra.mxu0 0
    %333 = vmatprep.subr.bf16.mxu0 0
    %334 = vmatpush2.bf16.msra.mxu0 0
    %335 = vmatprep.subr.bf16.mxu0 0
    %336 = vmatpush2.bf16.msra.mxu0 0
    %337 = vmatprep.subr.bf16.mxu0 0
    %338 = vmatpush2.bf16.msra.mxu0 0
    %339 = vmatprep.mubr.bf16.mxu0 0
    %340 = vmatmul.mubr.bf16.gmra.mxu0 %v154
    %v341 = vpop.f32.mrf.mxu0
    %v342 = vadd.f32 0.0, %v341
    %v343 = vpop.f32.mrf.mxu0
    %v344 = vadd.f32 0.0, %v343
    %v345 = vpop.f32.mrf.mxu0
    %v346 = vpop.f32.mrf.mxu0
    %347 = vdwg.mxu0
    %v353 = vunpack.c.l.b16 %v101
    %v354 = vunpack.c.h.b16 %v101
    %v355 = vunpack.c.l.b16 %v102
    %v356 = vunpack.c.h.b16 %v102
    %v357 = vunpack.c.l.b16 %v103
    %v358 = vunpack.c.h.b16 %v103
    %v359 = vunpack.c.l.b16 %v104
    %v360 = vunpack.c.h.b16 %v104
    %v361 = vunpack.c.l.b16 %v105
    %v362 = vunpack.c.h.b16 %v105
    %v363 = vpack.c.b16 %v355, %v353
    %v364 = vpack.c.b16 %v356, %v354
    %v365 = vpack.c.b16 %v359, %v357
    %v366 = vpack.c.b16 %v360, %v358
    %v367 = vpack.c.b16 %v361, %v361
    %v368 = vpack.c.b16 %v362, %v362
    %v374 = vsel %vm156, %v367, 0
    %v377 = vsel %vm156, %v368, 0
    %379 = vmatprep.subr.bf16.mxu0 0
    %380 = vmatpush1.bf16.msra.mxu0 0
    %381 = vmatprep.subr.bf16.mxu0 0
    %382 = vmatpush1.bf16.msra.mxu0 0
    %383 = vmatprep.subr.bf16.mxu0 0
    %384 = vmatpush1.bf16.msra.mxu0 0
    %385 = vmatprep.subr.bf16.mxu0 0
    %386 = vmatpush1.bf16.msra.mxu0 0
    %387 = vmatprep.subr.bf16.mxu0 0
    %388 = vmatpush1.bf16.msra.mxu0 0
    %389 = vmatprep.subr.bf16.mxu0 %v377
    %390 = vmatpush1.bf16.msra.mxu0 %v374
    %391 = vmatprep.subr.bf16.mxu0 %v366
    %392 = vmatpush1.bf16.msra.mxu0 %v365
    %393 = vmatprep.subr.bf16.mxu0 %v364
    %394 = vmatpush1.bf16.msra.mxu0 %v363
    %395 = vmatprep.subr.bf16.mxu0 0
    %396 = vmatpush2.bf16.msra.mxu0 0
    %397 = vmatprep.subr.bf16.mxu0 0
    %398 = vmatpush2.bf16.msra.mxu0 0
    %399 = vmatprep.subr.bf16.mxu0 0
    %400 = vmatpush2.bf16.msra.mxu0 0
    %401 = vmatprep.subr.bf16.mxu0 0
    %402 = vmatpush2.bf16.msra.mxu0 0
    %403 = vmatprep.subr.bf16.mxu0 0
    %404 = vmatpush2.bf16.msra.mxu0 0
    %405 = vmatprep.subr.bf16.mxu0 0
    %406 = vmatpush2.bf16.msra.mxu0 0
    %407 = vmatprep.subr.bf16.mxu0 0
    %408 = vmatpush2.bf16.msra.mxu0 0
    %409 = vmatprep.subr.bf16.mxu0 0
    %410 = vmatpush2.bf16.msra.mxu0 0
    %411 = vmatprep.mubr.bf16.mxu0 0
    %412 = vmatmul.mubr.bf16.gmra.mxu0 %v154
    %v413 = vpop.f32.mrf.mxu0
    %v414 = vadd.f32 0.0, %v413
    %v415 = vpop.f32.mrf.mxu0
    %v416 = vadd.f32 0.0, %v415
    %v417 = vpop.f32.mrf.mxu0
    %v418 = vpop.f32.mrf.mxu0
    %419 = vdwg.mxu0
    %v425 = vunpack.c.l.b16 %v106
    %v426 = vunpack.c.h.b16 %v106
    %v427 = vunpack.c.l.b16 %v107
    %v428 = vunpack.c.h.b16 %v107
    %v429 = vunpack.c.l.b16 %v108
    %v430 = vunpack.c.h.b16 %v108
    %v431 = vunpack.c.l.b16 %v109
    %v432 = vunpack.c.h.b16 %v109
    %v433 = vunpack.c.l.b16 %v110
    %v434 = vunpack.c.h.b16 %v110
    %v435 = vpack.c.b16 %v427, %v425
    %v436 = vpack.c.b16 %v428, %v426
    %v437 = vpack.c.b16 %v431, %v429
    %v438 = vpack.c.b16 %v432, %v430
    %v439 = vpack.c.b16 %v433, %v433
    %v440 = vpack.c.b16 %v434, %v434
    %v446 = vsel %vm156, %v439, 0
    %v449 = vsel %vm156, %v440, 0
    %451 = vmatprep.subr.bf16.mxu0 0
    %452 = vmatpush1.bf16.msra.mxu0 0
    %453 = vmatprep.subr.bf16.mxu0 0
    %454 = vmatpush1.bf16.msra.mxu0 0
    %455 = vmatprep.subr.bf16.mxu0 0
    %456 = vmatpush1.bf16.msra.mxu0 0
    %457 = vmatprep.subr.bf16.mxu0 0
    %458 = vmatpush1.bf16.msra.mxu0 0
    %459 = vmatprep.subr.bf16.mxu0 0
    %460 = vmatpush1.bf16.msra.mxu0 0
    %461 = vmatprep.subr.bf16.mxu0 %v449
    %462 = vmatpush1.bf16.msra.mxu0 %v446
    %463 = vmatprep.subr.bf16.mxu0 %v438
    %464 = vmatpush1.bf16.msra.mxu0 %v437
    %465 = vmatprep.subr.bf16.mxu0 %v436
    %466 = vmatpush1.bf16.msra.mxu0 %v435
    %467 = vmatprep.subr.bf16.mxu0 0
    %468 = vmatpush2.bf16.msra.mxu0 0
    %469 = vmatprep.subr.bf16.mxu0 0
    %470 = vmatpush2.bf16.msra.mxu0 0
    %471 = vmatprep.subr.bf16.mxu0 0
    %472 = vmatpush2.bf16.msra.mxu0 0
    %473 = vmatprep.subr.bf16.mxu0 0
    %474 = vmatpush2.bf16.msra.mxu0 0
    %475 = vmatprep.subr.bf16.mxu0 0
    %476 = vmatpush2.bf16.msra.mxu0 0
    %477 = vmatprep.subr.bf16.mxu0 0
    %478 = vmatpush2.bf16.msra.mxu0 0
    %479 = vmatprep.subr.bf16.mxu0 0
    %480 = vmatpush2.bf16.msra.mxu0 0
    %481 = vmatprep.subr.bf16.mxu0 0
    %482 = vmatpush2.bf16.msra.mxu0 0
    %483 = vmatprep.mubr.bf16.mxu0 0
    %484 = vmatmul.mubr.bf16.gmra.mxu0 %v154
    %v485 = vpop.f32.mrf.mxu0
    %v486 = vadd.f32 0.0, %v485
    %v487 = vpop.f32.mrf.mxu0
    %v488 = vadd.f32 0.0, %v487
    %v489 = vpop.f32.mrf.mxu0
    %v490 = vpop.f32.mrf.mxu0
    %491 = vdwg.mxu0
    %v497 = vunpack.c.l.b16 %v111
    %v498 = vunpack.c.h.b16 %v111
    %v499 = vunpack.c.l.b16 %v112
    %v500 = vunpack.c.h.b16 %v112
    %v501 = vunpack.c.l.b16 %v113
    %v502 = vunpack.c.h.b16 %v113
    %v503 = vunpack.c.l.b16 %v114
    %v504 = vunpack.c.h.b16 %v114
    %v505 = vunpack.c.l.b16 %v115
    %v506 = vunpack.c.h.b16 %v115
    %v507 = vpack.c.b16 %v499, %v497
    %v508 = vpack.c.b16 %v500, %v498
    %v509 = vpack.c.b16 %v503, %v501
    %v510 = vpack.c.b16 %v504, %v502
    %v511 = vpack.c.b16 %v505, %v505
    %v512 = vpack.c.b16 %v506, %v506
    %v518 = vsel %vm156, %v511, 0
    %v521 = vsel %vm156, %v512, 0
    %523 = vmatprep.subr.bf16.mxu0 0
    %524 = vmatpush1.bf16.msra.mxu0 0
    %525 = vmatprep.subr.bf16.mxu0 0
    %526 = vmatpush1.bf16.msra.mxu0 0
    %527 = vmatprep.subr.bf16.mxu0 0
    %528 = vmatpush1.bf16.msra.mxu0 0
    %529 = vmatprep.subr.bf16.mxu0 0
    %530 = vmatpush1.bf16.msra.mxu0 0
    %531 = vmatprep.subr.bf16.mxu0 0
    %532 = vmatpush1.bf16.msra.mxu0 0
    %533 = vmatprep.subr.bf16.mxu0 %v521
    %534 = vmatpush1.bf16.msra.mxu0 %v518
    %535 = vmatprep.subr.bf16.mxu0 %v510
    %536 = vmatpush1.bf16.msra.mxu0 %v509
    %537 = vmatprep.subr.bf16.mxu0 %v508
    %538 = vmatpush1.bf16.msra.mxu0 %v507
    %539 = vmatprep.subr.bf16.mxu0 0
    %540 = vmatpush2.bf16.msra.mxu0 0
    %541 = vmatprep.subr.bf16.mxu0 0
    %542 = vmatpush2.bf16.msra.mxu0 0
    %543 = vmatprep.subr.bf16.mxu0 0
    %544 = vmatpush2.bf16.msra.mxu0 0
    %545 = vmatprep.subr.bf16.mxu0 0
    %546 = vmatpush2.bf16.msra.mxu0 0
    %547 = vmatprep.subr.bf16.mxu0 0
    %548 = vmatpush2.bf16.msra.mxu0 0
    %549 = vmatprep.subr.bf16.mxu0 0
    %550 = vmatpush2.bf16.msra.mxu0 0
    %551 = vmatprep.subr.bf16.mxu0 0
    %552 = vmatpush2.bf16.msra.mxu0 0
    %553 = vmatprep.subr.bf16.mxu0 0
    %554 = vmatpush2.bf16.msra.mxu0 0
    %555 = vmatprep.mubr.bf16.mxu0 0
    %556 = vmatmul.mubr.bf16.gmra.mxu0 %v154
    %v557 = vpop.f32.mrf.mxu0
    %v558 = vadd.f32 0.0, %v557
    %v559 = vpop.f32.mrf.mxu0
    %v560 = vadd.f32 0.0, %v559
    %v561 = vpop.f32.mrf.mxu0
    %v562 = vpop.f32.mrf.mxu0
    %563 = vdwg.mxu0
    %v569 = vunpack.c.l.b16 %v116
    %v570 = vunpack.c.h.b16 %v116
    %v571 = vunpack.c.l.b16 %v117
    %v572 = vunpack.c.h.b16 %v117
    %v573 = vunpack.c.l.b16 %v118
    %v574 = vunpack.c.h.b16 %v118
    %v575 = vunpack.c.l.b16 %v119
    %v576 = vunpack.c.h.b16 %v119
    %v577 = vunpack.c.l.b16 %v120
    %v578 = vunpack.c.h.b16 %v120
    %v579 = vpack.c.b16 %v571, %v569
    %v580 = vpack.c.b16 %v572, %v570
    %v581 = vpack.c.b16 %v575, %v573
    %v582 = vpack.c.b16 %v576, %v574
    %v583 = vpack.c.b16 %v577, %v577
    %v584 = vpack.c.b16 %v578, %v578
    %v590 = vsel %vm156, %v583, 0
    %v593 = vsel %vm156, %v584, 0
    %595 = vmatprep.subr.bf16.mxu0 0
    %596 = vmatpush1.bf16.msra.mxu0 0
    %597 = vmatprep.subr.bf16.mxu0 0
    %598 = vmatpush1.bf16.msra.mxu0 0
    %599 = vmatprep.subr.bf16.mxu0 0
    %600 = vmatpush1.bf16.msra.mxu0 0
    %601 = vmatprep.subr.bf16.mxu0 0
    %602 = vmatpush1.bf16.msra.mxu0 0
    %603 = vmatprep.subr.bf16.mxu0 0
    %604 = vmatpush1.bf16.msra.mxu0 0
    %605 = vmatprep.subr.bf16.mxu0 %v593
    %606 = vmatpush1.bf16.msra.mxu0 %v590
    %607 = vmatprep.subr.bf16.mxu0 %v582
    %608 = vmatpush1.bf16.msra.mxu0 %v581
    %609 = vmatprep.subr.bf16.mxu0 %v580
    %610 = vmatpush1.bf16.msra.mxu0 %v579
    %611 = vmatprep.subr.bf16.mxu0 0
    %612 = vmatpush2.bf16.msra.mxu0 0
    %613 = vmatprep.subr.bf16.mxu0 0
    %614 = vmatpush2.bf16.msra.mxu0 0
    %615 = vmatprep.subr.bf16.mxu0 0
    %616 = vmatpush2.bf16.msra.mxu0 0
    %617 = vmatprep.subr.bf16.mxu0 0
    %618 = vmatpush2.bf16.msra.mxu0 0
    %619 = vmatprep.subr.bf16.mxu0 0
    %620 = vmatpush2.bf16.msra.mxu0 0
    %621 = vmatprep.subr.bf16.mxu0 0
    %622 = vmatpush2.bf16.msra.mxu0 0
    %623 = vmatprep.subr.bf16.mxu0 0
    %624 = vmatpush2.bf16.msra.mxu0 0
    %625 = vmatprep.subr.bf16.mxu0 0
    %626 = vmatpush2.bf16.msra.mxu0 0
    %627 = vmatprep.mubr.bf16.mxu0 0
    %628 = vmatmul.mubr.bf16.gmra.mxu0 %v154
    %v629 = vpop.f32.mrf.mxu0
    %v630 = vadd.f32 0.0, %v629
    %v631 = vpop.f32.mrf.mxu0
    %v632 = vadd.f32 0.0, %v631
    %v633 = vpop.f32.mrf.mxu0
    %v634 = vpop.f32.mrf.mxu0
    %635 = vdwg.mxu0
    %v641 = vunpack.c.l.b16 %v121
    %v642 = vunpack.c.h.b16 %v121
    %v643 = vunpack.c.l.b16 %v122
    %v644 = vunpack.c.h.b16 %v122
    %v645 = vunpack.c.l.b16 %v123
    %v646 = vunpack.c.h.b16 %v123
    %v647 = vunpack.c.l.b16 %v124
    %v648 = vunpack.c.h.b16 %v124
    %v649 = vunpack.c.l.b16 %v125
    %v650 = vunpack.c.h.b16 %v125
    %v651 = vpack.c.b16 %v643, %v641
    %v652 = vpack.c.b16 %v644, %v642
    %v653 = vpack.c.b16 %v647, %v645
    %v654 = vpack.c.b16 %v648, %v646
    %v655 = vpack.c.b16 %v649, %v649
    %v656 = vpack.c.b16 %v650, %v650
    %v662 = vsel %vm156, %v655, 0
    %v665 = vsel %vm156, %v656, 0
    %667 = vmatprep.subr.bf16.mxu0 0
    %668 = vmatpush1.bf16.msra.mxu0 0
    %669 = vmatprep.subr.bf16.mxu0 0
    %670 = vmatpush1.bf16.msra.mxu0 0
    %671 = vmatprep.subr.bf16.mxu0 0
    %672 = vmatpush1.bf16.msra.mxu0 0
    %673 = vmatprep.subr.bf16.mxu0 0
    %674 = vmatpush1.bf16.msra.mxu0 0
    %675 = vmatprep.subr.bf16.mxu0 0
    %676 = vmatpush1.bf16.msra.mxu0 0
    %677 = vmatprep.subr.bf16.mxu0 %v665
    %678 = vmatpush1.bf16.msra.mxu0 %v662
    %679 = vmatprep.subr.bf16.mxu0 %v654
    %680 = vmatpush1.bf16.msra.mxu0 %v653
    %681 = vmatprep.subr.bf16.mxu0 %v652
    %682 = vmatpush1.bf16.msra.mxu0 %v651
    %683 = vmatprep.subr.bf16.mxu0 0
    %684 = vmatpush2.bf16.msra.mxu0 0
    %685 = vmatprep.subr.bf16.mxu0 0
    %686 = vmatpush2.bf16.msra.mxu0 0
    %687 = vmatprep.subr.bf16.mxu0 0
    %688 = vmatpush2.bf16.msra.mxu0 0
    %689 = vmatprep.subr.bf16.mxu0 0
    %690 = vmatpush2.bf16.msra.mxu0 0
    %691 = vmatprep.subr.bf16.mxu0 0
    %692 = vmatpush2.bf16.msra.mxu0 0
    %693 = vmatprep.subr.bf16.mxu0 0
    %694 = vmatpush2.bf16.msra.mxu0 0
    %695 = vmatprep.subr.bf16.mxu0 0
    %696 = vmatpush2.bf16.msra.mxu0 0
    %697 = vmatprep.subr.bf16.mxu0 0
    %698 = vmatpush2.bf16.msra.mxu0 0
    %699 = vmatprep.mubr.bf16.mxu0 0
    %700 = vmatmul.mubr.bf16.gmra.mxu0 %v154
    %v701 = vpop.f32.mrf.mxu0
    %v702 = vadd.f32 0.0, %v701
    %v703 = vpop.f32.mrf.mxu0
    %v704 = vadd.f32 0.0, %v703
    %v705 = vpop.f32.mrf.mxu0
    %v706 = vpop.f32.mrf.mxu0
    %707 = vdwg.mxu0
    %v708 = vmax.f32 %v198, 0.0
    %v709 = vmax.f32 %v200, 0.0
    %v710 = vmax.f32 %v270, 0.0
    %v711 = vmax.f32 %v272, 0.0
    %v712 = vmax.f32 %v342, 0.0
    %v713 = vmax.f32 %v344, 0.0
    %v714 = vmax.f32 %v414, 0.0
    %v715 = vmax.f32 %v416, 0.0
    %v716 = vmax.f32 %v486, 0.0
    %v717 = vmax.f32 %v488, 0.0
    %v718 = vmax.f32 %v558, 0.0
    %v719 = vmax.f32 %v560, 0.0
    %v720 = vmax.f32 %v630, 0.0
    %v721 = vmax.f32 %v632, 0.0
    %v722 = vmax.f32 %v702, 0.0
    %v723 = vmax.f32 %v704, 0.0
    %v724 = vpack.c.bf16 %v708, %v708
    %v725 = vpack.c.bf16 %v709, %v709
    %v726 = vpack.c.bf16 %v710, %v710
    %v727 = vpack.c.bf16 %v711, %v711
    %v728 = vpack.c.bf16 %v712, %v712
    %v729 = vpack.c.bf16 %v713, %v713
    %v730 = vpack.c.bf16 %v714, %v714
    %v731 = vpack.c.bf16 %v715, %v715
    %v732 = vpack.c.bf16 %v716, %v716
    %v733 = vpack.c.bf16 %v717, %v717
    %v734 = vpack.c.bf16 %v718, %v718
    %v735 = vpack.c.bf16 %v719, %v719
    %v736 = vpack.c.bf16 %v720, %v720
    %v737 = vpack.c.bf16 %v721, %v721
    %v738 = vpack.c.bf16 %v722, %v722
    %v739 = vpack.c.bf16 %v723, %v723
    %v756 = vunpack.c.l.b16 %v724
    %v757 = vunpack.c.l.b16 %v725
    %v758 = vunpack.c.l.b16 %v726
    %v759 = vunpack.c.l.b16 %v727
    %v760 = vunpack.c.l.b16 %v728
    %v761 = vunpack.c.l.b16 %v729
    %v762 = vunpack.c.l.b16 %v730
    %v763 = vunpack.c.l.b16 %v731
    %v764 = vunpack.c.l.b16 %v732
    %v765 = vunpack.c.l.b16 %v733
    %v766 = vunpack.c.l.b16 %v734
    %v767 = vunpack.c.l.b16 %v735
    %v768 = vunpack.c.l.b16 %v736
    %v769 = vunpack.c.l.b16 %v737
    %v770 = vunpack.c.l.b16 %v738
    %v771 = vunpack.c.l.b16 %v739
    %v772 = vpack.c.b16 %v757, %v756
    %v773 = vpack.c.b16 %v759, %v758
    %v774 = vpack.c.b16 %v761, %v760
    %v775 = vpack.c.b16 %v763, %v762
    %v776 = vpack.c.b16 %v765, %v764
    %v777 = vpack.c.b16 %v767, %v766
    %v778 = vpack.c.b16 %v769, %v768
    %v779 = vpack.c.b16 %v771, %v770
    %788 = vst [vmem:[#allocation2] sm:$0xff] %v772
    %789 = vst [vmem:[#allocation2 + $0x8] sm:$0xff] %v773
    %790 = vst [vmem:[#allocation2 + $0x10] sm:$0xff] %v774
    %791 = vst [vmem:[#allocation2 + $0x18] sm:$0xff] %v775
    %792 = vst [vmem:[#allocation2 + $0x20] sm:$0xff] %v776
    %793 = vst [vmem:[#allocation2 + $0x28] sm:$0xff] %v777
    %794 = vst [vmem:[#allocation2 + $0x30] sm:$0xff] %v778
    %795 = vst [vmem:[#allocation2 + $0x38] sm:$0xff] %v779
    %v796 = vld [vmem:[#allocation8] sm:$0xff]
    %v798 = vlaneseq
    %v799 = vshrl.u32 %v798, 7
    %v800 = vsub.s32 0, %v799
    %v801 = vrot.slane %v796, %v800
    %v802 = vlaneseq
    %v803 = vshrl.u32 %v802, 7
    %v804 = vsub.s32 1, %v803
    %v805 = vrot.slane %v796, %v804
    %v806 = vlaneseq
    %v807 = vshrl.u32 %v806, 7
    %v808 = vsub.s32 2, %v807
    %v809 = vrot.slane %v796, %v808
    %v810 = vlaneseq
    %v811 = vshrl.u32 %v810, 7
    %v812 = vsub.s32 3, %v811
    %v813 = vrot.slane %v796, %v812
    %v814 = vlaneseq
    %v815 = vshrl.u32 %v814, 7
    %v816 = vsub.s32 4, %v815
    %v817 = vrot.slane %v796, %v816
    %v818 = vlaneseq
    %v819 = vshrl.u32 %v818, 7
    %v820 = vsub.s32 5, %v819
    %v821 = vrot.slane %v796, %v820
    %v822 = vlaneseq
    %v823 = vshrl.u32 %v822, 7
    %v824 = vsub.s32 6, %v823
    %v825 = vrot.slane %v796, %v824
    %v826 = vlaneseq
    %v827 = vshrl.u32 %v826, 7
    %v828 = vsub.s32 7, %v827
    %v829 = vrot.slane %v796, %v828
    %838 = vst [vmem:[#allocation3] sm:$0xff] %v801
    %839 = vst [vmem:[#allocation3 + $0x8] sm:$0xff] %v805
    %840 = vst [vmem:[#allocation3 + $0x10] sm:$0xff] %v809
    %841 = vst [vmem:[#allocation3 + $0x18] sm:$0xff] %v813
    %842 = vst [vmem:[#allocation3 + $0x20] sm:$0xff] %v817
    %843 = vst [vmem:[#allocation3 + $0x28] sm:$0xff] %v821
    %844 = vst [vmem:[#allocation3 + $0x30] sm:$0xff] %v825
    %845 = vst [vmem:[#allocation3 + $0x38] sm:$0xff] %v829
    %v846 = vld [vmem:[#allocation3] sm:$0xff]
    %v847 = vld [vmem:[#allocation3 + $0x8] sm:$0xff]
    %v848 = vld [vmem:[#allocation3 + $0x10] sm:$0xff]
    %v849 = vld [vmem:[#allocation3 + $0x18] sm:$0xff]
    %v850 = vld [vmem:[#allocation3 + $0x20] sm:$0xff]
    %v851 = vld [vmem:[#allocation3 + $0x28] sm:$0xff]
    %v852 = vld [vmem:[#allocation3 + $0x30] sm:$0xff]
    %v853 = vld [vmem:[#allocation3 + $0x38] sm:$0xff]
    %v854 = vld [vmem:[#allocation2] sm:$0x11]
    %v855 = vld [vmem:[#allocation2 + $0x8] sm:$0x11]
    %v856 = vld [vmem:[#allocation2 + $0x10] sm:$0x11]
    %v857 = vld [vmem:[#allocation2 + $0x18] sm:$0x11]
    %v858 = vld [vmem:[#allocation2 + $0x20] sm:$0x11]
    %v859 = vld [vmem:[#allocation2 + $0x28] sm:$0x11]
    %v860 = vld [vmem:[#allocation2 + $0x30] sm:$0x11]
    %v861 = vld [vmem:[#allocation2 + $0x38] sm:$0x11]
    %v862 = vld [vmem:[#allocation6] sm:$0xff]
    %v863 = vld [vmem:[#allocation6 + $0x8] sm:$0xff]
    %v864 = vld [vmem:[#allocation6 + $0x10] sm:$0xff]
    %v865 = vld [vmem:[#allocation6 + $0x18] sm:$0xff]
    %v866 = vld [vmem:[#allocation6 + $0x20] sm:$0xff]
    %v867 = vld [vmem:[#allocation6 + $0x28] sm:$0xff]
    %v868 = vld [vmem:[#allocation6 + $0x30] sm:$0xff]
    %v869 = vld [vmem:[#allocation6 + $0x38] sm:$0xff]
    %v870 = vld [vmem:[#allocation6 + $0x40] sm:$0xff]
    %v871 = vld [vmem:[#allocation6 + $0x48] sm:$0xff]
    %v872 = vld [vmem:[#allocation6 + $0x50] sm:$0xff]
    %v873 = vld [vmem:[#allocation6 + $0x58] sm:$0xff]
    %v874 = vld [vmem:[#allocation6 + $0x60] sm:$0xff]
    %v875 = vld [vmem:[#allocation6 + $0x68] sm:$0xff]
    %v876 = vld [vmem:[#allocation6 + $0x70] sm:$0xff]
    %v877 = vld [vmem:[#allocation6 + $0x78] sm:$0xff]
    %v878 = vld [vmem:[#allocation6 + $0x80] sm:$0xff]
    %v879 = vld [vmem:[#allocation6 + $0x88] sm:$0xff]
    %v880 = vld [vmem:[#allocation6 + $0x90] sm:$0xff]
    %v881 = vld [vmem:[#allocation6 + $0x98] sm:$0xff]
    %v882 = vld [vmem:[#allocation6 + $0xa0] sm:$0xff]
    %v883 = vld [vmem:[#allocation6 + $0xa8] sm:$0xff]
    %v884 = vld [vmem:[#allocation6 + $0xb0] sm:$0xff]
    %v885 = vld [vmem:[#allocation6 + $0xb8] sm:$0xff]
    %v886 = vld [vmem:[#allocation6 + $0xc0] sm:$0xff]
    %v887 = vld [vmem:[#allocation6 + $0xc8] sm:$0xff]
    %v888 = vld [vmem:[#allocation6 + $0xd0] sm:$0xff]
    %v889 = vld [vmem:[#allocation6 + $0xd8] sm:$0xff]
    %v890 = vld [vmem:[#allocation6 + $0xe0] sm:$0xff]
    %v891 = vld [vmem:[#allocation6 + $0xe8] sm:$0xff]
    %v892 = vld [vmem:[#allocation6 + $0xf0] sm:$0xff]
    %v893 = vld [vmem:[#allocation6 + $0xf8] sm:$0xff]
    %v894 = vld [vmem:[#allocation6 + $0x100] sm:$0xff]
    %v895 = vld [vmem:[#allocation6 + $0x108] sm:$0xff]
    %v896 = vld [vmem:[#allocation6 + $0x110] sm:$0xff]
    %v897 = vld [vmem:[#allocation6 + $0x118] sm:$0xff]
    %v898 = vld [vmem:[#allocation6 + $0x120] sm:$0xff]
    %v899 = vld [vmem:[#allocation6 + $0x128] sm:$0xff]
    %v900 = vld [vmem:[#allocation6 + $0x130] sm:$0xff]
    %v901 = vld [vmem:[#allocation6 + $0x138] sm:$0xff]
    %v902 = vld [vmem:[#allocation6 + $0x140] sm:$0xff]
    %v903 = vld [vmem:[#allocation6 + $0x148] sm:$0xff]
    %v904 = vld [vmem:[#allocation6 + $0x150] sm:$0xff]
    %v905 = vld [vmem:[#allocation6 + $0x158] sm:$0xff]
    %v906 = vld [vmem:[#allocation6 + $0x160] sm:$0xff]
    %v907 = vld [vmem:[#allocation6 + $0x168] sm:$0xff]
    %v908 = vld [vmem:[#allocation6 + $0x170] sm:$0xff]
    %v909 = vld [vmem:[#allocation6 + $0x178] sm:$0xff]
    %v910 = vld [vmem:[#allocation6 + $0x180] sm:$0xff]
    %v911 = vld [vmem:[#allocation6 + $0x188] sm:$0xff]
    %v912 = vld [vmem:[#allocation6 + $0x190] sm:$0xff]
    %v913 = vld [vmem:[#allocation6 + $0x198] sm:$0xff]
    %v914 = vld [vmem:[#allocation6 + $0x1a0] sm:$0xff]
    %v915 = vld [vmem:[#allocation6 + $0x1a8] sm:$0xff]
    %v916 = vld [vmem:[#allocation6 + $0x1b0] sm:$0xff]
    %v917 = vld [vmem:[#allocation6 + $0x1b8] sm:$0xff]
    %v918 = vld [vmem:[#allocation6 + $0x1c0] sm:$0xff]
    %v919 = vld [vmem:[#allocation6 + $0x1c8] sm:$0xff]
    %v920 = vld [vmem:[#allocation6 + $0x1d0] sm:$0xff]
    %v921 = vld [vmem:[#allocation6 + $0x1d8] sm:$0xff]
    %v922 = vld [vmem:[#allocation6 + $0x1e0] sm:$0xff]
    %v923 = vld [vmem:[#allocation6 + $0x1e8] sm:$0xff]
    %v924 = vld [vmem:[#allocation6 + $0x1f0] sm:$0xff]
    %v925 = vld [vmem:[#allocation6 + $0x1f8] sm:$0xff]
    %v926 = vld [vmem:[#allocation6 + $0x200] sm:$0xff]
    %v927 = vld [vmem:[#allocation6 + $0x208] sm:$0xff]
    %v928 = vld [vmem:[#allocation6 + $0x210] sm:$0xff]
    %v929 = vld [vmem:[#allocation6 + $0x218] sm:$0xff]
    %v930 = vld [vmem:[#allocation6 + $0x220] sm:$0xff]
    %v931 = vld [vmem:[#allocation6 + $0x228] sm:$0xff]
    %v932 = vld [vmem:[#allocation6 + $0x230] sm:$0xff]
    %v933 = vld [vmem:[#allocation6 + $0x238] sm:$0xff]
    %v934 = vld [vmem:[#allocation6 + $0x240] sm:$0xff]
    %v935 = vld [vmem:[#allocation6 + $0x248] sm:$0xff]
    %v936 = vld [vmem:[#allocation6 + $0x250] sm:$0xff]
    %v937 = vld [vmem:[#allocation6 + $0x258] sm:$0xff]
    %v938 = vld [vmem:[#allocation6 + $0x260] sm:$0xff]
    %v939 = vld [vmem:[#allocation6 + $0x268] sm:$0xff]
    %v940 = vld [vmem:[#allocation6 + $0x270] sm:$0xff]
    %v941 = vld [vmem:[#allocation6 + $0x278] sm:$0xff]
    %v942 = vld [vmem:[#allocation6 + $0x280] sm:$0xff]
    %v943 = vld [vmem:[#allocation6 + $0x288] sm:$0xff]
    %v944 = vld [vmem:[#allocation6 + $0x290] sm:$0xff]
    %v945 = vld [vmem:[#allocation6 + $0x298] sm:$0xff]
    %v946 = vld [vmem:[#allocation6 + $0x2a0] sm:$0xff]
    %v947 = vld [vmem:[#allocation6 + $0x2a8] sm:$0xff]
    %v948 = vld [vmem:[#allocation6 + $0x2b0] sm:$0xff]
    %v949 = vld [vmem:[#allocation6 + $0x2b8] sm:$0xff]
    %v950 = vld [vmem:[#allocation6 + $0x2c0] sm:$0xff]
    %v951 = vld [vmem:[#allocation6 + $0x2c8] sm:$0xff]
    %v952 = vld [vmem:[#allocation6 + $0x2d0] sm:$0xff]
    %v953 = vld [vmem:[#allocation6 + $0x2d8] sm:$0xff]
    %v954 = vld [vmem:[#allocation6 + $0x2e0] sm:$0xff]
    %v955 = vld [vmem:[#allocation6 + $0x2e8] sm:$0xff]
    %v956 = vld [vmem:[#allocation6 + $0x2f0] sm:$0xff]
    %v957 = vld [vmem:[#allocation6 + $0x2f8] sm:$0xff]
    %v958 = vld [vmem:[#allocation6 + $0x300] sm:$0xff]
    %v959 = vld [vmem:[#allocation6 + $0x308] sm:$0xff]
    %v960 = vld [vmem:[#allocation6 + $0x310] sm:$0xff]
    %v961 = vld [vmem:[#allocation6 + $0x318] sm:$0xff]
    %v962 = vld [vmem:[#allocation6 + $0x320] sm:$0xff]
    %v963 = vld [vmem:[#allocation6 + $0x328] sm:$0xff]
    %v964 = vld [vmem:[#allocation6 + $0x330] sm:$0xff]
    %v965 = vld [vmem:[#allocation6 + $0x338] sm:$0xff]
    %v966 = vld [vmem:[#allocation6 + $0x340] sm:$0xff]
    %v967 = vld [vmem:[#allocation6 + $0x348] sm:$0xff]
    %v968 = vld [vmem:[#allocation6 + $0x350] sm:$0xff]
    %v969 = vld [vmem:[#allocation6 + $0x358] sm:$0xff]
    %v970 = vld [vmem:[#allocation6 + $0x360] sm:$0xff]
    %v971 = vld [vmem:[#allocation6 + $0x368] sm:$0xff]
    %v972 = vld [vmem:[#allocation6 + $0x370] sm:$0xff]
    %v973 = vld [vmem:[#allocation6 + $0x378] sm:$0xff]
    %v974 = vld [vmem:[#allocation6 + $0x380] sm:$0xff]
    %v975 = vld [vmem:[#allocation6 + $0x388] sm:$0xff]
    %v976 = vld [vmem:[#allocation6 + $0x390] sm:$0xff]
    %v977 = vld [vmem:[#allocation6 + $0x398] sm:$0xff]
    %v978 = vld [vmem:[#allocation6 + $0x3a0] sm:$0xff]
    %v979 = vld [vmem:[#allocation6 + $0x3a8] sm:$0xff]
    %v980 = vld [vmem:[#allocation6 + $0x3b0] sm:$0xff]
    %v981 = vld [vmem:[#allocation6 + $0x3b8] sm:$0xff]
    %v982 = vld [vmem:[#allocation6 + $0x3c0] sm:$0xff]
    %v983 = vld [vmem:[#allocation6 + $0x3c8] sm:$0xff]
    %v984 = vld [vmem:[#allocation6 + $0x3d0] sm:$0xff]
    %v985 = vld [vmem:[#allocation6 + $0x3d8] sm:$0xff]
    %v986 = vld [vmem:[#allocation6 + $0x3e0] sm:$0xff]
    %v987 = vld [vmem:[#allocation6 + $0x3e8] sm:$0xff]
    %v988 = vld [vmem:[#allocation6 + $0x3f0] sm:$0xff]
    %v989 = vld [vmem:[#allocation6 + $0x3f8] sm:$0xff]
    %v998 = vunpack.c.l.b16 %v854
    %v999 = vunpack.c.h.b16 %v854
    %v1000 = vunpack.c.l.b16 %v855
    %v1001 = vunpack.c.h.b16 %v855
    %v1002 = vunpack.c.l.b16 %v856
    %v1003 = vunpack.c.h.b16 %v856
    %v1004 = vunpack.c.l.b16 %v857
    %v1005 = vunpack.c.h.b16 %v857
    %v1006 = vunpack.c.l.b16 %v858
    %v1007 = vunpack.c.h.b16 %v858
    %v1008 = vunpack.c.l.b16 %v859
    %v1009 = vunpack.c.h.b16 %v859
    %v1010 = vunpack.c.l.b16 %v860
    %v1011 = vunpack.c.h.b16 %v860
    %v1012 = vunpack.c.l.b16 %v861
    %v1013 = vunpack.c.h.b16 %v861
    %v1014 = vpack.c.b16 %v998, %v998
    %v1015 = vpack.c.b16 %v999, %v999
    %v1016 = vpack.c.b16 %v1000, %v1000
    %v1017 = vpack.c.b16 %v1001, %v1001
    %v1018 = vpack.c.b16 %v1002, %v1002
    %v1019 = vpack.c.b16 %v1003, %v1003
    %v1020 = vpack.c.b16 %v1004, %v1004
    %v1021 = vpack.c.b16 %v1005, %v1005
    %v1022 = vpack.c.b16 %v1006, %v1006
    %v1023 = vpack.c.b16 %v1007, %v1007
    %v1024 = vpack.c.b16 %v1008, %v1008
    %v1025 = vpack.c.b16 %v1009, %v1009
    %v1026 = vpack.c.b16 %v1010, %v1010
    %v1027 = vpack.c.b16 %v1011, %v1011
    %v1028 = vpack.c.b16 %v1012, %v1012
    %v1029 = vpack.c.b16 %v1013, %v1013
    %v1030 = vunpack.c.l.b16 %v1014
    %v1031 = vunpack.c.l.b16 %v1015
    %v1032 = vunpack.c.l.b16 %v1016
    %v1033 = vunpack.c.l.b16 %v1017
    %v1034 = vunpack.c.l.b16 %v1018
    %v1035 = vunpack.c.l.b16 %v1019
    %v1036 = vunpack.c.l.b16 %v1020
    %v1037 = vunpack.c.l.b16 %v1021
    %v1038 = vunpack.c.l.b16 %v1022
    %v1039 = vunpack.c.l.b16 %v1023
    %v1040 = vunpack.c.l.b16 %v1024
    %v1041 = vunpack.c.l.b16 %v1025
    %v1042 = vunpack.c.l.b16 %v1026
    %v1043 = vunpack.c.l.b16 %v1027
    %v1044 = vunpack.c.l.b16 %v1028
    %v1045 = vunpack.c.l.b16 %v1029
    %v1046 = vrot.slane %v1032, 7
    %vm1047 = vcmask 1041409
    %v1048 = vsel %vm1047, %v1046, %v1030
    %v1049 = vrot.slane %v1034, 6
    %vm1050 = vcmask 1042434
    %v1051 = vsel %vm1050, %v1049, %v1048
    %v1052 = vrot.slane %v1036, 5
    %vm1053 = vcmask 1043459
    %v1054 = vsel %vm1053, %v1052, %v1051
    %v1055 = vrot.slane %v1038, 4
    %vm1056 = vcmask 1044484
    %v1057 = vsel %vm1056, %v1055, %v1054
    %v1058 = vrot.slane %v1040, 3
    %vm1059 = vcmask 1045509
    %v1060 = vsel %vm1059, %v1058, %v1057
    %v1061 = vrot.slane %v1042, 2
    %vm1062 = vcmask 1046534
    %v1063 = vsel %vm1062, %v1061, %v1060
    %v1064 = vrot.slane %v1044, 1
    %vm1065 = vcmask 1047559
    %v1066 = vsel %vm1065, %v1064, %v1063
    %v1067 = vrot.slane %v1033, 7
    %v1068 = vsel %vm1047, %v1067, %v1031
    %v1069 = vrot.slane %v1035, 6
    %v1070 = vsel %vm1050, %v1069, %v1068
    %v1071 = vrot.slane %v1037, 5
    %v1072 = vsel %vm1053, %v1071, %v1070
    %v1073 = vrot.slane %v1039, 4
    %v1074 = vsel %vm1056, %v1073, %v1072
    %v1075 = vrot.slane %v1041, 3
    %v1076 = vsel %vm1059, %v1075, %v1074
    %v1077 = vrot.slane %v1043, 2
    %v1078 = vsel %vm1062, %v1077, %v1076
    %v1079 = vrot.slane %v1045, 1
    %v1080 = vsel %vm1065, %v1079, %v1078
    %v1081 = vpack.c.b16 %v1066, %v1066
    %v1082 = vpack.c.b16 %v1080, %v1080
    %v1213 = vunpack.c.l.b16 %v862
    %v1214 = vunpack.c.h.b16 %v862
    %v1215 = vunpack.c.l.b16 %v863
    %v1216 = vunpack.c.h.b16 %v863
    %v1217 = vunpack.c.l.b16 %v864
    %v1218 = vunpack.c.h.b16 %v864
    %v1219 = vunpack.c.l.b16 %v865
    %v1220 = vunpack.c.h.b16 %v865
    %v1221 = vunpack.c.l.b16 %v866
    %v1222 = vunpack.c.h.b16 %v866
    %v1223 = vunpack.c.l.b16 %v867
    %v1224 = vunpack.c.h.b16 %v867
    %v1225 = vunpack.c.l.b16 %v868
    %v1226 = vunpack.c.h.b16 %v868
    %v1227 = vunpack.c.l.b16 %v869
    %v1228 = vunpack.c.h.b16 %v869
    %v1229 = vunpack.c.l.b16 %v870
    %v1230 = vunpack.c.h.b16 %v870
    %v1231 = vunpack.c.l.b16 %v871
    %v1232 = vunpack.c.h.b16 %v871
    %v1233 = vunpack.c.l.b16 %v872
    %v1234 = vunpack.c.h.b16 %v872
    %v1235 = vunpack.c.l.b16 %v873
    %v1236 = vunpack.c.h.b16 %v873
    %v1237 = vunpack.c.l.b16 %v874
    %v1238 = vunpack.c.h.b16 %v874
    %v1239 = vunpack.c.l.b16 %v875
    %v1240 = vunpack.c.h.b16 %v875
    %v1241 = vunpack.c.l.b16 %v876
    %v1242 = vunpack.c.h.b16 %v876
    %v1243 = vunpack.c.l.b16 %v877
    %v1244 = vunpack.c.h.b16 %v877
    %v1245 = vunpack.c.l.b16 %v878
    %v1246 = vunpack.c.h.b16 %v878
    %v1247 = vunpack.c.l.b16 %v879
    %v1248 = vunpack.c.h.b16 %v879
    %v1249 = vunpack.c.l.b16 %v880
    %v1250 = vunpack.c.h.b16 %v880
    %v1251 = vunpack.c.l.b16 %v881
    %v1252 = vunpack.c.h.b16 %v881
    %v1253 = vunpack.c.l.b16 %v882
    %v1254 = vunpack.c.h.b16 %v882
    %v1255 = vunpack.c.l.b16 %v883
    %v1256 = vunpack.c.h.b16 %v883
    %v1257 = vunpack.c.l.b16 %v884
    %v1258 = vunpack.c.h.b16 %v884
    %v1259 = vunpack.c.l.b16 %v885
    %v1260 = vunpack.c.h.b16 %v885
    %v1261 = vunpack.c.l.b16 %v886
    %v1262 = vunpack.c.h.b16 %v886
    %v1263 = vunpack.c.l.b16 %v887
    %v1264 = vunpack.c.h.b16 %v887
    %v1265 = vunpack.c.l.b16 %v888
    %v1266 = vunpack.c.h.b16 %v888
    %v1267 = vunpack.c.l.b16 %v889
    %v1268 = vunpack.c.h.b16 %v889
    %v1269 = vunpack.c.l.b16 %v890
    %v1270 = vunpack.c.h.b16 %v890
    %v1271 = vunpack.c.l.b16 %v891
    %v1272 = vunpack.c.h.b16 %v891
    %v1273 = vunpack.c.l.b16 %v892
    %v1274 = vunpack.c.h.b16 %v892
    %v1275 = vunpack.c.l.b16 %v893
    %v1276 = vunpack.c.h.b16 %v893
    %v1277 = vunpack.c.l.b16 %v894
    %v1278 = vunpack.c.h.b16 %v894
    %v1279 = vunpack.c.l.b16 %v895
    %v1280 = vunpack.c.h.b16 %v895
    %v1281 = vunpack.c.l.b16 %v896
    %v1282 = vunpack.c.h.b16 %v896
    %v1283 = vunpack.c.l.b16 %v897
    %v1284 = vunpack.c.h.b16 %v897
    %v1285 = vunpack.c.l.b16 %v898
    %v1286 = vunpack.c.h.b16 %v898
    %v1287 = vunpack.c.l.b16 %v899
    %v1288 = vunpack.c.h.b16 %v899
    %v1289 = vunpack.c.l.b16 %v900
    %v1290 = vunpack.c.h.b16 %v900
    %v1291 = vunpack.c.l.b16 %v901
    %v1292 = vunpack.c.h.b16 %v901
    %v1293 = vunpack.c.l.b16 %v902
    %v1294 = vunpack.c.h.b16 %v902
    %v1295 = vunpack.c.l.b16 %v903
    %v1296 = vunpack.c.h.b16 %v903
    %v1297 = vunpack.c.l.b16 %v904
    %v1298 = vunpack.c.h.b16 %v904
    %v1299 = vunpack.c.l.b16 %v905
    %v1300 = vunpack.c.h.b16 %v905
    %v1301 = vunpack.c.l.b16 %v906
    %v1302 = vunpack.c.h.b16 %v906
    %v1303 = vunpack.c.l.b16 %v907
    %v1304 = vunpack.c.h.b16 %v907
    %v1305 = vunpack.c.l.b16 %v908
    %v1306 = vunpack.c.h.b16 %v908
    %v1307 = vunpack.c.l.b16 %v909
    %v1308 = vunpack.c.h.b16 %v909
    %v1309 = vunpack.c.l.b16 %v910
    %v1310 = vunpack.c.h.b16 %v910
    %v1311 = vunpack.c.l.b16 %v911
    %v1312 = vunpack.c.h.b16 %v911
    %v1313 = vunpack.c.l.b16 %v912
    %v1314 = vunpack.c.h.b16 %v912
    %v1315 = vunpack.c.l.b16 %v913
    %v1316 = vunpack.c.h.b16 %v913
    %v1317 = vunpack.c.l.b16 %v914
    %v1318 = vunpack.c.h.b16 %v914
    %v1319 = vunpack.c.l.b16 %v915
    %v1320 = vunpack.c.h.b16 %v915
    %v1321 = vunpack.c.l.b16 %v916
    %v1322 = vunpack.c.h.b16 %v916
    %v1323 = vunpack.c.l.b16 %v917
    %v1324 = vunpack.c.h.b16 %v917
    %v1325 = vunpack.c.l.b16 %v918
    %v1326 = vunpack.c.h.b16 %v918
    %v1327 = vunpack.c.l.b16 %v919
    %v1328 = vunpack.c.h.b16 %v919
    %v1329 = vunpack.c.l.b16 %v920
    %v1330 = vunpack.c.h.b16 %v920
    %v1331 = vunpack.c.l.b16 %v921
    %v1332 = vunpack.c.h.b16 %v921
    %v1333 = vunpack.c.l.b16 %v922
    %v1334 = vunpack.c.h.b16 %v922
    %v1335 = vunpack.c.l.b16 %v923
    %v1336 = vunpack.c.h.b16 %v923
    %v1337 = vunpack.c.l.b16 %v924
    %v1338 = vunpack.c.h.b16 %v924
    %v1339 = vunpack.c.l.b16 %v925
    %v1340 = vunpack.c.h.b16 %v925
    %v1341 = vunpack.c.l.b16 %v926
    %v1342 = vunpack.c.h.b16 %v926
    %v1343 = vunpack.c.l.b16 %v927
    %v1344 = vunpack.c.h.b16 %v927
    %v1345 = vunpack.c.l.b16 %v928
    %v1346 = vunpack.c.h.b16 %v928
    %v1347 = vunpack.c.l.b16 %v929
    %v1348 = vunpack.c.h.b16 %v929
    %v1349 = vunpack.c.l.b16 %v930
    %v1350 = vunpack.c.h.b16 %v930
    %v1351 = vunpack.c.l.b16 %v931
    %v1352 = vunpack.c.h.b16 %v931
    %v1353 = vunpack.c.l.b16 %v932
    %v1354 = vunpack.c.h.b16 %v932
    %v1355 = vunpack.c.l.b16 %v933
    %v1356 = vunpack.c.h.b16 %v933
    %v1357 = vunpack.c.l.b16 %v934
    %v1358 = vunpack.c.h.b16 %v934
    %v1359 = vunpack.c.l.b16 %v935
    %v1360 = vunpack.c.h.b16 %v935
    %v1361 = vunpack.c.l.b16 %v936
    %v1362 = vunpack.c.h.b16 %v936
    %v1363 = vunpack.c.l.b16 %v937
    %v1364 = vunpack.c.h.b16 %v937
    %v1365 = vunpack.c.l.b16 %v938
    %v1366 = vunpack.c.h.b16 %v938
    %v1367 = vunpack.c.l.b16 %v939
    %v1368 = vunpack.c.h.b16 %v939
    %v1369 = vunpack.c.l.b16 %v940
    %v1370 = vunpack.c.h.b16 %v940
    %v1371 = vunpack.c.l.b16 %v941
    %v1372 = vunpack.c.h.b16 %v941
    %v1373 = vunpack.c.l.b16 %v942
    %v1374 = vunpack.c.h.b16 %v942
    %v1375 = vunpack.c.l.b16 %v943
    %v1376 = vunpack.c.h.b16 %v943
    %v1377 = vunpack.c.l.b16 %v944
    %v1378 = vunpack.c.h.b16 %v944
    %v1379 = vunpack.c.l.b16 %v945
    %v1380 = vunpack.c.h.b16 %v945
    %v1381 = vunpack.c.l.b16 %v946
    %v1382 = vunpack.c.h.b16 %v946
    %v1383 = vunpack.c.l.b16 %v947
    %v1384 = vunpack.c.h.b16 %v947
    %v1385 = vunpack.c.l.b16 %v948
    %v1386 = vunpack.c.h.b16 %v948
    %v1387 = vunpack.c.l.b16 %v949
    %v1388 = vunpack.c.h.b16 %v949
    %v1389 = vunpack.c.l.b16 %v950
    %v1390 = vunpack.c.h.b16 %v950
    %v1391 = vunpack.c.l.b16 %v951
    %v1392 = vunpack.c.h.b16 %v951
    %v1393 = vunpack.c.l.b16 %v952
    %v1394 = vunpack.c.h.b16 %v952
    %v1395 = vunpack.c.l.b16 %v953
    %v1396 = vunpack.c.h.b16 %v953
    %v1397 = vunpack.c.l.b16 %v954
    %v1398 = vunpack.c.h.b16 %v954
    %v1399 = vunpack.c.l.b16 %v955
    %v1400 = vunpack.c.h.b16 %v955
    %v1401 = vunpack.c.l.b16 %v956
    %v1402 = vunpack.c.h.b16 %v956
    %v1403 = vunpack.c.l.b16 %v957
    %v1404 = vunpack.c.h.b16 %v957
    %v1405 = vunpack.c.l.b16 %v958
    %v1406 = vunpack.c.h.b16 %v958
    %v1407 = vunpack.c.l.b16 %v959
    %v1408 = vunpack.c.h.b16 %v959
    %v1409 = vunpack.c.l.b16 %v960
    %v1410 = vunpack.c.h.b16 %v960
    %v1411 = vunpack.c.l.b16 %v961
    %v1412 = vunpack.c.h.b16 %v961
    %v1413 = vunpack.c.l.b16 %v962
    %v1414 = vunpack.c.h.b16 %v962
    %v1415 = vunpack.c.l.b16 %v963
    %v1416 = vunpack.c.h.b16 %v963
    %v1417 = vunpack.c.l.b16 %v964
    %v1418 = vunpack.c.h.b16 %v964
    %v1419 = vunpack.c.l.b16 %v965
    %v1420 = vunpack.c.h.b16 %v965
    %v1421 = vunpack.c.l.b16 %v966
    %v1422 = vunpack.c.h.b16 %v966
    %v1423 = vunpack.c.l.b16 %v967
    %v1424 = vunpack.c.h.b16 %v967
    %v1425 = vunpack.c.l.b16 %v968
    %v1426 = vunpack.c.h.b16 %v968
    %v1427 = vunpack.c.l.b16 %v969
    %v1428 = vunpack.c.h.b16 %v969
    %v1429 = vunpack.c.l.b16 %v970
    %v1430 = vunpack.c.h.b16 %v970
    %v1431 = vunpack.c.l.b16 %v971
    %v1432 = vunpack.c.h.b16 %v971
    %v1433 = vunpack.c.l.b16 %v972
    %v1434 = vunpack.c.h.b16 %v972
    %v1435 = vunpack.c.l.b16 %v973
    %v1436 = vunpack.c.h.b16 %v973
    %v1437 = vunpack.c.l.b16 %v974
    %v1438 = vunpack.c.h.b16 %v974
    %v1439 = vunpack.c.l.b16 %v975
    %v1440 = vunpack.c.h.b16 %v975
    %v1441 = vunpack.c.l.b16 %v976
    %v1442 = vunpack.c.h.b16 %v976
    %v1443 = vunpack.c.l.b16 %v977
    %v1444 = vunpack.c.h.b16 %v977
    %v1445 = vunpack.c.l.b16 %v978
    %v1446 = vunpack.c.h.b16 %v978
    %v1447 = vunpack.c.l.b16 %v979
    %v1448 = vunpack.c.h.b16 %v979
    %v1449 = vunpack.c.l.b16 %v980
    %v1450 = vunpack.c.h.b16 %v980
    %v1451 = vunpack.c.l.b16 %v981
    %v1452 = vunpack.c.h.b16 %v981
    %v1453 = vunpack.c.l.b16 %v982
    %v1454 = vunpack.c.h.b16 %v982
    %v1455 = vunpack.c.l.b16 %v983
    %v1456 = vunpack.c.h.b16 %v983
    %v1457 = vunpack.c.l.b16 %v984
    %v1458 = vunpack.c.h.b16 %v984
    %v1459 = vunpack.c.l.b16 %v985
    %v1460 = vunpack.c.h.b16 %v985
    %v1461 = vunpack.c.l.b16 %v986
    %v1462 = vunpack.c.h.b16 %v986
    %v1463 = vunpack.c.l.b16 %v987
    %v1464 = vunpack.c.h.b16 %v987
    %v1465 = vunpack.c.l.b16 %v988
    %v1466 = vunpack.c.h.b16 %v988
    %v1467 = vunpack.c.l.b16 %v989
    %v1468 = vunpack.c.h.b16 %v989
    %v1469 = vpack.c.b16 %v1221, %v1213
    %v1470 = vpack.c.b16 %v1222, %v1214
    %v1471 = vpack.c.b16 %v1223, %v1215
    %v1472 = vpack.c.b16 %v1224, %v1216
    %v1473 = vpack.c.b16 %v1225, %v1217
    %v1474 = vpack.c.b16 %v1226, %v1218
    %v1475 = vpack.c.b16 %v1227, %v1219
    %v1476 = vpack.c.b16 %v1228, %v1220
    %v1477 = vpack.c.b16 %v1237, %v1229
    %v1478 = vpack.c.b16 %v1238, %v1230
    %v1479 = vpack.c.b16 %v1239, %v1231
    %v1480 = vpack.c.b16 %v1240, %v1232
    %v1481 = vpack.c.b16 %v1241, %v1233
    %v1482 = vpack.c.b16 %v1242, %v1234
    %v1483 = vpack.c.b16 %v1243, %v1235
    %v1484 = vpack.c.b16 %v1244, %v1236
    %v1485 = vpack.c.b16 %v1253, %v1245
    %v1486 = vpack.c.b16 %v1254, %v1246
    %v1487 = vpack.c.b16 %v1255, %v1247
    %v1488 = vpack.c.b16 %v1256, %v1248
    %v1489 = vpack.c.b16 %v1257, %v1249
    %v1490 = vpack.c.b16 %v1258, %v1250
    %v1491 = vpack.c.b16 %v1259, %v1251
    %v1492 = vpack.c.b16 %v1260, %v1252
    %v1493 = vpack.c.b16 %v1269, %v1261
    %v1494 = vpack.c.b16 %v1270, %v1262
    %v1495 = vpack.c.b16 %v1271, %v1263
    %v1496 = vpack.c.b16 %v1272, %v1264
    %v1497 = vpack.c.b16 %v1273, %v1265
    %v1498 = vpack.c.b16 %v1274, %v1266
    %v1499 = vpack.c.b16 %v1275, %v1267
    %v1500 = vpack.c.b16 %v1276, %v1268
    %v1501 = vpack.c.b16 %v1285, %v1277
    %v1502 = vpack.c.b16 %v1286, %v1278
    %v1503 = vpack.c.b16 %v1287, %v1279
    %v1504 = vpack.c.b16 %v1288, %v1280
    %v1505 = vpack.c.b16 %v1289, %v1281
    %v1506 = vpack.c.b16 %v1290, %v1282
    %v1507 = vpack.c.b16 %v1291, %v1283
    %v1508 = vpack.c.b16 %v1292, %v1284
    %v1509 = vpack.c.b16 %v1301, %v1293
    %v1510 = vpack.c.b16 %v1302, %v1294
    %v1511 = vpack.c.b16 %v1303, %v1295
    %v1512 = vpack.c.b16 %v1304, %v1296
    %v1513 = vpack.c.b16 %v1305, %v1297
    %v1514 = vpack.c.b16 %v1306, %v1298
    %v1515 = vpack.c.b16 %v1307, %v1299
    %v1516 = vpack.c.b16 %v1308, %v1300
    %v1517 = vpack.c.b16 %v1317, %v1309
    %v1518 = vpack.c.b16 %v1318, %v1310
    %v1519 = vpack.c.b16 %v1319, %v1311
    %v1520 = vpack.c.b16 %v1320, %v1312
    %v1521 = vpack.c.b16 %v1321, %v1313
    %v1522 = vpack.c.b16 %v1322, %v1314
    %v1523 = vpack.c.b16 %v1323, %v1315
    %v1524 = vpack.c.b16 %v1324, %v1316
    %v1525 = vpack.c.b16 %v1333, %v1325
    %v1526 = vpack.c.b16 %v1334, %v1326
    %v1527 = vpack.c.b16 %v1335, %v1327
    %v1528 = vpack.c.b16 %v1336, %v1328
    %v1529 = vpack.c.b16 %v1337, %v1329
    %v1530 = vpack.c.b16 %v1338, %v1330
    %v1531 = vpack.c.b16 %v1339, %v1331
    %v1532 = vpack.c.b16 %v1340, %v1332
    %v1533 = vpack.c.b16 %v1349, %v1341
    %v1534 = vpack.c.b16 %v1350, %v1342
    %v1535 = vpack.c.b16 %v1351, %v1343
    %v1536 = vpack.c.b16 %v1352, %v1344
    %v1537 = vpack.c.b16 %v1353, %v1345
    %v1538 = vpack.c.b16 %v1354, %v1346
    %v1539 = vpack.c.b16 %v1355, %v1347
    %v1540 = vpack.c.b16 %v1356, %v1348
    %v1541 = vpack.c.b16 %v1365, %v1357
    %v1542 = vpack.c.b16 %v1366, %v1358
    %v1543 = vpack.c.b16 %v1367, %v1359
    %v1544 = vpack.c.b16 %v1368, %v1360
    %v1545 = vpack.c.b16 %v1369, %v1361
    %v1546 = vpack.c.b16 %v1370, %v1362
    %v1547 = vpack.c.b16 %v1371, %v1363
    %v1548 = vpack.c.b16 %v1372, %v1364
    %v1549 = vpack.c.b16 %v1381, %v1373
    %v1550 = vpack.c.b16 %v1382, %v1374
    %v1551 = vpack.c.b16 %v1383, %v1375
    %v1552 = vpack.c.b16 %v1384, %v1376
    %v1553 = vpack.c.b16 %v1385, %v1377
    %v1554 = vpack.c.b16 %v1386, %v1378
    %v1555 = vpack.c.b16 %v1387, %v1379
    %v1556 = vpack.c.b16 %v1388, %v1380
    %v1557 = vpack.c.b16 %v1397, %v1389
    %v1558 = vpack.c.b16 %v1398, %v1390
    %v1559 = vpack.c.b16 %v1399, %v1391
    %v1560 = vpack.c.b16 %v1400, %v1392
    %v1561 = vpack.c.b16 %v1401, %v1393
    %v1562 = vpack.c.b16 %v1402, %v1394
    %v1563 = vpack.c.b16 %v1403, %v1395
    %v1564 = vpack.c.b16 %v1404, %v1396
    %v1565 = vpack.c.b16 %v1413, %v1405
    %v1566 = vpack.c.b16 %v1414, %v1406
    %v1567 = vpack.c.b16 %v1415, %v1407
    %v1568 = vpack.c.b16 %v1416, %v1408
    %v1569 = vpack.c.b16 %v1417, %v1409
    %v1570 = vpack.c.b16 %v1418, %v1410
    %v1571 = vpack.c.b16 %v1419, %v1411
    %v1572 = vpack.c.b16 %v1420, %v1412
    %v1573 = vpack.c.b16 %v1429, %v1421
    %v1574 = vpack.c.b16 %v1430, %v1422
    %v1575 = vpack.c.b16 %v1431, %v1423
    %v1576 = vpack.c.b16 %v1432, %v1424
    %v1577 = vpack.c.b16 %v1433, %v1425
    %v1578 = vpack.c.b16 %v1434, %v1426
    %v1579 = vpack.c.b16 %v1435, %v1427
    %v1580 = vpack.c.b16 %v1436, %v1428
    %v1581 = vpack.c.b16 %v1445, %v1437
    %v1582 = vpack.c.b16 %v1446, %v1438
    %v1583 = vpack.c.b16 %v1447, %v1439
    %v1584 = vpack.c.b16 %v1448, %v1440
    %v1585 = vpack.c.b16 %v1449, %v1441
    %v1586 = vpack.c.b16 %v1450, %v1442
    %v1587 = vpack.c.b16 %v1451, %v1443
    %v1588 = vpack.c.b16 %v1452, %v1444
    %v1589 = vpack.c.b16 %v1461, %v1453
    %v1590 = vpack.c.b16 %v1462, %v1454
    %v1591 = vpack.c.b16 %v1463, %v1455
    %v1592 = vpack.c.b16 %v1464, %v1456
    %v1593 = vpack.c.b16 %v1465, %v1457
    %v1594 = vpack.c.b16 %v1466, %v1458
    %v1595 = vpack.c.b16 %v1467, %v1459
    %v1596 = vpack.c.b16 %v1468, %v1460
    %1725 = vmatprep.subr.bf16.mxu0 %v1526
    %1726 = vmatpush1.bf16.msra.mxu0 %v1525
    %1727 = vmatprep.subr.bf16.mxu0 %v1518
    %1728 = vmatpush1.bf16.msra.mxu0 %v1517
    %1729 = vmatprep.subr.bf16.mxu0 %v1510
    %1730 = vmatpush1.bf16.msra.mxu0 %v1509
    %1731 = vmatprep.subr.bf16.mxu0 %v1502
    %1732 = vmatpush1.bf16.msra.mxu0 %v1501
    %1733 = vmatprep.subr.bf16.mxu0 %v1494
    %1734 = vmatpush1.bf16.msra.mxu0 %v1493
    %1735 = vmatprep.subr.bf16.mxu0 %v1486
    %1736 = vmatpush1.bf16.msra.mxu0 %v1485
    %1737 = vmatprep.subr.bf16.mxu0 %v1478
    %1738 = vmatpush1.bf16.msra.mxu0 %v1477
    %1739 = vmatprep.subr.bf16.mxu0 %v1470
    %1740 = vmatpush1.bf16.msra.mxu0 %v1469
    %1741 = vmatprep.subr.bf16.mxu0 %v1590
    %1742 = vmatpush2.bf16.msra.mxu0 %v1589
    %1743 = vmatprep.subr.bf16.mxu0 %v1582
    %1744 = vmatpush2.bf16.msra.mxu0 %v1581
    %1745 = vmatprep.subr.bf16.mxu0 %v1574
    %1746 = vmatpush2.bf16.msra.mxu0 %v1573
    %1747 = vmatprep.subr.bf16.mxu0 %v1566
    %1748 = vmatpush2.bf16.msra.mxu0 %v1565
    %1749 = vmatprep.subr.bf16.mxu0 %v1558
    %1750 = vmatpush2.bf16.msra.mxu0 %v1557
    %1751 = vmatprep.subr.bf16.mxu0 %v1550
    %1752 = vmatpush2.bf16.msra.mxu0 %v1549
    %1753 = vmatprep.subr.bf16.mxu0 %v1542
    %1754 = vmatpush2.bf16.msra.mxu0 %v1541
    %1755 = vmatprep.subr.bf16.mxu0 %v1534
    %1756 = vmatpush2.bf16.msra.mxu0 %v1533
    %1757 = vmatprep.mubr.bf16.mxu0 %v1082
    %1758 = vmatmul.mubr.bf16.gmra.mxu0 %v1081
    %v1759 = vpop.f32.mrf.mxu0
    %v1760 = vadd.f32 0.0, %v1759
    %v1761 = vpop.f32.mrf.mxu0
    %v1762 = vadd.f32 0.0, %v1761
    %v1763 = vpop.f32.mrf.mxu0
    %v1764 = vpop.f32.mrf.mxu0
    %1765 = vdwg.mxu0
    %1766 = vmatprep.subr.bf16.mxu0 %v1528
    %1767 = vmatpush1.bf16.msra.mxu0 %v1527
    %1768 = vmatprep.subr.bf16.mxu0 %v1520
    %1769 = vmatpush1.bf16.msra.mxu0 %v1519
    %1770 = vmatprep.subr.bf16.mxu0 %v1512
    %1771 = vmatpush1.bf16.msra.mxu0 %v1511
    %1772 = vmatprep.subr.bf16.mxu0 %v1504
    %1773 = vmatpush1.bf16.msra.mxu0 %v1503
    %1774 = vmatprep.subr.bf16.mxu0 %v1496
    %1775 = vmatpush1.bf16.msra.mxu0 %v1495
    %1776 = vmatprep.subr.bf16.mxu0 %v1488
    %1777 = vmatpush1.bf16.msra.mxu0 %v1487
    %1778 = vmatprep.subr.bf16.mxu0 %v1480
    %1779 = vmatpush1.bf16.msra.mxu0 %v1479
    %1780 = vmatprep.subr.bf16.mxu0 %v1472
    %1781 = vmatpush1.bf16.msra.mxu0 %v1471
    %1782 = vmatprep.subr.bf16.mxu0 %v1592
    %1783 = vmatpush2.bf16.msra.mxu0 %v1591
    %1784 = vmatprep.subr.bf16.mxu0 %v1584
    %1785 = vmatpush2.bf16.msra.mxu0 %v1583
    %1786 = vmatprep.subr.bf16.mxu0 %v1576
    %1787 = vmatpush2.bf16.msra.mxu0 %v1575
    %1788 = vmatprep.subr.bf16.mxu0 %v1568
    %1789 = vmatpush2.bf16.msra.mxu0 %v1567
    %1790 = vmatprep.subr.bf16.mxu0 %v1560
    %1791 = vmatpush2.bf16.msra.mxu0 %v1559
    %1792 = vmatprep.subr.bf16.mxu0 %v1552
    %1793 = vmatpush2.bf16.msra.mxu0 %v1551
    %1794 = vmatprep.subr.bf16.mxu0 %v1544
    %1795 = vmatpush2.bf16.msra.mxu0 %v1543
    %1796 = vmatprep.subr.bf16.mxu0 %v1536
    %1797 = vmatpush2.bf16.msra.mxu0 %v1535
    %1798 = vmatprep.mubr.bf16.mxu0 %v1082
    %1799 = vmatmul.mubr.bf16.gmra.mxu0 %v1081
    %v1800 = vpop.f32.mrf.mxu0
    %v1801 = vadd.f32 0.0, %v1800
    %v1802 = vpop.f32.mrf.mxu0
    %v1803 = vadd.f32 0.0, %v1802
    %v1804 = vpop.f32.mrf.mxu0
    %v1805 = vpop.f32.mrf.mxu0
    %1806 = vdwg.mxu0
    %1807 = vmatprep.subr.bf16.mxu0 %v1530
    %1808 = vmatpush1.bf16.msra.mxu0 %v1529
    %1809 = vmatprep.subr.bf16.mxu0 %v1522
    %1810 = vmatpush1.bf16.msra.mxu0 %v1521
    %1811 = vmatprep.subr.bf16.mxu0 %v1514
    %1812 = vmatpush1.bf16.msra.mxu0 %v1513
    %1813 = vmatprep.subr.bf16.mxu0 %v1506
    %1814 = vmatpush1.bf16.msra.mxu0 %v1505
    %1815 = vmatprep.subr.bf16.mxu0 %v1498
    %1816 = vmatpush1.bf16.msra.mxu0 %v1497
    %1817 = vmatprep.subr.bf16.mxu0 %v1490
    %1818 = vmatpush1.bf16.msra.mxu0 %v1489
    %1819 = vmatprep.subr.bf16.mxu0 %v1482
    %1820 = vmatpush1.bf16.msra.mxu0 %v1481
    %1821 = vmatprep.subr.bf16.mxu0 %v1474
    %1822 = vmatpush1.bf16.msra.mxu0 %v1473
    %1823 = vmatprep.subr.bf16.mxu0 %v1594
    %1824 = vmatpush2.bf16.msra.mxu0 %v1593
    %1825 = vmatprep.subr.bf16.mxu0 %v1586
    %1826 = vmatpush2.bf16.msra.mxu0 %v1585
    %1827 = vmatprep.subr.bf16.mxu0 %v1578
    %1828 = vmatpush2.bf16.msra.mxu0 %v1577
    %1829 = vmatprep.subr.bf16.mxu0 %v1570
    %1830 = vmatpush2.bf16.msra.mxu0 %v1569
    %1831 = vmatprep.subr.bf16.mxu0 %v1562
    %1832 = vmatpush2.bf16.msra.mxu0 %v1561
    %1833 = vmatprep.subr.bf16.mxu0 %v1554
    %1834 = vmatpush2.bf16.msra.mxu0 %v1553
    %1835 = vmatprep.subr.bf16.mxu0 %v1546
    %1836 = vmatpush2.bf16.msra.mxu0 %v1545
    %1837 = vmatprep.subr.bf16.mxu0 %v1538
    %1838 = vmatpush2.bf16.msra.mxu0 %v1537
    %1839 = vmatprep.mubr.bf16.mxu0 %v1082
    %1840 = vmatmul.mubr.bf16.gmra.mxu0 %v1081
    %v1841 = vpop.f32.mrf.mxu0
    %v1842 = vadd.f32 0.0, %v1841
    %v1843 = vpop.f32.mrf.mxu0
    %v1844 = vadd.f32 0.0, %v1843
    %v1845 = vpop.f32.mrf.mxu0
    %v1846 = vpop.f32.mrf.mxu0
    %1847 = vdwg.mxu0
    %1848 = vmatprep.subr.bf16.mxu0 %v1532
    %1849 = vmatpush1.bf16.msra.mxu0 %v1531
    %1850 = vmatprep.subr.bf16.mxu0 %v1524
    %1851 = vmatpush1.bf16.msra.mxu0 %v1523
    %1852 = vmatprep.subr.bf16.mxu0 %v1516
    %1853 = vmatpush1.bf16.msra.mxu0 %v1515
    %1854 = vmatprep.subr.bf16.mxu0 %v1508
    %1855 = vmatpush1.bf16.msra.mxu0 %v1507
    %1856 = vmatprep.subr.bf16.mxu0 %v1500
    %1857 = vmatpush1.bf16.msra.mxu0 %v1499
    %1858 = vmatprep.subr.bf16.mxu0 %v1492
    %1859 = vmatpush1.bf16.msra.mxu0 %v1491
    %1860 = vmatprep.subr.bf16.mxu0 %v1484
    %1861 = vmatpush1.bf16.msra.mxu0 %v1483
    %1862 = vmatprep.subr.bf16.mxu0 %v1476
    %1863 = vmatpush1.bf16.msra.mxu0 %v1475
    %1864 = vmatprep.subr.bf16.mxu0 %v1596
    %1865 = vmatpush2.bf16.msra.mxu0 %v1595
    %1866 = vmatprep.subr.bf16.mxu0 %v1588
    %1867 = vmatpush2.bf16.msra.mxu0 %v1587
    %1868 = vmatprep.subr.bf16.mxu0 %v1580
    %1869 = vmatpush2.bf16.msra.mxu0 %v1579
    %1870 = vmatprep.subr.bf16.mxu0 %v1572
    %1871 = vmatpush2.bf16.msra.mxu0 %v1571
    %1872 = vmatprep.subr.bf16.mxu0 %v1564
    %1873 = vmatpush2.bf16.msra.mxu0 %v1563
    %1874 = vmatprep.subr.bf16.mxu0 %v1556
    %1875 = vmatpush2.bf16.msra.mxu0 %v1555
    %1876 = vmatprep.subr.bf16.mxu0 %v1548
    %1877 = vmatpush2.bf16.msra.mxu0 %v1547
    %1878 = vmatprep.subr.bf16.mxu0 %v1540
    %1879 = vmatpush2.bf16.msra.mxu0 %v1539
    %1880 = vmatprep.mubr.bf16.mxu0 %v1082
    %1881 = vmatmul.mubr.bf16.gmra.mxu0 %v1081
    %v1882 = vpop.f32.mrf.mxu0
    %v1883 = vadd.f32 0.0, %v1882
    %v1884 = vpop.f32.mrf.mxu0
    %v1885 = vadd.f32 0.0, %v1884
    %v1886 = vpop.f32.mrf.mxu0
    %v1887 = vpop.f32.mrf.mxu0
    %1888 = vdwg.mxu0
    %v1889 = vadd.f32 %v846, %v1760
    %v1890 = vadd.f32 %v847, %v1762
    %v1891 = vadd.f32 %v848, %v1801
    %v1892 = vadd.f32 %v849, %v1803
    %v1893 = vadd.f32 %v850, %v1842
    %v1894 = vadd.f32 %v851, %v1844
    %v1895 = vadd.f32 %v852, %v1883
    %v1896 = vadd.f32 %v853, %v1885
    %1897 = vst [vmem:[#allocation3] sm:$0xff] %v1889
    %1898 = vst [vmem:[#allocation3 + $0x8] sm:$0xff] %v1890
    %1899 = vst [vmem:[#allocation3 + $0x10] sm:$0xff] %v1891
    %1900 = vst [vmem:[#allocation3 + $0x18] sm:$0xff] %v1892
    %1901 = vst [vmem:[#allocation3 + $0x20] sm:$0xff] %v1893
    %1902 = vst [vmem:[#allocation3 + $0x28] sm:$0xff] %v1894
    %1903 = vst [vmem:[#allocation3 + $0x30] sm:$0xff] %v1895
    %1904 = vst [vmem:[#allocation3 + $0x38] sm:$0xff] %v1896
    %v1905 = vld [vmem:[#allocation3] sm:$0xff]
    %v1906 = vld [vmem:[#allocation3 + $0x8] sm:$0xff]
    %v1907 = vld [vmem:[#allocation3 + $0x10] sm:$0xff]
    %v1908 = vld [vmem:[#allocation3 + $0x18] sm:$0xff]
    %v1909 = vld [vmem:[#allocation3 + $0x20] sm:$0xff]
    %v1910 = vld [vmem:[#allocation3 + $0x28] sm:$0xff]
    %v1911 = vld [vmem:[#allocation3 + $0x30] sm:$0xff]
    %v1912 = vld [vmem:[#allocation3 + $0x38] sm:$0xff]
    %v1913 = vld [vmem:[#allocation2] sm:$0x11]
    %v1914 = vld [vmem:[#allocation2 + $0x8] sm:$0x11]
    %v1915 = vld [vmem:[#allocation2 + $0x10] sm:$0x11]
    %v1916 = vld [vmem:[#allocation2 + $0x18] sm:$0x11]
    %v1917 = vld [vmem:[#allocation2 + $0x20] sm:$0x11]
    %v1918 = vld [vmem:[#allocation2 + $0x28] sm:$0x11]
    %v1919 = vld [vmem:[#allocation2 + $0x30] sm:$0x11]
    %v1920 = vld [vmem:[#allocation2 + $0x38] sm:$0x11]
    %s1921 = scalar_lea.vmem [#allocation6], 1024
    %v1922 = vld [vmem:[%s1921] sm:$0xff]
    %v1923 = vld [vmem:[%s1921 + $0x8] sm:$0xff]
    %v1924 = vld [vmem:[%s1921 + $0x10] sm:$0xff]
    %v1925 = vld [vmem:[%s1921 + $0x18] sm:$0xff]
    %v1926 = vld [vmem:[%s1921 + $0x20] sm:$0xff]
    %v1927 = vld [vmem:[%s1921 + $0x28] sm:$0xff]
    %v1928 = vld [vmem:[%s1921 + $0x30] sm:$0xff]
    %v1929 = vld [vmem:[%s1921 + $0x38] sm:$0xff]
    %v1930 = vld [vmem:[%s1921 + $0x40] sm:$0xff]
    %v1931 = vld [vmem:[%s1921 + $0x48] sm:$0xff]
    %v1932 = vld [vmem:[%s1921 + $0x50] sm:$0xff]
    %v1933 = vld [vmem:[%s1921 + $0x58] sm:$0xff]
    %v1934 = vld [vmem:[%s1921 + $0x60] sm:$0xff]
    %v1935 = vld [vmem:[%s1921 + $0x68] sm:$0xff]
    %v1936 = vld [vmem:[%s1921 + $0x70] sm:$0xff]
    %v1937 = vld [vmem:[%s1921 + $0x78] sm:$0xff]
    %v1938 = vld [vmem:[%s1921 + $0x80] sm:$0xff]
    %v1939 = vld [vmem:[%s1921 + $0x88] sm:$0xff]
    %v1940 = vld [vmem:[%s1921 + $0x90] sm:$0xff]
    %v1941 = vld [vmem:[%s1921 + $0x98] sm:$0xff]
    %v1942 = vld [vmem:[%s1921 + $0xa0] sm:$0xff]
    %v1943 = vld [vmem:[%s1921 + $0xa8] sm:$0xff]
    %v1944 = vld [vmem:[%s1921 + $0xb0] sm:$0xff]
    %v1945 = vld [vmem:[%s1921 + $0xb8] sm:$0xff]
    %v1946 = vld [vmem:[%s1921 + $0xc0] sm:$0xff]
    %v1947 = vld [vmem:[%s1921 + $0xc8] sm:$0xff]
    %v1948 = vld [vmem:[%s1921 + $0xd0] sm:$0xff]
    %v1949 = vld [vmem:[%s1921 + $0xd8] sm:$0xff]
    %v1950 = vld [vmem:[%s1921 + $0xe0] sm:$0xff]
    %v1951 = vld [vmem:[%s1921 + $0xe8] sm:$0xff]
    %v1952 = vld [vmem:[%s1921 + $0xf0] sm:$0xff]
    %v1953 = vld [vmem:[%s1921 + $0xf8] sm:$0xff]
    %v1954 = vld [vmem:[%s1921 + $0x100] sm:$0xff]
    %v1955 = vld [vmem:[%s1921 + $0x108] sm:$0xff]
    %v1956 = vld [vmem:[%s1921 + $0x110] sm:$0xff]
    %v1957 = vld [vmem:[%s1921 + $0x118] sm:$0xff]
    %v1958 = vld [vmem:[%s1921 + $0x120] sm:$0xff]
    %v1959 = vld [vmem:[%s1921 + $0x128] sm:$0xff]
    %v1960 = vld [vmem:[%s1921 + $0x130] sm:$0xff]
    %v1961 = vld [vmem:[%s1921 + $0x138] sm:$0xff]
    %v1962 = vld [vmem:[%s1921 + $0x140] sm:$0xff]
    %v1963 = vld [vmem:[%s1921 + $0x148] sm:$0xff]
    %v1964 = vld [vmem:[%s1921 + $0x150] sm:$0xff]
    %v1965 = vld [vmem:[%s1921 + $0x158] sm:$0xff]
    %v1966 = vld [vmem:[%s1921 + $0x160] sm:$0xff]
    %v1967 = vld [vmem:[%s1921 + $0x168] sm:$0xff]
    %v1968 = vld [vmem:[%s1921 + $0x170] sm:$0xff]
    %v1969 = vld [vmem:[%s1921 + $0x178] sm:$0xff]
    %v1970 = vld [vmem:[%s1921 + $0x180] sm:$0xff]
    %v1971 = vld [vmem:[%s1921 + $0x188] sm:$0xff]
    %v1972 = vld [vmem:[%s1921 + $0x190] sm:$0xff]
    %v1973 = vld [vmem:[%s1921 + $0x198] sm:$0xff]
    %v1974 = vld [vmem:[%s1921 + $0x1a0] sm:$0xff]
    %v1975 = vld [vmem:[%s1921 + $0x1a8] sm:$0xff]
    %v1976 = vld [vmem:[%s1921 + $0x1b0] sm:$0xff]
    %v1977 = vld [vmem:[%s1921 + $0x1b8] sm:$0xff]
    %v1978 = vld [vmem:[%s1921 + $0x1c0] sm:$0xff]
    %v1979 = vld [vmem:[%s1921 + $0x1c8] sm:$0xff]
    %v1980 = vld [vmem:[%s1921 + $0x1d0] sm:$0xff]
    %v1981 = vld [vmem:[%s1921 + $0x1d8] sm:$0xff]
    %v1982 = vld [vmem:[%s1921 + $0x1e0] sm:$0xff]
    %v1983 = vld [vmem:[%s1921 + $0x1e8] sm:$0xff]
    %v1984 = vld [vmem:[%s1921 + $0x1f0] sm:$0xff]
    %v1985 = vld [vmem:[%s1921 + $0x1f8] sm:$0xff]
    %v1986 = vld [vmem:[%s1921 + $0x200] sm:$0xff]
    %v1987 = vld [vmem:[%s1921 + $0x208] sm:$0xff]
    %v1988 = vld [vmem:[%s1921 + $0x210] sm:$0xff]
    %v1989 = vld [vmem:[%s1921 + $0x218] sm:$0xff]
    %v1990 = vld [vmem:[%s1921 + $0x220] sm:$0xff]
    %v1991 = vld [vmem:[%s1921 + $0x228] sm:$0xff]
    %v1992 = vld [vmem:[%s1921 + $0x230] sm:$0xff]
    %v1993 = vld [vmem:[%s1921 + $0x238] sm:$0xff]
    %v1994 = vld [vmem:[%s1921 + $0x240] sm:$0xff]
    %v1995 = vld [vmem:[%s1921 + $0x248] sm:$0xff]
    %v1996 = vld [vmem:[%s1921 + $0x250] sm:$0xff]
    %v1997 = vld [vmem:[%s1921 + $0x258] sm:$0xff]
    %v1998 = vld [vmem:[%s1921 + $0x260] sm:$0xff]
    %v1999 = vld [vmem:[%s1921 + $0x268] sm:$0xff]
    %v2000 = vld [vmem:[%s1921 + $0x270] sm:$0xff]
    %v2001 = vld [vmem:[%s1921 + $0x278] sm:$0xff]
    %v2002 = vld [vmem:[%s1921 + $0x280] sm:$0xff]
    %v2003 = vld [vmem:[%s1921 + $0x288] sm:$0xff]
    %v2004 = vld [vmem:[%s1921 + $0x290] sm:$0xff]
    %v2005 = vld [vmem:[%s1921 + $0x298] sm:$0xff]
    %v2006 = vld [vmem:[%s1921 + $0x2a0] sm:$0xff]
    %v2007 = vld [vmem:[%s1921 + $0x2a8] sm:$0xff]
    %v2008 = vld [vmem:[%s1921 + $0x2b0] sm:$0xff]
    %v2009 = vld [vmem:[%s1921 + $0x2b8] sm:$0xff]
    %v2010 = vld [vmem:[%s1921 + $0x2c0] sm:$0xff]
    %v2011 = vld [vmem:[%s1921 + $0x2c8] sm:$0xff]
    %v2012 = vld [vmem:[%s1921 + $0x2d0] sm:$0xff]
    %v2013 = vld [vmem:[%s1921 + $0x2d8] sm:$0xff]
    %v2014 = vld [vmem:[%s1921 + $0x2e0] sm:$0xff]
    %v2015 = vld [vmem:[%s1921 + $0x2e8] sm:$0xff]
    %v2016 = vld [vmem:[%s1921 + $0x2f0] sm:$0xff]
    %v2017 = vld [vmem:[%s1921 + $0x2f8] sm:$0xff]
    %v2018 = vld [vmem:[%s1921 + $0x300] sm:$0xff]
    %v2019 = vld [vmem:[%s1921 + $0x308] sm:$0xff]
    %v2020 = vld [vmem:[%s1921 + $0x310] sm:$0xff]
    %v2021 = vld [vmem:[%s1921 + $0x318] sm:$0xff]
    %v2022 = vld [vmem:[%s1921 + $0x320] sm:$0xff]
    %v2023 = vld [vmem:[%s1921 + $0x328] sm:$0xff]
    %v2024 = vld [vmem:[%s1921 + $0x330] sm:$0xff]
    %v2025 = vld [vmem:[%s1921 + $0x338] sm:$0xff]
    %v2026 = vld [vmem:[%s1921 + $0x340] sm:$0xff]
    %v2027 = vld [vmem:[%s1921 + $0x348] sm:$0xff]
    %v2028 = vld [vmem:[%s1921 + $0x350] sm:$0xff]
    %v2029 = vld [vmem:[%s1921 + $0x358] sm:$0xff]
    %v2030 = vld [vmem:[%s1921 + $0x360] sm:$0xff]
    %v2031 = vld [vmem:[%s1921 + $0x368] sm:$0xff]
    %v2032 = vld [vmem:[%s1921 + $0x370] sm:$0xff]
    %v2033 = vld [vmem:[%s1921 + $0x378] sm:$0xff]
    %v2034 = vld [vmem:[%s1921 + $0x380] sm:$0xff]
    %v2035 = vld [vmem:[%s1921 + $0x388] sm:$0xff]
    %v2036 = vld [vmem:[%s1921 + $0x390] sm:$0xff]
    %v2037 = vld [vmem:[%s1921 + $0x398] sm:$0xff]
    %v2038 = vld [vmem:[%s1921 + $0x3a0] sm:$0xff]
    %v2039 = vld [vmem:[%s1921 + $0x3a8] sm:$0xff]
    %v2040 = vld [vmem:[%s1921 + $0x3b0] sm:$0xff]
    %v2041 = vld [vmem:[%s1921 + $0x3b8] sm:$0xff]
    %v2042 = vld [vmem:[%s1921 + $0x3c0] sm:$0xff]
    %v2043 = vld [vmem:[%s1921 + $0x3c8] sm:$0xff]
    %v2044 = vld [vmem:[%s1921 + $0x3d0] sm:$0xff]
    %v2045 = vld [vmem:[%s1921 + $0x3d8] sm:$0xff]
    %v2046 = vld [vmem:[%s1921 + $0x3e0] sm:$0xff]
    %v2047 = vld [vmem:[%s1921 + $0x3e8] sm:$0xff]
    %v2048 = vld [vmem:[%s1921 + $0x3f0] sm:$0xff]
    %v2049 = vld [vmem:[%s1921 + $0x3f8] sm:$0xff]
    %v2058 = vunpack.c.l.b16 %v1913
    %v2059 = vunpack.c.h.b16 %v1913
    %v2060 = vunpack.c.l.b16 %v1914
    %v2061 = vunpack.c.h.b16 %v1914
    %v2062 = vunpack.c.l.b16 %v1915
    %v2063 = vunpack.c.h.b16 %v1915
    %v2064 = vunpack.c.l.b16 %v1916
    %v2065 = vunpack.c.h.b16 %v1916
    %v2066 = vunpack.c.l.b16 %v1917
    %v2067 = vunpack.c.h.b16 %v1917
    %v2068 = vunpack.c.l.b16 %v1918
    %v2069 = vunpack.c.h.b16 %v1918
    %v2070 = vunpack.c.l.b16 %v1919
    %v2071 = vunpack.c.h.b16 %v1919
    %v2072 = vunpack.c.l.b16 %v1920
    %v2073 = vunpack.c.h.b16 %v1920
    %v2074 = vpack.c.b16 %v2058, %v2058
    %v2075 = vpack.c.b16 %v2059, %v2059
    %v2076 = vpack.c.b16 %v2060, %v2060
    %v2077 = vpack.c.b16 %v2061, %v2061
    %v2078 = vpack.c.b16 %v2062, %v2062
    %v2079 = vpack.c.b16 %v2063, %v2063
    %v2080 = vpack.c.b16 %v2064, %v2064
    %v2081 = vpack.c.b16 %v2065, %v2065
    %v2082 = vpack.c.b16 %v2066, %v2066
    %v2083 = vpack.c.b16 %v2067, %v2067
    %v2084 = vpack.c.b16 %v2068, %v2068
    %v2085 = vpack.c.b16 %v2069, %v2069
    %v2086 = vpack.c.b16 %v2070, %v2070
    %v2087 = vpack.c.b16 %v2071, %v2071
    %v2088 = vpack.c.b16 %v2072, %v2072
    %v2089 = vpack.c.b16 %v2073, %v2073
    %v2090 = vunpack.c.l.b16 %v2074
    %v2091 = vunpack.c.l.b16 %v2075
    %v2092 = vunpack.c.l.b16 %v2076
    %v2093 = vunpack.c.l.b16 %v2077
    %v2094 = vunpack.c.l.b16 %v2078
    %v2095 = vunpack.c.l.b16 %v2079
    %v2096 = vunpack.c.l.b16 %v2080
    %v2097 = vunpack.c.l.b16 %v2081
    %v2098 = vunpack.c.l.b16 %v2082
    %v2099 = vunpack.c.l.b16 %v2083
    %v2100 = vunpack.c.l.b16 %v2084
    %v2101 = vunpack.c.l.b16 %v2085
    %v2102 = vunpack.c.l.b16 %v2086
    %v2103 = vunpack.c.l.b16 %v2087
    %v2104 = vunpack.c.l.b16 %v2088
    %v2105 = vunpack.c.l.b16 %v2089
    %v2106 = vrot.slane %v2090, 1
    %v2107 = vsel %vm1047, %v2092, %v2106
    %v2108 = vrot.slane %v2094, 7
    %v2109 = vsel %vm1050, %v2108, %v2107
    %v2110 = vrot.slane %v2096, 6
    %v2111 = vsel %vm1053, %v2110, %v2109
    %v2112 = vrot.slane %v2098, 5
    %v2113 = vsel %vm1056, %v2112, %v2111
    %v2114 = vrot.slane %v2100, 4
    %v2115 = vsel %vm1059, %v2114, %v2113
    %v2116 = vrot.slane %v2102, 3
    %v2117 = vsel %vm1062, %v2116, %v2115
    %v2118 = vrot.slane %v2104, 2
    %v2119 = vsel %vm1065, %v2118, %v2117
    %v2120 = vrot.slane %v2091, 1
    %v2121 = vsel %vm1047, %v2093, %v2120
    %v2122 = vrot.slane %v2095, 7
    %v2123 = vsel %vm1050, %v2122, %v2121
    %v2124 = vrot.slane %v2097, 6
    %v2125 = vsel %vm1053, %v2124, %v2123
    %v2126 = vrot.slane %v2099, 5
    %v2127 = vsel %vm1056, %v2126, %v2125
    %v2128 = vrot.slane %v2101, 4
    %v2129 = vsel %vm1059, %v2128, %v2127
    %v2130 = vrot.slane %v2103, 3
    %v2131 = vsel %vm1062, %v2130, %v2129
    %v2132 = vrot.slane %v2105, 2
    %v2133 = vsel %vm1065, %v2132, %v2131
    %v2134 = vpack.c.b16 %v2119, %v2119
    %v2135 = vpack.c.b16 %v2133, %v2133
    %v2266 = vunpack.c.l.b16 %v1922
    %v2267 = vunpack.c.h.b16 %v1922
    %v2268 = vunpack.c.l.b16 %v1923
    %v2269 = vunpack.c.h.b16 %v1923
    %v2270 = vunpack.c.l.b16 %v1924
    %v2271 = vunpack.c.h.b16 %v1924
    %v2272 = vunpack.c.l.b16 %v1925
    %v2273 = vunpack.c.h.b16 %v1925
    %v2274 = vunpack.c.l.b16 %v1926
    %v2275 = vunpack.c.h.b16 %v1926
    %v2276 = vunpack.c.l.b16 %v1927
    %v2277 = vunpack.c.h.b16 %v1927
    %v2278 = vunpack.c.l.b16 %v1928
    %v2279 = vunpack.c.h.b16 %v1928
    %v2280 = vunpack.c.l.b16 %v1929
    %v2281 = vunpack.c.h.b16 %v1929
    %v2282 = vunpack.c.l.b16 %v1930
    %v2283 = vunpack.c.h.b16 %v1930
    %v2284 = vunpack.c.l.b16 %v1931
    %v2285 = vunpack.c.h.b16 %v1931
    %v2286 = vunpack.c.l.b16 %v1932
    %v2287 = vunpack.c.h.b16 %v1932
    %v2288 = vunpack.c.l.b16 %v1933
    %v2289 = vunpack.c.h.b16 %v1933
    %v2290 = vunpack.c.l.b16 %v1934
    %v2291 = vunpack.c.h.b16 %v1934
    %v2292 = vunpack.c.l.b16 %v1935
    %v2293 = vunpack.c.h.b16 %v1935
    %v2294 = vunpack.c.l.b16 %v1936
    %v2295 = vunpack.c.h.b16 %v1936
    %v2296 = vunpack.c.l.b16 %v1937
    %v2297 = vunpack.c.h.b16 %v1937
    %v2298 = vunpack.c.l.b16 %v1938
    %v2299 = vunpack.c.h.b16 %v1938
    %v2300 = vunpack.c.l.b16 %v1939
    %v2301 = vunpack.c.h.b16 %v1939
    %v2302 = vunpack.c.l.b16 %v1940
    %v2303 = vunpack.c.h.b16 %v1940
    %v2304 = vunpack.c.l.b16 %v1941
    %v2305 = vunpack.c.h.b16 %v1941
    %v2306 = vunpack.c.l.b16 %v1942
    %v2307 = vunpack.c.h.b16 %v1942
    %v2308 = vunpack.c.l.b16 %v1943
    %v2309 = vunpack.c.h.b16 %v1943
    %v2310 = vunpack.c.l.b16 %v1944
    %v2311 = vunpack.c.h.b16 %v1944
    %v2312 = vunpack.c.l.b16 %v1945
    %v2313 = vunpack.c.h.b16 %v1945
    %v2314 = vunpack.c.l.b16 %v1946
    %v2315 = vunpack.c.h.b16 %v1946
    %v2316 = vunpack.c.l.b16 %v1947
    %v2317 = vunpack.c.h.b16 %v1947
    %v2318 = vunpack.c.l.b16 %v1948
    %v2319 = vunpack.c.h.b16 %v1948
    %v2320 = vunpack.c.l.b16 %v1949
    %v2321 = vunpack.c.h.b16 %v1949
    %v2322 = vunpack.c.l.b16 %v1950
    %v2323 = vunpack.c.h.b16 %v1950
    %v2324 = vunpack.c.l.b16 %v1951
    %v2325 = vunpack.c.h.b16 %v1951
    %v2326 = vunpack.c.l.b16 %v1952
    %v2327 = vunpack.c.h.b16 %v1952
    %v2328 = vunpack.c.l.b16 %v1953
    %v2329 = vunpack.c.h.b16 %v1953
    %v2330 = vunpack.c.l.b16 %v1954
    %v2331 = vunpack.c.h.b16 %v1954
    %v2332 = vunpack.c.l.b16 %v1955
    %v2333 = vunpack.c.h.b16 %v1955
    %v2334 = vunpack.c.l.b16 %v1956
    %v2335 = vunpack.c.h.b16 %v1956
    %v2336 = vunpack.c.l.b16 %v1957
    %v2337 = vunpack.c.h.b16 %v1957
    %v2338 = vunpack.c.l.b16 %v1958
    %v2339 = vunpack.c.h.b16 %v1958
    %v2340 = vunpack.c.l.b16 %v1959
    %v2341 = vunpack.c.h.b16 %v1959
    %v2342 = vunpack.c.l.b16 %v1960
    %v2343 = vunpack.c.h.b16 %v1960
    %v2344 = vunpack.c.l.b16 %v1961
    %v2345 = vunpack.c.h.b16 %v1961
    %v2346 = vunpack.c.l.b16 %v1962
    %v2347 = vunpack.c.h.b16 %v1962
    %v2348 = vunpack.c.l.b16 %v1963
    %v2349 = vunpack.c.h.b16 %v1963
    %v2350 = vunpack.c.l.b16 %v1964
    %v2351 = vunpack.c.h.b16 %v1964
    %v2352 = vunpack.c.l.b16 %v1965
    %v2353 = vunpack.c.h.b16 %v1965
    %v2354 = vunpack.c.l.b16 %v1966
    %v2355 = vunpack.c.h.b16 %v1966
    %v2356 = vunpack.c.l.b16 %v1967
    %v2357 = vunpack.c.h.b16 %v1967
    %v2358 = vunpack.c.l.b16 %v1968
    %v2359 = vunpack.c.h.b16 %v1968
    %v2360 = vunpack.c.l.b16 %v1969
    %v2361 = vunpack.c.h.b16 %v1969
    %v2362 = vunpack.c.l.b16 %v1970
    %v2363 = vunpack.c.h.b16 %v1970
    %v2364 = vunpack.c.l.b16 %v1971
    %v2365 = vunpack.c.h.b16 %v1971
    %v2366 = vunpack.c.l.b16 %v1972
    %v2367 = vunpack.c.h.b16 %v1972
    %v2368 = vunpack.c.l.b16 %v1973
    %v2369 = vunpack.c.h.b16 %v1973
    %v2370 = vunpack.c.l.b16 %v1974
    %v2371 = vunpack.c.h.b16 %v1974
    %v2372 = vunpack.c.l.b16 %v1975
    %v2373 = vunpack.c.h.b16 %v1975
    %v2374 = vunpack.c.l.b16 %v1976
    %v2375 = vunpack.c.h.b16 %v1976
    %v2376 = vunpack.c.l.b16 %v1977
    %v2377 = vunpack.c.h.b16 %v1977
    %v2378 = vunpack.c.l.b16 %v1978
    %v2379 = vunpack.c.h.b16 %v1978
    %v2380 = vunpack.c.l.b16 %v1979
    %v2381 = vunpack.c.h.b16 %v1979
    %v2382 = vunpack.c.l.b16 %v1980
    %v2383 = vunpack.c.h.b16 %v1980
    %v2384 = vunpack.c.l.b16 %v1981
    %v2385 = vunpack.c.h.b16 %v1981
    %v2386 = vunpack.c.l.b16 %v1982
    %v2387 = vunpack.c.h.b16 %v1982
    %v2388 = vunpack.c.l.b16 %v1983
    %v2389 = vunpack.c.h.b16 %v1983
    %v2390 = vunpack.c.l.b16 %v1984
    %v2391 = vunpack.c.h.b16 %v1984
    %v2392 = vunpack.c.l.b16 %v1985
    %v2393 = vunpack.c.h.b16 %v1985
    %v2394 = vunpack.c.l.b16 %v1986
    %v2395 = vunpack.c.h.b16 %v1986
    %v2396 = vunpack.c.l.b16 %v1987
    %v2397 = vunpack.c.h.b16 %v1987
    %v2398 = vunpack.c.l.b16 %v1988
    %v2399 = vunpack.c.h.b16 %v1988
    %v2400 = vunpack.c.l.b16 %v1989
    %v2401 = vunpack.c.h.b16 %v1989
    %v2402 = vunpack.c.l.b16 %v1990
    %v2403 = vunpack.c.h.b16 %v1990
    %v2404 = vunpack.c.l.b16 %v1991
    %v2405 = vunpack.c.h.b16 %v1991
    %v2406 = vunpack.c.l.b16 %v1992
    %v2407 = vunpack.c.h.b16 %v1992
    %v2408 = vunpack.c.l.b16 %v1993
    %v2409 = vunpack.c.h.b16 %v1993
    %v2410 = vunpack.c.l.b16 %v1994
    %v2411 = vunpack.c.h.b16 %v1994
    %v2412 = vunpack.c.l.b16 %v1995
    %v2413 = vunpack.c.h.b16 %v1995
    %v2414 = vunpack.c.l.b16 %v1996
    %v2415 = vunpack.c.h.b16 %v1996
    %v2416 = vunpack.c.l.b16 %v1997
    %v2417 = vunpack.c.h.b16 %v1997
    %v2418 = vunpack.c.l.b16 %v1998
    %v2419 = vunpack.c.h.b16 %v1998
    %v2420 = vunpack.c.l.b16 %v1999
    %v2421 = vunpack.c.h.b16 %v1999
    %v2422 = vunpack.c.l.b16 %v2000
    %v2423 = vunpack.c.h.b16 %v2000
    %v2424 = vunpack.c.l.b16 %v2001
    %v2425 = vunpack.c.h.b16 %v2001
    %v2426 = vunpack.c.l.b16 %v2002
    %v2427 = vunpack.c.h.b16 %v2002
    %v2428 = vunpack.c.l.b16 %v2003
    %v2429 = vunpack.c.h.b16 %v2003
    %v2430 = vunpack.c.l.b16 %v2004
    %v2431 = vunpack.c.h.b16 %v2004
    %v2432 = vunpack.c.l.b16 %v2005
    %v2433 = vunpack.c.h.b16 %v2005
    %v2434 = vunpack.c.l.b16 %v2006
    %v2435 = vunpack.c.h.b16 %v2006
    %v2436 = vunpack.c.l.b16 %v2007
    %v2437 = vunpack.c.h.b16 %v2007
    %v2438 = vunpack.c.l.b16 %v2008
    %v2439 = vunpack.c.h.b16 %v2008
    %v2440 = vunpack.c.l.b16 %v2009
    %v2441 = vunpack.c.h.b16 %v2009
    %v2442 = vunpack.c.l.b16 %v2010
    %v2443 = vunpack.c.h.b16 %v2010
    %v2444 = vunpack.c.l.b16 %v2011
    %v2445 = vunpack.c.h.b16 %v2011
    %v2446 = vunpack.c.l.b16 %v2012
    %v2447 = vunpack.c.h.b16 %v2012
    %v2448 = vunpack.c.l.b16 %v2013
    %v2449 = vunpack.c.h.b16 %v2013
    %v2450 = vunpack.c.l.b16 %v2014
    %v2451 = vunpack.c.h.b16 %v2014
    %v2452 = vunpack.c.l.b16 %v2015
    %v2453 = vunpack.c.h.b16 %v2015
    %v2454 = vunpack.c.l.b16 %v2016
    %v2455 = vunpack.c.h.b16 %v2016
    %v2456 = vunpack.c.l.b16 %v2017
    %v2457 = vunpack.c.h.b16 %v2017
    %v2458 = vunpack.c.l.b16 %v2018
    %v2459 = vunpack.c.h.b16 %v2018
    %v2460 = vunpack.c.l.b16 %v2019
    %v2461 = vunpack.c.h.b16 %v2019
    %v2462 = vunpack.c.l.b16 %v2020
    %v2463 = vunpack.c.h.b16 %v2020
    %v2464 = vunpack.c.l.b16 %v2021
    %v2465 = vunpack.c.h.b16 %v2021
    %v2466 = vunpack.c.l.b16 %v2022
    %v2467 = vunpack.c.h.b16 %v2022
    %v2468 = vunpack.c.l.b16 %v2023
    %v2469 = vunpack.c.h.b16 %v2023
    %v2470 = vunpack.c.l.b16 %v2024
    %v2471 = vunpack.c.h.b16 %v2024
    %v2472 = vunpack.c.l.b16 %v2025
    %v2473 = vunpack.c.h.b16 %v2025
    %v2474 = vunpack.c.l.b16 %v2026
    %v2475 = vunpack.c.h.b16 %v2026
    %v2476 = vunpack.c.l.b16 %v2027
    %v2477 = vunpack.c.h.b16 %v2027
    %v2478 = vunpack.c.l.b16 %v2028
    %v2479 = vunpack.c.h.b16 %v2028
    %v2480 = vunpack.c.l.b16 %v2029
    %v2481 = vunpack.c.h.b16 %v2029
    %v2482 = vunpack.c.l.b16 %v2030
    %v2483 = vunpack.c.h.b16 %v2030
    %v2484 = vunpack.c.l.b16 %v2031
    %v2485 = vunpack.c.h.b16 %v2031
    %v2486 = vunpack.c.l.b16 %v2032
    %v2487 = vunpack.c.h.b16 %v2032
    %v2488 = vunpack.c.l.b16 %v2033
    %v2489 = vunpack.c.h.b16 %v2033
    %v2490 = vunpack.c.l.b16 %v2034
    %v2491 = vunpack.c.h.b16 %v2034
    %v2492 = vunpack.c.l.b16 %v2035
    %v2493 = vunpack.c.h.b16 %v2035
    %v2494 = vunpack.c.l.b16 %v2036
    %v2495 = vunpack.c.h.b16 %v2036
    %v2496 = vunpack.c.l.b16 %v2037
    %v2497 = vunpack.c.h.b16 %v2037
    %v2498 = vunpack.c.l.b16 %v2038
    %v2499 = vunpack.c.h.b16 %v2038
    %v2500 = vunpack.c.l.b16 %v2039
    %v2501 = vunpack.c.h.b16 %v2039
    %v2502 = vunpack.c.l.b16 %v2040
    %v2503 = vunpack.c.h.b16 %v2040
    %v2504 = vunpack.c.l.b16 %v2041
    %v2505 = vunpack.c.h.b16 %v2041
    %v2506 = vunpack.c.l.b16 %v2042
    %v2507 = vunpack.c.h.b16 %v2042
    %v2508 = vunpack.c.l.b16 %v2043
    %v2509 = vunpack.c.h.b16 %v2043
    %v2510 = vunpack.c.l.b16 %v2044
    %v2511 = vunpack.c.h.b16 %v2044
    %v2512 = vunpack.c.l.b16 %v2045
    %v2513 = vunpack.c.h.b16 %v2045
    %v2514 = vunpack.c.l.b16 %v2046
    %v2515 = vunpack.c.h.b16 %v2046
    %v2516 = vunpack.c.l.b16 %v2047
    %v2517 = vunpack.c.h.b16 %v2047
    %v2518 = vunpack.c.l.b16 %v2048
    %v2519 = vunpack.c.h.b16 %v2048
    %v2520 = vunpack.c.l.b16 %v2049
    %v2521 = vunpack.c.h.b16 %v2049
    %v2522 = vpack.c.b16 %v2274, %v2266
    %v2523 = vpack.c.b16 %v2275, %v2267
    %v2524 = vpack.c.b16 %v2276, %v2268
    %v2525 = vpack.c.b16 %v2277, %v2269
    %v2526 = vpack.c.b16 %v2278, %v2270
    %v2527 = vpack.c.b16 %v2279, %v2271
    %v2528 = vpack.c.b16 %v2280, %v2272
    %v2529 = vpack.c.b16 %v2281, %v2273
    %v2530 = vpack.c.b16 %v2290, %v2282
    %v2531 = vpack.c.b16 %v2291, %v2283
    %v2532 = vpack.c.b16 %v2292, %v2284
    %v2533 = vpack.c.b16 %v2293, %v2285
    %v2534 = vpack.c.b16 %v2294, %v2286
    %v2535 = vpack.c.b16 %v2295, %v2287
    %v2536 = vpack.c.b16 %v2296, %v2288
    %v2537 = vpack.c.b16 %v2297, %v2289
    %v2538 = vpack.c.b16 %v2306, %v2298
    %v2539 = vpack.c.b16 %v2307, %v2299
    %v2540 = vpack.c.b16 %v2308, %v2300
    %v2541 = vpack.c.b16 %v2309, %v2301
    %v2542 = vpack.c.b16 %v2310, %v2302
    %v2543 = vpack.c.b16 %v2311, %v2303
    %v2544 = vpack.c.b16 %v2312, %v2304
    %v2545 = vpack.c.b16 %v2313, %v2305
    %v2546 = vpack.c.b16 %v2322, %v2314
    %v2547 = vpack.c.b16 %v2323, %v2315
    %v2548 = vpack.c.b16 %v2324, %v2316
    %v2549 = vpack.c.b16 %v2325, %v2317
    %v2550 = vpack.c.b16 %v2326, %v2318
    %v2551 = vpack.c.b16 %v2327, %v2319
    %v2552 = vpack.c.b16 %v2328, %v2320
    %v2553 = vpack.c.b16 %v2329, %v2321
    %v2554 = vpack.c.b16 %v2338, %v2330
    %v2555 = vpack.c.b16 %v2339, %v2331
    %v2556 = vpack.c.b16 %v2340, %v2332
    %v2557 = vpack.c.b16 %v2341, %v2333
    %v2558 = vpack.c.b16 %v2342, %v2334
    %v2559 = vpack.c.b16 %v2343, %v2335
    %v2560 = vpack.c.b16 %v2344, %v2336
    %v2561 = vpack.c.b16 %v2345, %v2337
    %v2562 = vpack.c.b16 %v2354, %v2346
    %v2563 = vpack.c.b16 %v2355, %v2347
    %v2564 = vpack.c.b16 %v2356, %v2348
    %v2565 = vpack.c.b16 %v2357, %v2349
    %v2566 = vpack.c.b16 %v2358, %v2350
    %v2567 = vpack.c.b16 %v2359, %v2351
    %v2568 = vpack.c.b16 %v2360, %v2352
    %v2569 = vpack.c.b16 %v2361, %v2353
    %v2570 = vpack.c.b16 %v2370, %v2362
    %v2571 = vpack.c.b16 %v2371, %v2363
    %v2572 = vpack.c.b16 %v2372, %v2364
    %v2573 = vpack.c.b16 %v2373, %v2365
    %v2574 = vpack.c.b16 %v2374, %v2366
    %v2575 = vpack.c.b16 %v2375, %v2367
    %v2576 = vpack.c.b16 %v2376, %v2368
    %v2577 = vpack.c.b16 %v2377, %v2369
    %v2578 = vpack.c.b16 %v2386, %v2378
    %v2579 = vpack.c.b16 %v2387, %v2379
    %v2580 = vpack.c.b16 %v2388, %v2380
    %v2581 = vpack.c.b16 %v2389, %v2381
    %v2582 = vpack.c.b16 %v2390, %v2382
    %v2583 = vpack.c.b16 %v2391, %v2383
    %v2584 = vpack.c.b16 %v2392, %v2384
    %v2585 = vpack.c.b16 %v2393, %v2385
    %v2586 = vpack.c.b16 %v2402, %v2394
    %v2587 = vpack.c.b16 %v2403, %v2395
    %v2588 = vpack.c.b16 %v2404, %v2396
    %v2589 = vpack.c.b16 %v2405, %v2397
    %v2590 = vpack.c.b16 %v2406, %v2398
    %v2591 = vpack.c.b16 %v2407, %v2399
    %v2592 = vpack.c.b16 %v2408, %v2400
    %v2593 = vpack.c.b16 %v2409, %v2401
    %v2594 = vpack.c.b16 %v2418, %v2410
    %v2595 = vpack.c.b16 %v2419, %v2411
    %v2596 = vpack.c.b16 %v2420, %v2412
    %v2597 = vpack.c.b16 %v2421, %v2413
    %v2598 = vpack.c.b16 %v2422, %v2414
    %v2599 = vpack.c.b16 %v2423, %v2415
    %v2600 = vpack.c.b16 %v2424, %v2416
    %v2601 = vpack.c.b16 %v2425, %v2417
    %v2602 = vpack.c.b16 %v2434, %v2426
    %v2603 = vpack.c.b16 %v2435, %v2427
    %v2604 = vpack.c.b16 %v2436, %v2428
    %v2605 = vpack.c.b16 %v2437, %v2429
    %v2606 = vpack.c.b16 %v2438, %v2430
    %v2607 = vpack.c.b16 %v2439, %v2431
    %v2608 = vpack.c.b16 %v2440, %v2432
    %v2609 = vpack.c.b16 %v2441, %v2433
    %v2610 = vpack.c.b16 %v2450, %v2442
    %v2611 = vpack.c.b16 %v2451, %v2443
    %v2612 = vpack.c.b16 %v2452, %v2444
    %v2613 = vpack.c.b16 %v2453, %v2445
    %v2614 = vpack.c.b16 %v2454, %v2446
    %v2615 = vpack.c.b16 %v2455, %v2447
    %v2616 = vpack.c.b16 %v2456, %v2448
    %v2617 = vpack.c.b16 %v2457, %v2449
    %v2618 = vpack.c.b16 %v2466, %v2458
    %v2619 = vpack.c.b16 %v2467, %v2459
    %v2620 = vpack.c.b16 %v2468, %v2460
    %v2621 = vpack.c.b16 %v2469, %v2461
    %v2622 = vpack.c.b16 %v2470, %v2462
    %v2623 = vpack.c.b16 %v2471, %v2463
    %v2624 = vpack.c.b16 %v2472, %v2464
    %v2625 = vpack.c.b16 %v2473, %v2465
    %v2626 = vpack.c.b16 %v2482, %v2474
    %v2627 = vpack.c.b16 %v2483, %v2475
    %v2628 = vpack.c.b16 %v2484, %v2476
    %v2629 = vpack.c.b16 %v2485, %v2477
    %v2630 = vpack.c.b16 %v2486, %v2478
    %v2631 = vpack.c.b16 %v2487, %v2479
    %v2632 = vpack.c.b16 %v2488, %v2480
    %v2633 = vpack.c.b16 %v2489, %v2481
    %v2634 = vpack.c.b16 %v2498, %v2490
    %v2635 = vpack.c.b16 %v2499, %v2491
    %v2636 = vpack.c.b16 %v2500, %v2492
    %v2637 = vpack.c.b16 %v2501, %v2493
    %v2638 = vpack.c.b16 %v2502, %v2494
    %v2639 = vpack.c.b16 %v2503, %v2495
    %v2640 = vpack.c.b16 %v2504, %v2496
    %v2641 = vpack.c.b16 %v2505, %v2497
    %v2642 = vpack.c.b16 %v2514, %v2506
    %v2643 = vpack.c.b16 %v2515, %v2507
    %v2644 = vpack.c.b16 %v2516, %v2508
    %v2645 = vpack.c.b16 %v2517, %v2509
    %v2646 = vpack.c.b16 %v2518, %v2510
    %v2647 = vpack.c.b16 %v2519, %v2511
    %v2648 = vpack.c.b16 %v2520, %v2512
    %v2649 = vpack.c.b16 %v2521, %v2513
    %2778 = vmatprep.subr.bf16.mxu0 %v2579
    %2779 = vmatpush1.bf16.msra.mxu0 %v2578
    %2780 = vmatprep.subr.bf16.mxu0 %v2571
    %2781 = vmatpush1.bf16.msra.mxu0 %v2570
    %2782 = vmatprep.subr.bf16.mxu0 %v2563
    %2783 = vmatpush1.bf16.msra.mxu0 %v2562
    %2784 = vmatprep.subr.bf16.mxu0 %v2555
    %2785 = vmatpush1.bf16.msra.mxu0 %v2554
    %2786 = vmatprep.subr.bf16.mxu0 %v2547
    %2787 = vmatpush1.bf16.msra.mxu0 %v2546
    %2788 = vmatprep.subr.bf16.mxu0 %v2539
    %2789 = vmatpush1.bf16.msra.mxu0 %v2538
    %2790 = vmatprep.subr.bf16.mxu0 %v2531
    %2791 = vmatpush1.bf16.msra.mxu0 %v2530
    %2792 = vmatprep.subr.bf16.mxu0 %v2523
    %2793 = vmatpush1.bf16.msra.mxu0 %v2522
    %2794 = vmatprep.subr.bf16.mxu0 %v2643
    %2795 = vmatpush2.bf16.msra.mxu0 %v2642
    %2796 = vmatprep.subr.bf16.mxu0 %v2635
    %2797 = vmatpush2.bf16.msra.mxu0 %v2634
    %2798 = vmatprep.subr.bf16.mxu0 %v2627
    %2799 = vmatpush2.bf16.msra.mxu0 %v2626
    %2800 = vmatprep.subr.bf16.mxu0 %v2619
    %2801 = vmatpush2.bf16.msra.mxu0 %v2618
    %2802 = vmatprep.subr.bf16.mxu0 %v2611
    %2803 = vmatpush2.bf16.msra.mxu0 %v2610
    %2804 = vmatprep.subr.bf16.mxu0 %v2603
    %2805 = vmatpush2.bf16.msra.mxu0 %v2602
    %2806 = vmatprep.subr.bf16.mxu0 %v2595
    %2807 = vmatpush2.bf16.msra.mxu0 %v2594
    %2808 = vmatprep.subr.bf16.mxu0 %v2587
    %2809 = vmatpush2.bf16.msra.mxu0 %v2586
    %2810 = vmatprep.mubr.bf16.mxu0 %v2135
    %2811 = vmatmul.mubr.bf16.gmra.mxu0 %v2134
    %v2812 = vpop.f32.mrf.mxu0
    %v2813 = vadd.f32 0.0, %v2812
    %v2814 = vpop.f32.mrf.mxu0
    %v2815 = vadd.f32 0.0, %v2814
    %v2816 = vpop.f32.mrf.mxu0
    %v2817 = vpop.f32.mrf.mxu0
    %2818 = vdwg.mxu0
    %2819 = vmatprep.subr.bf16.mxu0 %v2581
    %2820 = vmatpush1.bf16.msra.mxu0 %v2580
    %2821 = vmatprep.subr.bf16.mxu0 %v2573
    %2822 = vmatpush1.bf16.msra.mxu0 %v2572
    %2823 = vmatprep.subr.bf16.mxu0 %v2565
    %2824 = vmatpush1.bf16.msra.mxu0 %v2564
    %2825 = vmatprep.subr.bf16.mxu0 %v2557
    %2826 = vmatpush1.bf16.msra.mxu0 %v2556
    %2827 = vmatprep.subr.bf16.mxu0 %v2549
    %2828 = vmatpush1.bf16.msra.mxu0 %v2548
    %2829 = vmatprep.subr.bf16.mxu0 %v2541
    %2830 = vmatpush1.bf16.msra.mxu0 %v2540
    %2831 = vmatprep.subr.bf16.mxu0 %v2533
    %2832 = vmatpush1.bf16.msra.mxu0 %v2532
    %2833 = vmatprep.subr.bf16.mxu0 %v2525
    %2834 = vmatpush1.bf16.msra.mxu0 %v2524
    %2835 = vmatprep.subr.bf16.mxu0 %v2645
    %2836 = vmatpush2.bf16.msra.mxu0 %v2644
    %2837 = vmatprep.subr.bf16.mxu0 %v2637
    %2838 = vmatpush2.bf16.msra.mxu0 %v2636
    %2839 = vmatprep.subr.bf16.mxu0 %v2629
    %2840 = vmatpush2.bf16.msra.mxu0 %v2628
    %2841 = vmatprep.subr.bf16.mxu0 %v2621
    %2842 = vmatpush2.bf16.msra.mxu0 %v2620
    %2843 = vmatprep.subr.bf16.mxu0 %v2613
    %2844 = vmatpush2.bf16.msra.mxu0 %v2612
    %2845 = vmatprep.subr.bf16.mxu0 %v2605
    %2846 = vmatpush2.bf16.msra.mxu0 %v2604
    %2847 = vmatprep.subr.bf16.mxu0 %v2597
    %2848 = vmatpush2.bf16.msra.mxu0 %v2596
    %2849 = vmatprep.subr.bf16.mxu0 %v2589
    %2850 = vmatpush2.bf16.msra.mxu0 %v2588
    %2851 = vmatprep.mubr.bf16.mxu0 %v2135
    %2852 = vmatmul.mubr.bf16.gmra.mxu0 %v2134
    %v2853 = vpop.f32.mrf.mxu0
    %v2854 = vadd.f32 0.0, %v2853
    %v2855 = vpop.f32.mrf.mxu0
    %v2856 = vadd.f32 0.0, %v2855
    %v2857 = vpop.f32.mrf.mxu0
    %v2858 = vpop.f32.mrf.mxu0
    %2859 = vdwg.mxu0
    %2860 = vmatprep.subr.bf16.mxu0 %v2583
    %2861 = vmatpush1.bf16.msra.mxu0 %v2582
    %2862 = vmatprep.subr.bf16.mxu0 %v2575
    %2863 = vmatpush1.bf16.msra.mxu0 %v2574
    %2864 = vmatprep.subr.bf16.mxu0 %v2567
    %2865 = vmatpush1.bf16.msra.mxu0 %v2566
    %2866 = vmatprep.subr.bf16.mxu0 %v2559
    %2867 = vmatpush1.bf16.msra.mxu0 %v2558
    %2868 = vmatprep.subr.bf16.mxu0 %v2551
    %2869 = vmatpush1.bf16.msra.mxu0 %v2550
    %2870 = vmatprep.subr.bf16.mxu0 %v2543
    %2871 = vmatpush1.bf16.msra.mxu0 %v2542
    %2872 = vmatprep.subr.bf16.mxu0 %v2535
    %2873 = vmatpush1.bf16.msra.mxu0 %v2534
    %2874 = vmatprep.subr.bf16.mxu0 %v2527
    %2875 = vmatpush1.bf16.msra.mxu0 %v2526
    %2876 = vmatprep.subr.bf16.mxu0 %v2647
    %2877 = vmatpush2.bf16.msra.mxu0 %v2646
    %2878 = vmatprep.subr.bf16.mxu0 %v2639
    %2879 = vmatpush2.bf16.msra.mxu0 %v2638
    %2880 = vmatprep.subr.bf16.mxu0 %v2631
    %2881 = vmatpush2.bf16.msra.mxu0 %v2630
    %2882 = vmatprep.subr.bf16.mxu0 %v2623
    %2883 = vmatpush2.bf16.msra.mxu0 %v2622
    %2884 = vmatprep.subr.bf16.mxu0 %v2615
    %2885 = vmatpush2.bf16.msra.mxu0 %v2614
    %2886 = vmatprep.subr.bf16.mxu0 %v2607
    %2887 = vmatpush2.bf16.msra.mxu0 %v2606
    %2888 = vmatprep.subr.bf16.mxu0 %v2599
    %2889 = vmatpush2.bf16.msra.mxu0 %v2598
    %2890 = vmatprep.subr.bf16.mxu0 %v2591
    %2891 = vmatpush2.bf16.msra.mxu0 %v2590
    %2892 = vmatprep.mubr.bf16.mxu0 %v2135
    %2893 = vmatmul.mubr.bf16.gmra.mxu0 %v2134
    %v2894 = vpop.f32.mrf.mxu0
    %v2895 = vadd.f32 0.0, %v2894
    %v2896 = vpop.f32.mrf.mxu0
    %v2897 = vadd.f32 0.0, %v2896
    %v2898 = vpop.f32.mrf.mxu0
    %v2899 = vpop.f32.mrf.mxu0
    %2900 = vdwg.mxu0
    %2901 = vmatprep.subr.bf16.mxu0 %v2585
    %2902 = vmatpush1.bf16.msra.mxu0 %v2584
    %2903 = vmatprep.subr.bf16.mxu0 %v2577
    %2904 = vmatpush1.bf16.msra.mxu0 %v2576
    %2905 = vmatprep.subr.bf16.mxu0 %v2569
    %2906 = vmatpush1.bf16.msra.mxu0 %v2568
    %2907 = vmatprep.subr.bf16.mxu0 %v2561
    %2908 = vmatpush1.bf16.msra.mxu0 %v2560
    %2909 = vmatprep.subr.bf16.mxu0 %v2553
    %2910 = vmatpush1.bf16.msra.mxu0 %v2552
    %2911 = vmatprep.subr.bf16.mxu0 %v2545
    %2912 = vmatpush1.bf16.msra.mxu0 %v2544
    %2913 = vmatprep.subr.bf16.mxu0 %v2537
    %2914 = vmatpush1.bf16.msra.mxu0 %v2536
    %2915 = vmatprep.subr.bf16.mxu0 %v2529
    %2916 = vmatpush1.bf16.msra.mxu0 %v2528
    %2917 = vmatprep.subr.bf16.mxu0 %v2649
    %2918 = vmatpush2.bf16.msra.mxu0 %v2648
    %2919 = vmatprep.subr.bf16.mxu0 %v2641
    %2920 = vmatpush2.bf16.msra.mxu0 %v2640
    %2921 = vmatprep.subr.bf16.mxu0 %v2633
    %2922 = vmatpush2.bf16.msra.mxu0 %v2632
    %2923 = vmatprep.subr.bf16.mxu0 %v2625
    %2924 = vmatpush2.bf16.msra.mxu0 %v2624
    %2925 = vmatprep.subr.bf16.mxu0 %v2617
    %2926 = vmatpush2.bf16.msra.mxu0 %v2616
    %2927 = vmatprep.subr.bf16.mxu0 %v2609
    %2928 = vmatpush2.bf16.msra.mxu0 %v2608
    %2929 = vmatprep.subr.bf16.mxu0 %v2601
    %2930 = vmatpush2.bf16.msra.mxu0 %v2600
    %2931 = vmatprep.subr.bf16.mxu0 %v2593
    %2932 = vmatpush2.bf16.msra.mxu0 %v2592
    %2933 = vmatprep.mubr.bf16.mxu0 %v2135
    %2934 = vmatmul.mubr.bf16.gmra.mxu0 %v2134
    %v2935 = vpop.f32.mrf.mxu0
    %v2936 = vadd.f32 0.0, %v2935
    %v2937 = vpop.f32.mrf.mxu0
    %v2938 = vadd.f32 0.0, %v2937
    %v2939 = vpop.f32.mrf.mxu0
    %v2940 = vpop.f32.mrf.mxu0
    %2941 = vdwg.mxu0
    %v2942 = vadd.f32 %v1905, %v2813
    %v2943 = vadd.f32 %v1906, %v2815
    %v2944 = vadd.f32 %v1907, %v2854
    %v2945 = vadd.f32 %v1908, %v2856
    %v2946 = vadd.f32 %v1909, %v2895
    %v2947 = vadd.f32 %v1910, %v2897
    %v2948 = vadd.f32 %v1911, %v2936
    %v2949 = vadd.f32 %v1912, %v2938
    %2950 = vst [vmem:[#allocation3] sm:$0xff] %v2942
    %2951 = vst [vmem:[#allocation3 + $0x8] sm:$0xff] %v2943
    %2952 = vst [vmem:[#allocation3 + $0x10] sm:$0xff] %v2944
    %2953 = vst [vmem:[#allocation3 + $0x18] sm:$0xff] %v2945
    %2954 = vst [vmem:[#allocation3 + $0x20] sm:$0xff] %v2946
    %2955 = vst [vmem:[#allocation3 + $0x28] sm:$0xff] %v2947
    %2956 = vst [vmem:[#allocation3 + $0x30] sm:$0xff] %v2948
    %2957 = vst [vmem:[#allocation3 + $0x38] sm:$0xff] %v2949
    %v2958 = vld [vmem:[#allocation3] sm:$0xff]
    %v2959 = vld [vmem:[#allocation3 + $0x8] sm:$0xff]
    %v2960 = vld [vmem:[#allocation3 + $0x10] sm:$0xff]
    %v2961 = vld [vmem:[#allocation3 + $0x18] sm:$0xff]
    %v2962 = vld [vmem:[#allocation3 + $0x20] sm:$0xff]
    %v2963 = vld [vmem:[#allocation3 + $0x28] sm:$0xff]
    %v2964 = vld [vmem:[#allocation3 + $0x30] sm:$0xff]
    %v2965 = vld [vmem:[#allocation3 + $0x38] sm:$0xff]
    %v2966 = vld [vmem:[#allocation2] sm:$0x22]
    %v2967 = vld [vmem:[#allocation2 + $0x8] sm:$0x22]
    %v2968 = vld [vmem:[#allocation2 + $0x10] sm:$0x22]
    %v2969 = vld [vmem:[#allocation2 + $0x18] sm:$0x22]
    %v2970 = vld [vmem:[#allocation2 + $0x20] sm:$0x22]
    %v2971 = vld [vmem:[#allocation2 + $0x28] sm:$0x22]
    %v2972 = vld [vmem:[#allocation2 + $0x30] sm:$0x22]
    %v2973 = vld [vmem:[#allocation2 + $0x38] sm:$0x22]
    %s2974 = scalar_lea.vmem [#allocation6], 2048
    %v2975 = vld [vmem:[%s2974] sm:$0xff]
    %v2976 = vld [vmem:[%s2974 + $0x8] sm:$0xff]
    %v2977 = vld [vmem:[%s2974 + $0x10] sm:$0xff]
    %v2978 = vld [vmem:[%s2974 + $0x18] sm:$0xff]
    %v2979 = vld [vmem:[%s2974 + $0x20] sm:$0xff]
    %v2980 = vld [vmem:[%s2974 + $0x28] sm:$0xff]
    %v2981 = vld [vmem:[%s2974 + $0x30] sm:$0xff]
    %v2982 = vld [vmem:[%s2974 + $0x38] sm:$0xff]
    %v2983 = vld [vmem:[%s2974 + $0x40] sm:$0xff]
    %v2984 = vld [vmem:[%s2974 + $0x48] sm:$0xff]
    %v2985 = vld [vmem:[%s2974 + $0x50] sm:$0xff]
    %v2986 = vld [vmem:[%s2974 + $0x58] sm:$0xff]
    %v2987 = vld [vmem:[%s2974 + $0x60] sm:$0xff]
    %v2988 = vld [vmem:[%s2974 + $0x68] sm:$0xff]
    %v2989 = vld [vmem:[%s2974 + $0x70] sm:$0xff]
    %v2990 = vld [vmem:[%s2974 + $0x78] sm:$0xff]
    %v2991 = vld [vmem:[%s2974 + $0x80] sm:$0xff]
    %v2992 = vld [vmem:[%s2974 + $0x88] sm:$0xff]
    %v2993 = vld [vmem:[%s2974 + $0x90] sm:$0xff]
    %v2994 = vld [vmem:[%s2974 + $0x98] sm:$0xff]
    %v2995 = vld [vmem:[%s2974 + $0xa0] sm:$0xff]
    %v2996 = vld [vmem:[%s2974 + $0xa8] sm:$0xff]
    %v2997 = vld [vmem:[%s2974 + $0xb0] sm:$0xff]
    %v2998 = vld [vmem:[%s2974 + $0xb8] sm:$0xff]
    %v2999 = vld [vmem:[%s2974 + $0xc0] sm:$0xff]
    %v3000 = vld [vmem:[%s2974 + $0xc8] sm:$0xff]
    %v3001 = vld [vmem:[%s2974 + $0xd0] sm:$0xff]
    %v3002 = vld [vmem:[%s2974 + $0xd8] sm:$0xff]
    %v3003 = vld [vmem:[%s2974 + $0xe0] sm:$0xff]
    %v3004 = vld [vmem:[%s2974 + $0xe8] sm:$0xff]
    %v3005 = vld [vmem:[%s2974 + $0xf0] sm:$0xff]
    %v3006 = vld [vmem:[%s2974 + $0xf8] sm:$0xff]
    %v3007 = vld [vmem:[%s2974 + $0x100] sm:$0xff]
    %v3008 = vld [vmem:[%s2974 + $0x108] sm:$0xff]
    %v3009 = vld [vmem:[%s2974 + $0x110] sm:$0xff]
    %v3010 = vld [vmem:[%s2974 + $0x118] sm:$0xff]
    %v3011 = vld [vmem:[%s2974 + $0x120] sm:$0xff]
    %v3012 = vld [vmem:[%s2974 + $0x128] sm:$0xff]
    %v3013 = vld [vmem:[%s2974 + $0x130] sm:$0xff]
    %v3014 = vld [vmem:[%s2974 + $0x138] sm:$0xff]
    %v3015 = vld [vmem:[%s2974 + $0x140] sm:$0xff]
    %v3016 = vld [vmem:[%s2974 + $0x148] sm:$0xff]
    %v3017 = vld [vmem:[%s2974 + $0x150] sm:$0xff]
    %v3018 = vld [vmem:[%s2974 + $0x158] sm:$0xff]
    %v3019 = vld [vmem:[%s2974 + $0x160] sm:$0xff]
    %v3020 = vld [vmem:[%s2974 + $0x168] sm:$0xff]
    %v3021 = vld [vmem:[%s2974 + $0x170] sm:$0xff]
    %v3022 = vld [vmem:[%s2974 + $0x178] sm:$0xff]
    %v3023 = vld [vmem:[%s2974 + $0x180] sm:$0xff]
    %v3024 = vld [vmem:[%s2974 + $0x188] sm:$0xff]
    %v3025 = vld [vmem:[%s2974 + $0x190] sm:$0xff]
    %v3026 = vld [vmem:[%s2974 + $0x198] sm:$0xff]
    %v3027 = vld [vmem:[%s2974 + $0x1a0] sm:$0xff]
    %v3028 = vld [vmem:[%s2974 + $0x1a8] sm:$0xff]
    %v3029 = vld [vmem:[%s2974 + $0x1b0] sm:$0xff]
    %v3030 = vld [vmem:[%s2974 + $0x1b8] sm:$0xff]
    %v3031 = vld [vmem:[%s2974 + $0x1c0] sm:$0xff]
    %v3032 = vld [vmem:[%s2974 + $0x1c8] sm:$0xff]
    %v3033 = vld [vmem:[%s2974 + $0x1d0] sm:$0xff]
    %v3034 = vld [vmem:[%s2974 + $0x1d8] sm:$0xff]
    %v3035 = vld [vmem:[%s2974 + $0x1e0] sm:$0xff]
    %v3036 = vld [vmem:[%s2974 + $0x1e8] sm:$0xff]
    %v3037 = vld [vmem:[%s2974 + $0x1f0] sm:$0xff]
    %v3038 = vld [vmem:[%s2974 + $0x1f8] sm:$0xff]
    %v3039 = vld [vmem:[%s2974 + $0x200] sm:$0xff]
    %v3040 = vld [vmem:[%s2974 + $0x208] sm:$0xff]
    %v3041 = vld [vmem:[%s2974 + $0x210] sm:$0xff]
    %v3042 = vld [vmem:[%s2974 + $0x218] sm:$0xff]
    %v3043 = vld [vmem:[%s2974 + $0x220] sm:$0xff]
    %v3044 = vld [vmem:[%s2974 + $0x228] sm:$0xff]
    %v3045 = vld [vmem:[%s2974 + $0x230] sm:$0xff]
    %v3046 = vld [vmem:[%s2974 + $0x238] sm:$0xff]
    %v3047 = vld [vmem:[%s2974 + $0x240] sm:$0xff]
    %v3048 = vld [vmem:[%s2974 + $0x248] sm:$0xff]
    %v3049 = vld [vmem:[%s2974 + $0x250] sm:$0xff]
    %v3050 = vld [vmem:[%s2974 + $0x258] sm:$0xff]
    %v3051 = vld [vmem:[%s2974 + $0x260] sm:$0xff]
    %v3052 = vld [vmem:[%s2974 + $0x268] sm:$0xff]
    %v3053 = vld [vmem:[%s2974 + $0x270] sm:$0xff]
    %v3054 = vld [vmem:[%s2974 + $0x278] sm:$0xff]
    %v3055 = vld [vmem:[%s2974 + $0x280] sm:$0xff]
    %v3056 = vld [vmem:[%s2974 + $0x288] sm:$0xff]
    %v3057 = vld [vmem:[%s2974 + $0x290] sm:$0xff]
    %v3058 = vld [vmem:[%s2974 + $0x298] sm:$0xff]
    %v3059 = vld [vmem:[%s2974 + $0x2a0] sm:$0xff]
    %v3060 = vld [vmem:[%s2974 + $0x2a8] sm:$0xff]
    %v3061 = vld [vmem:[%s2974 + $0x2b0] sm:$0xff]
    %v3062 = vld [vmem:[%s2974 + $0x2b8] sm:$0xff]
    %v3063 = vld [vmem:[%s2974 + $0x2c0] sm:$0xff]
    %v3064 = vld [vmem:[%s2974 + $0x2c8] sm:$0xff]
    %v3065 = vld [vmem:[%s2974 + $0x2d0] sm:$0xff]
    %v3066 = vld [vmem:[%s2974 + $0x2d8] sm:$0xff]
    %v3067 = vld [vmem:[%s2974 + $0x2e0] sm:$0xff]
    %v3068 = vld [vmem:[%s2974 + $0x2e8] sm:$0xff]
    %v3069 = vld [vmem:[%s2974 + $0x2f0] sm:$0xff]
    %v3070 = vld [vmem:[%s2974 + $0x2f8] sm:$0xff]
    %v3071 = vld [vmem:[%s2974 + $0x300] sm:$0xff]
    %v3072 = vld [vmem:[%s2974 + $0x308] sm:$0xff]
    %v3073 = vld [vmem:[%s2974 + $0x310] sm:$0xff]
    %v3074 = vld [vmem:[%s2974 + $0x318] sm:$0xff]
    %v3075 = vld [vmem:[%s2974 + $0x320] sm:$0xff]
    %v3076 = vld [vmem:[%s2974 + $0x328] sm:$0xff]
    %v3077 = vld [vmem:[%s2974 + $0x330] sm:$0xff]
    %v3078 = vld [vmem:[%s2974 + $0x338] sm:$0xff]
    %v3079 = vld [vmem:[%s2974 + $0x340] sm:$0xff]
    %v3080 = vld [vmem:[%s2974 + $0x348] sm:$0xff]
    %v3081 = vld [vmem:[%s2974 + $0x350] sm:$0xff]
    %v3082 = vld [vmem:[%s2974 + $0x358] sm:$0xff]
    %v3083 = vld [vmem:[%s2974 + $0x360] sm:$0xff]
    %v3084 = vld [vmem:[%s2974 + $0x368] sm:$0xff]
    %v3085 = vld [vmem:[%s2974 + $0x370] sm:$0xff]
    %v3086 = vld [vmem:[%s2974 + $0x378] sm:$0xff]
    %v3087 = vld [vmem:[%s2974 + $0x380] sm:$0xff]
    %v3088 = vld [vmem:[%s2974 + $0x388] sm:$0xff]
    %v3089 = vld [vmem:[%s2974 + $0x390] sm:$0xff]
    %v3090 = vld [vmem:[%s2974 + $0x398] sm:$0xff]
    %v3091 = vld [vmem:[%s2974 + $0x3a0] sm:$0xff]
    %v3092 = vld [vmem:[%s2974 + $0x3a8] sm:$0xff]
    %v3093 = vld [vmem:[%s2974 + $0x3b0] sm:$0xff]
    %v3094 = vld [vmem:[%s2974 + $0x3b8] sm:$0xff]
    %v3095 = vld [vmem:[%s2974 + $0x3c0] sm:$0xff]
    %v3096 = vld [vmem:[%s2974 + $0x3c8] sm:$0xff]
    %v3097 = vld [vmem:[%s2974 + $0x3d0] sm:$0xff]
    %v3098 = vld [vmem:[%s2974 + $0x3d8] sm:$0xff]
    %v3099 = vld [vmem:[%s2974 + $0x3e0] sm:$0xff]
    %v3100 = vld [vmem:[%s2974 + $0x3e8] sm:$0xff]
    %v3101 = vld [vmem:[%s2974 + $0x3f0] sm:$0xff]
    %v3102 = vld [vmem:[%s2974 + $0x3f8] sm:$0xff]
    %v3111 = vunpack.c.l.b16 %v2966
    %v3112 = vunpack.c.h.b16 %v2966
    %v3113 = vunpack.c.l.b16 %v2967
    %v3114 = vunpack.c.h.b16 %v2967
    %v3115 = vunpack.c.l.b16 %v2968
    %v3116 = vunpack.c.h.b16 %v2968
    %v3117 = vunpack.c.l.b16 %v2969
    %v3118 = vunpack.c.h.b16 %v2969
    %v3119 = vunpack.c.l.b16 %v2970
    %v3120 = vunpack.c.h.b16 %v2970
    %v3121 = vunpack.c.l.b16 %v2971
    %v3122 = vunpack.c.h.b16 %v2971
    %v3123 = vunpack.c.l.b16 %v2972
    %v3124 = vunpack.c.h.b16 %v2972
    %v3125 = vunpack.c.l.b16 %v2973
    %v3126 = vunpack.c.h.b16 %v2973
    %v3127 = vpack.c.b16 %v3111, %v3111
    %v3128 = vpack.c.b16 %v3112, %v3112
    %v3129 = vpack.c.b16 %v3113, %v3113
    %v3130 = vpack.c.b16 %v3114, %v3114
    %v3131 = vpack.c.b16 %v3115, %v3115
    %v3132 = vpack.c.b16 %v3116, %v3116
    %v3133 = vpack.c.b16 %v3117, %v3117
    %v3134 = vpack.c.b16 %v3118, %v3118
    %v3135 = vpack.c.b16 %v3119, %v3119
    %v3136 = vpack.c.b16 %v3120, %v3120
    %v3137 = vpack.c.b16 %v3121, %v3121
    %v3138 = vpack.c.b16 %v3122, %v3122
    %v3139 = vpack.c.b16 %v3123, %v3123
    %v3140 = vpack.c.b16 %v3124, %v3124
    %v3141 = vpack.c.b16 %v3125, %v3125
    %v3142 = vpack.c.b16 %v3126, %v3126
    %v3143 = vunpack.c.l.b16 %v3127
    %v3144 = vunpack.c.l.b16 %v3128
    %v3145 = vunpack.c.l.b16 %v3129
    %v3146 = vunpack.c.l.b16 %v3130
    %v3147 = vunpack.c.l.b16 %v3131
    %v3148 = vunpack.c.l.b16 %v3132
    %v3149 = vunpack.c.l.b16 %v3133
    %v3150 = vunpack.c.l.b16 %v3134
    %v3151 = vunpack.c.l.b16 %v3135
    %v3152 = vunpack.c.l.b16 %v3136
    %v3153 = vunpack.c.l.b16 %v3137
    %v3154 = vunpack.c.l.b16 %v3138
    %v3155 = vunpack.c.l.b16 %v3139
    %v3156 = vunpack.c.l.b16 %v3140
    %v3157 = vunpack.c.l.b16 %v3141
    %v3158 = vunpack.c.l.b16 %v3142
    %v3159 = vrot.slane %v3143, 2
    %v3160 = vrot.slane %v3145, 1
    %v3161 = vsel %vm1047, %v3160, %v3159
    %v3162 = vsel %vm1050, %v3147, %v3161
    %v3163 = vrot.slane %v3149, 7
    %v3164 = vsel %vm1053, %v3163, %v3162
    %v3165 = vrot.slane %v3151, 6
    %v3166 = vsel %vm1056, %v3165, %v3164
    %v3167 = vrot.slane %v3153, 5
    %v3168 = vsel %vm1059, %v3167, %v3166
    %v3169 = vrot.slane %v3155, 4
    %v3170 = vsel %vm1062, %v3169, %v3168
    %v3171 = vrot.slane %v3157, 3
    %v3172 = vsel %vm1065, %v3171, %v3170
    %v3173 = vrot.slane %v3144, 2
    %v3174 = vrot.slane %v3146, 1
    %v3175 = vsel %vm1047, %v3174, %v3173
    %v3176 = vsel %vm1050, %v3148, %v3175
    %v3177 = vrot.slane %v3150, 7
    %v3178 = vsel %vm1053, %v3177, %v3176
    %v3179 = vrot.slane %v3152, 6
    %v3180 = vsel %vm1056, %v3179, %v3178
    %v3181 = vrot.slane %v3154, 5
    %v3182 = vsel %vm1059, %v3181, %v3180
    %v3183 = vrot.slane %v3156, 4
    %v3184 = vsel %vm1062, %v3183, %v3182
    %v3185 = vrot.slane %v3158, 3
    %v3186 = vsel %vm1065, %v3185, %v3184
    %v3187 = vpack.c.b16 %v3172, %v3172
    %v3188 = vpack.c.b16 %v3186, %v3186
    %v3319 = vunpack.c.l.b16 %v2975
    %v3320 = vunpack.c.h.b16 %v2975
    %v3321 = vunpack.c.l.b16 %v2976
    %v3322 = vunpack.c.h.b16 %v2976
    %v3323 = vunpack.c.l.b16 %v2977
    %v3324 = vunpack.c.h.b16 %v2977
    %v3325 = vunpack.c.l.b16 %v2978
    %v3326 = vunpack.c.h.b16 %v2978
    %v3327 = vunpack.c.l.b16 %v2979
    %v3328 = vunpack.c.h.b16 %v2979
    %v3329 = vunpack.c.l.b16 %v2980
    %v3330 = vunpack.c.h.b16 %v2980
    %v3331 = vunpack.c.l.b16 %v2981
    %v3332 = vunpack.c.h.b16 %v2981
    %v3333 = vunpack.c.l.b16 %v2982
    %v3334 = vunpack.c.h.b16 %v2982
    %v3335 = vunpack.c.l.b16 %v2983
    %v3336 = vunpack.c.h.b16 %v2983
    %v3337 = vunpack.c.l.b16 %v2984
    %v3338 = vunpack.c.h.b16 %v2984
    %v3339 = vunpack.c.l.b16 %v2985
    %v3340 = vunpack.c.h.b16 %v2985
    %v3341 = vunpack.c.l.b16 %v2986
    %v3342 = vunpack.c.h.b16 %v2986
    %v3343 = vunpack.c.l.b16 %v2987
    %v3344 = vunpack.c.h.b16 %v2987
    %v3345 = vunpack.c.l.b16 %v2988
    %v3346 = vunpack.c.h.b16 %v2988
    %v3347 = vunpack.c.l.b16 %v2989
    %v3348 = vunpack.c.h.b16 %v2989
    %v3349 = vunpack.c.l.b16 %v2990
    %v3350 = vunpack.c.h.b16 %v2990
    %v3351 = vunpack.c.l.b16 %v2991
    %v3352 = vunpack.c.h.b16 %v2991
    %v3353 = vunpack.c.l.b16 %v2992
    %v3354 = vunpack.c.h.b16 %v2992
    %v3355 = vunpack.c.l.b16 %v2993
    %v3356 = vunpack.c.h.b16 %v2993
    %v3357 = vunpack.c.l.b16 %v2994
    %v3358 = vunpack.c.h.b16 %v2994
    %v3359 = vunpack.c.l.b16 %v2995
    %v3360 = vunpack.c.h.b16 %v2995
    %v3361 = vunpack.c.l.b16 %v2996
    %v3362 = vunpack.c.h.b16 %v2996
    %v3363 = vunpack.c.l.b16 %v2997
    %v3364 = vunpack.c.h.b16 %v2997
    %v3365 = vunpack.c.l.b16 %v2998
    %v3366 = vunpack.c.h.b16 %v2998
    %v3367 = vunpack.c.l.b16 %v2999
    %v3368 = vunpack.c.h.b16 %v2999
    %v3369 = vunpack.c.l.b16 %v3000
    %v3370 = vunpack.c.h.b16 %v3000
    %v3371 = vunpack.c.l.b16 %v3001
    %v3372 = vunpack.c.h.b16 %v3001
    %v3373 = vunpack.c.l.b16 %v3002
    %v3374 = vunpack.c.h.b16 %v3002
    %v3375 = vunpack.c.l.b16 %v3003
    %v3376 = vunpack.c.h.b16 %v3003
    %v3377 = vunpack.c.l.b16 %v3004
    %v3378 = vunpack.c.h.b16 %v3004
    %v3379 = vunpack.c.l.b16 %v3005
    %v3380 = vunpack.c.h.b16 %v3005
    %v3381 = vunpack.c.l.b16 %v3006
    %v3382 = vunpack.c.h.b16 %v3006
    %v3383 = vunpack.c.l.b16 %v3007
    %v3384 = vunpack.c.h.b16 %v3007
    %v3385 = vunpack.c.l.b16 %v3008
    %v3386 = vunpack.c.h.b16 %v3008
    %v3387 = vunpack.c.l.b16 %v3009
    %v3388 = vunpack.c.h.b16 %v3009
    %v3389 = vunpack.c.l.b16 %v3010
    %v3390 = vunpack.c.h.b16 %v3010
    %v3391 = vunpack.c.l.b16 %v3011
    %v3392 = vunpack.c.h.b16 %v3011
    %v3393 = vunpack.c.l.b16 %v3012
    %v3394 = vunpack.c.h.b16 %v3012
    %v3395 = vunpack.c.l.b16 %v3013
    %v3396 = vunpack.c.h.b16 %v3013
    %v3397 = vunpack.c.l.b16 %v3014
    %v3398 = vunpack.c.h.b16 %v3014
    %v3399 = vunpack.c.l.b16 %v3015
    %v3400 = vunpack.c.h.b16 %v3015
    %v3401 = vunpack.c.l.b16 %v3016
    %v3402 = vunpack.c.h.b16 %v3016
    %v3403 = vunpack.c.l.b16 %v3017
    %v3404 = vunpack.c.h.b16 %v3017
    %v3405 = vunpack.c.l.b16 %v3018
    %v3406 = vunpack.c.h.b16 %v3018
    %v3407 = vunpack.c.l.b16 %v3019
    %v3408 = vunpack.c.h.b16 %v3019
    %v3409 = vunpack.c.l.b16 %v3020
    %v3410 = vunpack.c.h.b16 %v3020
    %v3411 = vunpack.c.l.b16 %v3021
    %v3412 = vunpack.c.h.b16 %v3021
    %v3413 = vunpack.c.l.b16 %v3022
    %v3414 = vunpack.c.h.b16 %v3022
    %v3415 = vunpack.c.l.b16 %v3023
    %v3416 = vunpack.c.h.b16 %v3023
    %v3417 = vunpack.c.l.b16 %v3024
    %v3418 = vunpack.c.h.b16 %v3024
    %v3419 = vunpack.c.l.b16 %v3025
    %v3420 = vunpack.c.h.b16 %v3025
    %v3421 = vunpack.c.l.b16 %v3026
    %v3422 = vunpack.c.h.b16 %v3026
    %v3423 = vunpack.c.l.b16 %v3027
    %v3424 = vunpack.c.h.b16 %v3027
    %v3425 = vunpack.c.l.b16 %v3028
    %v3426 = vunpack.c.h.b16 %v3028
    %v3427 = vunpack.c.l.b16 %v3029
    %v3428 = vunpack.c.h.b16 %v3029
    %v3429 = vunpack.c.l.b16 %v3030
    %v3430 = vunpack.c.h.b16 %v3030
    %v3431 = vunpack.c.l.b16 %v3031
    %v3432 = vunpack.c.h.b16 %v3031
    %v3433 = vunpack.c.l.b16 %v3032
    %v3434 = vunpack.c.h.b16 %v3032
    %v3435 = vunpack.c.l.b16 %v3033
    %v3436 = vunpack.c.h.b16 %v3033
    %v3437 = vunpack.c.l.b16 %v3034
    %v3438 = vunpack.c.h.b16 %v3034
    %v3439 = vunpack.c.l.b16 %v3035
    %v3440 = vunpack.c.h.b16 %v3035
    %v3441 = vunpack.c.l.b16 %v3036
    %v3442 = vunpack.c.h.b16 %v3036
    %v3443 = vunpack.c.l.b16 %v3037
    %v3444 = vunpack.c.h.b16 %v3037
    %v3445 = vunpack.c.l.b16 %v3038
    %v3446 = vunpack.c.h.b16 %v3038
    %v3447 = vunpack.c.l.b16 %v3039
    %v3448 = vunpack.c.h.b16 %v3039
    %v3449 = vunpack.c.l.b16 %v3040
    %v3450 = vunpack.c.h.b16 %v3040
    %v3451 = vunpack.c.l.b16 %v3041
    %v3452 = vunpack.c.h.b16 %v3041
    %v3453 = vunpack.c.l.b16 %v3042
    %v3454 = vunpack.c.h.b16 %v3042
    %v3455 = vunpack.c.l.b16 %v3043
    %v3456 = vunpack.c.h.b16 %v3043
    %v3457 = vunpack.c.l.b16 %v3044
    %v3458 = vunpack.c.h.b16 %v3044
    %v3459 = vunpack.c.l.b16 %v3045
    %v3460 = vunpack.c.h.b16 %v3045
    %v3461 = vunpack.c.l.b16 %v3046
    %v3462 = vunpack.c.h.b16 %v3046
    %v3463 = vunpack.c.l.b16 %v3047
    %v3464 = vunpack.c.h.b16 %v3047
    %v3465 = vunpack.c.l.b16 %v3048
    %v3466 = vunpack.c.h.b16 %v3048
    %v3467 = vunpack.c.l.b16 %v3049
    %v3468 = vunpack.c.h.b16 %v3049
    %v3469 = vunpack.c.l.b16 %v3050
    %v3470 = vunpack.c.h.b16 %v3050
    %v3471 = vunpack.c.l.b16 %v3051
    %v3472 = vunpack.c.h.b16 %v3051
    %v3473 = vunpack.c.l.b16 %v3052
    %v3474 = vunpack.c.h.b16 %v3052
    %v3475 = vunpack.c.l.b16 %v3053
    %v3476 = vunpack.c.h.b16 %v3053
    %v3477 = vunpack.c.l.b16 %v3054
    %v3478 = vunpack.c.h.b16 %v3054
    %v3479 = vunpack.c.l.b16 %v3055
    %v3480 = vunpack.c.h.b16 %v3055
    %v3481 = vunpack.c.l.b16 %v3056
    %v3482 = vunpack.c.h.b16 %v3056
    %v3483 = vunpack.c.l.b16 %v3057
    %v3484 = vunpack.c.h.b16 %v3057
    %v3485 = vunpack.c.l.b16 %v3058
    %v3486 = vunpack.c.h.b16 %v3058
    %v3487 = vunpack.c.l.b16 %v3059
    %v3488 = vunpack.c.h.b16 %v3059
    %v3489 = vunpack.c.l.b16 %v3060
    %v3490 = vunpack.c.h.b16 %v3060
    %v3491 = vunpack.c.l.b16 %v3061
    %v3492 = vunpack.c.h.b16 %v3061
    %v3493 = vunpack.c.l.b16 %v3062
    %v3494 = vunpack.c.h.b16 %v3062
    %v3495 = vunpack.c.l.b16 %v3063
    %v3496 = vunpack.c.h.b16 %v3063
    %v3497 = vunpack.c.l.b16 %v3064
    %v3498 = vunpack.c.h.b16 %v3064
    %v3499 = vunpack.c.l.b16 %v3065
    %v3500 = vunpack.c.h.b16 %v3065
    %v3501 = vunpack.c.l.b16 %v3066
    %v3502 = vunpack.c.h.b16 %v3066
    %v3503 = vunpack.c.l.b16 %v3067
    %v3504 = vunpack.c.h.b16 %v3067
    %v3505 = vunpack.c.l.b16 %v3068
    %v3506 = vunpack.c.h.b16 %v3068
    %v3507 = vunpack.c.l.b16 %v3069
    %v3508 = vunpack.c.h.b16 %v3069
    %v3509 = vunpack.c.l.b16 %v3070
    %v3510 = vunpack.c.h.b16 %v3070
    %v3511 = vunpack.c.l.b16 %v3071
    %v3512 = vunpack.c.h.b16 %v3071
    %v3513 = vunpack.c.l.b16 %v3072
    %v3514 = vunpack.c.h.b16 %v3072
    %v3515 = vunpack.c.l.b16 %v3073
    %v3516 = vunpack.c.h.b16 %v3073
    %v3517 = vunpack.c.l.b16 %v3074
    %v3518 = vunpack.c.h.b16 %v3074
    %v3519 = vunpack.c.l.b16 %v3075
    %v3520 = vunpack.c.h.b16 %v3075
    %v3521 = vunpack.c.l.b16 %v3076
    %v3522 = vunpack.c.h.b16 %v3076
    %v3523 = vunpack.c.l.b16 %v3077
    %v3524 = vunpack.c.h.b16 %v3077
    %v3525 = vunpack.c.l.b16 %v3078
    %v3526 = vunpack.c.h.b16 %v3078
    %v3527 = vunpack.c.l.b16 %v3079
    %v3528 = vunpack.c.h.b16 %v3079
    %v3529 = vunpack.c.l.b16 %v3080
    %v3530 = vunpack.c.h.b16 %v3080
    %v3531 = vunpack.c.l.b16 %v3081
    %v3532 = vunpack.c.h.b16 %v3081
    %v3533 = vunpack.c.l.b16 %v3082
    %v3534 = vunpack.c.h.b16 %v3082
    %v3535 = vunpack.c.l.b16 %v3083
    %v3536 = vunpack.c.h.b16 %v3083
    %v3537 = vunpack.c.l.b16 %v3084
    %v3538 = vunpack.c.h.b16 %v3084
    %v3539 = vunpack.c.l.b16 %v3085
    %v3540 = vunpack.c.h.b16 %v3085
    %v3541 = vunpack.c.l.b16 %v3086
    %v3542 = vunpack.c.h.b16 %v3086
    %v3543 = vunpack.c.l.b16 %v3087
    %v3544 = vunpack.c.h.b16 %v3087
    %v3545 = vunpack.c.l.b16 %v3088
    %v3546 = vunpack.c.h.b16 %v3088
    %v3547 = vunpack.c.l.b16 %v3089
    %v3548 = vunpack.c.h.b16 %v3089
    %v3549 = vunpack.c.l.b16 %v3090
    %v3550 = vunpack.c.h.b16 %v3090
    %v3551 = vunpack.c.l.b16 %v3091
    %v3552 = vunpack.c.h.b16 %v3091
    %v3553 = vunpack.c.l.b16 %v3092
    %v3554 = vunpack.c.h.b16 %v3092
    %v3555 = vunpack.c.l.b16 %v3093
    %v3556 = vunpack.c.h.b16 %v3093
    %v3557 = vunpack.c.l.b16 %v3094
    %v3558 = vunpack.c.h.b16 %v3094
    %v3559 = vunpack.c.l.b16 %v3095
    %v3560 = vunpack.c.h.b16 %v3095
    %v3561 = vunpack.c.l.b16 %v3096
    %v3562 = vunpack.c.h.b16 %v3096
    %v3563 = vunpack.c.l.b16 %v3097
    %v3564 = vunpack.c.h.b16 %v3097
    %v3565 = vunpack.c.l.b16 %v3098
    %v3566 = vunpack.c.h.b16 %v3098
    %v3567 = vunpack.c.l.b16 %v3099
    %v3568 = vunpack.c.h.b16 %v3099
    %v3569 = vunpack.c.l.b16 %v3100
    %v3570 = vunpack.c.h.b16 %v3100
    %v3571 = vunpack.c.l.b16 %v3101
    %v3572 = vunpack.c.h.b16 %v3101
    %v3573 = vunpack.c.l.b16 %v3102
    %v3574 = vunpack.c.h.b16 %v3102
    %v3575 = vpack.c.b16 %v3327, %v3319
    %v3576 = vpack.c.b16 %v3328, %v3320
    %v3577 = vpack.c.b16 %v3329, %v3321
    %v3578 = vpack.c.b16 %v3330, %v3322
    %v3579 = vpack.c.b16 %v3331, %v3323
    %v3580 = vpack.c.b16 %v3332, %v3324
    %v3581 = vpack.c.b16 %v3333, %v3325
    %v3582 = vpack.c.b16 %v3334, %v3326
    %v3583 = vpack.c.b16 %v3343, %v3335
    %v3584 = vpack.c.b16 %v3344, %v3336
    %v3585 = vpack.c.b16 %v3345, %v3337
    %v3586 = vpack.c.b16 %v3346, %v3338
    %v3587 = vpack.c.b16 %v3347, %v3339
    %v3588 = vpack.c.b16 %v3348, %v3340
    %v3589 = vpack.c.b16 %v3349, %v3341
    %v3590 = vpack.c.b16 %v3350, %v3342
    %v3591 = vpack.c.b16 %v3359, %v3351
    %v3592 = vpack.c.b16 %v3360, %v3352
    %v3593 = vpack.c.b16 %v3361, %v3353
    %v3594 = vpack.c.b16 %v3362, %v3354
    %v3595 = vpack.c.b16 %v3363, %v3355
    %v3596 = vpack.c.b16 %v3364, %v3356
    %v3597 = vpack.c.b16 %v3365, %v3357
    %v3598 = vpack.c.b16 %v3366, %v3358
    %v3599 = vpack.c.b16 %v3375, %v3367
    %v3600 = vpack.c.b16 %v3376, %v3368
    %v3601 = vpack.c.b16 %v3377, %v3369
    %v3602 = vpack.c.b16 %v3378, %v3370
    %v3603 = vpack.c.b16 %v3379, %v3371
    %v3604 = vpack.c.b16 %v3380, %v3372
    %v3605 = vpack.c.b16 %v3381, %v3373
    %v3606 = vpack.c.b16 %v3382, %v3374
    %v3607 = vpack.c.b16 %v3391, %v3383
    %v3608 = vpack.c.b16 %v3392, %v3384
    %v3609 = vpack.c.b16 %v3393, %v3385
    %v3610 = vpack.c.b16 %v3394, %v3386
    %v3611 = vpack.c.b16 %v3395, %v3387
    %v3612 = vpack.c.b16 %v3396, %v3388
    %v3613 = vpack.c.b16 %v3397, %v3389
    %v3614 = vpack.c.b16 %v3398, %v3390
    %v3615 = vpack.c.b16 %v3407, %v3399
    %v3616 = vpack.c.b16 %v3408, %v3400
    %v3617 = vpack.c.b16 %v3409, %v3401
    %v3618 = vpack.c.b16 %v3410, %v3402
    %v3619 = vpack.c.b16 %v3411, %v3403
    %v3620 = vpack.c.b16 %v3412, %v3404
    %v3621 = vpack.c.b16 %v3413, %v3405
    %v3622 = vpack.c.b16 %v3414, %v3406
    %v3623 = vpack.c.b16 %v3423, %v3415
    %v3624 = vpack.c.b16 %v3424, %v3416
    %v3625 = vpack.c.b16 %v3425, %v3417
    %v3626 = vpack.c.b16 %v3426, %v3418
    %v3627 = vpack.c.b16 %v3427, %v3419
    %v3628 = vpack.c.b16 %v3428, %v3420
    %v3629 = vpack.c.b16 %v3429, %v3421
    %v3630 = vpack.c.b16 %v3430, %v3422
    %v3631 = vpack.c.b16 %v3439, %v3431
    %v3632 = vpack.c.b16 %v3440, %v3432
    %v3633 = vpack.c.b16 %v3441, %v3433
    %v3634 = vpack.c.b16 %v3442, %v3434
    %v3635 = vpack.c.b16 %v3443, %v3435
    %v3636 = vpack.c.b16 %v3444, %v3436
    %v3637 = vpack.c.b16 %v3445, %v3437
    %v3638 = vpack.c.b16 %v3446, %v3438
    %v3639 = vpack.c.b16 %v3455, %v3447
    %v3640 = vpack.c.b16 %v3456, %v3448
    %v3641 = vpack.c.b16 %v3457, %v3449
    %v3642 = vpack.c.b16 %v3458, %v3450
    %v3643 = vpack.c.b16 %v3459, %v3451
    %v3644 = vpack.c.b16 %v3460, %v3452
    %v3645 = vpack.c.b16 %v3461, %v3453
    %v3646 = vpack.c.b16 %v3462, %v3454
    %v3647 = vpack.c.b16 %v3471, %v3463
    %v3648 = vpack.c.b16 %v3472, %v3464
    %v3649 = vpack.c.b16 %v3473, %v3465
    %v3650 = vpack.c.b16 %v3474, %v3466
    %v3651 = vpack.c.b16 %v3475, %v3467
    %v3652 = vpack.c.b16 %v3476, %v3468
    %v3653 = vpack.c.b16 %v3477, %v3469
    %v3654 = vpack.c.b16 %v3478, %v3470
    %v3655 = vpack.c.b16 %v3487, %v3479
    %v3656 = vpack.c.b16 %v3488, %v3480
    %v3657 = vpack.c.b16 %v3489, %v3481
    %v3658 = vpack.c.b16 %v3490, %v3482
    %v3659 = vpack.c.b16 %v3491, %v3483
    %v3660 = vpack.c.b16 %v3492, %v3484
    %v3661 = vpack.c.b16 %v3493, %v3485
    %v3662 = vpack.c.b16 %v3494, %v3486
    %v3663 = vpack.c.b16 %v3503, %v3495
    %v3664 = vpack.c.b16 %v3504, %v3496
    %v3665 = vpack.c.b16 %v3505, %v3497
    %v3666 = vpack.c.b16 %v3506, %v3498
    %v3667 = vpack.c.b16 %v3507, %v3499
    %v3668 = vpack.c.b16 %v3508, %v3500
    %v3669 = vpack.c.b16 %v3509, %v3501
    %v3670 = vpack.c.b16 %v3510, %v3502
    %v3671 = vpack.c.b16 %v3519, %v3511
    %v3672 = vpack.c.b16 %v3520, %v3512
    %v3673 = vpack.c.b16 %v3521, %v3513
    %v3674 = vpack.c.b16 %v3522, %v3514
    %v3675 = vpack.c.b16 %v3523, %v3515
    %v3676 = vpack.c.b16 %v3524, %v3516
    %v3677 = vpack.c.b16 %v3525, %v3517
    %v3678 = vpack.c.b16 %v3526, %v3518
    %v3679 = vpack.c.b16 %v3535, %v3527
    %v3680 = vpack.c.b16 %v3536, %v3528
    %v3681 = vpack.c.b16 %v3537, %v3529
    %v3682 = vpack.c.b16 %v3538, %v3530
    %v3683 = vpack.c.b16 %v3539, %v3531
    %v3684 = vpack.c.b16 %v3540, %v3532
    %v3685 = vpack.c.b16 %v3541, %v3533
    %v3686 = vpack.c.b16 %v3542, %v3534
    %v3687 = vpack.c.b16 %v3551, %v3543
    %v3688 = vpack.c.b16 %v3552, %v3544
    %v3689 = vpack.c.b16 %v3553, %v3545
    %v3690 = vpack.c.b16 %v3554, %v3546
    %v3691 = vpack.c.b16 %v3555, %v3547
    %v3692 = vpack.c.b16 %v3556, %v3548
    %v3693 = vpack.c.b16 %v3557, %v3549
    %v3694 = vpack.c.b16 %v3558, %v3550
    %v3695 = vpack.c.b16 %v3567, %v3559
    %v3696 = vpack.c.b16 %v3568, %v3560
    %v3697 = vpack.c.b16 %v3569, %v3561
    %v3698 = vpack.c.b16 %v3570, %v3562
    %v3699 = vpack.c.b16 %v3571, %v3563
    %v3700 = vpack.c.b16 %v3572, %v3564
    %v3701 = vpack.c.b16 %v3573, %v3565
    %v3702 = vpack.c.b16 %v3574, %v3566
    %3831 = vmatprep.subr.bf16.mxu0 %v3632
    %3832 = vmatpush1.bf16.msra.mxu0 %v3631
    %3833 = vmatprep.subr.bf16.mxu0 %v3624
    %3834 = vmatpush1.bf16.msra.mxu0 %v3623
    %3835 = vmatprep.subr.bf16.mxu0 %v3616
    %3836 = vmatpush1.bf16.msra.mxu0 %v3615
    %3837 = vmatprep.subr.bf16.mxu0 %v3608
    %3838 = vmatpush1.bf16.msra.mxu0 %v3607
    %3839 = vmatprep.subr.bf16.mxu0 %v3600
    %3840 = vmatpush1.bf16.msra.mxu0 %v3599
    %3841 = vmatprep.subr.bf16.mxu0 %v3592
    %3842 = vmatpush1.bf16.msra.mxu0 %v3591
    %3843 = vmatprep.subr.bf16.mxu0 %v3584
    %3844 = vmatpush1.bf16.msra.mxu0 %v3583
    %3845 = vmatprep.subr.bf16.mxu0 %v3576
    %3846 = vmatpush1.bf16.msra.mxu0 %v3575
    %3847 = vmatprep.subr.bf16.mxu0 %v3696
    %3848 = vmatpush2.bf16.msra.mxu0 %v3695
    %3849 = vmatprep.subr.bf16.mxu0 %v3688
    %3850 = vmatpush2.bf16.msra.mxu0 %v3687
    %3851 = vmatprep.subr.bf16.mxu0 %v3680
    %3852 = vmatpush2.bf16.msra.mxu0 %v3679
    %3853 = vmatprep.subr.bf16.mxu0 %v3672
    %3854 = vmatpush2.bf16.msra.mxu0 %v3671
    %3855 = vmatprep.subr.bf16.mxu0 %v3664
    %3856 = vmatpush2.bf16.msra.mxu0 %v3663
    %3857 = vmatprep.subr.bf16.mxu0 %v3656
    %3858 = vmatpush2.bf16.msra.mxu0 %v3655
    %3859 = vmatprep.subr.bf16.mxu0 %v3648
    %3860 = vmatpush2.bf16.msra.mxu0 %v3647
    %3861 = vmatprep.subr.bf16.mxu0 %v3640
    %3862 = vmatpush2.bf16.msra.mxu0 %v3639
    %3863 = vmatprep.mubr.bf16.mxu0 %v3188
    %3864 = vmatmul.mubr.bf16.gmra.mxu0 %v3187
    %v3865 = vpop.f32.mrf.mxu0
    %v3866 = vadd.f32 0.0, %v3865
    %v3867 = vpop.f32.mrf.mxu0
    %v3868 = vadd.f32 0.0, %v3867
    %v3869 = vpop.f32.mrf.mxu0
    %v3870 = vpop.f32.mrf.mxu0
    %3871 = vdwg.mxu0
    %3872 = vmatprep.subr.bf16.mxu0 %v3634
    %3873 = vmatpush1.bf16.msra.mxu0 %v3633
    %3874 = vmatprep.subr.bf16.mxu0 %v3626
    %3875 = vmatpush1.bf16.msra.mxu0 %v3625
    %3876 = vmatprep.subr.bf16.mxu0 %v3618
    %3877 = vmatpush1.bf16.msra.mxu0 %v3617
    %3878 = vmatprep.subr.bf16.mxu0 %v3610
    %3879 = vmatpush1.bf16.msra.mxu0 %v3609
    %3880 = vmatprep.subr.bf16.mxu0 %v3602
    %3881 = vmatpush1.bf16.msra.mxu0 %v3601
    %3882 = vmatprep.subr.bf16.mxu0 %v3594
    %3883 = vmatpush1.bf16.msra.mxu0 %v3593
    %3884 = vmatprep.subr.bf16.mxu0 %v3586
    %3885 = vmatpush1.bf16.msra.mxu0 %v3585
    %3886 = vmatprep.subr.bf16.mxu0 %v3578
    %3887 = vmatpush1.bf16.msra.mxu0 %v3577
    %3888 = vmatprep.subr.bf16.mxu0 %v3698
    %3889 = vmatpush2.bf16.msra.mxu0 %v3697
    %3890 = vmatprep.subr.bf16.mxu0 %v3690
    %3891 = vmatpush2.bf16.msra.mxu0 %v3689
    %3892 = vmatprep.subr.bf16.mxu0 %v3682
    %3893 = vmatpush2.bf16.msra.mxu0 %v3681
    %3894 = vmatprep.subr.bf16.mxu0 %v3674
    %3895 = vmatpush2.bf16.msra.mxu0 %v3673
    %3896 = vmatprep.subr.bf16.mxu0 %v3666
    %3897 = vmatpush2.bf16.msra.mxu0 %v3665
    %3898 = vmatprep.subr.bf16.mxu0 %v3658
    %3899 = vmatpush2.bf16.msra.mxu0 %v3657
    %3900 = vmatprep.subr.bf16.mxu0 %v3650
    %3901 = vmatpush2.bf16.msra.mxu0 %v3649
    %3902 = vmatprep.subr.bf16.mxu0 %v3642
    %3903 = vmatpush2.bf16.msra.mxu0 %v3641
    %3904 = vmatprep.mubr.bf16.mxu0 %v3188
    %3905 = vmatmul.mubr.bf16.gmra.mxu0 %v3187
    %v3906 = vpop.f32.mrf.mxu0
    %v3907 = vadd.f32 0.0, %v3906
    %v3908 = vpop.f32.mrf.mxu0
    %v3909 = vadd.f32 0.0, %v3908
    %v3910 = vpop.f32.mrf.mxu0
    %v3911 = vpop.f32.mrf.mxu0
    %3912 = vdwg.mxu0
    %3913 = vmatprep.subr.bf16.mxu0 %v3636
    %3914 = vmatpush1.bf16.msra.mxu0 %v3635
    %3915 = vmatprep.subr.bf16.mxu0 %v3628
    %3916 = vmatpush1.bf16.msra.mxu0 %v3627
    %3917 = vmatprep.subr.bf16.mxu0 %v3620
    %3918 = vmatpush1.bf16.msra.mxu0 %v3619
    %3919 = vmatprep.subr.bf16.mxu0 %v3612
    %3920 = vmatpush1.bf16.msra.mxu0 %v3611
    %3921 = vmatprep.subr.bf16.mxu0 %v3604
    %3922 = vmatpush1.bf16.msra.mxu0 %v3603
    %3923 = vmatprep.subr.bf16.mxu0 %v3596
    %3924 = vmatpush1.bf16.msra.mxu0 %v3595
    %3925 = vmatprep.subr.bf16.mxu0 %v3588
    %3926 = vmatpush1.bf16.msra.mxu0 %v3587
    %3927 = vmatprep.subr.bf16.mxu0 %v3580
    %3928 = vmatpush1.bf16.msra.mxu0 %v3579
    %3929 = vmatprep.subr.bf16.mxu0 %v3700
    %3930 = vmatpush2.bf16.msra.mxu0 %v3699
    %3931 = vmatprep.subr.bf16.mxu0 %v3692
    %3932 = vmatpush2.bf16.msra.mxu0 %v3691
    %3933 = vmatprep.subr.bf16.mxu0 %v3684
    %3934 = vmatpush2.bf16.msra.mxu0 %v3683
    %3935 = vmatprep.subr.bf16.mxu0 %v3676
    %3936 = vmatpush2.bf16.msra.mxu0 %v3675
    %3937 = vmatprep.subr.bf16.mxu0 %v3668
    %3938 = vmatpush2.bf16.msra.mxu0 %v3667
    %3939 = vmatprep.subr.bf16.mxu0 %v3660
    %3940 = vmatpush2.bf16.msra.mxu0 %v3659
    %3941 = vmatprep.subr.bf16.mxu0 %v3652
    %3942 = vmatpush2.bf16.msra.mxu0 %v3651
    %3943 = vmatprep.subr.bf16.mxu0 %v3644
    %3944 = vmatpush2.bf16.msra.mxu0 %v3643
    %3945 = vmatprep.mubr.bf16.mxu0 %v3188
    %3946 = vmatmul.mubr.bf16.gmra.mxu0 %v3187
    %v3947 = vpop.f32.mrf.mxu0
    %v3948 = vadd.f32 0.0, %v3947
    %v3949 = vpop.f32.mrf.mxu0
    %v3950 = vadd.f32 0.0, %v3949
    %v3951 = vpop.f32.mrf.mxu0
    %v3952 = vpop.f32.mrf.mxu0
    %3953 = vdwg.mxu0
    %3954 = vmatprep.subr.bf16.mxu0 %v3638
    %3955 = vmatpush1.bf16.msra.mxu0 %v3637
    %3956 = vmatprep.subr.bf16.mxu0 %v3630
    %3957 = vmatpush1.bf16.msra.mxu0 %v3629
    %3958 = vmatprep.subr.bf16.mxu0 %v3622
    %3959 = vmatpush1.bf16.msra.mxu0 %v3621
    %3960 = vmatprep.subr.bf16.mxu0 %v3614
    %3961 = vmatpush1.bf16.msra.mxu0 %v3613
    %3962 = vmatprep.subr.bf16.mxu0 %v3606
    %3963 = vmatpush1.bf16.msra.mxu0 %v3605
    %3964 = vmatprep.subr.bf16.mxu0 %v3598
    %3965 = vmatpush1.bf16.msra.mxu0 %v3597
    %3966 = vmatprep.subr.bf16.mxu0 %v3590
    %3967 = vmatpush1.bf16.msra.mxu0 %v3589
    %3968 = vmatprep.subr.bf16.mxu0 %v3582
    %3969 = vmatpush1.bf16.msra.mxu0 %v3581
    %3970 = vmatprep.subr.bf16.mxu0 %v3702
    %3971 = vmatpush2.bf16.msra.mxu0 %v3701
    %3972 = vmatprep.subr.bf16.mxu0 %v3694
    %3973 = vmatpush2.bf16.msra.mxu0 %v3693
    %3974 = vmatprep.subr.bf16.mxu0 %v3686
    %3975 = vmatpush2.bf16.msra.mxu0 %v3685
    %3976 = vmatprep.subr.bf16.mxu0 %v3678
    %3977 = vmatpush2.bf16.msra.mxu0 %v3677
    %3978 = vmatprep.subr.bf16.mxu0 %v3670
    %3979 = vmatpush2.bf16.msra.mxu0 %v3669
    %3980 = vmatprep.subr.bf16.mxu0 %v3662
    %3981 = vmatpush2.bf16.msra.mxu0 %v3661
    %3982 = vmatprep.subr.bf16.mxu0 %v3654
    %3983 = vmatpush2.bf16.msra.mxu0 %v3653
    %3984 = vmatprep.subr.bf16.mxu0 %v3646
    %3985 = vmatpush2.bf16.msra.mxu0 %v3645
    %3986 = vmatprep.mubr.bf16.mxu0 %v3188
    %3987 = vmatmul.mubr.bf16.gmra.mxu0 %v3187
    %v3988 = vpop.f32.mrf.mxu0
    %v3989 = vadd.f32 0.0, %v3988
    %v3990 = vpop.f32.mrf.mxu0
    %v3991 = vadd.f32 0.0, %v3990
    %v3992 = vpop.f32.mrf.mxu0
    %v3993 = vpop.f32.mrf.mxu0
    %3994 = vdwg.mxu0
    %v3995 = vadd.f32 %v2958, %v3866
    %v3996 = vadd.f32 %v2959, %v3868
    %v3997 = vadd.f32 %v2960, %v3907
    %v3998 = vadd.f32 %v2961, %v3909
    %v3999 = vadd.f32 %v2962, %v3948
    %v4000 = vadd.f32 %v2963, %v3950
    %v4001 = vadd.f32 %v2964, %v3989
    %v4002 = vadd.f32 %v2965, %v3991
    %4003 = vst [vmem:[#allocation3] sm:$0xff] %v3995
    %4004 = vst [vmem:[#allocation3 + $0x8] sm:$0xff] %v3996
    %4005 = vst [vmem:[#allocation3 + $0x10] sm:$0xff] %v3997
    %4006 = vst [vmem:[#allocation3 + $0x18] sm:$0xff] %v3998
    %4007 = vst [vmem:[#allocation3 + $0x20] sm:$0xff] %v3999
    %4008 = vst [vmem:[#allocation3 + $0x28] sm:$0xff] %v4000
    %4009 = vst [vmem:[#allocation3 + $0x30] sm:$0xff] %v4001
    %4010 = vst [vmem:[#allocation3 + $0x38] sm:$0xff] %v4002
    %v4011 = vld [vmem:[#allocation3] sm:$0xff]
    %v4012 = vld [vmem:[#allocation3 + $0x8] sm:$0xff]
    %v4013 = vld [vmem:[#allocation3 + $0x10] sm:$0xff]
    %v4014 = vld [vmem:[#allocation3 + $0x18] sm:$0xff]
    %v4015 = vld [vmem:[#allocation3 + $0x20] sm:$0xff]
    %v4016 = vld [vmem:[#allocation3 + $0x28] sm:$0xff]
    %v4017 = vld [vmem:[#allocation3 + $0x30] sm:$0xff]
    %v4018 = vld [vmem:[#allocation3 + $0x38] sm:$0xff]
    %v4019 = vld [vmem:[#allocation2] sm:$0x22]
    %v4020 = vld [vmem:[#allocation2 + $0x8] sm:$0x22]
    %v4021 = vld [vmem:[#allocation2 + $0x10] sm:$0x22]
    %v4022 = vld [vmem:[#allocation2 + $0x18] sm:$0x22]
    %v4023 = vld [vmem:[#allocation2 + $0x20] sm:$0x22]
    %v4024 = vld [vmem:[#allocation2 + $0x28] sm:$0x22]
    %v4025 = vld [vmem:[#allocation2 + $0x30] sm:$0x22]
    %v4026 = vld [vmem:[#allocation2 + $0x38] sm:$0x22]
    %s4027 = scalar_lea.vmem [#allocation6], 3072
    %v4028 = vld [vmem:[%s4027] sm:$0xff]
    %v4029 = vld [vmem:[%s4027 + $0x8] sm:$0xff]
    %v4030 = vld [vmem:[%s4027 + $0x10] sm:$0xff]
    %v4031 = vld [vmem:[%s4027 + $0x18] sm:$0xff]
    %v4032 = vld [vmem:[%s4027 + $0x20] sm:$0xff]
    %v4033 = vld [vmem:[%s4027 + $0x28] sm:$0xff]
    %v4034 = vld [vmem:[%s4027 + $0x30] sm:$0xff]
    %v4035 = vld [vmem:[%s4027 + $0x38] sm:$0xff]
    %v4036 = vld [vmem:[%s4027 + $0x40] sm:$0xff]
    %v4037 = vld [vmem:[%s4027 + $0x48] sm:$0xff]
    %v4038 = vld [vmem:[%s4027 + $0x50] sm:$0xff]
    %v4039 = vld [vmem:[%s4027 + $0x58] sm:$0xff]
    %v4040 = vld [vmem:[%s4027 + $0x60] sm:$0xff]
    %v4041 = vld [vmem:[%s4027 + $0x68] sm:$0xff]
    %v4042 = vld [vmem:[%s4027 + $0x70] sm:$0xff]
    %v4043 = vld [vmem:[%s4027 + $0x78] sm:$0xff]
    %v4044 = vld [vmem:[%s4027 + $0x80] sm:$0xff]
    %v4045 = vld [vmem:[%s4027 + $0x88] sm:$0xff]
    %v4046 = vld [vmem:[%s4027 + $0x90] sm:$0xff]
    %v4047 = vld [vmem:[%s4027 + $0x98] sm:$0xff]
    %v4048 = vld [vmem:[%s4027 + $0xa0] sm:$0xff]
    %v4049 = vld [vmem:[%s4027 + $0xa8] sm:$0xff]
    %v4050 = vld [vmem:[%s4027 + $0xb0] sm:$0xff]
    %v4051 = vld [vmem:[%s4027 + $0xb8] sm:$0xff]
    %v4052 = vld [vmem:[%s4027 + $0xc0] sm:$0xff]
    %v4053 = vld [vmem:[%s4027 + $0xc8] sm:$0xff]
    %v4054 = vld [vmem:[%s4027 + $0xd0] sm:$0xff]
    %v4055 = vld [vmem:[%s4027 + $0xd8] sm:$0xff]
    %v4056 = vld [vmem:[%s4027 + $0xe0] sm:$0xff]
    %v4057 = vld [vmem:[%s4027 + $0xe8] sm:$0xff]
    %v4058 = vld [vmem:[%s4027 + $0xf0] sm:$0xff]
    %v4059 = vld [vmem:[%s4027 + $0xf8] sm:$0xff]
    %v4060 = vld [vmem:[%s4027 + $0x100] sm:$0xff]
    %v4061 = vld [vmem:[%s4027 + $0x108] sm:$0xff]
    %v4062 = vld [vmem:[%s4027 + $0x110] sm:$0xff]
    %v4063 = vld [vmem:[%s4027 + $0x118] sm:$0xff]
    %v4064 = vld [vmem:[%s4027 + $0x120] sm:$0xff]
    %v4065 = vld [vmem:[%s4027 + $0x128] sm:$0xff]
    %v4066 = vld [vmem:[%s4027 + $0x130] sm:$0xff]
    %v4067 = vld [vmem:[%s4027 + $0x138] sm:$0xff]
    %v4068 = vld [vmem:[%s4027 + $0x140] sm:$0xff]
    %v4069 = vld [vmem:[%s4027 + $0x148] sm:$0xff]
    %v4070 = vld [vmem:[%s4027 + $0x150] sm:$0xff]
    %v4071 = vld [vmem:[%s4027 + $0x158] sm:$0xff]
    %v4072 = vld [vmem:[%s4027 + $0x160] sm:$0xff]
    %v4073 = vld [vmem:[%s4027 + $0x168] sm:$0xff]
    %v4074 = vld [vmem:[%s4027 + $0x170] sm:$0xff]
    %v4075 = vld [vmem:[%s4027 + $0x178] sm:$0xff]
    %v4076 = vld [vmem:[%s4027 + $0x180] sm:$0xff]
    %v4077 = vld [vmem:[%s4027 + $0x188] sm:$0xff]
    %v4078 = vld [vmem:[%s4027 + $0x190] sm:$0xff]
    %v4079 = vld [vmem:[%s4027 + $0x198] sm:$0xff]
    %v4080 = vld [vmem:[%s4027 + $0x1a0] sm:$0xff]
    %v4081 = vld [vmem:[%s4027 + $0x1a8] sm:$0xff]
    %v4082 = vld [vmem:[%s4027 + $0x1b0] sm:$0xff]
    %v4083 = vld [vmem:[%s4027 + $0x1b8] sm:$0xff]
    %v4084 = vld [vmem:[%s4027 + $0x1c0] sm:$0xff]
    %v4085 = vld [vmem:[%s4027 + $0x1c8] sm:$0xff]
    %v4086 = vld [vmem:[%s4027 + $0x1d0] sm:$0xff]
    %v4087 = vld [vmem:[%s4027 + $0x1d8] sm:$0xff]
    %v4088 = vld [vmem:[%s4027 + $0x1e0] sm:$0xff]
    %v4089 = vld [vmem:[%s4027 + $0x1e8] sm:$0xff]
    %v4090 = vld [vmem:[%s4027 + $0x1f0] sm:$0xff]
    %v4091 = vld [vmem:[%s4027 + $0x1f8] sm:$0xff]
    %v4092 = vld [vmem:[%s4027 + $0x200] sm:$0xff]
    %v4093 = vld [vmem:[%s4027 + $0x208] sm:$0xff]
    %v4094 = vld [vmem:[%s4027 + $0x210] sm:$0xff]
    %v4095 = vld [vmem:[%s4027 + $0x218] sm:$0xff]
    %v4096 = vld [vmem:[%s4027 + $0x220] sm:$0xff]
    %v4097 = vld [vmem:[%s4027 + $0x228] sm:$0xff]
    %v4098 = vld [vmem:[%s4027 + $0x230] sm:$0xff]
    %v4099 = vld [vmem:[%s4027 + $0x238] sm:$0xff]
    %v4100 = vld [vmem:[%s4027 + $0x240] sm:$0xff]
    %v4101 = vld [vmem:[%s4027 + $0x248] sm:$0xff]
    %v4102 = vld [vmem:[%s4027 + $0x250] sm:$0xff]
    %v4103 = vld [vmem:[%s4027 + $0x258] sm:$0xff]
    %v4104 = vld [vmem:[%s4027 + $0x260] sm:$0xff]
    %v4105 = vld [vmem:[%s4027 + $0x268] sm:$0xff]
    %v4106 = vld [vmem:[%s4027 + $0x270] sm:$0xff]
    %v4107 = vld [vmem:[%s4027 + $0x278] sm:$0xff]
    %v4108 = vld [vmem:[%s4027 + $0x280] sm:$0xff]
    %v4109 = vld [vmem:[%s4027 + $0x288] sm:$0xff]
    %v4110 = vld [vmem:[%s4027 + $0x290] sm:$0xff]
    %v4111 = vld [vmem:[%s4027 + $0x298] sm:$0xff]
    %v4112 = vld [vmem:[%s4027 + $0x2a0] sm:$0xff]
    %v4113 = vld [vmem:[%s4027 + $0x2a8] sm:$0xff]
    %v4114 = vld [vmem:[%s4027 + $0x2b0] sm:$0xff]
    %v4115 = vld [vmem:[%s4027 + $0x2b8] sm:$0xff]
    %v4116 = vld [vmem:[%s4027 + $0x2c0] sm:$0xff]
    %v4117 = vld [vmem:[%s4027 + $0x2c8] sm:$0xff]
    %v4118 = vld [vmem:[%s4027 + $0x2d0] sm:$0xff]
    %v4119 = vld [vmem:[%s4027 + $0x2d8] sm:$0xff]
    %v4120 = vld [vmem:[%s4027 + $0x2e0] sm:$0xff]
    %v4121 = vld [vmem:[%s4027 + $0x2e8] sm:$0xff]
    %v4122 = vld [vmem:[%s4027 + $0x2f0] sm:$0xff]
    %v4123 = vld [vmem:[%s4027 + $0x2f8] sm:$0xff]
    %v4124 = vld [vmem:[%s4027 + $0x300] sm:$0xff]
    %v4125 = vld [vmem:[%s4027 + $0x308] sm:$0xff]
    %v4126 = vld [vmem:[%s4027 + $0x310] sm:$0xff]
    %v4127 = vld [vmem:[%s4027 + $0x318] sm:$0xff]
    %v4128 = vld [vmem:[%s4027 + $0x320] sm:$0xff]
    %v4129 = vld [vmem:[%s4027 + $0x328] sm:$0xff]
    %v4130 = vld [vmem:[%s4027 + $0x330] sm:$0xff]
    %v4131 = vld [vmem:[%s4027 + $0x338] sm:$0xff]
    %v4132 = vld [vmem:[%s4027 + $0x340] sm:$0xff]
    %v4133 = vld [vmem:[%s4027 + $0x348] sm:$0xff]
    %v4134 = vld [vmem:[%s4027 + $0x350] sm:$0xff]
    %v4135 = vld [vmem:[%s4027 + $0x358] sm:$0xff]
    %v4136 = vld [vmem:[%s4027 + $0x360] sm:$0xff]
    %v4137 = vld [vmem:[%s4027 + $0x368] sm:$0xff]
    %v4138 = vld [vmem:[%s4027 + $0x370] sm:$0xff]
    %v4139 = vld [vmem:[%s4027 + $0x378] sm:$0xff]
    %v4140 = vld [vmem:[%s4027 + $0x380] sm:$0xff]
    %v4141 = vld [vmem:[%s4027 + $0x388] sm:$0xff]
    %v4142 = vld [vmem:[%s4027 + $0x390] sm:$0xff]
    %v4143 = vld [vmem:[%s4027 + $0x398] sm:$0xff]
    %v4144 = vld [vmem:[%s4027 + $0x3a0] sm:$0xff]
    %v4145 = vld [vmem:[%s4027 + $0x3a8] sm:$0xff]
    %v4146 = vld [vmem:[%s4027 + $0x3b0] sm:$0xff]
    %v4147 = vld [vmem:[%s4027 + $0x3b8] sm:$0xff]
    %v4148 = vld [vmem:[%s4027 + $0x3c0] sm:$0xff]
    %v4149 = vld [vmem:[%s4027 + $0x3c8] sm:$0xff]
    %v4150 = vld [vmem:[%s4027 + $0x3d0] sm:$0xff]
    %v4151 = vld [vmem:[%s4027 + $0x3d8] sm:$0xff]
    %v4152 = vld [vmem:[%s4027 + $0x3e0] sm:$0xff]
    %v4153 = vld [vmem:[%s4027 + $0x3e8] sm:$0xff]
    %v4154 = vld [vmem:[%s4027 + $0x3f0] sm:$0xff]
    %v4155 = vld [vmem:[%s4027 + $0x3f8] sm:$0xff]
    %v4164 = vunpack.c.l.b16 %v4019
    %v4165 = vunpack.c.h.b16 %v4019
    %v4166 = vunpack.c.l.b16 %v4020
    %v4167 = vunpack.c.h.b16 %v4020
    %v4168 = vunpack.c.l.b16 %v4021
    %v4169 = vunpack.c.h.b16 %v4021
    %v4170 = vunpack.c.l.b16 %v4022
    %v4171 = vunpack.c.h.b16 %v4022
    %v4172 = vunpack.c.l.b16 %v4023
    %v4173 = vunpack.c.h.b16 %v4023
    %v4174 = vunpack.c.l.b16 %v4024
    %v4175 = vunpack.c.h.b16 %v4024
    %v4176 = vunpack.c.l.b16 %v4025
    %v4177 = vunpack.c.h.b16 %v4025
    %v4178 = vunpack.c.l.b16 %v4026
    %v4179 = vunpack.c.h.b16 %v4026
    %v4180 = vpack.c.b16 %v4164, %v4164
    %v4181 = vpack.c.b16 %v4165, %v4165
    %v4182 = vpack.c.b16 %v4166, %v4166
    %v4183 = vpack.c.b16 %v4167, %v4167
    %v4184 = vpack.c.b16 %v4168, %v4168
    %v4185 = vpack.c.b16 %v4169, %v4169
    %v4186 = vpack.c.b16 %v4170, %v4170
    %v4187 = vpack.c.b16 %v4171, %v4171
    %v4188 = vpack.c.b16 %v4172, %v4172
    %v4189 = vpack.c.b16 %v4173, %v4173
    %v4190 = vpack.c.b16 %v4174, %v4174
    %v4191 = vpack.c.b16 %v4175, %v4175
    %v4192 = vpack.c.b16 %v4176, %v4176
    %v4193 = vpack.c.b16 %v4177, %v4177
    %v4194 = vpack.c.b16 %v4178, %v4178
    %v4195 = vpack.c.b16 %v4179, %v4179
    %v4196 = vunpack.c.l.b16 %v4180
    %v4197 = vunpack.c.l.b16 %v4181
    %v4198 = vunpack.c.l.b16 %v4182
    %v4199 = vunpack.c.l.b16 %v4183
    %v4200 = vunpack.c.l.b16 %v4184
    %v4201 = vunpack.c.l.b16 %v4185
    %v4202 = vunpack.c.l.b16 %v4186
    %v4203 = vunpack.c.l.b16 %v4187
    %v4204 = vunpack.c.l.b16 %v4188
    %v4205 = vunpack.c.l.b16 %v4189
    %v4206 = vunpack.c.l.b16 %v4190
    %v4207 = vunpack.c.l.b16 %v4191
    %v4208 = vunpack.c.l.b16 %v4192
    %v4209 = vunpack.c.l.b16 %v4193
    %v4210 = vunpack.c.l.b16 %v4194
    %v4211 = vunpack.c.l.b16 %v4195
    %v4212 = vrot.slane %v4196, 3
    %v4213 = vrot.slane %v4198, 2
    %v4214 = vsel %vm1047, %v4213, %v4212
    %v4215 = vrot.slane %v4200, 1
    %v4216 = vsel %vm1050, %v4215, %v4214
    %v4217 = vsel %vm1053, %v4202, %v4216
    %v4218 = vrot.slane %v4204, 7
    %v4219 = vsel %vm1056, %v4218, %v4217
    %v4220 = vrot.slane %v4206, 6
    %v4221 = vsel %vm1059, %v4220, %v4219
    %v4222 = vrot.slane %v4208, 5
    %v4223 = vsel %vm1062, %v4222, %v4221
    %v4224 = vrot.slane %v4210, 4
    %v4225 = vsel %vm1065, %v4224, %v4223
    %v4226 = vrot.slane %v4197, 3
    %v4227 = vrot.slane %v4199, 2
    %v4228 = vsel %vm1047, %v4227, %v4226
    %v4229 = vrot.slane %v4201, 1
    %v4230 = vsel %vm1050, %v4229, %v4228
    %v4231 = vsel %vm1053, %v4203, %v4230
    %v4232 = vrot.slane %v4205, 7
    %v4233 = vsel %vm1056, %v4232, %v4231
    %v4234 = vrot.slane %v4207, 6
    %v4235 = vsel %vm1059, %v4234, %v4233
    %v4236 = vrot.slane %v4209, 5
    %v4237 = vsel %vm1062, %v4236, %v4235
    %v4238 = vrot.slane %v4211, 4
    %v4239 = vsel %vm1065, %v4238, %v4237
    %v4240 = vpack.c.b16 %v4225, %v4225
    %v4241 = vpack.c.b16 %v4239, %v4239
    %v4372 = vunpack.c.l.b16 %v4028
    %v4373 = vunpack.c.h.b16 %v4028
    %v4374 = vunpack.c.l.b16 %v4029
    %v4375 = vunpack.c.h.b16 %v4029
    %v4376 = vunpack.c.l.b16 %v4030
    %v4377 = vunpack.c.h.b16 %v4030
    %v4378 = vunpack.c.l.b16 %v4031
    %v4379 = vunpack.c.h.b16 %v4031
    %v4380 = vunpack.c.l.b16 %v4032
    %v4381 = vunpack.c.h.b16 %v4032
    %v4382 = vunpack.c.l.b16 %v4033
    %v4383 = vunpack.c.h.b16 %v4033
    %v4384 = vunpack.c.l.b16 %v4034
    %v4385 = vunpack.c.h.b16 %v4034
    %v4386 = vunpack.c.l.b16 %v4035
    %v4387 = vunpack.c.h.b16 %v4035
    %v4388 = vunpack.c.l.b16 %v4036
    %v4389 = vunpack.c.h.b16 %v4036
    %v4390 = vunpack.c.l.b16 %v4037
    %v4391 = vunpack.c.h.b16 %v4037
    %v4392 = vunpack.c.l.b16 %v4038
    %v4393 = vunpack.c.h.b16 %v4038
    %v4394 = vunpack.c.l.b16 %v4039
    %v4395 = vunpack.c.h.b16 %v4039
    %v4396 = vunpack.c.l.b16 %v4040
    %v4397 = vunpack.c.h.b16 %v4040
    %v4398 = vunpack.c.l.b16 %v4041
    %v4399 = vunpack.c.h.b16 %v4041
    %v4400 = vunpack.c.l.b16 %v4042
    %v4401 = vunpack.c.h.b16 %v4042
    %v4402 = vunpack.c.l.b16 %v4043
    %v4403 = vunpack.c.h.b16 %v4043
    %v4404 = vunpack.c.l.b16 %v4044
    %v4405 = vunpack.c.h.b16 %v4044
    %v4406 = vunpack.c.l.b16 %v4045
    %v4407 = vunpack.c.h.b16 %v4045
    %v4408 = vunpack.c.l.b16 %v4046
    %v4409 = vunpack.c.h.b16 %v4046
    %v4410 = vunpack.c.l.b16 %v4047
    %v4411 = vunpack.c.h.b16 %v4047
    %v4412 = vunpack.c.l.b16 %v4048
    %v4413 = vunpack.c.h.b16 %v4048
    %v4414 = vunpack.c.l.b16 %v4049
    %v4415 = vunpack.c.h.b16 %v4049
    %v4416 = vunpack.c.l.b16 %v4050
    %v4417 = vunpack.c.h.b16 %v4050
    %v4418 = vunpack.c.l.b16 %v4051
    %v4419 = vunpack.c.h.b16 %v4051
    %v4420 = vunpack.c.l.b16 %v4052
    %v4421 = vunpack.c.h.b16 %v4052
    %v4422 = vunpack.c.l.b16 %v4053
    %v4423 = vunpack.c.h.b16 %v4053
    %v4424 = vunpack.c.l.b16 %v4054
    %v4425 = vunpack.c.h.b16 %v4054
    %v4426 = vunpack.c.l.b16 %v4055
    %v4427 = vunpack.c.h.b16 %v4055
    %v4428 = vunpack.c.l.b16 %v4056
    %v4429 = vunpack.c.h.b16 %v4056
    %v4430 = vunpack.c.l.b16 %v4057
    %v4431 = vunpack.c.h.b16 %v4057
    %v4432 = vunpack.c.l.b16 %v4058
    %v4433 = vunpack.c.h.b16 %v4058
    %v4434 = vunpack.c.l.b16 %v4059
    %v4435 = vunpack.c.h.b16 %v4059
    %v4436 = vunpack.c.l.b16 %v4060
    %v4437 = vunpack.c.h.b16 %v4060
    %v4438 = vunpack.c.l.b16 %v4061
    %v4439 = vunpack.c.h.b16 %v4061
    %v4440 = vunpack.c.l.b16 %v4062
    %v4441 = vunpack.c.h.b16 %v4062
    %v4442 = vunpack.c.l.b16 %v4063
    %v4443 = vunpack.c.h.b16 %v4063
    %v4444 = vunpack.c.l.b16 %v4064
    %v4445 = vunpack.c.h.b16 %v4064
    %v4446 = vunpack.c.l.b16 %v4065
    %v4447 = vunpack.c.h.b16 %v4065
    %v4448 = vunpack.c.l.b16 %v4066
    %v4449 = vunpack.c.h.b16 %v4066
    %v4450 = vunpack.c.l.b16 %v4067
    %v4451 = vunpack.c.h.b16 %v4067
    %v4452 = vunpack.c.l.b16 %v4068
    %v4453 = vunpack.c.h.b16 %v4068
    %v4454 = vunpack.c.l.b16 %v4069
    %v4455 = vunpack.c.h.b16 %v4069
    %v4456 = vunpack.c.l.b16 %v4070
    %v4457 = vunpack.c.h.b16 %v4070
    %v4458 = vunpack.c.l.b16 %v4071
    %v4459 = vunpack.c.h.b16 %v4071
    %v4460 = vunpack.c.l.b16 %v4072
    %v4461 = vunpack.c.h.b16 %v4072
    %v4462 = vunpack.c.l.b16 %v4073
    %v4463 = vunpack.c.h.b16 %v4073
    %v4464 = vunpack.c.l.b16 %v4074
    %v4465 = vunpack.c.h.b16 %v4074
    %v4466 = vunpack.c.l.b16 %v4075
    %v4467 = vunpack.c.h.b16 %v4075
    %v4468 = vunpack.c.l.b16 %v4076
    %v4469 = vunpack.c.h.b16 %v4076
    %v4470 = vunpack.c.l.b16 %v4077
    %v4471 = vunpack.c.h.b16 %v4077
    %v4472 = vunpack.c.l.b16 %v4078
    %v4473 = vunpack.c.h.b16 %v4078
    %v4474 = vunpack.c.l.b16 %v4079
    %v4475 = vunpack.c.h.b16 %v4079
    %v4476 = vunpack.c.l.b16 %v4080
    %v4477 = vunpack.c.h.b16 %v4080
    %v4478 = vunpack.c.l.b16 %v4081
    %v4479 = vunpack.c.h.b16 %v4081
    %v4480 = vunpack.c.l.b16 %v4082
    %v4481 = vunpack.c.h.b16 %v4082
    %v4482 = vunpack.c.l.b16 %v4083
    %v4483 = vunpack.c.h.b16 %v4083
    %v4484 = vunpack.c.l.b16 %v4084
    %v4485 = vunpack.c.h.b16 %v4084
    %v4486 = vunpack.c.l.b16 %v4085
    %v4487 = vunpack.c.h.b16 %v4085
    %v4488 = vunpack.c.l.b16 %v4086
    %v4489 = vunpack.c.h.b16 %v4086
    %v4490 = vunpack.c.l.b16 %v4087
    %v4491 = vunpack.c.h.b16 %v4087
    %v4492 = vunpack.c.l.b16 %v4088
    %v4493 = vunpack.c.h.b16 %v4088
    %v4494 = vunpack.c.l.b16 %v4089
    %v4495 = vunpack.c.h.b16 %v4089
    %v4496 = vunpack.c.l.b16 %v4090
    %v4497 = vunpack.c.h.b16 %v4090
    %v4498 = vunpack.c.l.b16 %v4091
    %v4499 = vunpack.c.h.b16 %v4091
    %v4500 = vunpack.c.l.b16 %v4092
    %v4501 = vunpack.c.h.b16 %v4092
    %v4502 = vunpack.c.l.b16 %v4093
    %v4503 = vunpack.c.h.b16 %v4093
    %v4504 = vunpack.c.l.b16 %v4094
    %v4505 = vunpack.c.h.b16 %v4094
    %v4506 = vunpack.c.l.b16 %v4095
    %v4507 = vunpack.c.h.b16 %v4095
    %v4508 = vunpack.c.l.b16 %v4096
    %v4509 = vunpack.c.h.b16 %v4096
    %v4510 = vunpack.c.l.b16 %v4097
    %v4511 = vunpack.c.h.b16 %v4097
    %v4512 = vunpack.c.l.b16 %v4098
    %v4513 = vunpack.c.h.b16 %v4098
    %v4514 = vunpack.c.l.b16 %v4099
    %v4515 = vunpack.c.h.b16 %v4099
    %v4516 = vunpack.c.l.b16 %v4100
    %v4517 = vunpack.c.h.b16 %v4100
    %v4518 = vunpack.c.l.b16 %v4101
    %v4519 = vunpack.c.h.b16 %v4101
    %v4520 = vunpack.c.l.b16 %v4102
    %v4521 = vunpack.c.h.b16 %v4102
    %v4522 = vunpack.c.l.b16 %v4103
    %v4523 = vunpack.c.h.b16 %v4103
    %v4524 = vunpack.c.l.b16 %v4104
    %v4525 = vunpack.c.h.b16 %v4104
    %v4526 = vunpack.c.l.b16 %v4105
    %v4527 = vunpack.c.h.b16 %v4105
    %v4528 = vunpack.c.l.b16 %v4106
    %v4529 = vunpack.c.h.b16 %v4106
    %v4530 = vunpack.c.l.b16 %v4107
    %v4531 = vunpack.c.h.b16 %v4107
    %v4532 = vunpack.c.l.b16 %v4108
    %v4533 = vunpack.c.h.b16 %v4108
    %v4534 = vunpack.c.l.b16 %v4109
    %v4535 = vunpack.c.h.b16 %v4109
    %v4536 = vunpack.c.l.b16 %v4110
    %v4537 = vunpack.c.h.b16 %v4110
    %v4538 = vunpack.c.l.b16 %v4111
    %v4539 = vunpack.c.h.b16 %v4111
    %v4540 = vunpack.c.l.b16 %v4112
    %v4541 = vunpack.c.h.b16 %v4112
    %v4542 = vunpack.c.l.b16 %v4113
    %v4543 = vunpack.c.h.b16 %v4113
    %v4544 = vunpack.c.l.b16 %v4114
    %v4545 = vunpack.c.h.b16 %v4114
    %v4546 = vunpack.c.l.b16 %v4115
    %v4547 = vunpack.c.h.b16 %v4115
    %v4548 = vunpack.c.l.b16 %v4116
    %v4549 = vunpack.c.h.b16 %v4116
    %v4550 = vunpack.c.l.b16 %v4117
    %v4551 = vunpack.c.h.b16 %v4117
    %v4552 = vunpack.c.l.b16 %v4118
    %v4553 = vunpack.c.h.b16 %v4118
    %v4554 = vunpack.c.l.b16 %v4119
    %v4555 = vunpack.c.h.b16 %v4119
    %v4556 = vunpack.c.l.b16 %v4120
    %v4557 = vunpack.c.h.b16 %v4120
    %v4558 = vunpack.c.l.b16 %v4121
    %v4559 = vunpack.c.h.b16 %v4121
    %v4560 = vunpack.c.l.b16 %v4122
    %v4561 = vunpack.c.h.b16 %v4122
    %v4562 = vunpack.c.l.b16 %v4123
    %v4563 = vunpack.c.h.b16 %v4123
    %v4564 = vunpack.c.l.b16 %v4124
    %v4565 = vunpack.c.h.b16 %v4124
    %v4566 = vunpack.c.l.b16 %v4125
    %v4567 = vunpack.c.h.b16 %v4125
    %v4568 = vunpack.c.l.b16 %v4126
    %v4569 = vunpack.c.h.b16 %v4126
    %v4570 = vunpack.c.l.b16 %v4127
    %v4571 = vunpack.c.h.b16 %v4127
    %v4572 = vunpack.c.l.b16 %v4128
    %v4573 = vunpack.c.h.b16 %v4128
    %v4574 = vunpack.c.l.b16 %v4129
    %v4575 = vunpack.c.h.b16 %v4129
    %v4576 = vunpack.c.l.b16 %v4130
    %v4577 = vunpack.c.h.b16 %v4130
    %v4578 = vunpack.c.l.b16 %v4131
    %v4579 = vunpack.c.h.b16 %v4131
    %v4580 = vunpack.c.l.b16 %v4132
    %v4581 = vunpack.c.h.b16 %v4132
    %v4582 = vunpack.c.l.b16 %v4133
    %v4583 = vunpack.c.h.b16 %v4133
    %v4584 = vunpack.c.l.b16 %v4134
    %v4585 = vunpack.c.h.b16 %v4134
    %v4586 = vunpack.c.l.b16 %v4135
    %v4587 = vunpack.c.h.b16 %v4135
    %v4588 = vunpack.c.l.b16 %v4136
    %v4589 = vunpack.c.h.b16 %v4136
    %v4590 = vunpack.c.l.b16 %v4137
    %v4591 = vunpack.c.h.b16 %v4137
    %v4592 = vunpack.c.l.b16 %v4138
    %v4593 = vunpack.c.h.b16 %v4138
    %v4594 = vunpack.c.l.b16 %v4139
    %v4595 = vunpack.c.h.b16 %v4139
    %v4596 = vunpack.c.l.b16 %v4140
    %v4597 = vunpack.c.h.b16 %v4140
    %v4598 = vunpack.c.l.b16 %v4141
    %v4599 = vunpack.c.h.b16 %v4141
    %v4600 = vunpack.c.l.b16 %v4142
    %v4601 = vunpack.c.h.b16 %v4142
    %v4602 = vunpack.c.l.b16 %v4143
    %v4603 = vunpack.c.h.b16 %v4143
    %v4604 = vunpack.c.l.b16 %v4144
    %v4605 = vunpack.c.h.b16 %v4144
    %v4606 = vunpack.c.l.b16 %v4145
    %v4607 = vunpack.c.h.b16 %v4145
    %v4608 = vunpack.c.l.b16 %v4146
    %v4609 = vunpack.c.h.b16 %v4146
    %v4610 = vunpack.c.l.b16 %v4147
    %v4611 = vunpack.c.h.b16 %v4147
    %v4612 = vunpack.c.l.b16 %v4148
    %v4613 = vunpack.c.h.b16 %v4148
    %v4614 = vunpack.c.l.b16 %v4149
    %v4615 = vunpack.c.h.b16 %v4149
    %v4616 = vunpack.c.l.b16 %v4150
    %v4617 = vunpack.c.h.b16 %v4150
    %v4618 = vunpack.c.l.b16 %v4151
    %v4619 = vunpack.c.h.b16 %v4151
    %v4620 = vunpack.c.l.b16 %v4152
    %v4621 = vunpack.c.h.b16 %v4152
    %v4622 = vunpack.c.l.b16 %v4153
    %v4623 = vunpack.c.h.b16 %v4153
    %v4624 = vunpack.c.l.b16 %v4154
    %v4625 = vunpack.c.h.b16 %v4154
    %v4626 = vunpack.c.l.b16 %v4155
    %v4627 = vunpack.c.h.b16 %v4155
    %v4628 = vpack.c.b16 %v4380, %v4372
    %v4629 = vpack.c.b16 %v4381, %v4373
    %v4630 = vpack.c.b16 %v4382, %v4374
    %v4631 = vpack.c.b16 %v4383, %v4375
    %v4632 = vpack.c.b16 %v4384, %v4376
    %v4633 = vpack.c.b16 %v4385, %v4377
    %v4634 = vpack.c.b16 %v4386, %v4378
    %v4635 = vpack.c.b16 %v4387, %v4379
    %v4636 = vpack.c.b16 %v4396, %v4388
    %v4637 = vpack.c.b16 %v4397, %v4389
    %v4638 = vpack.c.b16 %v4398, %v4390
    %v4639 = vpack.c.b16 %v4399, %v4391
    %v4640 = vpack.c.b16 %v4400, %v4392
    %v4641 = vpack.c.b16 %v4401, %v4393
    %v4642 = vpack.c.b16 %v4402, %v4394
    %v4643 = vpack.c.b16 %v4403, %v4395
    %v4644 = vpack.c.b16 %v4412, %v4404
    %v4645 = vpack.c.b16 %v4413, %v4405
    %v4646 = vpack.c.b16 %v4414, %v4406
    %v4647 = vpack.c.b16 %v4415, %v4407
    %v4648 = vpack.c.b16 %v4416, %v4408
    %v4649 = vpack.c.b16 %v4417, %v4409
    %v4650 = vpack.c.b16 %v4418, %v4410
    %v4651 = vpack.c.b16 %v4419, %v4411
    %v4652 = vpack.c.b16 %v4428, %v4420
    %v4653 = vpack.c.b16 %v4429, %v4421
    %v4654 = vpack.c.b16 %v4430, %v4422
    %v4655 = vpack.c.b16 %v4431, %v4423
    %v4656 = vpack.c.b16 %v4432, %v4424
    %v4657 = vpack.c.b16 %v4433, %v4425
    %v4658 = vpack.c.b16 %v4434, %v4426
    %v4659 = vpack.c.b16 %v4435, %v4427
    %v4660 = vpack.c.b16 %v4444, %v4436
    %v4661 = vpack.c.b16 %v4445, %v4437
    %v4662 = vpack.c.b16 %v4446, %v4438
    %v4663 = vpack.c.b16 %v4447, %v4439
    %v4664 = vpack.c.b16 %v4448, %v4440
    %v4665 = vpack.c.b16 %v4449, %v4441
    %v4666 = vpack.c.b16 %v4450, %v4442
    %v4667 = vpack.c.b16 %v4451, %v4443
    %v4668 = vpack.c.b16 %v4460, %v4452
    %v4669 = vpack.c.b16 %v4461, %v4453
    %v4670 = vpack.c.b16 %v4462, %v4454
    %v4671 = vpack.c.b16 %v4463, %v4455
    %v4672 = vpack.c.b16 %v4464, %v4456
    %v4673 = vpack.c.b16 %v4465, %v4457
    %v4674 = vpack.c.b16 %v4466, %v4458
    %v4675 = vpack.c.b16 %v4467, %v4459
    %v4676 = vpack.c.b16 %v4476, %v4468
    %v4677 = vpack.c.b16 %v4477, %v4469
    %v4678 = vpack.c.b16 %v4478, %v4470
    %v4679 = vpack.c.b16 %v4479, %v4471
    %v4680 = vpack.c.b16 %v4480, %v4472
    %v4681 = vpack.c.b16 %v4481, %v4473
    %v4682 = vpack.c.b16 %v4482, %v4474
    %v4683 = vpack.c.b16 %v4483, %v4475
    %v4684 = vpack.c.b16 %v4492, %v4484
    %v4685 = vpack.c.b16 %v4493, %v4485
    %v4686 = vpack.c.b16 %v4494, %v4486
    %v4687 = vpack.c.b16 %v4495, %v4487
    %v4688 = vpack.c.b16 %v4496, %v4488
    %v4689 = vpack.c.b16 %v4497, %v4489
    %v4690 = vpack.c.b16 %v4498, %v4490
    %v4691 = vpack.c.b16 %v4499, %v4491
    %v4692 = vpack.c.b16 %v4508, %v4500
    %v4693 = vpack.c.b16 %v4509, %v4501
    %v4694 = vpack.c.b16 %v4510, %v4502
    %v4695 = vpack.c.b16 %v4511, %v4503
    %v4696 = vpack.c.b16 %v4512, %v4504
    %v4697 = vpack.c.b16 %v4513, %v4505
    %v4698 = vpack.c.b16 %v4514, %v4506
    %v4699 = vpack.c.b16 %v4515, %v4507
    %v4700 = vpack.c.b16 %v4524, %v4516
    %v4701 = vpack.c.b16 %v4525, %v4517
    %v4702 = vpack.c.b16 %v4526, %v4518
    %v4703 = vpack.c.b16 %v4527, %v4519
    %v4704 = vpack.c.b16 %v4528, %v4520
    %v4705 = vpack.c.b16 %v4529, %v4521
    %v4706 = vpack.c.b16 %v4530, %v4522
    %v4707 = vpack.c.b16 %v4531, %v4523
    %v4708 = vpack.c.b16 %v4540, %v4532
    %v4709 = vpack.c.b16 %v4541, %v4533
    %v4710 = vpack.c.b16 %v4542, %v4534
    %v4711 = vpack.c.b16 %v4543, %v4535
    %v4712 = vpack.c.b16 %v4544, %v4536
    %v4713 = vpack.c.b16 %v4545, %v4537
    %v4714 = vpack.c.b16 %v4546, %v4538
    %v4715 = vpack.c.b16 %v4547, %v4539
    %v4716 = vpack.c.b16 %v4556, %v4548
    %v4717 = vpack.c.b16 %v4557, %v4549
    %v4718 = vpack.c.b16 %v4558, %v4550
    %v4719 = vpack.c.b16 %v4559, %v4551
    %v4720 = vpack.c.b16 %v4560, %v4552
    %v4721 = vpack.c.b16 %v4561, %v4553
    %v4722 = vpack.c.b16 %v4562, %v4554
    %v4723 = vpack.c.b16 %v4563, %v4555
    %v4724 = vpack.c.b16 %v4572, %v4564
    %v4725 = vpack.c.b16 %v4573, %v4565
    %v4726 = vpack.c.b16 %v4574, %v4566
    %v4727 = vpack.c.b16 %v4575, %v4567
    %v4728 = vpack.c.b16 %v4576, %v4568
    %v4729 = vpack.c.b16 %v4577, %v4569
    %v4730 = vpack.c.b16 %v4578, %v4570
    %v4731 = vpack.c.b16 %v4579, %v4571
    %v4732 = vpack.c.b16 %v4588, %v4580
    %v4733 = vpack.c.b16 %v4589, %v4581
    %v4734 = vpack.c.b16 %v4590, %v4582
    %v4735 = vpack.c.b16 %v4591, %v4583
    %v4736 = vpack.c.b16 %v4592, %v4584
    %v4737 = vpack.c.b16 %v4593, %v4585
    %v4738 = vpack.c.b16 %v4594, %v4586
    %v4739 = vpack.c.b16 %v4595, %v4587
    %v4740 = vpack.c.b16 %v4604, %v4596
    %v4741 = vpack.c.b16 %v4605, %v4597
    %v4742 = vpack.c.b16 %v4606, %v4598
    %v4743 = vpack.c.b16 %v4607, %v4599
    %v4744 = vpack.c.b16 %v4608, %v4600
    %v4745 = vpack.c.b16 %v4609, %v4601
    %v4746 = vpack.c.b16 %v4610, %v4602
    %v4747 = vpack.c.b16 %v4611, %v4603
    %v4748 = vpack.c.b16 %v4620, %v4612
    %v4749 = vpack.c.b16 %v4621, %v4613
    %v4750 = vpack.c.b16 %v4622, %v4614
    %v4751 = vpack.c.b16 %v4623, %v4615
    %v4752 = vpack.c.b16 %v4624, %v4616
    %v4753 = vpack.c.b16 %v4625, %v4617
    %v4754 = vpack.c.b16 %v4626, %v4618
    %v4755 = vpack.c.b16 %v4627, %v4619
    %4884 = vmatprep.subr.bf16.mxu0 %v4685
    %4885 = vmatpush1.bf16.msra.mxu0 %v4684
    %4886 = vmatprep.subr.bf16.mxu0 %v4677
    %4887 = vmatpush1.bf16.msra.mxu0 %v4676
    %4888 = vmatprep.subr.bf16.mxu0 %v4669
    %4889 = vmatpush1.bf16.msra.mxu0 %v4668
    %4890 = vmatprep.subr.bf16.mxu0 %v4661
    %4891 = vmatpush1.bf16.msra.mxu0 %v4660
    %4892 = vmatprep.subr.bf16.mxu0 %v4653
    %4893 = vmatpush1.bf16.msra.mxu0 %v4652
    %4894 = vmatprep.subr.bf16.mxu0 %v4645
    %4895 = vmatpush1.bf16.msra.mxu0 %v4644
    %4896 = vmatprep.subr.bf16.mxu0 %v4637
    %4897 = vmatpush1.bf16.msra.mxu0 %v4636
    %4898 = vmatprep.subr.bf16.mxu0 %v4629
    %4899 = vmatpush1.bf16.msra.mxu0 %v4628
    %4900 = vmatprep.subr.bf16.mxu0 %v4749
    %4901 = vmatpush2.bf16.msra.mxu0 %v4748
    %4902 = vmatprep.subr.bf16.mxu0 %v4741
    %4903 = vmatpush2.bf16.msra.mxu0 %v4740
    %4904 = vmatprep.subr.bf16.mxu0 %v4733
    %4905 = vmatpush2.bf16.msra.mxu0 %v4732
    %4906 = vmatprep.subr.bf16.mxu0 %v4725
    %4907 = vmatpush2.bf16.msra.mxu0 %v4724
    %4908 = vmatprep.subr.bf16.mxu0 %v4717
    %4909 = vmatpush2.bf16.msra.mxu0 %v4716
    %4910 = vmatprep.subr.bf16.mxu0 %v4709
    %4911 = vmatpush2.bf16.msra.mxu0 %v4708
    %4912 = vmatprep.subr.bf16.mxu0 %v4701
    %4913 = vmatpush2.bf16.msra.mxu0 %v4700
    %4914 = vmatprep.subr.bf16.mxu0 %v4693
    %4915 = vmatpush2.bf16.msra.mxu0 %v4692
    %4916 = vmatprep.mubr.bf16.mxu0 %v4241
    %4917 = vmatmul.mubr.bf16.gmra.mxu0 %v4240
    %v4918 = vpop.f32.mrf.mxu0
    %v4919 = vadd.f32 0.0, %v4918
    %v4920 = vpop.f32.mrf.mxu0
    %v4921 = vadd.f32 0.0, %v4920
    %v4922 = vpop.f32.mrf.mxu0
    %v4923 = vpop.f32.mrf.mxu0
    %4924 = vdwg.mxu0
    %4925 = vmatprep.subr.bf16.mxu0 %v4687
    %4926 = vmatpush1.bf16.msra.mxu0 %v4686
    %4927 = vmatprep.subr.bf16.mxu0 %v4679
    %4928 = vmatpush1.bf16.msra.mxu0 %v4678
    %4929 = vmatprep.subr.bf16.mxu0 %v4671
    %4930 = vmatpush1.bf16.msra.mxu0 %v4670
    %4931 = vmatprep.subr.bf16.mxu0 %v4663
    %4932 = vmatpush1.bf16.msra.mxu0 %v4662
    %4933 = vmatprep.subr.bf16.mxu0 %v4655
    %4934 = vmatpush1.bf16.msra.mxu0 %v4654
    %4935 = vmatprep.subr.bf16.mxu0 %v4647
    %4936 = vmatpush1.bf16.msra.mxu0 %v4646
    %4937 = vmatprep.subr.bf16.mxu0 %v4639
    %4938 = vmatpush1.bf16.msra.mxu0 %v4638
    %4939 = vmatprep.subr.bf16.mxu0 %v4631
    %4940 = vmatpush1.bf16.msra.mxu0 %v4630
    %4941 = vmatprep.subr.bf16.mxu0 %v4751
    %4942 = vmatpush2.bf16.msra.mxu0 %v4750
    %4943 = vmatprep.subr.bf16.mxu0 %v4743
    %4944 = vmatpush2.bf16.msra.mxu0 %v4742
    %4945 = vmatprep.subr.bf16.mxu0 %v4735
    %4946 = vmatpush2.bf16.msra.mxu0 %v4734
    %4947 = vmatprep.subr.bf16.mxu0 %v4727
    %4948 = vmatpush2.bf16.msra.mxu0 %v4726
    %4949 = vmatprep.subr.bf16.mxu0 %v4719
    %4950 = vmatpush2.bf16.msra.mxu0 %v4718
    %4951 = vmatprep.subr.bf16.mxu0 %v4711
    %4952 = vmatpush2.bf16.msra.mxu0 %v4710
    %4953 = vmatprep.subr.bf16.mxu0 %v4703
    %4954 = vmatpush2.bf16.msra.mxu0 %v4702
    %4955 = vmatprep.subr.bf16.mxu0 %v4695
    %4956 = vmatpush2.bf16.msra.mxu0 %v4694
    %4957 = vmatprep.mubr.bf16.mxu0 %v4241
    %4958 = vmatmul.mubr.bf16.gmra.mxu0 %v4240
    %v4959 = vpop.f32.mrf.mxu0
    %v4960 = vadd.f32 0.0, %v4959
    %v4961 = vpop.f32.mrf.mxu0
    %v4962 = vadd.f32 0.0, %v4961
    %v4963 = vpop.f32.mrf.mxu0
    %v4964 = vpop.f32.mrf.mxu0
    %4965 = vdwg.mxu0
    %4966 = vmatprep.subr.bf16.mxu0 %v4689
    %4967 = vmatpush1.bf16.msra.mxu0 %v4688
    %4968 = vmatprep.subr.bf16.mxu0 %v4681
    %4969 = vmatpush1.bf16.msra.mxu0 %v4680
    %4970 = vmatprep.subr.bf16.mxu0 %v4673
    %4971 = vmatpush1.bf16.msra.mxu0 %v4672
    %4972 = vmatprep.subr.bf16.mxu0 %v4665
    %4973 = vmatpush1.bf16.msra.mxu0 %v4664
    %4974 = vmatprep.subr.bf16.mxu0 %v4657
    %4975 = vmatpush1.bf16.msra.mxu0 %v4656
    %4976 = vmatprep.subr.bf16.mxu0 %v4649
    %4977 = vmatpush1.bf16.msra.mxu0 %v4648
    %4978 = vmatprep.subr.bf16.mxu0 %v4641
    %4979 = vmatpush1.bf16.msra.mxu0 %v4640
    %4980 = vmatprep.subr.bf16.mxu0 %v4633
    %4981 = vmatpush1.bf16.msra.mxu0 %v4632
    %4982 = vmatprep.subr.bf16.mxu0 %v4753
    %4983 = vmatpush2.bf16.msra.mxu0 %v4752
    %4984 = vmatprep.subr.bf16.mxu0 %v4745
    %4985 = vmatpush2.bf16.msra.mxu0 %v4744
    %4986 = vmatprep.subr.bf16.mxu0 %v4737
    %4987 = vmatpush2.bf16.msra.mxu0 %v4736
    %4988 = vmatprep.subr.bf16.mxu0 %v4729
    %4989 = vmatpush2.bf16.msra.mxu0 %v4728
    %4990 = vmatprep.subr.bf16.mxu0 %v4721
    %4991 = vmatpush2.bf16.msra.mxu0 %v4720
    %4992 = vmatprep.subr.bf16.mxu0 %v4713
    %4993 = vmatpush2.bf16.msra.mxu0 %v4712
    %4994 = vmatprep.subr.bf16.mxu0 %v4705
    %4995 = vmatpush2.bf16.msra.mxu0 %v4704
    %4996 = vmatprep.subr.bf16.mxu0 %v4697
    %4997 = vmatpush2.bf16.msra.mxu0 %v4696
    %4998 = vmatprep.mubr.bf16.mxu0 %v4241
    %4999 = vmatmul.mubr.bf16.gmra.mxu0 %v4240
    %v5000 = vpop.f32.mrf.mxu0
    %v5001 = vadd.f32 0.0, %v5000
    %v5002 = vpop.f32.mrf.mxu0
    %v5003 = vadd.f32 0.0, %v5002
    %v5004 = vpop.f32.mrf.mxu0
    %v5005 = vpop.f32.mrf.mxu0
    %5006 = vdwg.mxu0
    %5007 = vmatprep.subr.bf16.mxu0 %v4691
    %5008 = vmatpush1.bf16.msra.mxu0 %v4690
    %5009 = vmatprep.subr.bf16.mxu0 %v4683
    %5010 = vmatpush1.bf16.msra.mxu0 %v4682
    %5011 = vmatprep.subr.bf16.mxu0 %v4675
    %5012 = vmatpush1.bf16.msra.mxu0 %v4674
    %5013 = vmatprep.subr.bf16.mxu0 %v4667
    %5014 = vmatpush1.bf16.msra.mxu0 %v4666
    %5015 = vmatprep.subr.bf16.mxu0 %v4659
    %5016 = vmatpush1.bf16.msra.mxu0 %v4658
    %5017 = vmatprep.subr.bf16.mxu0 %v4651
    %5018 = vmatpush1.bf16.msra.mxu0 %v4650
    %5019 = vmatprep.subr.bf16.mxu0 %v4643
    %5020 = vmatpush1.bf16.msra.mxu0 %v4642
    %5021 = vmatprep.subr.bf16.mxu0 %v4635
    %5022 = vmatpush1.bf16.msra.mxu0 %v4634
    %5023 = vmatprep.subr.bf16.mxu0 %v4755
    %5024 = vmatpush2.bf16.msra.mxu0 %v4754
    %5025 = vmatprep.subr.bf16.mxu0 %v4747
    %5026 = vmatpush2.bf16.msra.mxu0 %v4746
    %5027 = vmatprep.subr.bf16.mxu0 %v4739
    %5028 = vmatpush2.bf16.msra.mxu0 %v4738
    %5029 = vmatprep.subr.bf16.mxu0 %v4731
    %5030 = vmatpush2.bf16.msra.mxu0 %v4730
    %5031 = vmatprep.subr.bf16.mxu0 %v4723
    %5032 = vmatpush2.bf16.msra.mxu0 %v4722
    %5033 = vmatprep.subr.bf16.mxu0 %v4715
    %5034 = vmatpush2.bf16.msra.mxu0 %v4714
    %5035 = vmatprep.subr.bf16.mxu0 %v4707
    %5036 = vmatpush2.bf16.msra.mxu0 %v4706
    %5037 = vmatprep.subr.bf16.mxu0 %v4699
    %5038 = vmatpush2.bf16.msra.mxu0 %v4698
    %5039 = vmatprep.mubr.bf16.mxu0 %v4241
    %5040 = vmatmul.mubr.bf16.gmra.mxu0 %v4240
    %v5041 = vpop.f32.mrf.mxu0
    %v5042 = vadd.f32 0.0, %v5041
    %v5043 = vpop.f32.mrf.mxu0
    %v5044 = vadd.f32 0.0, %v5043
    %v5045 = vpop.f32.mrf.mxu0
    %v5046 = vpop.f32.mrf.mxu0
    %5047 = vdwg.mxu0
    %v5048 = vadd.f32 %v4011, %v4919
    %v5049 = vadd.f32 %v4012, %v4921
    %v5050 = vadd.f32 %v4013, %v4960
    %v5051 = vadd.f32 %v4014, %v4962
    %v5052 = vadd.f32 %v4015, %v5001
    %v5053 = vadd.f32 %v4016, %v5003
    %v5054 = vadd.f32 %v4017, %v5042
    %v5055 = vadd.f32 %v4018, %v5044
    %5056 = vst [vmem:[#allocation3] sm:$0xff] %v5048
    %5057 = vst [vmem:[#allocation3 + $0x8] sm:$0xff] %v5049
    %5058 = vst [vmem:[#allocation3 + $0x10] sm:$0xff] %v5050
    %5059 = vst [vmem:[#allocation3 + $0x18] sm:$0xff] %v5051
    %5060 = vst [vmem:[#allocation3 + $0x20] sm:$0xff] %v5052
    %5061 = vst [vmem:[#allocation3 + $0x28] sm:$0xff] %v5053
    %5062 = vst [vmem:[#allocation3 + $0x30] sm:$0xff] %v5054
    %5063 = vst [vmem:[#allocation3 + $0x38] sm:$0xff] %v5055
    %v5064 = vld [vmem:[#allocation3] sm:$0xff]
    %v5065 = vld [vmem:[#allocation3 + $0x8] sm:$0xff]
    %v5066 = vld [vmem:[#allocation3 + $0x10] sm:$0xff]
    %v5067 = vld [vmem:[#allocation3 + $0x18] sm:$0xff]
    %v5068 = vld [vmem:[#allocation3 + $0x20] sm:$0xff]
    %v5069 = vld [vmem:[#allocation3 + $0x28] sm:$0xff]
    %v5070 = vld [vmem:[#allocation3 + $0x30] sm:$0xff]
    %v5071 = vld [vmem:[#allocation3 + $0x38] sm:$0xff]
    %v5072 = vld [vmem:[#allocation2] sm:$0x44]
    %v5073 = vld [vmem:[#allocation2 + $0x8] sm:$0x44]
    %v5074 = vld [vmem:[#allocation2 + $0x10] sm:$0x44]
    %v5075 = vld [vmem:[#allocation2 + $0x18] sm:$0x44]
    %v5076 = vld [vmem:[#allocation2 + $0x20] sm:$0x44]
    %v5077 = vld [vmem:[#allocation2 + $0x28] sm:$0x44]
    %v5078 = vld [vmem:[#allocation2 + $0x30] sm:$0x44]
    %v5079 = vld [vmem:[#allocation2 + $0x38] sm:$0x44]
    %s5080 = scalar_lea.vmem [#allocation6], 4096
    %v5081 = vld [vmem:[%s5080] sm:$0xff]
    %v5082 = vld [vmem:[%s5080 + $0x8] sm:$0xff]
    %v5083 = vld [vmem:[%s5080 + $0x10] sm:$0xff]
    %v5084 = vld [vmem:[%s5080 + $0x18] sm:$0xff]
    %v5085 = vld [vmem:[%s5080 + $0x20] sm:$0xff]
    %v5086 = vld [vmem:[%s5080 + $0x28] sm:$0xff]
    %v5087 = vld [vmem:[%s5080 + $0x30] sm:$0xff]
    %v5088 = vld [vmem:[%s5080 + $0x38] sm:$0xff]
    %v5089 = vld [vmem:[%s5080 + $0x40] sm:$0xff]
    %v5090 = vld [vmem:[%s5080 + $0x48] sm:$0xff]
    %v5091 = vld [vmem:[%s5080 + $0x50] sm:$0xff]
    %v5092 = vld [vmem:[%s5080 + $0x58] sm:$0xff]
    %v5093 = vld [vmem:[%s5080 + $0x60] sm:$0xff]
    %v5094 = vld [vmem:[%s5080 + $0x68] sm:$0xff]
    %v5095 = vld [vmem:[%s5080 + $0x70] sm:$0xff]
    %v5096 = vld [vmem:[%s5080 + $0x78] sm:$0xff]
    %v5097 = vld [vmem:[%s5080 + $0x80] sm:$0xff]
    %v5098 = vld [vmem:[%s5080 + $0x88] sm:$0xff]
    %v5099 = vld [vmem:[%s5080 + $0x90] sm:$0xff]
    %v5100 = vld [vmem:[%s5080 + $0x98] sm:$0xff]
    %v5101 = vld [vmem:[%s5080 + $0xa0] sm:$0xff]
    %v5102 = vld [vmem:[%s5080 + $0xa8] sm:$0xff]
    %v5103 = vld [vmem:[%s5080 + $0xb0] sm:$0xff]
    %v5104 = vld [vmem:[%s5080 + $0xb8] sm:$0xff]
    %v5105 = vld [vmem:[%s5080 + $0xc0] sm:$0xff]
    %v5106 = vld [vmem:[%s5080 + $0xc8] sm:$0xff]
    %v5107 = vld [vmem:[%s5080 + $0xd0] sm:$0xff]
    %v5108 = vld [vmem:[%s5080 + $0xd8] sm:$0xff]
    %v5109 = vld [vmem:[%s5080 + $0xe0] sm:$0xff]
    %v5110 = vld [vmem:[%s5080 + $0xe8] sm:$0xff]
    %v5111 = vld [vmem:[%s5080 + $0xf0] sm:$0xff]
    %v5112 = vld [vmem:[%s5080 + $0xf8] sm:$0xff]
    %v5113 = vld [vmem:[%s5080 + $0x100] sm:$0xff]
    %v5114 = vld [vmem:[%s5080 + $0x108] sm:$0xff]
    %v5115 = vld [vmem:[%s5080 + $0x110] sm:$0xff]
    %v5116 = vld [vmem:[%s5080 + $0x118] sm:$0xff]
    %v5117 = vld [vmem:[%s5080 + $0x120] sm:$0xff]
    %v5118 = vld [vmem:[%s5080 + $0x128] sm:$0xff]
    %v5119 = vld [vmem:[%s5080 + $0x130] sm:$0xff]
    %v5120 = vld [vmem:[%s5080 + $0x138] sm:$0xff]
    %v5121 = vld [vmem:[%s5080 + $0x140] sm:$0xff]
    %v5122 = vld [vmem:[%s5080 + $0x148] sm:$0xff]
    %v5123 = vld [vmem:[%s5080 + $0x150] sm:$0xff]
    %v5124 = vld [vmem:[%s5080 + $0x158] sm:$0xff]
    %v5125 = vld [vmem:[%s5080 + $0x160] sm:$0xff]
    %v5126 = vld [vmem:[%s5080 + $0x168] sm:$0xff]
    %v5127 = vld [vmem:[%s5080 + $0x170] sm:$0xff]
    %v5128 = vld [vmem:[%s5080 + $0x178] sm:$0xff]
    %v5129 = vld [vmem:[%s5080 + $0x180] sm:$0xff]
    %v5130 = vld [vmem:[%s5080 + $0x188] sm:$0xff]
    %v5131 = vld [vmem:[%s5080 + $0x190] sm:$0xff]
    %v5132 = vld [vmem:[%s5080 + $0x198] sm:$0xff]
    %v5133 = vld [vmem:[%s5080 + $0x1a0] sm:$0xff]
    %v5134 = vld [vmem:[%s5080 + $0x1a8] sm:$0xff]
    %v5135 = vld [vmem:[%s5080 + $0x1b0] sm:$0xff]
    %v5136 = vld [vmem:[%s5080 + $0x1b8] sm:$0xff]
    %v5137 = vld [vmem:[%s5080 + $0x1c0] sm:$0xff]
    %v5138 = vld [vmem:[%s5080 + $0x1c8] sm:$0xff]
    %v5139 = vld [vmem:[%s5080 + $0x1d0] sm:$0xff]
    %v5140 = vld [vmem:[%s5080 + $0x1d8] sm:$0xff]
    %v5141 = vld [vmem:[%s5080 + $0x1e0] sm:$0xff]
    %v5142 = vld [vmem:[%s5080 + $0x1e8] sm:$0xff]
    %v5143 = vld [vmem:[%s5080 + $0x1f0] sm:$0xff]
    %v5144 = vld [vmem:[%s5080 + $0x1f8] sm:$0xff]
    %v5145 = vld [vmem:[%s5080 + $0x200] sm:$0xff]
    %v5146 = vld [vmem:[%s5080 + $0x208] sm:$0xff]
    %v5147 = vld [vmem:[%s5080 + $0x210] sm:$0xff]
    %v5148 = vld [vmem:[%s5080 + $0x218] sm:$0xff]
    %v5149 = vld [vmem:[%s5080 + $0x220] sm:$0xff]
    %v5150 = vld [vmem:[%s5080 + $0x228] sm:$0xff]
    %v5151 = vld [vmem:[%s5080 + $0x230] sm:$0xff]
    %v5152 = vld [vmem:[%s5080 + $0x238] sm:$0xff]
    %v5153 = vld [vmem:[%s5080 + $0x240] sm:$0xff]
    %v5154 = vld [vmem:[%s5080 + $0x248] sm:$0xff]
    %v5155 = vld [vmem:[%s5080 + $0x250] sm:$0xff]
    %v5156 = vld [vmem:[%s5080 + $0x258] sm:$0xff]
    %v5157 = vld [vmem:[%s5080 + $0x260] sm:$0xff]
    %v5158 = vld [vmem:[%s5080 + $0x268] sm:$0xff]
    %v5159 = vld [vmem:[%s5080 + $0x270] sm:$0xff]
    %v5160 = vld [vmem:[%s5080 + $0x278] sm:$0xff]
    %v5161 = vld [vmem:[%s5080 + $0x280] sm:$0xff]
    %v5162 = vld [vmem:[%s5080 + $0x288] sm:$0xff]
    %v5163 = vld [vmem:[%s5080 + $0x290] sm:$0xff]
    %v5164 = vld [vmem:[%s5080 + $0x298] sm:$0xff]
    %v5165 = vld [vmem:[%s5080 + $0x2a0] sm:$0xff]
    %v5166 = vld [vmem:[%s5080 + $0x2a8] sm:$0xff]
    %v5167 = vld [vmem:[%s5080 + $0x2b0] sm:$0xff]
    %v5168 = vld [vmem:[%s5080 + $0x2b8] sm:$0xff]
    %v5169 = vld [vmem:[%s5080 + $0x2c0] sm:$0xff]
    %v5170 = vld [vmem:[%s5080 + $0x2c8] sm:$0xff]
    %v5171 = vld [vmem:[%s5080 + $0x2d0] sm:$0xff]
    %v5172 = vld [vmem:[%s5080 + $0x2d8] sm:$0xff]
    %v5173 = vld [vmem:[%s5080 + $0x2e0] sm:$0xff]
    %v5174 = vld [vmem:[%s5080 + $0x2e8] sm:$0xff]
    %v5175 = vld [vmem:[%s5080 + $0x2f0] sm:$0xff]
    %v5176 = vld [vmem:[%s5080 + $0x2f8] sm:$0xff]
    %v5177 = vld [vmem:[%s5080 + $0x300] sm:$0xff]
    %v5178 = vld [vmem:[%s5080 + $0x308] sm:$0xff]
    %v5179 = vld [vmem:[%s5080 + $0x310] sm:$0xff]
    %v5180 = vld [vmem:[%s5080 + $0x318] sm:$0xff]
    %v5181 = vld [vmem:[%s5080 + $0x320] sm:$0xff]
    %v5182 = vld [vmem:[%s5080 + $0x328] sm:$0xff]
    %v5183 = vld [vmem:[%s5080 + $0x330] sm:$0xff]
    %v5184 = vld [vmem:[%s5080 + $0x338] sm:$0xff]
    %v5185 = vld [vmem:[%s5080 + $0x340] sm:$0xff]
    %v5186 = vld [vmem:[%s5080 + $0x348] sm:$0xff]
    %v5187 = vld [vmem:[%s5080 + $0x350] sm:$0xff]
    %v5188 = vld [vmem:[%s5080 + $0x358] sm:$0xff]
    %v5189 = vld [vmem:[%s5080 + $0x360] sm:$0xff]
    %v5190 = vld [vmem:[%s5080 + $0x368] sm:$0xff]
    %v5191 = vld [vmem:[%s5080 + $0x370] sm:$0xff]
    %v5192 = vld [vmem:[%s5080 + $0x378] sm:$0xff]
    %v5193 = vld [vmem:[%s5080 + $0x380] sm:$0xff]
    %v5194 = vld [vmem:[%s5080 + $0x388] sm:$0xff]
    %v5195 = vld [vmem:[%s5080 + $0x390] sm:$0xff]
    %v5196 = vld [vmem:[%s5080 + $0x398] sm:$0xff]
    %v5197 = vld [vmem:[%s5080 + $0x3a0] sm:$0xff]
    %v5198 = vld [vmem:[%s5080 + $0x3a8] sm:$0xff]
    %v5199 = vld [vmem:[%s5080 + $0x3b0] sm:$0xff]
    %v5200 = vld [vmem:[%s5080 + $0x3b8] sm:$0xff]
    %v5201 = vld [vmem:[%s5080 + $0x3c0] sm:$0xff]
    %v5202 = vld [vmem:[%s5080 + $0x3c8] sm:$0xff]
    %v5203 = vld [vmem:[%s5080 + $0x3d0] sm:$0xff]
    %v5204 = vld [vmem:[%s5080 + $0x3d8] sm:$0xff]
    %v5205 = vld [vmem:[%s5080 + $0x3e0] sm:$0xff]
    %v5206 = vld [vmem:[%s5080 + $0x3e8] sm:$0xff]
    %v5207 = vld [vmem:[%s5080 + $0x3f0] sm:$0xff]
    %v5208 = vld [vmem:[%s5080 + $0x3f8] sm:$0xff]
    %v5217 = vunpack.c.l.b16 %v5072
    %v5218 = vunpack.c.h.b16 %v5072
    %v5219 = vunpack.c.l.b16 %v5073
    %v5220 = vunpack.c.h.b16 %v5073
    %v5221 = vunpack.c.l.b16 %v5074
    %v5222 = vunpack.c.h.b16 %v5074
    %v5223 = vunpack.c.l.b16 %v5075
    %v5224 = vunpack.c.h.b16 %v5075
    %v5225 = vunpack.c.l.b16 %v5076
    %v5226 = vunpack.c.h.b16 %v5076
    %v5227 = vunpack.c.l.b16 %v5077
    %v5228 = vunpack.c.h.b16 %v5077
    %v5229 = vunpack.c.l.b16 %v5078
    %v5230 = vunpack.c.h.b16 %v5078
    %v5231 = vunpack.c.l.b16 %v5079
    %v5232 = vunpack.c.h.b16 %v5079
    %v5233 = vpack.c.b16 %v5217, %v5217
    %v5234 = vpack.c.b16 %v5218, %v5218
    %v5235 = vpack.c.b16 %v5219, %v5219
    %v5236 = vpack.c.b16 %v5220, %v5220
    %v5237 = vpack.c.b16 %v5221, %v5221
    %v5238 = vpack.c.b16 %v5222, %v5222
    %v5239 = vpack.c.b16 %v5223, %v5223
    %v5240 = vpack.c.b16 %v5224, %v5224
    %v5241 = vpack.c.b16 %v5225, %v5225
    %v5242 = vpack.c.b16 %v5226, %v5226
    %v5243 = vpack.c.b16 %v5227, %v5227
    %v5244 = vpack.c.b16 %v5228, %v5228
    %v5245 = vpack.c.b16 %v5229, %v5229
    %v5246 = vpack.c.b16 %v5230, %v5230
    %v5247 = vpack.c.b16 %v5231, %v5231
    %v5248 = vpack.c.b16 %v5232, %v5232
    %v5249 = vunpack.c.l.b16 %v5233
    %v5250 = vunpack.c.l.b16 %v5234
    %v5251 = vunpack.c.l.b16 %v5235
    %v5252 = vunpack.c.l.b16 %v5236
    %v5253 = vunpack.c.l.b16 %v5237
    %v5254 = vunpack.c.l.b16 %v5238
    %v5255 = vunpack.c.l.b16 %v5239
    %v5256 = vunpack.c.l.b16 %v5240
    %v5257 = vunpack.c.l.b16 %v5241
    %v5258 = vunpack.c.l.b16 %v5242
    %v5259 = vunpack.c.l.b16 %v5243
    %v5260 = vunpack.c.l.b16 %v5244
    %v5261 = vunpack.c.l.b16 %v5245
    %v5262 = vunpack.c.l.b16 %v5246
    %v5263 = vunpack.c.l.b16 %v5247
    %v5264 = vunpack.c.l.b16 %v5248
    %v5265 = vrot.slane %v5249, 4
    %v5266 = vrot.slane %v5251, 3
    %v5267 = vsel %vm1047, %v5266, %v5265
    %v5268 = vrot.slane %v5253, 2
    %v5269 = vsel %vm1050, %v5268, %v5267
    %v5270 = vrot.slane %v5255, 1
    %v5271 = vsel %vm1053, %v5270, %v5269
    %v5272 = vsel %vm1056, %v5257, %v5271
    %v5273 = vrot.slane %v5259, 7
    %v5274 = vsel %vm1059, %v5273, %v5272
    %v5275 = vrot.slane %v5261, 6
    %v5276 = vsel %vm1062, %v5275, %v5274
    %v5277 = vrot.slane %v5263, 5
    %v5278 = vsel %vm1065, %v5277, %v5276
    %v5279 = vrot.slane %v5250, 4
    %v5280 = vrot.slane %v5252, 3
    %v5281 = vsel %vm1047, %v5280, %v5279
    %v5282 = vrot.slane %v5254, 2
    %v5283 = vsel %vm1050, %v5282, %v5281
    %v5284 = vrot.slane %v5256, 1
    %v5285 = vsel %vm1053, %v5284, %v5283
    %v5286 = vsel %vm1056, %v5258, %v5285
    %v5287 = vrot.slane %v5260, 7
    %v5288 = vsel %vm1059, %v5287, %v5286
    %v5289 = vrot.slane %v5262, 6
    %v5290 = vsel %vm1062, %v5289, %v5288
    %v5291 = vrot.slane %v5264, 5
    %v5292 = vsel %vm1065, %v5291, %v5290
    %v5293 = vpack.c.b16 %v5278, %v5278
    %v5294 = vpack.c.b16 %v5292, %v5292
    %v5425 = vunpack.c.l.b16 %v5081
    %v5426 = vunpack.c.h.b16 %v5081
    %v5427 = vunpack.c.l.b16 %v5082
    %v5428 = vunpack.c.h.b16 %v5082
    %v5429 = vunpack.c.l.b16 %v5083
    %v5430 = vunpack.c.h.b16 %v5083
    %v5431 = vunpack.c.l.b16 %v5084
    %v5432 = vunpack.c.h.b16 %v5084
    %v5433 = vunpack.c.l.b16 %v5085
    %v5434 = vunpack.c.h.b16 %v5085
    %v5435 = vunpack.c.l.b16 %v5086
    %v5436 = vunpack.c.h.b16 %v5086
    %v5437 = vunpack.c.l.b16 %v5087
    %v5438 = vunpack.c.h.b16 %v5087
    %v5439 = vunpack.c.l.b16 %v5088
    %v5440 = vunpack.c.h.b16 %v5088
    %v5441 = vunpack.c.l.b16 %v5089
    %v5442 = vunpack.c.h.b16 %v5089
    %v5443 = vunpack.c.l.b16 %v5090
    %v5444 = vunpack.c.h.b16 %v5090
    %v5445 = vunpack.c.l.b16 %v5091
    %v5446 = vunpack.c.h.b16 %v5091
    %v5447 = vunpack.c.l.b16 %v5092
    %v5448 = vunpack.c.h.b16 %v5092
    %v5449 = vunpack.c.l.b16 %v5093
    %v5450 = vunpack.c.h.b16 %v5093
    %v5451 = vunpack.c.l.b16 %v5094
    %v5452 = vunpack.c.h.b16 %v5094
    %v5453 = vunpack.c.l.b16 %v5095
    %v5454 = vunpack.c.h.b16 %v5095
    %v5455 = vunpack.c.l.b16 %v5096
    %v5456 = vunpack.c.h.b16 %v5096
    %v5457 = vunpack.c.l.b16 %v5097
    %v5458 = vunpack.c.h.b16 %v5097
    %v5459 = vunpack.c.l.b16 %v5098
    %v5460 = vunpack.c.h.b16 %v5098
    %v5461 = vunpack.c.l.b16 %v5099
    %v5462 = vunpack.c.h.b16 %v5099
    %v5463 = vunpack.c.l.b16 %v5100
    %v5464 = vunpack.c.h.b16 %v5100
    %v5465 = vunpack.c.l.b16 %v5101
    %v5466 = vunpack.c.h.b16 %v5101
    %v5467 = vunpack.c.l.b16 %v5102
    %v5468 = vunpack.c.h.b16 %v5102
    %v5469 = vunpack.c.l.b16 %v5103
    %v5470 = vunpack.c.h.b16 %v5103
    %v5471 = vunpack.c.l.b16 %v5104
    %v5472 = vunpack.c.h.b16 %v5104
    %v5473 = vunpack.c.l.b16 %v5105
    %v5474 = vunpack.c.h.b16 %v5105
    %v5475 = vunpack.c.l.b16 %v5106
    %v5476 = vunpack.c.h.b16 %v5106
    %v5477 = vunpack.c.l.b16 %v5107
    %v5478 = vunpack.c.h.b16 %v5107
    %v5479 = vunpack.c.l.b16 %v5108
    %v5480 = vunpack.c.h.b16 %v5108
    %v5481 = vunpack.c.l.b16 %v5109
    %v5482 = vunpack.c.h.b16 %v5109
    %v5483 = vunpack.c.l.b16 %v5110
    %v5484 = vunpack.c.h.b16 %v5110
    %v5485 = vunpack.c.l.b16 %v5111
    %v5486 = vunpack.c.h.b16 %v5111
    %v5487 = vunpack.c.l.b16 %v5112
    %v5488 = vunpack.c.h.b16 %v5112
    %v5489 = vunpack.c.l.b16 %v5113
    %v5490 = vunpack.c.h.b16 %v5113
    %v5491 = vunpack.c.l.b16 %v5114
    %v5492 = vunpack.c.h.b16 %v5114
    %v5493 = vunpack.c.l.b16 %v5115
    %v5494 = vunpack.c.h.b16 %v5115
    %v5495 = vunpack.c.l.b16 %v5116
    %v5496 = vunpack.c.h.b16 %v5116
    %v5497 = vunpack.c.l.b16 %v5117
    %v5498 = vunpack.c.h.b16 %v5117
    %v5499 = vunpack.c.l.b16 %v5118
    %v5500 = vunpack.c.h.b16 %v5118
    %v5501 = vunpack.c.l.b16 %v5119
    %v5502 = vunpack.c.h.b16 %v5119
    %v5503 = vunpack.c.l.b16 %v5120
    %v5504 = vunpack.c.h.b16 %v5120
    %v5505 = vunpack.c.l.b16 %v5121
    %v5506 = vunpack.c.h.b16 %v5121
    %v5507 = vunpack.c.l.b16 %v5122
    %v5508 = vunpack.c.h.b16 %v5122
    %v5509 = vunpack.c.l.b16 %v5123
    %v5510 = vunpack.c.h.b16 %v5123
    %v5511 = vunpack.c.l.b16 %v5124
    %v5512 = vunpack.c.h.b16 %v5124
    %v5513 = vunpack.c.l.b16 %v5125
    %v5514 = vunpack.c.h.b16 %v5125
    %v5515 = vunpack.c.l.b16 %v5126
    %v5516 = vunpack.c.h.b16 %v5126
    %v5517 = vunpack.c.l.b16 %v5127
    %v5518 = vunpack.c.h.b16 %v5127
    %v5519 = vunpack.c.l.b16 %v5128
    %v5520 = vunpack.c.h.b16 %v5128
    %v5521 = vunpack.c.l.b16 %v5129
    %v5522 = vunpack.c.h.b16 %v5129
    %v5523 = vunpack.c.l.b16 %v5130
    %v5524 = vunpack.c.h.b16 %v5130
    %v5525 = vunpack.c.l.b16 %v5131
    %v5526 = vunpack.c.h.b16 %v5131
    %v5527 = vunpack.c.l.b16 %v5132
    %v5528 = vunpack.c.h.b16 %v5132
    %v5529 = vunpack.c.l.b16 %v5133
    %v5530 = vunpack.c.h.b16 %v5133
    %v5531 = vunpack.c.l.b16 %v5134
    %v5532 = vunpack.c.h.b16 %v5134
    %v5533 = vunpack.c.l.b16 %v5135
    %v5534 = vunpack.c.h.b16 %v5135
    %v5535 = vunpack.c.l.b16 %v5136
    %v5536 = vunpack.c.h.b16 %v5136
    %v5537 = vunpack.c.l.b16 %v5137
    %v5538 = vunpack.c.h.b16 %v5137
    %v5539 = vunpack.c.l.b16 %v5138
    %v5540 = vunpack.c.h.b16 %v5138
    %v5541 = vunpack.c.l.b16 %v5139
    %v5542 = vunpack.c.h.b16 %v5139
    %v5543 = vunpack.c.l.b16 %v5140
    %v5544 = vunpack.c.h.b16 %v5140
    %v5545 = vunpack.c.l.b16 %v5141
    %v5546 = vunpack.c.h.b16 %v5141
    %v5547 = vunpack.c.l.b16 %v5142
    %v5548 = vunpack.c.h.b16 %v5142
    %v5549 = vunpack.c.l.b16 %v5143
    %v5550 = vunpack.c.h.b16 %v5143
    %v5551 = vunpack.c.l.b16 %v5144
    %v5552 = vunpack.c.h.b16 %v5144
    %v5553 = vunpack.c.l.b16 %v5145
    %v5554 = vunpack.c.h.b16 %v5145
    %v5555 = vunpack.c.l.b16 %v5146
    %v5556 = vunpack.c.h.b16 %v5146
    %v5557 = vunpack.c.l.b16 %v5147
    %v5558 = vunpack.c.h.b16 %v5147
    %v5559 = vunpack.c.l.b16 %v5148
    %v5560 = vunpack.c.h.b16 %v5148
    %v5561 = vunpack.c.l.b16 %v5149
    %v5562 = vunpack.c.h.b16 %v5149
    %v5563 = vunpack.c.l.b16 %v5150
    %v5564 = vunpack.c.h.b16 %v5150
    %v5565 = vunpack.c.l.b16 %v5151
    %v5566 = vunpack.c.h.b16 %v5151
    %v5567 = vunpack.c.l.b16 %v5152
    %v5568 = vunpack.c.h.b16 %v5152
    %v5569 = vunpack.c.l.b16 %v5153
    %v5570 = vunpack.c.h.b16 %v5153
    %v5571 = vunpack.c.l.b16 %v5154
    %v5572 = vunpack.c.h.b16 %v5154
    %v5573 = vunpack.c.l.b16 %v5155
    %v5574 = vunpack.c.h.b16 %v5155
    %v5575 = vunpack.c.l.b16 %v5156
    %v5576 = vunpack.c.h.b16 %v5156
    %v5577 = vunpack.c.l.b16 %v5157
    %v5578 = vunpack.c.h.b16 %v5157
    %v5579 = vunpack.c.l.b16 %v5158
    %v5580 = vunpack.c.h.b16 %v5158
    %v5581 = vunpack.c.l.b16 %v5159
    %v5582 = vunpack.c.h.b16 %v5159
    %v5583 = vunpack.c.l.b16 %v5160
    %v5584 = vunpack.c.h.b16 %v5160
    %v5585 = vunpack.c.l.b16 %v5161
    %v5586 = vunpack.c.h.b16 %v5161
    %v5587 = vunpack.c.l.b16 %v5162
    %v5588 = vunpack.c.h.b16 %v5162
    %v5589 = vunpack.c.l.b16 %v5163
    %v5590 = vunpack.c.h.b16 %v5163
    %v5591 = vunpack.c.l.b16 %v5164
    %v5592 = vunpack.c.h.b16 %v5164
    %v5593 = vunpack.c.l.b16 %v5165
    %v5594 = vunpack.c.h.b16 %v5165
    %v5595 = vunpack.c.l.b16 %v5166
    %v5596 = vunpack.c.h.b16 %v5166
    %v5597 = vunpack.c.l.b16 %v5167
    %v5598 = vunpack.c.h.b16 %v5167
    %v5599 = vunpack.c.l.b16 %v5168
    %v5600 = vunpack.c.h.b16 %v5168
    %v5601 = vunpack.c.l.b16 %v5169
    %v5602 = vunpack.c.h.b16 %v5169
    %v5603 = vunpack.c.l.b16 %v5170
    %v5604 = vunpack.c.h.b16 %v5170
    %v5605 = vunpack.c.l.b16 %v5171
    %v5606 = vunpack.c.h.b16 %v5171
    %v5607 = vunpack.c.l.b16 %v5172
    %v5608 = vunpack.c.h.b16 %v5172
    %v5609 = vunpack.c.l.b16 %v5173
    %v5610 = vunpack.c.h.b16 %v5173
    %v5611 = vunpack.c.l.b16 %v5174
    %v5612 = vunpack.c.h.b16 %v5174
    %v5613 = vunpack.c.l.b16 %v5175
    %v5614 = vunpack.c.h.b16 %v5175
    %v5615 = vunpack.c.l.b16 %v5176
    %v5616 = vunpack.c.h.b16 %v5176
    %v5617 = vunpack.c.l.b16 %v5177
    %v5618 = vunpack.c.h.b16 %v5177
    %v5619 = vunpack.c.l.b16 %v5178
    %v5620 = vunpack.c.h.b16 %v5178
    %v5621 = vunpack.c.l.b16 %v5179
    %v5622 = vunpack.c.h.b16 %v5179
    %v5623 = vunpack.c.l.b16 %v5180
    %v5624 = vunpack.c.h.b16 %v5180
    %v5625 = vunpack.c.l.b16 %v5181
    %v5626 = vunpack.c.h.b16 %v5181
    %v5627 = vunpack.c.l.b16 %v5182
    %v5628 = vunpack.c.h.b16 %v5182
    %v5629 = vunpack.c.l.b16 %v5183
    %v5630 = vunpack.c.h.b16 %v5183
    %v5631 = vunpack.c.l.b16 %v5184
    %v5632 = vunpack.c.h.b16 %v5184
    %v5633 = vunpack.c.l.b16 %v5185
    %v5634 = vunpack.c.h.b16 %v5185
    %v5635 = vunpack.c.l.b16 %v5186
    %v5636 = vunpack.c.h.b16 %v5186
    %v5637 = vunpack.c.l.b16 %v5187
    %v5638 = vunpack.c.h.b16 %v5187
    %v5639 = vunpack.c.l.b16 %v5188
    %v5640 = vunpack.c.h.b16 %v5188
    %v5641 = vunpack.c.l.b16 %v5189
    %v5642 = vunpack.c.h.b16 %v5189
    %v5643 = vunpack.c.l.b16 %v5190
    %v5644 = vunpack.c.h.b16 %v5190
    %v5645 = vunpack.c.l.b16 %v5191
    %v5646 = vunpack.c.h.b16 %v5191
    %v5647 = vunpack.c.l.b16 %v5192
    %v5648 = vunpack.c.h.b16 %v5192
    %v5649 = vunpack.c.l.b16 %v5193
    %v5650 = vunpack.c.h.b16 %v5193
    %v5651 = vunpack.c.l.b16 %v5194
    %v5652 = vunpack.c.h.b16 %v5194
    %v5653 = vunpack.c.l.b16 %v5195
    %v5654 = vunpack.c.h.b16 %v5195
    %v5655 = vunpack.c.l.b16 %v5196
    %v5656 = vunpack.c.h.b16 %v5196
    %v5657 = vunpack.c.l.b16 %v5197
    %v5658 = vunpack.c.h.b16 %v5197
    %v5659 = vunpack.c.l.b16 %v5198
    %v5660 = vunpack.c.h.b16 %v5198
    %v5661 = vunpack.c.l.b16 %v5199
    %v5662 = vunpack.c.h.b16 %v5199
    %v5663 = vunpack.c.l.b16 %v5200
    %v5664 = vunpack.c.h.b16 %v5200
    %v5665 = vunpack.c.l.b16 %v5201
    %v5666 = vunpack.c.h.b16 %v5201
    %v5667 = vunpack.c.l.b16 %v5202
    %v5668 = vunpack.c.h.b16 %v5202
    %v5669 = vunpack.c.l.b16 %v5203
    %v5670 = vunpack.c.h.b16 %v5203
    %v5671 = vunpack.c.l.b16 %v5204
    %v5672 = vunpack.c.h.b16 %v5204
    %v5673 = vunpack.c.l.b16 %v5205
    %v5674 = vunpack.c.h.b16 %v5205
    %v5675 = vunpack.c.l.b16 %v5206
    %v5676 = vunpack.c.h.b16 %v5206
    %v5677 = vunpack.c.l.b16 %v5207
    %v5678 = vunpack.c.h.b16 %v5207
    %v5679 = vunpack.c.l.b16 %v5208
    %v5680 = vunpack.c.h.b16 %v5208
    %v5681 = vpack.c.b16 %v5433, %v5425
    %v5682 = vpack.c.b16 %v5434, %v5426
    %v5683 = vpack.c.b16 %v5435, %v5427
    %v5684 = vpack.c.b16 %v5436, %v5428
    %v5685 = vpack.c.b16 %v5437, %v5429
    %v5686 = vpack.c.b16 %v5438, %v5430
    %v5687 = vpack.c.b16 %v5439, %v5431
    %v5688 = vpack.c.b16 %v5440, %v5432
    %v5689 = vpack.c.b16 %v5449, %v5441
    %v5690 = vpack.c.b16 %v5450, %v5442
    %v5691 = vpack.c.b16 %v5451, %v5443
    %v5692 = vpack.c.b16 %v5452, %v5444
    %v5693 = vpack.c.b16 %v5453, %v5445
    %v5694 = vpack.c.b16 %v5454, %v5446
    %v5695 = vpack.c.b16 %v5455, %v5447
    %v5696 = vpack.c.b16 %v5456, %v5448
    %v5697 = vpack.c.b16 %v5465, %v5457
    %v5698 = vpack.c.b16 %v5466, %v5458
    %v5699 = vpack.c.b16 %v5467, %v5459
    %v5700 = vpack.c.b16 %v5468, %v5460
    %v5701 = vpack.c.b16 %v5469, %v5461
    %v5702 = vpack.c.b16 %v5470, %v5462
    %v5703 = vpack.c.b16 %v5471, %v5463
    %v5704 = vpack.c.b16 %v5472, %v5464
    %v5705 = vpack.c.b16 %v5481, %v5473
    %v5706 = vpack.c.b16 %v5482, %v5474
    %v5707 = vpack.c.b16 %v5483, %v5475
    %v5708 = vpack.c.b16 %v5484, %v5476
    %v5709 = vpack.c.b16 %v5485, %v5477
    %v5710 = vpack.c.b16 %v5486, %v5478
    %v5711 = vpack.c.b16 %v5487, %v5479
    %v5712 = vpack.c.b16 %v5488, %v5480
    %v5713 = vpack.c.b16 %v5497, %v5489
    %v5714 = vpack.c.b16 %v5498, %v5490
    %v5715 = vpack.c.b16 %v5499, %v5491
    %v5716 = vpack.c.b16 %v5500, %v5492
    %v5717 = vpack.c.b16 %v5501, %v5493
    %v5718 = vpack.c.b16 %v5502, %v5494
    %v5719 = vpack.c.b16 %v5503, %v5495
    %v5720 = vpack.c.b16 %v5504, %v5496
    %v5721 = vpack.c.b16 %v5513, %v5505
    %v5722 = vpack.c.b16 %v5514, %v5506
    %v5723 = vpack.c.b16 %v5515, %v5507
    %v5724 = vpack.c.b16 %v5516, %v5508
    %v5725 = vpack.c.b16 %v5517, %v5509
    %v5726 = vpack.c.b16 %v5518, %v5510
    %v5727 = vpack.c.b16 %v5519, %v5511
    %v5728 = vpack.c.b16 %v5520, %v5512
    %v5729 = vpack.c.b16 %v5529, %v5521
    %v5730 = vpack.c.b16 %v5530, %v5522
    %v5731 = vpack.c.b16 %v5531, %v5523
    %v5732 = vpack.c.b16 %v5532, %v5524
    %v5733 = vpack.c.b16 %v5533, %v5525
    %v5734 = vpack.c.b16 %v5534, %v5526
    %v5735 = vpack.c.b16 %v5535, %v5527
    %v5736 = vpack.c.b16 %v5536, %v5528
    %v5737 = vpack.c.b16 %v5545, %v5537
    %v5738 = vpack.c.b16 %v5546, %v5538
    %v5739 = vpack.c.b16 %v5547, %v5539
    %v5740 = vpack.c.b16 %v5548, %v5540
    %v5741 = vpack.c.b16 %v5549, %v5541
    %v5742 = vpack.c.b16 %v5550, %v5542
    %v5743 = vpack.c.b16 %v5551, %v5543
    %v5744 = vpack.c.b16 %v5552, %v5544
    %v5745 = vpack.c.b16 %v5561, %v5553
    %v5746 = vpack.c.b16 %v5562, %v5554
    %v5747 = vpack.c.b16 %v5563, %v5555
    %v5748 = vpack.c.b16 %v5564, %v5556
    %v5749 = vpack.c.b16 %v5565, %v5557
    %v5750 = vpack.c.b16 %v5566, %v5558
    %v5751 = vpack.c.b16 %v5567, %v5559
    %v5752 = vpack.c.b16 %v5568, %v5560
    %v5753 = vpack.c.b16 %v5577, %v5569
    %v5754 = vpack.c.b16 %v5578, %v5570
    %v5755 = vpack.c.b16 %v5579, %v5571
    %v5756 = vpack.c.b16 %v5580, %v5572
    %v5757 = vpack.c.b16 %v5581, %v5573
    %v5758 = vpack.c.b16 %v5582, %v5574
    %v5759 = vpack.c.b16 %v5583, %v5575
    %v5760 = vpack.c.b16 %v5584, %v5576
    %v5761 = vpack.c.b16 %v5593, %v5585
    %v5762 = vpack.c.b16 %v5594, %v5586
    %v5763 = vpack.c.b16 %v5595, %v5587
    %v5764 = vpack.c.b16 %v5596, %v5588
    %v5765 = vpack.c.b16 %v5597, %v5589
    %v5766 = vpack.c.b16 %v5598, %v5590
    %v5767 = vpack.c.b16 %v5599, %v5591
    %v5768 = vpack.c.b16 %v5600, %v5592
    %v5769 = vpack.c.b16 %v5609, %v5601
    %v5770 = vpack.c.b16 %v5610, %v5602
    %v5771 = vpack.c.b16 %v5611, %v5603
    %v5772 = vpack.c.b16 %v5612, %v5604
    %v5773 = vpack.c.b16 %v5613, %v5605
    %v5774 = vpack.c.b16 %v5614, %v5606
    %v5775 = vpack.c.b16 %v5615, %v5607
    %v5776 = vpack.c.b16 %v5616, %v5608
    %v5777 = vpack.c.b16 %v5625, %v5617
    %v5778 = vpack.c.b16 %v5626, %v5618
    %v5779 = vpack.c.b16 %v5627, %v5619
    %v5780 = vpack.c.b16 %v5628, %v5620
    %v5781 = vpack.c.b16 %v5629, %v5621
    %v5782 = vpack.c.b16 %v5630, %v5622
    %v5783 = vpack.c.b16 %v5631, %v5623
    %v5784 = vpack.c.b16 %v5632, %v5624
    %v5785 = vpack.c.b16 %v5641, %v5633
    %v5786 = vpack.c.b16 %v5642, %v5634
    %v5787 = vpack.c.b16 %v5643, %v5635
    %v5788 = vpack.c.b16 %v5644, %v5636
    %v5789 = vpack.c.b16 %v5645, %v5637
    %v5790 = vpack.c.b16 %v5646, %v5638
    %v5791 = vpack.c.b16 %v5647, %v5639
    %v5792 = vpack.c.b16 %v5648, %v5640
    %v5793 = vpack.c.b16 %v5657, %v5649
    %v5794 = vpack.c.b16 %v5658, %v5650
    %v5795 = vpack.c.b16 %v5659, %v5651
    %v5796 = vpack.c.b16 %v5660, %v5652
    %v5797 = vpack.c.b16 %v5661, %v5653
    %v5798 = vpack.c.b16 %v5662, %v5654
    %v5799 = vpack.c.b16 %v5663, %v5655
    %v5800 = vpack.c.b16 %v5664, %v5656
    %v5801 = vpack.c.b16 %v5673, %v5665
    %v5802 = vpack.c.b16 %v5674, %v5666
    %v5803 = vpack.c.b16 %v5675, %v5667
    %v5804 = vpack.c.b16 %v5676, %v5668
    %v5805 = vpack.c.b16 %v5677, %v5669
    %v5806 = vpack.c.b16 %v5678, %v5670
    %v5807 = vpack.c.b16 %v5679, %v5671
    %v5808 = vpack.c.b16 %v5680, %v5672
    %5937 = vmatprep.subr.bf16.mxu0 %v5738
    %5938 = vmatpush1.bf16.msra.mxu0 %v5737
    %5939 = vmatprep.subr.bf16.mxu0 %v5730
    %5940 = vmatpush1.bf16.msra.mxu0 %v5729
    %5941 = vmatprep.subr.bf16.mxu0 %v5722
    %5942 = vmatpush1.bf16.msra.mxu0 %v5721
    %5943 = vmatprep.subr.bf16.mxu0 %v5714
    %5944 = vmatpush1.bf16.msra.mxu0 %v5713
    %5945 = vmatprep.subr.bf16.mxu0 %v5706
    %5946 = vmatpush1.bf16.msra.mxu0 %v5705
    %5947 = vmatprep.subr.bf16.mxu0 %v5698
    %5948 = vmatpush1.bf16.msra.mxu0 %v5697
    %5949 = vmatprep.subr.bf16.mxu0 %v5690
    %5950 = vmatpush1.bf16.msra.mxu0 %v5689
    %5951 = vmatprep.subr.bf16.mxu0 %v5682
    %5952 = vmatpush1.bf16.msra.mxu0 %v5681
    %5953 = vmatprep.subr.bf16.mxu0 %v5802
    %5954 = vmatpush2.bf16.msra.mxu0 %v5801
    %5955 = vmatprep.subr.bf16.mxu0 %v5794
    %5956 = vmatpush2.bf16.msra.mxu0 %v5793
    %5957 = vmatprep.subr.bf16.mxu0 %v5786
    %5958 = vmatpush2.bf16.msra.mxu0 %v5785
    %5959 = vmatprep.subr.bf16.mxu0 %v5778
    %5960 = vmatpush2.bf16.msra.mxu0 %v5777
    %5961 = vmatprep.subr.bf16.mxu0 %v5770
    %5962 = vmatpush2.bf16.msra.mxu0 %v5769
    %5963 = vmatprep.subr.bf16.mxu0 %v5762
    %5964 = vmatpush2.bf16.msra.mxu0 %v5761
    %5965 = vmatprep.subr.bf16.mxu0 %v5754
    %5966 = vmatpush2.bf16.msra.mxu0 %v5753
    %5967 = vmatprep.subr.bf16.mxu0 %v5746
    %5968 = vmatpush2.bf16.msra.mxu0 %v5745
    %5969 = vmatprep.mubr.bf16.mxu0 %v5294
    %5970 = vmatmul.mubr.bf16.gmra.mxu0 %v5293
    %v5971 = vpop.f32.mrf.mxu0
    %v5972 = vadd.f32 0.0, %v5971
    %v5973 = vpop.f32.mrf.mxu0
    %v5974 = vadd.f32 0.0, %v5973
    %v5975 = vpop.f32.mrf.mxu0
    %v5976 = vpop.f32.mrf.mxu0
    %5977 = vdwg.mxu0
    %5978 = vmatprep.subr.bf16.mxu0 %v5740
    %5979 = vmatpush1.bf16.msra.mxu0 %v5739
    %5980 = vmatprep.subr.bf16.mxu0 %v5732
    %5981 = vmatpush1.bf16.msra.mxu0 %v5731
    %5982 = vmatprep.subr.bf16.mxu0 %v5724
    %5983 = vmatpush1.bf16.msra.mxu0 %v5723
    %5984 = vmatprep.subr.bf16.mxu0 %v5716
    %5985 = vmatpush1.bf16.msra.mxu0 %v5715
    %5986 = vmatprep.subr.bf16.mxu0 %v5708
    %5987 = vmatpush1.bf16.msra.mxu0 %v5707
    %5988 = vmatprep.subr.bf16.mxu0 %v5700
    %5989 = vmatpush1.bf16.msra.mxu0 %v5699
    %5990 = vmatprep.subr.bf16.mxu0 %v5692
    %5991 = vmatpush1.bf16.msra.mxu0 %v5691
    %5992 = vmatprep.subr.bf16.mxu0 %v5684
    %5993 = vmatpush1.bf16.msra.mxu0 %v5683
    %5994 = vmatprep.subr.bf16.mxu0 %v5804
    %5995 = vmatpush2.bf16.msra.mxu0 %v5803
    %5996 = vmatprep.subr.bf16.mxu0 %v5796
    %5997 = vmatpush2.bf16.msra.mxu0 %v5795
    %5998 = vmatprep.subr.bf16.mxu0 %v5788
    %5999 = vmatpush2.bf16.msra.mxu0 %v5787
    %6000 = vmatprep.subr.bf16.mxu0 %v5780
    %6001 = vmatpush2.bf16.msra.mxu0 %v5779
    %6002 = vmatprep.subr.bf16.mxu0 %v5772
    %6003 = vmatpush2.bf16.msra.mxu0 %v5771
    %6004 = vmatprep.subr.bf16.mxu0 %v5764
    %6005 = vmatpush2.bf16.msra.mxu0 %v5763
    %6006 = vmatprep.subr.bf16.mxu0 %v5756
    %6007 = vmatpush2.bf16.msra.mxu0 %v5755
    %6008 = vmatprep.subr.bf16.mxu0 %v5748
    %6009 = vmatpush2.bf16.msra.mxu0 %v5747
    %6010 = vmatprep.mubr.bf16.mxu0 %v5294
    %6011 = vmatmul.mubr.bf16.gmra.mxu0 %v5293
    %v6012 = vpop.f32.mrf.mxu0
    %v6013 = vadd.f32 0.0, %v6012
    %v6014 = vpop.f32.mrf.mxu0
    %v6015 = vadd.f32 0.0, %v6014
    %v6016 = vpop.f32.mrf.mxu0
    %v6017 = vpop.f32.mrf.mxu0
    %6018 = vdwg.mxu0
    %6019 = vmatprep.subr.bf16.mxu0 %v5742
    %6020 = vmatpush1.bf16.msra.mxu0 %v5741
    %6021 = vmatprep.subr.bf16.mxu0 %v5734
    %6022 = vmatpush1.bf16.msra.mxu0 %v5733
    %6023 = vmatprep.subr.bf16.mxu0 %v5726
    %6024 = vmatpush1.bf16.msra.mxu0 %v5725
    %6025 = vmatprep.subr.bf16.mxu0 %v5718
    %6026 = vmatpush1.bf16.msra.mxu0 %v5717
    %6027 = vmatprep.subr.bf16.mxu0 %v5710
    %6028 = vmatpush1.bf16.msra.mxu0 %v5709
    %6029 = vmatprep.subr.bf16.mxu0 %v5702
    %6030 = vmatpush1.bf16.msra.mxu0 %v5701
    %6031 = vmatprep.subr.bf16.mxu0 %v5694
    %6032 = vmatpush1.bf16.msra.mxu0 %v5693
    %6033 = vmatprep.subr.bf16.mxu0 %v5686
    %6034 = vmatpush1.bf16.msra.mxu0 %v5685
    %6035 = vmatprep.subr.bf16.mxu0 %v5806
    %6036 = vmatpush2.bf16.msra.mxu0 %v5805
    %6037 = vmatprep.subr.bf16.mxu0 %v5798
    %6038 = vmatpush2.bf16.msra.mxu0 %v5797
    %6039 = vmatprep.subr.bf16.mxu0 %v5790
    %6040 = vmatpush2.bf16.msra.mxu0 %v5789
    %6041 = vmatprep.subr.bf16.mxu0 %v5782
    %6042 = vmatpush2.bf16.msra.mxu0 %v5781
    %6043 = vmatprep.subr.bf16.mxu0 %v5774
    %6044 = vmatpush2.bf16.msra.mxu0 %v5773
    %6045 = vmatprep.subr.bf16.mxu0 %v5766
    %6046 = vmatpush2.bf16.msra.mxu0 %v5765
    %6047 = vmatprep.subr.bf16.mxu0 %v5758
    %6048 = vmatpush2.bf16.msra.mxu0 %v5757
    %6049 = vmatprep.subr.bf16.mxu0 %v5750
    %6050 = vmatpush2.bf16.msra.mxu0 %v5749
    %6051 = vmatprep.mubr.bf16.mxu0 %v5294
    %6052 = vmatmul.mubr.bf16.gmra.mxu0 %v5293
    %v6053 = vpop.f32.mrf.mxu0
    %v6054 = vadd.f32 0.0, %v6053
    %v6055 = vpop.f32.mrf.mxu0
    %v6056 = vadd.f32 0.0, %v6055
    %v6057 = vpop.f32.mrf.mxu0
    %v6058 = vpop.f32.mrf.mxu0
    %6059 = vdwg.mxu0
    %6060 = vmatprep.subr.bf16.mxu0 %v5744
    %6061 = vmatpush1.bf16.msra.mxu0 %v5743
    %6062 = vmatprep.subr.bf16.mxu0 %v5736
    %6063 = vmatpush1.bf16.msra.mxu0 %v5735
    %6064 = vmatprep.subr.bf16.mxu0 %v5728
    %6065 = vmatpush1.bf16.msra.mxu0 %v5727
    %6066 = vmatprep.subr.bf16.mxu0 %v5720
    %6067 = vmatpush1.bf16.msra.mxu0 %v5719
    %6068 = vmatprep.subr.bf16.mxu0 %v5712
    %6069 = vmatpush1.bf16.msra.mxu0 %v5711
    %6070 = vmatprep.subr.bf16.mxu0 %v5704
    %6071 = vmatpush1.bf16.msra.mxu0 %v5703
    %6072 = vmatprep.subr.bf16.mxu0 %v5696
    %6073 = vmatpush1.bf16.msra.mxu0 %v5695
    %6074 = vmatprep.subr.bf16.mxu0 %v5688
    %6075 = vmatpush1.bf16.msra.mxu0 %v5687
    %6076 = vmatprep.subr.bf16.mxu0 %v5808
    %6077 = vmatpush2.bf16.msra.mxu0 %v5807
    %6078 = vmatprep.subr.bf16.mxu0 %v5800
    %6079 = vmatpush2.bf16.msra.mxu0 %v5799
    %6080 = vmatprep.subr.bf16.mxu0 %v5792
    %6081 = vmatpush2.bf16.msra.mxu0 %v5791
    %6082 = vmatprep.subr.bf16.mxu0 %v5784
    %6083 = vmatpush2.bf16.msra.mxu0 %v5783
    %6084 = vmatprep.subr.bf16.mxu0 %v5776
    %6085 = vmatpush2.bf16.msra.mxu0 %v5775
    %6086 = vmatprep.subr.bf16.mxu0 %v5768
    %6087 = vmatpush2.bf16.msra.mxu0 %v5767
    %6088 = vmatprep.subr.bf16.mxu0 %v5760
    %6089 = vmatpush2.bf16.msra.mxu0 %v5759
    %6090 = vmatprep.subr.bf16.mxu0 %v5752
    %6091 = vmatpush2.bf16.msra.mxu0 %v5751
    %6092 = vmatprep.mubr.bf16.mxu0 %v5294
    %6093 = vmatmul.mubr.bf16.gmra.mxu0 %v5293
    %v6094 = vpop.f32.mrf.mxu0
    %v6095 = vadd.f32 0.0, %v6094
    %v6096 = vpop.f32.mrf.mxu0
    %v6097 = vadd.f32 0.0, %v6096
    %v6098 = vpop.f32.mrf.mxu0
    %v6099 = vpop.f32.mrf.mxu0
    %6100 = vdwg.mxu0
    %v6101 = vadd.f32 %v5064, %v5972
    %v6102 = vadd.f32 %v5065, %v5974
    %v6103 = vadd.f32 %v5066, %v6013
    %v6104 = vadd.f32 %v5067, %v6015
    %v6105 = vadd.f32 %v5068, %v6054
    %v6106 = vadd.f32 %v5069, %v6056
    %v6107 = vadd.f32 %v5070, %v6095
    %v6108 = vadd.f32 %v5071, %v6097
    %6109 = vst [vmem:[#allocation3] sm:$0xff] %v6101
    %6110 = vst [vmem:[#allocation3 + $0x8] sm:$0xff] %v6102
    %6111 = vst [vmem:[#allocation3 + $0x10] sm:$0xff] %v6103
    %6112 = vst [vmem:[#allocation3 + $0x18] sm:$0xff] %v6104
    %6113 = vst [vmem:[#allocation3 + $0x20] sm:$0xff] %v6105
    %6114 = vst [vmem:[#allocation3 + $0x28] sm:$0xff] %v6106
    %6115 = vst [vmem:[#allocation3 + $0x30] sm:$0xff] %v6107
    %6116 = vst [vmem:[#allocation3 + $0x38] sm:$0xff] %v6108
    %v6117 = vld [vmem:[#allocation3] sm:$0xff]
    %v6118 = vld [vmem:[#allocation3 + $0x8] sm:$0xff]
    %v6119 = vld [vmem:[#allocation3 + $0x10] sm:$0xff]
    %v6120 = vld [vmem:[#allocation3 + $0x18] sm:$0xff]
    %v6121 = vld [vmem:[#allocation3 + $0x20] sm:$0xff]
    %v6122 = vld [vmem:[#allocation3 + $0x28] sm:$0xff]
    %v6123 = vld [vmem:[#allocation3 + $0x30] sm:$0xff]
    %v6124 = vld [vmem:[#allocation3 + $0x38] sm:$0xff]
    %v6125 = vld [vmem:[#allocation2] sm:$0x44]
    %v6126 = vld [vmem:[#allocation2 + $0x8] sm:$0x44]
    %v6127 = vld [vmem:[#allocation2 + $0x10] sm:$0x44]
    %v6128 = vld [vmem:[#allocation2 + $0x18] sm:$0x44]
    %v6129 = vld [vmem:[#allocation2 + $0x20] sm:$0x44]
    %v6130 = vld [vmem:[#allocation2 + $0x28] sm:$0x44]
    %v6131 = vld [vmem:[#allocation2 + $0x30] sm:$0x44]
    %v6132 = vld [vmem:[#allocation2 + $0x38] sm:$0x44]
    %s6133 = scalar_lea.vmem [#allocation6], 5120
    %v6134 = vld [vmem:[%s6133] sm:$0xff]
    %v6135 = vld [vmem:[%s6133 + $0x8] sm:$0xff]
    %v6136 = vld [vmem:[%s6133 + $0x10] sm:$0xff]
    %v6137 = vld [vmem:[%s6133 + $0x18] sm:$0xff]
    %v6138 = vld [vmem:[%s6133 + $0x20] sm:$0xff]
    %v6139 = vld [vmem:[%s6133 + $0x28] sm:$0xff]
    %v6140 = vld [vmem:[%s6133 + $0x30] sm:$0xff]
    %v6141 = vld [vmem:[%s6133 + $0x38] sm:$0xff]
    %v6142 = vld [vmem:[%s6133 + $0x40] sm:$0xff]
    %v6143 = vld [vmem:[%s6133 + $0x48] sm:$0xff]
    %v6144 = vld [vmem:[%s6133 + $0x50] sm:$0xff]
    %v6145 = vld [vmem:[%s6133 + $0x58] sm:$0xff]
    %v6146 = vld [vmem:[%s6133 + $0x60] sm:$0xff]
    %v6147 = vld [vmem:[%s6133 + $0x68] sm:$0xff]
    %v6148 = vld [vmem:[%s6133 + $0x70] sm:$0xff]
    %v6149 = vld [vmem:[%s6133 + $0x78] sm:$0xff]
    %v6150 = vld [vmem:[%s6133 + $0x80] sm:$0xff]
    %v6151 = vld [vmem:[%s6133 + $0x88] sm:$0xff]
    %v6152 = vld [vmem:[%s6133 + $0x90] sm:$0xff]
    %v6153 = vld [vmem:[%s6133 + $0x98] sm:$0xff]
    %v6154 = vld [vmem:[%s6133 + $0xa0] sm:$0xff]
    %v6155 = vld [vmem:[%s6133 + $0xa8] sm:$0xff]
    %v6156 = vld [vmem:[%s6133 + $0xb0] sm:$0xff]
    %v6157 = vld [vmem:[%s6133 + $0xb8] sm:$0xff]
    %v6158 = vld [vmem:[%s6133 + $0xc0] sm:$0xff]
    %v6159 = vld [vmem:[%s6133 + $0xc8] sm:$0xff]
    %v6160 = vld [vmem:[%s6133 + $0xd0] sm:$0xff]
    %v6161 = vld [vmem:[%s6133 + $0xd8] sm:$0xff]
    %v6162 = vld [vmem:[%s6133 + $0xe0] sm:$0xff]
    %v6163 = vld [vmem:[%s6133 + $0xe8] sm:$0xff]
    %v6164 = vld [vmem:[%s6133 + $0xf0] sm:$0xff]
    %v6165 = vld [vmem:[%s6133 + $0xf8] sm:$0xff]
    %v6166 = vld [vmem:[%s6133 + $0x100] sm:$0xff]
    %v6167 = vld [vmem:[%s6133 + $0x108] sm:$0xff]
    %v6168 = vld [vmem:[%s6133 + $0x110] sm:$0xff]
    %v6169 = vld [vmem:[%s6133 + $0x118] sm:$0xff]
    %v6170 = vld [vmem:[%s6133 + $0x120] sm:$0xff]
    %v6171 = vld [vmem:[%s6133 + $0x128] sm:$0xff]
    %v6172 = vld [vmem:[%s6133 + $0x130] sm:$0xff]
    %v6173 = vld [vmem:[%s6133 + $0x138] sm:$0xff]
    %v6174 = vld [vmem:[%s6133 + $0x140] sm:$0xff]
    %v6175 = vld [vmem:[%s6133 + $0x148] sm:$0xff]
    %v6176 = vld [vmem:[%s6133 + $0x150] sm:$0xff]
    %v6177 = vld [vmem:[%s6133 + $0x158] sm:$0xff]
    %v6178 = vld [vmem:[%s6133 + $0x160] sm:$0xff]
    %v6179 = vld [vmem:[%s6133 + $0x168] sm:$0xff]
    %v6180 = vld [vmem:[%s6133 + $0x170] sm:$0xff]
    %v6181 = vld [vmem:[%s6133 + $0x178] sm:$0xff]
    %v6182 = vld [vmem:[%s6133 + $0x180] sm:$0xff]
    %v6183 = vld [vmem:[%s6133 + $0x188] sm:$0xff]
    %v6184 = vld [vmem:[%s6133 + $0x190] sm:$0xff]
    %v6185 = vld [vmem:[%s6133 + $0x198] sm:$0xff]
    %v6186 = vld [vmem:[%s6133 + $0x1a0] sm:$0xff]
    %v6187 = vld [vmem:[%s6133 + $0x1a8] sm:$0xff]
    %v6188 = vld [vmem:[%s6133 + $0x1b0] sm:$0xff]
    %v6189 = vld [vmem:[%s6133 + $0x1b8] sm:$0xff]
    %v6190 = vld [vmem:[%s6133 + $0x1c0] sm:$0xff]
    %v6191 = vld [vmem:[%s6133 + $0x1c8] sm:$0xff]
    %v6192 = vld [vmem:[%s6133 + $0x1d0] sm:$0xff]
    %v6193 = vld [vmem:[%s6133 + $0x1d8] sm:$0xff]
    %v6194 = vld [vmem:[%s6133 + $0x1e0] sm:$0xff]
    %v6195 = vld [vmem:[%s6133 + $0x1e8] sm:$0xff]
    %v6196 = vld [vmem:[%s6133 + $0x1f0] sm:$0xff]
    %v6197 = vld [vmem:[%s6133 + $0x1f8] sm:$0xff]
    %v6198 = vld [vmem:[%s6133 + $0x200] sm:$0xff]
    %v6199 = vld [vmem:[%s6133 + $0x208] sm:$0xff]
    %v6200 = vld [vmem:[%s6133 + $0x210] sm:$0xff]
    %v6201 = vld [vmem:[%s6133 + $0x218] sm:$0xff]
    %v6202 = vld [vmem:[%s6133 + $0x220] sm:$0xff]
    %v6203 = vld [vmem:[%s6133 + $0x228] sm:$0xff]
    %v6204 = vld [vmem:[%s6133 + $0x230] sm:$0xff]
    %v6205 = vld [vmem:[%s6133 + $0x238] sm:$0xff]
    %v6206 = vld [vmem:[%s6133 + $0x240] sm:$0xff]
    %v6207 = vld [vmem:[%s6133 + $0x248] sm:$0xff]
    %v6208 = vld [vmem:[%s6133 + $0x250] sm:$0xff]
    %v6209 = vld [vmem:[%s6133 + $0x258] sm:$0xff]
    %v6210 = vld [vmem:[%s6133 + $0x260] sm:$0xff]
    %v6211 = vld [vmem:[%s6133 + $0x268] sm:$0xff]
    %v6212 = vld [vmem:[%s6133 + $0x270] sm:$0xff]
    %v6213 = vld [vmem:[%s6133 + $0x278] sm:$0xff]
    %v6214 = vld [vmem:[%s6133 + $0x280] sm:$0xff]
    %v6215 = vld [vmem:[%s6133 + $0x288] sm:$0xff]
    %v6216 = vld [vmem:[%s6133 + $0x290] sm:$0xff]
    %v6217 = vld [vmem:[%s6133 + $0x298] sm:$0xff]
    %v6218 = vld [vmem:[%s6133 + $0x2a0] sm:$0xff]
    %v6219 = vld [vmem:[%s6133 + $0x2a8] sm:$0xff]
    %v6220 = vld [vmem:[%s6133 + $0x2b0] sm:$0xff]
    %v6221 = vld [vmem:[%s6133 + $0x2b8] sm:$0xff]
    %v6222 = vld [vmem:[%s6133 + $0x2c0] sm:$0xff]
    %v6223 = vld [vmem:[%s6133 + $0x2c8] sm:$0xff]
    %v6224 = vld [vmem:[%s6133 + $0x2d0] sm:$0xff]
    %v6225 = vld [vmem:[%s6133 + $0x2d8] sm:$0xff]
    %v6226 = vld [vmem:[%s6133 + $0x2e0] sm:$0xff]
    %v6227 = vld [vmem:[%s6133 + $0x2e8] sm:$0xff]
    %v6228 = vld [vmem:[%s6133 + $0x2f0] sm:$0xff]
    %v6229 = vld [vmem:[%s6133 + $0x2f8] sm:$0xff]
    %v6230 = vld [vmem:[%s6133 + $0x300] sm:$0xff]
    %v6231 = vld [vmem:[%s6133 + $0x308] sm:$0xff]
    %v6232 = vld [vmem:[%s6133 + $0x310] sm:$0xff]
    %v6233 = vld [vmem:[%s6133 + $0x318] sm:$0xff]
    %v6234 = vld [vmem:[%s6133 + $0x320] sm:$0xff]
    %v6235 = vld [vmem:[%s6133 + $0x328] sm:$0xff]
    %v6236 = vld [vmem:[%s6133 + $0x330] sm:$0xff]
    %v6237 = vld [vmem:[%s6133 + $0x338] sm:$0xff]
    %v6238 = vld [vmem:[%s6133 + $0x340] sm:$0xff]
    %v6239 = vld [vmem:[%s6133 + $0x348] sm:$0xff]
    %v6240 = vld [vmem:[%s6133 + $0x350] sm:$0xff]
    %v6241 = vld [vmem:[%s6133 + $0x358] sm:$0xff]
    %v6242 = vld [vmem:[%s6133 + $0x360] sm:$0xff]
    %v6243 = vld [vmem:[%s6133 + $0x368] sm:$0xff]
    %v6244 = vld [vmem:[%s6133 + $0x370] sm:$0xff]
    %v6245 = vld [vmem:[%s6133 + $0x378] sm:$0xff]
    %v6246 = vld [vmem:[%s6133 + $0x380] sm:$0xff]
    %v6247 = vld [vmem:[%s6133 + $0x388] sm:$0xff]
    %v6248 = vld [vmem:[%s6133 + $0x390] sm:$0xff]
    %v6249 = vld [vmem:[%s6133 + $0x398] sm:$0xff]
    %v6250 = vld [vmem:[%s6133 + $0x3a0] sm:$0xff]
    %v6251 = vld [vmem:[%s6133 + $0x3a8] sm:$0xff]
    %v6252 = vld [vmem:[%s6133 + $0x3b0] sm:$0xff]
    %v6253 = vld [vmem:[%s6133 + $0x3b8] sm:$0xff]
    %v6254 = vld [vmem:[%s6133 + $0x3c0] sm:$0xff]
    %v6255 = vld [vmem:[%s6133 + $0x3c8] sm:$0xff]
    %v6256 = vld [vmem:[%s6133 + $0x3d0] sm:$0xff]
    %v6257 = vld [vmem:[%s6133 + $0x3d8] sm:$0xff]
    %v6258 = vld [vmem:[%s6133 + $0x3e0] sm:$0xff]
    %v6259 = vld [vmem:[%s6133 + $0x3e8] sm:$0xff]
    %v6260 = vld [vmem:[%s6133 + $0x3f0] sm:$0xff]
    %v6261 = vld [vmem:[%s6133 + $0x3f8] sm:$0xff]
    %v6270 = vunpack.c.l.b16 %v6125
    %v6271 = vunpack.c.h.b16 %v6125
    %v6272 = vunpack.c.l.b16 %v6126
    %v6273 = vunpack.c.h.b16 %v6126
    %v6274 = vunpack.c.l.b16 %v6127
    %v6275 = vunpack.c.h.b16 %v6127
    %v6276 = vunpack.c.l.b16 %v6128
    %v6277 = vunpack.c.h.b16 %v6128
    %v6278 = vunpack.c.l.b16 %v6129
    %v6279 = vunpack.c.h.b16 %v6129
    %v6280 = vunpack.c.l.b16 %v6130
    %v6281 = vunpack.c.h.b16 %v6130
    %v6282 = vunpack.c.l.b16 %v6131
    %v6283 = vunpack.c.h.b16 %v6131
    %v6284 = vunpack.c.l.b16 %v6132
    %v6285 = vunpack.c.h.b16 %v6132
    %v6286 = vpack.c.b16 %v6270, %v6270
    %v6287 = vpack.c.b16 %v6271, %v6271
    %v6288 = vpack.c.b16 %v6272, %v6272
    %v6289 = vpack.c.b16 %v6273, %v6273
    %v6290 = vpack.c.b16 %v6274, %v6274
    %v6291 = vpack.c.b16 %v6275, %v6275
    %v6292 = vpack.c.b16 %v6276, %v6276
    %v6293 = vpack.c.b16 %v6277, %v6277
    %v6294 = vpack.c.b16 %v6278, %v6278
    %v6295 = vpack.c.b16 %v6279, %v6279
    %v6296 = vpack.c.b16 %v6280, %v6280
    %v6297 = vpack.c.b16 %v6281, %v6281
    %v6298 = vpack.c.b16 %v6282, %v6282
    %v6299 = vpack.c.b16 %v6283, %v6283
    %v6300 = vpack.c.b16 %v6284, %v6284
    %v6301 = vpack.c.b16 %v6285, %v6285
    %v6302 = vunpack.c.l.b16 %v6286
    %v6303 = vunpack.c.l.b16 %v6287
    %v6304 = vunpack.c.l.b16 %v6288
    %v6305 = vunpack.c.l.b16 %v6289
    %v6306 = vunpack.c.l.b16 %v6290
    %v6307 = vunpack.c.l.b16 %v6291
    %v6308 = vunpack.c.l.b16 %v6292
    %v6309 = vunpack.c.l.b16 %v6293
    %v6310 = vunpack.c.l.b16 %v6294
    %v6311 = vunpack.c.l.b16 %v6295
    %v6312 = vunpack.c.l.b16 %v6296
    %v6313 = vunpack.c.l.b16 %v6297
    %v6314 = vunpack.c.l.b16 %v6298
    %v6315 = vunpack.c.l.b16 %v6299
    %v6316 = vunpack.c.l.b16 %v6300
    %v6317 = vunpack.c.l.b16 %v6301
    %v6318 = vrot.slane %v6302, 5
    %v6319 = vrot.slane %v6304, 4
    %v6320 = vsel %vm1047, %v6319, %v6318
    %v6321 = vrot.slane %v6306, 3
    %v6322 = vsel %vm1050, %v6321, %v6320
    %v6323 = vrot.slane %v6308, 2
    %v6324 = vsel %vm1053, %v6323, %v6322
    %v6325 = vrot.slane %v6310, 1
    %v6326 = vsel %vm1056, %v6325, %v6324
    %v6327 = vsel %vm1059, %v6312, %v6326
    %v6328 = vrot.slane %v6314, 7
    %v6329 = vsel %vm1062, %v6328, %v6327
    %v6330 = vrot.slane %v6316, 6
    %v6331 = vsel %vm1065, %v6330, %v6329
    %v6332 = vrot.slane %v6303, 5
    %v6333 = vrot.slane %v6305, 4
    %v6334 = vsel %vm1047, %v6333, %v6332
    %v6335 = vrot.slane %v6307, 3
    %v6336 = vsel %vm1050, %v6335, %v6334
    %v6337 = vrot.slane %v6309, 2
    %v6338 = vsel %vm1053, %v6337, %v6336
    %v6339 = vrot.slane %v6311, 1
    %v6340 = vsel %vm1056, %v6339, %v6338
    %v6341 = vsel %vm1059, %v6313, %v6340
    %v6342 = vrot.slane %v6315, 7
    %v6343 = vsel %vm1062, %v6342, %v6341
    %v6344 = vrot.slane %v6317, 6
    %v6345 = vsel %vm1065, %v6344, %v6343
    %v6346 = vpack.c.b16 %v6331, %v6331
    %v6347 = vpack.c.b16 %v6345, %v6345
    %v6478 = vunpack.c.l.b16 %v6134
    %v6479 = vunpack.c.h.b16 %v6134
    %v6480 = vunpack.c.l.b16 %v6135
    %v6481 = vunpack.c.h.b16 %v6135
    %v6482 = vunpack.c.l.b16 %v6136
    %v6483 = vunpack.c.h.b16 %v6136
    %v6484 = vunpack.c.l.b16 %v6137
    %v6485 = vunpack.c.h.b16 %v6137
    %v6486 = vunpack.c.l.b16 %v6138
    %v6487 = vunpack.c.h.b16 %v6138
    %v6488 = vunpack.c.l.b16 %v6139
    %v6489 = vunpack.c.h.b16 %v6139
    %v6490 = vunpack.c.l.b16 %v6140
    %v6491 = vunpack.c.h.b16 %v6140
    %v6492 = vunpack.c.l.b16 %v6141
    %v6493 = vunpack.c.h.b16 %v6141
    %v6494 = vunpack.c.l.b16 %v6142
    %v6495 = vunpack.c.h.b16 %v6142
    %v6496 = vunpack.c.l.b16 %v6143
    %v6497 = vunpack.c.h.b16 %v6143
    %v6498 = vunpack.c.l.b16 %v6144
    %v6499 = vunpack.c.h.b16 %v6144
    %v6500 = vunpack.c.l.b16 %v6145
    %v6501 = vunpack.c.h.b16 %v6145
    %v6502 = vunpack.c.l.b16 %v6146
    %v6503 = vunpack.c.h.b16 %v6146
    %v6504 = vunpack.c.l.b16 %v6147
    %v6505 = vunpack.c.h.b16 %v6147
    %v6506 = vunpack.c.l.b16 %v6148
    %v6507 = vunpack.c.h.b16 %v6148
    %v6508 = vunpack.c.l.b16 %v6149
    %v6509 = vunpack.c.h.b16 %v6149
    %v6510 = vunpack.c.l.b16 %v6150
    %v6511 = vunpack.c.h.b16 %v6150
    %v6512 = vunpack.c.l.b16 %v6151
    %v6513 = vunpack.c.h.b16 %v6151
    %v6514 = vunpack.c.l.b16 %v6152
    %v6515 = vunpack.c.h.b16 %v6152
    %v6516 = vunpack.c.l.b16 %v6153
    %v6517 = vunpack.c.h.b16 %v6153
    %v6518 = vunpack.c.l.b16 %v6154
    %v6519 = vunpack.c.h.b16 %v6154
    %v6520 = vunpack.c.l.b16 %v6155
    %v6521 = vunpack.c.h.b16 %v6155
    %v6522 = vunpack.c.l.b16 %v6156
    %v6523 = vunpack.c.h.b16 %v6156
    %v6524 = vunpack.c.l.b16 %v6157
    %v6525 = vunpack.c.h.b16 %v6157
    %v6526 = vunpack.c.l.b16 %v6158
    %v6527 = vunpack.c.h.b16 %v6158
    %v6528 = vunpack.c.l.b16 %v6159
    %v6529 = vunpack.c.h.b16 %v6159
    %v6530 = vunpack.c.l.b16 %v6160
    %v6531 = vunpack.c.h.b16 %v6160
    %v6532 = vunpack.c.l.b16 %v6161
    %v6533 = vunpack.c.h.b16 %v6161
    %v6534 = vunpack.c.l.b16 %v6162
    %v6535 = vunpack.c.h.b16 %v6162
    %v6536 = vunpack.c.l.b16 %v6163
    %v6537 = vunpack.c.h.b16 %v6163
    %v6538 = vunpack.c.l.b16 %v6164
    %v6539 = vunpack.c.h.b16 %v6164
    %v6540 = vunpack.c.l.b16 %v6165
    %v6541 = vunpack.c.h.b16 %v6165
    %v6542 = vunpack.c.l.b16 %v6166
    %v6543 = vunpack.c.h.b16 %v6166
    %v6544 = vunpack.c.l.b16 %v6167
    %v6545 = vunpack.c.h.b16 %v6167
    %v6546 = vunpack.c.l.b16 %v6168
    %v6547 = vunpack.c.h.b16 %v6168
    %v6548 = vunpack.c.l.b16 %v6169
    %v6549 = vunpack.c.h.b16 %v6169
    %v6550 = vunpack.c.l.b16 %v6170
    %v6551 = vunpack.c.h.b16 %v6170
    %v6552 = vunpack.c.l.b16 %v6171
    %v6553 = vunpack.c.h.b16 %v6171
    %v6554 = vunpack.c.l.b16 %v6172
    %v6555 = vunpack.c.h.b16 %v6172
    %v6556 = vunpack.c.l.b16 %v6173
    %v6557 = vunpack.c.h.b16 %v6173
    %v6558 = vunpack.c.l.b16 %v6174
    %v6559 = vunpack.c.h.b16 %v6174
    %v6560 = vunpack.c.l.b16 %v6175
    %v6561 = vunpack.c.h.b16 %v6175
    %v6562 = vunpack.c.l.b16 %v6176
    %v6563 = vunpack.c.h.b16 %v6176
    %v6564 = vunpack.c.l.b16 %v6177
    %v6565 = vunpack.c.h.b16 %v6177
    %v6566 = vunpack.c.l.b16 %v6178
    %v6567 = vunpack.c.h.b16 %v6178
    %v6568 = vunpack.c.l.b16 %v6179
    %v6569 = vunpack.c.h.b16 %v6179
    %v6570 = vunpack.c.l.b16 %v6180
    %v6571 = vunpack.c.h.b16 %v6180
    %v6572 = vunpack.c.l.b16 %v6181
    %v6573 = vunpack.c.h.b16 %v6181
    %v6574 = vunpack.c.l.b16 %v6182
    %v6575 = vunpack.c.h.b16 %v6182
    %v6576 = vunpack.c.l.b16 %v6183
    %v6577 = vunpack.c.h.b16 %v6183
    %v6578 = vunpack.c.l.b16 %v6184
    %v6579 = vunpack.c.h.b16 %v6184
    %v6580 = vunpack.c.l.b16 %v6185
    %v6581 = vunpack.c.h.b16 %v6185
    %v6582 = vunpack.c.l.b16 %v6186
    %v6583 = vunpack.c.h.b16 %v6186
    %v6584 = vunpack.c.l.b16 %v6187
    %v6585 = vunpack.c.h.b16 %v6187
    %v6586 = vunpack.c.l.b16 %v6188
    %v6587 = vunpack.c.h.b16 %v6188
    %v6588 = vunpack.c.l.b16 %v6189
    %v6589 = vunpack.c.h.b16 %v6189
    %v6590 = vunpack.c.l.b16 %v6190
    %v6591 = vunpack.c.h.b16 %v6190
    %v6592 = vunpack.c.l.b16 %v6191
    %v6593 = vunpack.c.h.b16 %v6191
    %v6594 = vunpack.c.l.b16 %v6192
    %v6595 = vunpack.c.h.b16 %v6192
    %v6596 = vunpack.c.l.b16 %v6193
    %v6597 = vunpack.c.h.b16 %v6193
    %v6598 = vunpack.c.l.b16 %v6194
    %v6599 = vunpack.c.h.b16 %v6194
    %v6600 = vunpack.c.l.b16 %v6195
    %v6601 = vunpack.c.h.b16 %v6195
    %v6602 = vunpack.c.l.b16 %v6196
    %v6603 = vunpack.c.h.b16 %v6196
    %v6604 = vunpack.c.l.b16 %v6197
    %v6605 = vunpack.c.h.b16 %v6197
    %v6606 = vunpack.c.l.b16 %v6198
    %v6607 = vunpack.c.h.b16 %v6198
    %v6608 = vunpack.c.l.b16 %v6199
    %v6609 = vunpack.c.h.b16 %v6199
    %v6610 = vunpack.c.l.b16 %v6200
    %v6611 = vunpack.c.h.b16 %v6200
    %v6612 = vunpack.c.l.b16 %v6201
    %v6613 = vunpack.c.h.b16 %v6201
    %v6614 = vunpack.c.l.b16 %v6202
    %v6615 = vunpack.c.h.b16 %v6202
    %v6616 = vunpack.c.l.b16 %v6203
    %v6617 = vunpack.c.h.b16 %v6203
    %v6618 = vunpack.c.l.b16 %v6204
    %v6619 = vunpack.c.h.b16 %v6204
    %v6620 = vunpack.c.l.b16 %v6205
    %v6621 = vunpack.c.h.b16 %v6205
    %v6622 = vunpack.c.l.b16 %v6206
    %v6623 = vunpack.c.h.b16 %v6206
    %v6624 = vunpack.c.l.b16 %v6207
    %v6625 = vunpack.c.h.b16 %v6207
    %v6626 = vunpack.c.l.b16 %v6208
    %v6627 = vunpack.c.h.b16 %v6208
    %v6628 = vunpack.c.l.b16 %v6209
    %v6629 = vunpack.c.h.b16 %v6209
    %v6630 = vunpack.c.l.b16 %v6210
    %v6631 = vunpack.c.h.b16 %v6210
    %v6632 = vunpack.c.l.b16 %v6211
    %v6633 = vunpack.c.h.b16 %v6211
    %v6634 = vunpack.c.l.b16 %v6212
    %v6635 = vunpack.c.h.b16 %v6212
    %v6636 = vunpack.c.l.b16 %v6213
    %v6637 = vunpack.c.h.b16 %v6213
    %v6638 = vunpack.c.l.b16 %v6214
    %v6639 = vunpack.c.h.b16 %v6214
    %v6640 = vunpack.c.l.b16 %v6215
    %v6641 = vunpack.c.h.b16 %v6215
    %v6642 = vunpack.c.l.b16 %v6216
    %v6643 = vunpack.c.h.b16 %v6216
    %v6644 = vunpack.c.l.b16 %v6217
    %v6645 = vunpack.c.h.b16 %v6217
    %v6646 = vunpack.c.l.b16 %v6218
    %v6647 = vunpack.c.h.b16 %v6218
    %v6648 = vunpack.c.l.b16 %v6219
    %v6649 = vunpack.c.h.b16 %v6219
    %v6650 = vunpack.c.l.b16 %v6220
    %v6651 = vunpack.c.h.b16 %v6220
    %v6652 = vunpack.c.l.b16 %v6221
    %v6653 = vunpack.c.h.b16 %v6221
    %v6654 = vunpack.c.l.b16 %v6222
    %v6655 = vunpack.c.h.b16 %v6222
    %v6656 = vunpack.c.l.b16 %v6223
    %v6657 = vunpack.c.h.b16 %v6223
    %v6658 = vunpack.c.l.b16 %v6224
    %v6659 = vunpack.c.h.b16 %v6224
    %v6660 = vunpack.c.l.b16 %v6225
    %v6661 = vunpack.c.h.b16 %v6225
    %v6662 = vunpack.c.l.b16 %v6226
    %v6663 = vunpack.c.h.b16 %v6226
    %v6664 = vunpack.c.l.b16 %v6227
    %v6665 = vunpack.c.h.b16 %v6227
    %v6666 = vunpack.c.l.b16 %v6228
    %v6667 = vunpack.c.h.b16 %v6228
    %v6668 = vunpack.c.l.b16 %v6229
    %v6669 = vunpack.c.h.b16 %v6229
    %v6670 = vunpack.c.l.b16 %v6230
    %v6671 = vunpack.c.h.b16 %v6230
    %v6672 = vunpack.c.l.b16 %v6231
    %v6673 = vunpack.c.h.b16 %v6231
    %v6674 = vunpack.c.l.b16 %v6232
    %v6675 = vunpack.c.h.b16 %v6232
    %v6676 = vunpack.c.l.b16 %v6233
    %v6677 = vunpack.c.h.b16 %v6233
    %v6678 = vunpack.c.l.b16 %v6234
    %v6679 = vunpack.c.h.b16 %v6234
    %v6680 = vunpack.c.l.b16 %v6235
    %v6681 = vunpack.c.h.b16 %v6235
    %v6682 = vunpack.c.l.b16 %v6236
    %v6683 = vunpack.c.h.b16 %v6236
    %v6684 = vunpack.c.l.b16 %v6237
    %v6685 = vunpack.c.h.b16 %v6237
    %v6686 = vunpack.c.l.b16 %v6238
    %v6687 = vunpack.c.h.b16 %v6238
    %v6688 = vunpack.c.l.b16 %v6239
    %v6689 = vunpack.c.h.b16 %v6239
    %v6690 = vunpack.c.l.b16 %v6240
    %v6691 = vunpack.c.h.b16 %v6240
    %v6692 = vunpack.c.l.b16 %v6241
    %v6693 = vunpack.c.h.b16 %v6241
    %v6694 = vunpack.c.l.b16 %v6242
    %v6695 = vunpack.c.h.b16 %v6242
    %v6696 = vunpack.c.l.b16 %v6243
    %v6697 = vunpack.c.h.b16 %v6243
    %v6698 = vunpack.c.l.b16 %v6244
    %v6699 = vunpack.c.h.b16 %v6244
    %v6700 = vunpack.c.l.b16 %v6245
    %v6701 = vunpack.c.h.b16 %v6245
    %v6702 = vunpack.c.l.b16 %v6246
    %v6703 = vunpack.c.h.b16 %v6246
    %v6704 = vunpack.c.l.b16 %v6247
    %v6705 = vunpack.c.h.b16 %v6247
    %v6706 = vunpack.c.l.b16 %v6248
    %v6707 = vunpack.c.h.b16 %v6248
    %v6708 = vunpack.c.l.b16 %v6249
    %v6709 = vunpack.c.h.b16 %v6249
    %v6710 = vunpack.c.l.b16 %v6250
    %v6711 = vunpack.c.h.b16 %v6250
    %v6712 = vunpack.c.l.b16 %v6251
    %v6713 = vunpack.c.h.b16 %v6251
    %v6714 = vunpack.c.l.b16 %v6252
    %v6715 = vunpack.c.h.b16 %v6252
    %v6716 = vunpack.c.l.b16 %v6253
    %v6717 = vunpack.c.h.b16 %v6253
    %v6718 = vunpack.c.l.b16 %v6254
    %v6719 = vunpack.c.h.b16 %v6254
    %v6720 = vunpack.c.l.b16 %v6255
    %v6721 = vunpack.c.h.b16 %v6255
    %v6722 = vunpack.c.l.b16 %v6256
    %v6723 = vunpack.c.h.b16 %v6256
    %v6724 = vunpack.c.l.b16 %v6257
    %v6725 = vunpack.c.h.b16 %v6257
    %v6726 = vunpack.c.l.b16 %v6258
    %v6727 = vunpack.c.h.b16 %v6258
    %v6728 = vunpack.c.l.b16 %v6259
    %v6729 = vunpack.c.h.b16 %v6259
    %v6730 = vunpack.c.l.b16 %v6260
    %v6731 = vunpack.c.h.b16 %v6260
    %v6732 = vunpack.c.l.b16 %v6261
    %v6733 = vunpack.c.h.b16 %v6261
    %v6734 = vpack.c.b16 %v6486, %v6478
    %v6735 = vpack.c.b16 %v6487, %v6479
    %v6736 = vpack.c.b16 %v6488, %v6480
    %v6737 = vpack.c.b16 %v6489, %v6481
    %v6738 = vpack.c.b16 %v6490, %v6482
    %v6739 = vpack.c.b16 %v6491, %v6483
    %v6740 = vpack.c.b16 %v6492, %v6484
    %v6741 = vpack.c.b16 %v6493, %v6485
    %v6742 = vpack.c.b16 %v6502, %v6494
    %v6743 = vpack.c.b16 %v6503, %v6495
    %v6744 = vpack.c.b16 %v6504, %v6496
    %v6745 = vpack.c.b16 %v6505, %v6497
    %v6746 = vpack.c.b16 %v6506, %v6498
    %v6747 = vpack.c.b16 %v6507, %v6499
    %v6748 = vpack.c.b16 %v6508, %v6500
    %v6749 = vpack.c.b16 %v6509, %v6501
    %v6750 = vpack.c.b16 %v6518, %v6510
    %v6751 = vpack.c.b16 %v6519, %v6511
    %v6752 = vpack.c.b16 %v6520, %v6512
    %v6753 = vpack.c.b16 %v6521, %v6513
    %v6754 = vpack.c.b16 %v6522, %v6514
    %v6755 = vpack.c.b16 %v6523, %v6515
    %v6756 = vpack.c.b16 %v6524, %v6516
    %v6757 = vpack.c.b16 %v6525, %v6517
    %v6758 = vpack.c.b16 %v6534, %v6526
    %v6759 = vpack.c.b16 %v6535, %v6527
    %v6760 = vpack.c.b16 %v6536, %v6528
    %v6761 = vpack.c.b16 %v6537, %v6529
    %v6762 = vpack.c.b16 %v6538, %v6530
    %v6763 = vpack.c.b16 %v6539, %v6531
    %v6764 = vpack.c.b16 %v6540, %v6532
    %v6765 = vpack.c.b16 %v6541, %v6533
    %v6766 = vpack.c.b16 %v6550, %v6542
    %v6767 = vpack.c.b16 %v6551, %v6543
    %v6768 = vpack.c.b16 %v6552, %v6544
    %v6769 = vpack.c.b16 %v6553, %v6545
    %v6770 = vpack.c.b16 %v6554, %v6546
    %v6771 = vpack.c.b16 %v6555, %v6547
    %v6772 = vpack.c.b16 %v6556, %v6548
    %v6773 = vpack.c.b16 %v6557, %v6549
    %v6774 = vpack.c.b16 %v6566, %v6558
    %v6775 = vpack.c.b16 %v6567, %v6559
    %v6776 = vpack.c.b16 %v6568, %v6560
    %v6777 = vpack.c.b16 %v6569, %v6561
    %v6778 = vpack.c.b16 %v6570, %v6562
    %v6779 = vpack.c.b16 %v6571, %v6563
    %v6780 = vpack.c.b16 %v6572, %v6564
    %v6781 = vpack.c.b16 %v6573, %v6565
    %v6782 = vpack.c.b16 %v6582, %v6574
    %v6783 = vpack.c.b16 %v6583, %v6575
    %v6784 = vpack.c.b16 %v6584, %v6576
    %v6785 = vpack.c.b16 %v6585, %v6577
    %v6786 = vpack.c.b16 %v6586, %v6578
    %v6787 = vpack.c.b16 %v6587, %v6579
    %v6788 = vpack.c.b16 %v6588, %v6580
    %v6789 = vpack.c.b16 %v6589, %v6581
    %v6790 = vpack.c.b16 %v6598, %v6590
    %v6791 = vpack.c.b16 %v6599, %v6591
    %v6792 = vpack.c.b16 %v6600, %v6592
    %v6793 = vpack.c.b16 %v6601, %v6593
    %v6794 = vpack.c.b16 %v6602, %v6594
    %v6795 = vpack.c.b16 %v6603, %v6595
    %v6796 = vpack.c.b16 %v6604, %v6596
    %v6797 = vpack.c.b16 %v6605, %v6597
    %v6798 = vpack.c.b16 %v6614, %v6606
    %v6799 = vpack.c.b16 %v6615, %v6607
    %v6800 = vpack.c.b16 %v6616, %v6608
    %v6801 = vpack.c.b16 %v6617, %v6609
    %v6802 = vpack.c.b16 %v6618, %v6610
    %v6803 = vpack.c.b16 %v6619, %v6611
    %v6804 = vpack.c.b16 %v6620, %v6612
    %v6805 = vpack.c.b16 %v6621, %v6613
    %v6806 = vpack.c.b16 %v6630, %v6622
    %v6807 = vpack.c.b16 %v6631, %v6623
    %v6808 = vpack.c.b16 %v6632, %v6624
    %v6809 = vpack.c.b16 %v6633, %v6625
    %v6810 = vpack.c.b16 %v6634, %v6626
    %v6811 = vpack.c.b16 %v6635, %v6627
    %v6812 = vpack.c.b16 %v6636, %v6628
    %v6813 = vpack.c.b16 %v6637, %v6629
    %v6814 = vpack.c.b16 %v6646, %v6638
    %v6815 = vpack.c.b16 %v6647, %v6639
    %v6816 = vpack.c.b16 %v6648, %v6640
    %v6817 = vpack.c.b16 %v6649, %v6641
    %v6818 = vpack.c.b16 %v6650, %v6642
    %v6819 = vpack.c.b16 %v6651, %v6643
    %v6820 = vpack.c.b16 %v6652, %v6644
    %v6821 = vpack.c.b16 %v6653, %v6645
    %v6822 = vpack.c.b16 %v6662, %v6654
    %v6823 = vpack.c.b16 %v6663, %v6655
    %v6824 = vpack.c.b16 %v6664, %v6656
    %v6825 = vpack.c.b16 %v6665, %v6657
    %v6826 = vpack.c.b16 %v6666, %v6658
    %v6827 = vpack.c.b16 %v6667, %v6659
    %v6828 = vpack.c.b16 %v6668, %v6660
    %v6829 = vpack.c.b16 %v6669, %v6661
    %v6830 = vpack.c.b16 %v6678, %v6670
    %v6831 = vpack.c.b16 %v6679, %v6671
    %v6832 = vpack.c.b16 %v6680, %v6672
    %v6833 = vpack.c.b16 %v6681, %v6673
    %v6834 = vpack.c.b16 %v6682, %v6674
    %v6835 = vpack.c.b16 %v6683, %v6675
    %v6836 = vpack.c.b16 %v6684, %v6676
    %v6837 = vpack.c.b16 %v6685, %v6677
    %v6838 = vpack.c.b16 %v6694, %v6686
    %v6839 = vpack.c.b16 %v6695, %v6687
    %v6840 = vpack.c.b16 %v6696, %v6688
    %v6841 = vpack.c.b16 %v6697, %v6689
    %v6842 = vpack.c.b16 %v6698, %v6690
    %v6843 = vpack.c.b16 %v6699, %v6691
    %v6844 = vpack.c.b16 %v6700, %v6692
    %v6845 = vpack.c.b16 %v6701, %v6693
    %v6846 = vpack.c.b16 %v6710, %v6702
    %v6847 = vpack.c.b16 %v6711, %v6703
    %v6848 = vpack.c.b16 %v6712, %v6704
    %v6849 = vpack.c.b16 %v6713, %v6705
    %v6850 = vpack.c.b16 %v6714, %v6706
    %v6851 = vpack.c.b16 %v6715, %v6707
    %v6852 = vpack.c.b16 %v6716, %v6708
    %v6853 = vpack.c.b16 %v6717, %v6709
    %v6854 = vpack.c.b16 %v6726, %v6718
    %v6855 = vpack.c.b16 %v6727, %v6719
    %v6856 = vpack.c.b16 %v6728, %v6720
    %v6857 = vpack.c.b16 %v6729, %v6721
    %v6858 = vpack.c.b16 %v6730, %v6722
    %v6859 = vpack.c.b16 %v6731, %v6723
    %v6860 = vpack.c.b16 %v6732, %v6724
    %v6861 = vpack.c.b16 %v6733, %v6725
    %6990 = vmatprep.subr.bf16.mxu0 %v6791
    %6991 = vmatpush1.bf16.msra.mxu0 %v6790
    %6992 = vmatprep.subr.bf16.mxu0 %v6783
    %6993 = vmatpush1.bf16.msra.mxu0 %v6782
    %6994 = vmatprep.subr.bf16.mxu0 %v6775
    %6995 = vmatpush1.bf16.msra.mxu0 %v6774
    %6996 = vmatprep.subr.bf16.mxu0 %v6767
    %6997 = vmatpush1.bf16.msra.mxu0 %v6766
    %6998 = vmatprep.subr.bf16.mxu0 %v6759
    %6999 = vmatpush1.bf16.msra.mxu0 %v6758
    %7000 = vmatprep.subr.bf16.mxu0 %v6751
    %7001 = vmatpush1.bf16.msra.mxu0 %v6750
    %7002 = vmatprep.subr.bf16.mxu0 %v6743
    %7003 = vmatpush1.bf16.msra.mxu0 %v6742
    %7004 = vmatprep.subr.bf16.mxu0 %v6735
    %7005 = vmatpush1.bf16.msra.mxu0 %v6734
    %7006 = vmatprep.subr.bf16.mxu0 %v6855
    %7007 = vmatpush2.bf16.msra.mxu0 %v6854
    %7008 = vmatprep.subr.bf16.mxu0 %v6847
    %7009 = vmatpush2.bf16.msra.mxu0 %v6846
    %7010 = vmatprep.subr.bf16.mxu0 %v6839
    %7011 = vmatpush2.bf16.msra.mxu0 %v6838
    %7012 = vmatprep.subr.bf16.mxu0 %v6831
    %7013 = vmatpush2.bf16.msra.mxu0 %v6830
    %7014 = vmatprep.subr.bf16.mxu0 %v6823
    %7015 = vmatpush2.bf16.msra.mxu0 %v6822
    %7016 = vmatprep.subr.bf16.mxu0 %v6815
    %7017 = vmatpush2.bf16.msra.mxu0 %v6814
    %7018 = vmatprep.subr.bf16.mxu0 %v6807
    %7019 = vmatpush2.bf16.msra.mxu0 %v6806
    %7020 = vmatprep.subr.bf16.mxu0 %v6799
    %7021 = vmatpush2.bf16.msra.mxu0 %v6798
    %7022 = vmatprep.mubr.bf16.mxu0 %v6347
    %7023 = vmatmul.mubr.bf16.gmra.mxu0 %v6346
    %v7024 = vpop.f32.mrf.mxu0
    %v7025 = vadd.f32 0.0, %v7024
    %v7026 = vpop.f32.mrf.mxu0
    %v7027 = vadd.f32 0.0, %v7026
    %v7028 = vpop.f32.mrf.mxu0
    %v7029 = vpop.f32.mrf.mxu0
    %7030 = vdwg.mxu0
    %7031 = vmatprep.subr.bf16.mxu0 %v6793
    %7032 = vmatpush1.bf16.msra.mxu0 %v6792
    %7033 = vmatprep.subr.bf16.mxu0 %v6785
    %7034 = vmatpush1.bf16.msra.mxu0 %v6784
    %7035 = vmatprep.subr.bf16.mxu0 %v6777
    %7036 = vmatpush1.bf16.msra.mxu0 %v6776
    %7037 = vmatprep.subr.bf16.mxu0 %v6769
    %7038 = vmatpush1.bf16.msra.mxu0 %v6768
    %7039 = vmatprep.subr.bf16.mxu0 %v6761
    %7040 = vmatpush1.bf16.msra.mxu0 %v6760
    %7041 = vmatprep.subr.bf16.mxu0 %v6753
    %7042 = vmatpush1.bf16.msra.mxu0 %v6752
    %7043 = vmatprep.subr.bf16.mxu0 %v6745
    %7044 = vmatpush1.bf16.msra.mxu0 %v6744
    %7045 = vmatprep.subr.bf16.mxu0 %v6737
    %7046 = vmatpush1.bf16.msra.mxu0 %v6736
    %7047 = vmatprep.subr.bf16.mxu0 %v6857
    %7048 = vmatpush2.bf16.msra.mxu0 %v6856
    %7049 = vmatprep.subr.bf16.mxu0 %v6849
    %7050 = vmatpush2.bf16.msra.mxu0 %v6848
    %7051 = vmatprep.subr.bf16.mxu0 %v6841
    %7052 = vmatpush2.bf16.msra.mxu0 %v6840
    %7053 = vmatprep.subr.bf16.mxu0 %v6833
    %7054 = vmatpush2.bf16.msra.mxu0 %v6832
    %7055 = vmatprep.subr.bf16.mxu0 %v6825
    %7056 = vmatpush2.bf16.msra.mxu0 %v6824
    %7057 = vmatprep.subr.bf16.mxu0 %v6817
    %7058 = vmatpush2.bf16.msra.mxu0 %v6816
    %7059 = vmatprep.subr.bf16.mxu0 %v6809
    %7060 = vmatpush2.bf16.msra.mxu0 %v6808
    %7061 = vmatprep.subr.bf16.mxu0 %v6801
    %7062 = vmatpush2.bf16.msra.mxu0 %v6800
    %7063 = vmatprep.mubr.bf16.mxu0 %v6347
    %7064 = vmatmul.mubr.bf16.gmra.mxu0 %v6346
    %v7065 = vpop.f32.mrf.mxu0
    %v7066 = vadd.f32 0.0, %v7065
    %v7067 = vpop.f32.mrf.mxu0
    %v7068 = vadd.f32 0.0, %v7067
    %v7069 = vpop.f32.mrf.mxu0
    %v7070 = vpop.f32.mrf.mxu0
    %7071 = vdwg.mxu0
    %7072 = vmatprep.subr.bf16.mxu0 %v6795
    %7073 = vmatpush1.bf16.msra.mxu0 %v6794
    %7074 = vmatprep.subr.bf16.mxu0 %v6787
    %7075 = vmatpush1.bf16.msra.mxu0 %v6786
    %7076 = vmatprep.subr.bf16.mxu0 %v6779
    %7077 = vmatpush1.bf16.msra.mxu0 %v6778
    %7078 = vmatprep.subr.bf16.mxu0 %v6771
    %7079 = vmatpush1.bf16.msra.mxu0 %v6770
    %7080 = vmatprep.subr.bf16.mxu0 %v6763
    %7081 = vmatpush1.bf16.msra.mxu0 %v6762
    %7082 = vmatprep.subr.bf16.mxu0 %v6755
    %7083 = vmatpush1.bf16.msra.mxu0 %v6754
    %7084 = vmatprep.subr.bf16.mxu0 %v6747
    %7085 = vmatpush1.bf16.msra.mxu0 %v6746
    %7086 = vmatprep.subr.bf16.mxu0 %v6739
    %7087 = vmatpush1.bf16.msra.mxu0 %v6738
    %7088 = vmatprep.subr.bf16.mxu0 %v6859
    %7089 = vmatpush2.bf16.msra.mxu0 %v6858
    %7090 = vmatprep.subr.bf16.mxu0 %v6851
    %7091 = vmatpush2.bf16.msra.mxu0 %v6850
    %7092 = vmatprep.subr.bf16.mxu0 %v6843
    %7093 = vmatpush2.bf16.msra.mxu0 %v6842
    %7094 = vmatprep.subr.bf16.mxu0 %v6835
    %7095 = vmatpush2.bf16.msra.mxu0 %v6834
    %7096 = vmatprep.subr.bf16.mxu0 %v6827
    %7097 = vmatpush2.bf16.msra.mxu0 %v6826
    %7098 = vmatprep.subr.bf16.mxu0 %v6819
    %7099 = vmatpush2.bf16.msra.mxu0 %v6818
    %7100 = vmatprep.subr.bf16.mxu0 %v6811
    %7101 = vmatpush2.bf16.msra.mxu0 %v6810
    %7102 = vmatprep.subr.bf16.mxu0 %v6803
    %7103 = vmatpush2.bf16.msra.mxu0 %v6802
    %7104 = vmatprep.mubr.bf16.mxu0 %v6347
    %7105 = vmatmul.mubr.bf16.gmra.mxu0 %v6346
    %v7106 = vpop.f32.mrf.mxu0
    %v7107 = vadd.f32 0.0, %v7106
    %v7108 = vpop.f32.mrf.mxu0
    %v7109 = vadd.f32 0.0, %v7108
    %v7110 = vpop.f32.mrf.mxu0
    %v7111 = vpop.f32.mrf.mxu0
    %7112 = vdwg.mxu0
    %7113 = vmatprep.subr.bf16.mxu0 %v6797
    %7114 = vmatpush1.bf16.msra.mxu0 %v6796
    %7115 = vmatprep.subr.bf16.mxu0 %v6789
    %7116 = vmatpush1.bf16.msra.mxu0 %v6788
    %7117 = vmatprep.subr.bf16.mxu0 %v6781
    %7118 = vmatpush1.bf16.msra.mxu0 %v6780
    %7119 = vmatprep.subr.bf16.mxu0 %v6773
    %7120 = vmatpush1.bf16.msra.mxu0 %v6772
    %7121 = vmatprep.subr.bf16.mxu0 %v6765
    %7122 = vmatpush1.bf16.msra.mxu0 %v6764
    %7123 = vmatprep.subr.bf16.mxu0 %v6757
    %7124 = vmatpush1.bf16.msra.mxu0 %v6756
    %7125 = vmatprep.subr.bf16.mxu0 %v6749
    %7126 = vmatpush1.bf16.msra.mxu0 %v6748
    %7127 = vmatprep.subr.bf16.mxu0 %v6741
    %7128 = vmatpush1.bf16.msra.mxu0 %v6740
    %7129 = vmatprep.subr.bf16.mxu0 %v6861
    %7130 = vmatpush2.bf16.msra.mxu0 %v6860
    %7131 = vmatprep.subr.bf16.mxu0 %v6853
    %7132 = vmatpush2.bf16.msra.mxu0 %v6852
    %7133 = vmatprep.subr.bf16.mxu0 %v6845
    %7134 = vmatpush2.bf16.msra.mxu0 %v6844
    %7135 = vmatprep.subr.bf16.mxu0 %v6837
    %7136 = vmatpush2.bf16.msra.mxu0 %v6836
    %7137 = vmatprep.subr.bf16.mxu0 %v6829
    %7138 = vmatpush2.bf16.msra.mxu0 %v6828
    %7139 = vmatprep.subr.bf16.mxu0 %v6821
    %7140 = vmatpush2.bf16.msra.mxu0 %v6820
    %7141 = vmatprep.subr.bf16.mxu0 %v6813
    %7142 = vmatpush2.bf16.msra.mxu0 %v6812
    %7143 = vmatprep.subr.bf16.mxu0 %v6805
    %7144 = vmatpush2.bf16.msra.mxu0 %v6804
    %7145 = vmatprep.mubr.bf16.mxu0 %v6347
    %7146 = vmatmul.mubr.bf16.gmra.mxu0 %v6346
    %v7147 = vpop.f32.mrf.mxu0
    %v7148 = vadd.f32 0.0, %v7147
    %v7149 = vpop.f32.mrf.mxu0
    %v7150 = vadd.f32 0.0, %v7149
    %v7151 = vpop.f32.mrf.mxu0
    %v7152 = vpop.f32.mrf.mxu0
    %7153 = vdwg.mxu0
    %v7154 = vadd.f32 %v6117, %v7025
    %v7155 = vadd.f32 %v6118, %v7027
    %v7156 = vadd.f32 %v6119, %v7066
    %v7157 = vadd.f32 %v6120, %v7068
    %v7158 = vadd.f32 %v6121, %v7107
    %v7159 = vadd.f32 %v6122, %v7109
    %v7160 = vadd.f32 %v6123, %v7148
    %v7161 = vadd.f32 %v6124, %v7150
    %7162 = vst [vmem:[#allocation3] sm:$0xff] %v7154
    %7163 = vst [vmem:[#allocation3 + $0x8] sm:$0xff] %v7155
    %7164 = vst [vmem:[#allocation3 + $0x10] sm:$0xff] %v7156
    %7165 = vst [vmem:[#allocation3 + $0x18] sm:$0xff] %v7157
    %7166 = vst [vmem:[#allocation3 + $0x20] sm:$0xff] %v7158
    %7167 = vst [vmem:[#allocation3 + $0x28] sm:$0xff] %v7159
    %7168 = vst [vmem:[#allocation3 + $0x30] sm:$0xff] %v7160
    %7169 = vst [vmem:[#allocation3 + $0x38] sm:$0xff] %v7161
    %v7170 = vld [vmem:[#allocation3] sm:$0xff]
    %v7171 = vld [vmem:[#allocation3 + $0x8] sm:$0xff]
    %v7172 = vld [vmem:[#allocation3 + $0x10] sm:$0xff]
    %v7173 = vld [vmem:[#allocation3 + $0x18] sm:$0xff]
    %v7174 = vld [vmem:[#allocation3 + $0x20] sm:$0xff]
    %v7175 = vld [vmem:[#allocation3 + $0x28] sm:$0xff]
    %v7176 = vld [vmem:[#allocation3 + $0x30] sm:$0xff]
    %v7177 = vld [vmem:[#allocation3 + $0x38] sm:$0xff]
    %v7178 = vld [vmem:[#allocation2] sm:$0x88]
    %v7179 = vld [vmem:[#allocation2 + $0x8] sm:$0x88]
    %v7180 = vld [vmem:[#allocation2 + $0x10] sm:$0x88]
    %v7181 = vld [vmem:[#allocation2 + $0x18] sm:$0x88]
    %v7182 = vld [vmem:[#allocation2 + $0x20] sm:$0x88]
    %v7183 = vld [vmem:[#allocation2 + $0x28] sm:$0x88]
    %v7184 = vld [vmem:[#allocation2 + $0x30] sm:$0x88]
    %v7185 = vld [vmem:[#allocation2 + $0x38] sm:$0x88]
    %s7186 = scalar_lea.vmem [#allocation6], 6144
    %v7187 = vld [vmem:[%s7186] sm:$0xff]
    %v7188 = vld [vmem:[%s7186 + $0x8] sm:$0xff]
    %v7189 = vld [vmem:[%s7186 + $0x10] sm:$0xff]
    %v7190 = vld [vmem:[%s7186 + $0x18] sm:$0xff]
    %v7191 = vld [vmem:[%s7186 + $0x20] sm:$0xff]
    %v7192 = vld [vmem:[%s7186 + $0x28] sm:$0xff]
    %v7193 = vld [vmem:[%s7186 + $0x30] sm:$0xff]
    %v7194 = vld [vmem:[%s7186 + $0x38] sm:$0xff]
    %v7195 = vld [vmem:[%s7186 + $0x40] sm:$0xff]
    %v7196 = vld [vmem:[%s7186 + $0x48] sm:$0xff]
    %v7197 = vld [vmem:[%s7186 + $0x50] sm:$0xff]
    %v7198 = vld [vmem:[%s7186 + $0x58] sm:$0xff]
    %v7199 = vld [vmem:[%s7186 + $0x60] sm:$0xff]
    %v7200 = vld [vmem:[%s7186 + $0x68] sm:$0xff]
    %v7201 = vld [vmem:[%s7186 + $0x70] sm:$0xff]
    %v7202 = vld [vmem:[%s7186 + $0x78] sm:$0xff]
    %v7203 = vld [vmem:[%s7186 + $0x80] sm:$0xff]
    %v7204 = vld [vmem:[%s7186 + $0x88] sm:$0xff]
    %v7205 = vld [vmem:[%s7186 + $0x90] sm:$0xff]
    %v7206 = vld [vmem:[%s7186 + $0x98] sm:$0xff]
    %v7207 = vld [vmem:[%s7186 + $0xa0] sm:$0xff]
    %v7208 = vld [vmem:[%s7186 + $0xa8] sm:$0xff]
    %v7209 = vld [vmem:[%s7186 + $0xb0] sm:$0xff]
    %v7210 = vld [vmem:[%s7186 + $0xb8] sm:$0xff]
    %v7211 = vld [vmem:[%s7186 + $0xc0] sm:$0xff]
    %v7212 = vld [vmem:[%s7186 + $0xc8] sm:$0xff]
    %v7213 = vld [vmem:[%s7186 + $0xd0] sm:$0xff]
    %v7214 = vld [vmem:[%s7186 + $0xd8] sm:$0xff]
    %v7215 = vld [vmem:[%s7186 + $0xe0] sm:$0xff]
    %v7216 = vld [vmem:[%s7186 + $0xe8] sm:$0xff]
    %v7217 = vld [vmem:[%s7186 + $0xf0] sm:$0xff]
    %v7218 = vld [vmem:[%s7186 + $0xf8] sm:$0xff]
    %v7219 = vld [vmem:[%s7186 + $0x100] sm:$0xff]
    %v7220 = vld [vmem:[%s7186 + $0x108] sm:$0xff]
    %v7221 = vld [vmem:[%s7186 + $0x110] sm:$0xff]
    %v7222 = vld [vmem:[%s7186 + $0x118] sm:$0xff]
    %v7223 = vld [vmem:[%s7186 + $0x120] sm:$0xff]
    %v7224 = vld [vmem:[%s7186 + $0x128] sm:$0xff]
    %v7225 = vld [vmem:[%s7186 + $0x130] sm:$0xff]
    %v7226 = vld [vmem:[%s7186 + $0x138] sm:$0xff]
    %v7227 = vld [vmem:[%s7186 + $0x140] sm:$0xff]
    %v7228 = vld [vmem:[%s7186 + $0x148] sm:$0xff]
    %v7229 = vld [vmem:[%s7186 + $0x150] sm:$0xff]
    %v7230 = vld [vmem:[%s7186 + $0x158] sm:$0xff]
    %v7231 = vld [vmem:[%s7186 + $0x160] sm:$0xff]
    %v7232 = vld [vmem:[%s7186 + $0x168] sm:$0xff]
    %v7233 = vld [vmem:[%s7186 + $0x170] sm:$0xff]
    %v7234 = vld [vmem:[%s7186 + $0x178] sm:$0xff]
    %v7235 = vld [vmem:[%s7186 + $0x180] sm:$0xff]
    %v7236 = vld [vmem:[%s7186 + $0x188] sm:$0xff]
    %v7237 = vld [vmem:[%s7186 + $0x190] sm:$0xff]
    %v7238 = vld [vmem:[%s7186 + $0x198] sm:$0xff]
    %v7239 = vld [vmem:[%s7186 + $0x1a0] sm:$0xff]
    %v7240 = vld [vmem:[%s7186 + $0x1a8] sm:$0xff]
    %v7241 = vld [vmem:[%s7186 + $0x1b0] sm:$0xff]
    %v7242 = vld [vmem:[%s7186 + $0x1b8] sm:$0xff]
    %v7243 = vld [vmem:[%s7186 + $0x1c0] sm:$0xff]
    %v7244 = vld [vmem:[%s7186 + $0x1c8] sm:$0xff]
    %v7245 = vld [vmem:[%s7186 + $0x1d0] sm:$0xff]
    %v7246 = vld [vmem:[%s7186 + $0x1d8] sm:$0xff]
    %v7247 = vld [vmem:[%s7186 + $0x1e0] sm:$0xff]
    %v7248 = vld [vmem:[%s7186 + $0x1e8] sm:$0xff]
    %v7249 = vld [vmem:[%s7186 + $0x1f0] sm:$0xff]
    %v7250 = vld [vmem:[%s7186 + $0x1f8] sm:$0xff]
    %v7251 = vld [vmem:[%s7186 + $0x200] sm:$0xff]
    %v7252 = vld [vmem:[%s7186 + $0x208] sm:$0xff]
    %v7253 = vld [vmem:[%s7186 + $0x210] sm:$0xff]
    %v7254 = vld [vmem:[%s7186 + $0x218] sm:$0xff]
    %v7255 = vld [vmem:[%s7186 + $0x220] sm:$0xff]
    %v7256 = vld [vmem:[%s7186 + $0x228] sm:$0xff]
    %v7257 = vld [vmem:[%s7186 + $0x230] sm:$0xff]
    %v7258 = vld [vmem:[%s7186 + $0x238] sm:$0xff]
    %v7259 = vld [vmem:[%s7186 + $0x240] sm:$0xff]
    %v7260 = vld [vmem:[%s7186 + $0x248] sm:$0xff]
    %v7261 = vld [vmem:[%s7186 + $0x250] sm:$0xff]
    %v7262 = vld [vmem:[%s7186 + $0x258] sm:$0xff]
    %v7263 = vld [vmem:[%s7186 + $0x260] sm:$0xff]
    %v7264 = vld [vmem:[%s7186 + $0x268] sm:$0xff]
    %v7265 = vld [vmem:[%s7186 + $0x270] sm:$0xff]
    %v7266 = vld [vmem:[%s7186 + $0x278] sm:$0xff]
    %v7267 = vld [vmem:[%s7186 + $0x280] sm:$0xff]
    %v7268 = vld [vmem:[%s7186 + $0x288] sm:$0xff]
    %v7269 = vld [vmem:[%s7186 + $0x290] sm:$0xff]
    %v7270 = vld [vmem:[%s7186 + $0x298] sm:$0xff]
    %v7271 = vld [vmem:[%s7186 + $0x2a0] sm:$0xff]
    %v7272 = vld [vmem:[%s7186 + $0x2a8] sm:$0xff]
    %v7273 = vld [vmem:[%s7186 + $0x2b0] sm:$0xff]
    %v7274 = vld [vmem:[%s7186 + $0x2b8] sm:$0xff]
    %v7275 = vld [vmem:[%s7186 + $0x2c0] sm:$0xff]
    %v7276 = vld [vmem:[%s7186 + $0x2c8] sm:$0xff]
    %v7277 = vld [vmem:[%s7186 + $0x2d0] sm:$0xff]
    %v7278 = vld [vmem:[%s7186 + $0x2d8] sm:$0xff]
    %v7279 = vld [vmem:[%s7186 + $0x2e0] sm:$0xff]
    %v7280 = vld [vmem:[%s7186 + $0x2e8] sm:$0xff]
    %v7281 = vld [vmem:[%s7186 + $0x2f0] sm:$0xff]
    %v7282 = vld [vmem:[%s7186 + $0x2f8] sm:$0xff]
    %v7283 = vld [vmem:[%s7186 + $0x300] sm:$0xff]
    %v7284 = vld [vmem:[%s7186 + $0x308] sm:$0xff]
    %v7285 = vld [vmem:[%s7186 + $0x310] sm:$0xff]
    %v7286 = vld [vmem:[%s7186 + $0x318] sm:$0xff]
    %v7287 = vld [vmem:[%s7186 + $0x320] sm:$0xff]
    %v7288 = vld [vmem:[%s7186 + $0x328] sm:$0xff]
    %v7289 = vld [vmem:[%s7186 + $0x330] sm:$0xff]
    %v7290 = vld [vmem:[%s7186 + $0x338] sm:$0xff]
    %v7291 = vld [vmem:[%s7186 + $0x340] sm:$0xff]
    %v7292 = vld [vmem:[%s7186 + $0x348] sm:$0xff]
    %v7293 = vld [vmem:[%s7186 + $0x350] sm:$0xff]
    %v7294 = vld [vmem:[%s7186 + $0x358] sm:$0xff]
    %v7295 = vld [vmem:[%s7186 + $0x360] sm:$0xff]
    %v7296 = vld [vmem:[%s7186 + $0x368] sm:$0xff]
    %v7297 = vld [vmem:[%s7186 + $0x370] sm:$0xff]
    %v7298 = vld [vmem:[%s7186 + $0x378] sm:$0xff]
    %v7299 = vld [vmem:[%s7186 + $0x380] sm:$0xff]
    %v7300 = vld [vmem:[%s7186 + $0x388] sm:$0xff]
    %v7301 = vld [vmem:[%s7186 + $0x390] sm:$0xff]
    %v7302 = vld [vmem:[%s7186 + $0x398] sm:$0xff]
    %v7303 = vld [vmem:[%s7186 + $0x3a0] sm:$0xff]
    %v7304 = vld [vmem:[%s7186 + $0x3a8] sm:$0xff]
    %v7305 = vld [vmem:[%s7186 + $0x3b0] sm:$0xff]
    %v7306 = vld [vmem:[%s7186 + $0x3b8] sm:$0xff]
    %v7307 = vld [vmem:[%s7186 + $0x3c0] sm:$0xff]
    %v7308 = vld [vmem:[%s7186 + $0x3c8] sm:$0xff]
    %v7309 = vld [vmem:[%s7186 + $0x3d0] sm:$0xff]
    %v7310 = vld [vmem:[%s7186 + $0x3d8] sm:$0xff]
    %v7311 = vld [vmem:[%s7186 + $0x3e0] sm:$0xff]
    %v7312 = vld [vmem:[%s7186 + $0x3e8] sm:$0xff]
    %v7313 = vld [vmem:[%s7186 + $0x3f0] sm:$0xff]
    %v7314 = vld [vmem:[%s7186 + $0x3f8] sm:$0xff]
    %v7323 = vunpack.c.l.b16 %v7178
    %v7324 = vunpack.c.h.b16 %v7178
    %v7325 = vunpack.c.l.b16 %v7179
    %v7326 = vunpack.c.h.b16 %v7179
    %v7327 = vunpack.c.l.b16 %v7180
    %v7328 = vunpack.c.h.b16 %v7180
    %v7329 = vunpack.c.l.b16 %v7181
    %v7330 = vunpack.c.h.b16 %v7181
    %v7331 = vunpack.c.l.b16 %v7182
    %v7332 = vunpack.c.h.b16 %v7182
    %v7333 = vunpack.c.l.b16 %v7183
    %v7334 = vunpack.c.h.b16 %v7183
    %v7335 = vunpack.c.l.b16 %v7184
    %v7336 = vunpack.c.h.b16 %v7184
    %v7337 = vunpack.c.l.b16 %v7185
    %v7338 = vunpack.c.h.b16 %v7185
    %v7339 = vpack.c.b16 %v7323, %v7323
    %v7340 = vpack.c.b16 %v7324, %v7324
    %v7341 = vpack.c.b16 %v7325, %v7325
    %v7342 = vpack.c.b16 %v7326, %v7326
    %v7343 = vpack.c.b16 %v7327, %v7327
    %v7344 = vpack.c.b16 %v7328, %v7328
    %v7345 = vpack.c.b16 %v7329, %v7329
    %v7346 = vpack.c.b16 %v7330, %v7330
    %v7347 = vpack.c.b16 %v7331, %v7331
    %v7348 = vpack.c.b16 %v7332, %v7332
    %v7349 = vpack.c.b16 %v7333, %v7333
    %v7350 = vpack.c.b16 %v7334, %v7334
    %v7351 = vpack.c.b16 %v7335, %v7335
    %v7352 = vpack.c.b16 %v7336, %v7336
    %v7353 = vpack.c.b16 %v7337, %v7337
    %v7354 = vpack.c.b16 %v7338, %v7338
    %v7355 = vunpack.c.l.b16 %v7339
    %v7356 = vunpack.c.l.b16 %v7340
    %v7357 = vunpack.c.l.b16 %v7341
    %v7358 = vunpack.c.l.b16 %v7342
    %v7359 = vunpack.c.l.b16 %v7343
    %v7360 = vunpack.c.l.b16 %v7344
    %v7361 = vunpack.c.l.b16 %v7345
    %v7362 = vunpack.c.l.b16 %v7346
    %v7363 = vunpack.c.l.b16 %v7347
    %v7364 = vunpack.c.l.b16 %v7348
    %v7365 = vunpack.c.l.b16 %v7349
    %v7366 = vunpack.c.l.b16 %v7350
    %v7367 = vunpack.c.l.b16 %v7351
    %v7368 = vunpack.c.l.b16 %v7352
    %v7369 = vunpack.c.l.b16 %v7353
    %v7370 = vunpack.c.l.b16 %v7354
    %v7371 = vrot.slane %v7355, 6
    %v7372 = vrot.slane %v7357, 5
    %v7373 = vsel %vm1047, %v7372, %v7371
    %v7374 = vrot.slane %v7359, 4
    %v7375 = vsel %vm1050, %v7374, %v7373
    %v7376 = vrot.slane %v7361, 3
    %v7377 = vsel %vm1053, %v7376, %v7375
    %v7378 = vrot.slane %v7363, 2
    %v7379 = vsel %vm1056, %v7378, %v7377
    %v7380 = vrot.slane %v7365, 1
    %v7381 = vsel %vm1059, %v7380, %v7379
    %v7382 = vsel %vm1062, %v7367, %v7381
    %v7383 = vrot.slane %v7369, 7
    %v7384 = vsel %vm1065, %v7383, %v7382
    %v7385 = vrot.slane %v7356, 6
    %v7386 = vrot.slane %v7358, 5
    %v7387 = vsel %vm1047, %v7386, %v7385
    %v7388 = vrot.slane %v7360, 4
    %v7389 = vsel %vm1050, %v7388, %v7387
    %v7390 = vrot.slane %v7362, 3
    %v7391 = vsel %vm1053, %v7390, %v7389
    %v7392 = vrot.slane %v7364, 2
    %v7393 = vsel %vm1056, %v7392, %v7391
    %v7394 = vrot.slane %v7366, 1
    %v7395 = vsel %vm1059, %v7394, %v7393
    %v7396 = vsel %vm1062, %v7368, %v7395
    %v7397 = vrot.slane %v7370, 7
    %v7398 = vsel %vm1065, %v7397, %v7396
    %v7399 = vpack.c.b16 %v7384, %v7384
    %v7400 = vpack.c.b16 %v7398, %v7398
    %v7531 = vunpack.c.l.b16 %v7187
    %v7532 = vunpack.c.h.b16 %v7187
    %v7533 = vunpack.c.l.b16 %v7188
    %v7534 = vunpack.c.h.b16 %v7188
    %v7535 = vunpack.c.l.b16 %v7189
    %v7536 = vunpack.c.h.b16 %v7189
    %v7537 = vunpack.c.l.b16 %v7190
    %v7538 = vunpack.c.h.b16 %v7190
    %v7539 = vunpack.c.l.b16 %v7191
    %v7540 = vunpack.c.h.b16 %v7191
    %v7541 = vunpack.c.l.b16 %v7192
    %v7542 = vunpack.c.h.b16 %v7192
    %v7543 = vunpack.c.l.b16 %v7193
    %v7544 = vunpack.c.h.b16 %v7193
    %v7545 = vunpack.c.l.b16 %v7194
    %v7546 = vunpack.c.h.b16 %v7194
    %v7547 = vunpack.c.l.b16 %v7195
    %v7548 = vunpack.c.h.b16 %v7195
    %v7549 = vunpack.c.l.b16 %v7196
    %v7550 = vunpack.c.h.b16 %v7196
    %v7551 = vunpack.c.l.b16 %v7197
    %v7552 = vunpack.c.h.b16 %v7197
    %v7553 = vunpack.c.l.b16 %v7198
    %v7554 = vunpack.c.h.b16 %v7198
    %v7555 = vunpack.c.l.b16 %v7199
    %v7556 = vunpack.c.h.b16 %v7199
    %v7557 = vunpack.c.l.b16 %v7200
    %v7558 = vunpack.c.h.b16 %v7200
    %v7559 = vunpack.c.l.b16 %v7201
    %v7560 = vunpack.c.h.b16 %v7201
    %v7561 = vunpack.c.l.b16 %v7202
    %v7562 = vunpack.c.h.b16 %v7202
    %v7563 = vunpack.c.l.b16 %v7203
    %v7564 = vunpack.c.h.b16 %v7203
    %v7565 = vunpack.c.l.b16 %v7204
    %v7566 = vunpack.c.h.b16 %v7204
    %v7567 = vunpack.c.l.b16 %v7205
    %v7568 = vunpack.c.h.b16 %v7205
    %v7569 = vunpack.c.l.b16 %v7206
    %v7570 = vunpack.c.h.b16 %v7206
    %v7571 = vunpack.c.l.b16 %v7207
    %v7572 = vunpack.c.h.b16 %v7207
    %v7573 = vunpack.c.l.b16 %v7208
    %v7574 = vunpack.c.h.b16 %v7208
    %v7575 = vunpack.c.l.b16 %v7209
    %v7576 = vunpack.c.h.b16 %v7209
    %v7577 = vunpack.c.l.b16 %v7210
    %v7578 = vunpack.c.h.b16 %v7210
    %v7579 = vunpack.c.l.b16 %v7211
    %v7580 = vunpack.c.h.b16 %v7211
    %v7581 = vunpack.c.l.b16 %v7212
    %v7582 = vunpack.c.h.b16 %v7212
    %v7583 = vunpack.c.l.b16 %v7213
    %v7584 = vunpack.c.h.b16 %v7213
    %v7585 = vunpack.c.l.b16 %v7214
    %v7586 = vunpack.c.h.b16 %v7214
    %v7587 = vunpack.c.l.b16 %v7215
    %v7588 = vunpack.c.h.b16 %v7215
    %v7589 = vunpack.c.l.b16 %v7216
    %v7590 = vunpack.c.h.b16 %v7216
    %v7591 = vunpack.c.l.b16 %v7217
    %v7592 = vunpack.c.h.b16 %v7217
    %v7593 = vunpack.c.l.b16 %v7218
    %v7594 = vunpack.c.h.b16 %v7218
    %v7595 = vunpack.c.l.b16 %v7219
    %v7596 = vunpack.c.h.b16 %v7219
    %v7597 = vunpack.c.l.b16 %v7220
    %v7598 = vunpack.c.h.b16 %v7220
    %v7599 = vunpack.c.l.b16 %v7221
    %v7600 = vunpack.c.h.b16 %v7221
    %v7601 = vunpack.c.l.b16 %v7222
    %v7602 = vunpack.c.h.b16 %v7222
    %v7603 = vunpack.c.l.b16 %v7223
    %v7604 = vunpack.c.h.b16 %v7223
    %v7605 = vunpack.c.l.b16 %v7224
    %v7606 = vunpack.c.h.b16 %v7224
    %v7607 = vunpack.c.l.b16 %v7225
    %v7608 = vunpack.c.h.b16 %v7225
    %v7609 = vunpack.c.l.b16 %v7226
    %v7610 = vunpack.c.h.b16 %v7226
    %v7611 = vunpack.c.l.b16 %v7227
    %v7612 = vunpack.c.h.b16 %v7227
    %v7613 = vunpack.c.l.b16 %v7228
    %v7614 = vunpack.c.h.b16 %v7228
    %v7615 = vunpack.c.l.b16 %v7229
    %v7616 = vunpack.c.h.b16 %v7229
    %v7617 = vunpack.c.l.b16 %v7230
    %v7618 = vunpack.c.h.b16 %v7230
    %v7619 = vunpack.c.l.b16 %v7231
    %v7620 = vunpack.c.h.b16 %v7231
    %v7621 = vunpack.c.l.b16 %v7232
    %v7622 = vunpack.c.h.b16 %v7232
    %v7623 = vunpack.c.l.b16 %v7233
    %v7624 = vunpack.c.h.b16 %v7233
    %v7625 = vunpack.c.l.b16 %v7234
    %v7626 = vunpack.c.h.b16 %v7234
    %v7627 = vunpack.c.l.b16 %v7235
    %v7628 = vunpack.c.h.b16 %v7235
    %v7629 = vunpack.c.l.b16 %v7236
    %v7630 = vunpack.c.h.b16 %v7236
    %v7631 = vunpack.c.l.b16 %v7237
    %v7632 = vunpack.c.h.b16 %v7237
    %v7633 = vunpack.c.l.b16 %v7238
    %v7634 = vunpack.c.h.b16 %v7238
    %v7635 = vunpack.c.l.b16 %v7239
    %v7636 = vunpack.c.h.b16 %v7239
    %v7637 = vunpack.c.l.b16 %v7240
    %v7638 = vunpack.c.h.b16 %v7240
    %v7639 = vunpack.c.l.b16 %v7241
    %v7640 = vunpack.c.h.b16 %v7241
    %v7641 = vunpack.c.l.b16 %v7242
    %v7642 = vunpack.c.h.b16 %v7242
    %v7643 = vunpack.c.l.b16 %v7243
    %v7644 = vunpack.c.h.b16 %v7243
    %v7645 = vunpack.c.l.b16 %v7244
    %v7646 = vunpack.c.h.b16 %v7244
    %v7647 = vunpack.c.l.b16 %v7245
    %v7648 = vunpack.c.h.b16 %v7245
    %v7649 = vunpack.c.l.b16 %v7246
    %v7650 = vunpack.c.h.b16 %v7246
    %v7651 = vunpack.c.l.b16 %v7247
    %v7652 = vunpack.c.h.b16 %v7247
    %v7653 = vunpack.c.l.b16 %v7248
    %v7654 = vunpack.c.h.b16 %v7248
    %v7655 = vunpack.c.l.b16 %v7249
    %v7656 = vunpack.c.h.b16 %v7249
    %v7657 = vunpack.c.l.b16 %v7250
    %v7658 = vunpack.c.h.b16 %v7250
    %v7659 = vunpack.c.l.b16 %v7251
    %v7660 = vunpack.c.h.b16 %v7251
    %v7661 = vunpack.c.l.b16 %v7252
    %v7662 = vunpack.c.h.b16 %v7252
    %v7663 = vunpack.c.l.b16 %v7253
    %v7664 = vunpack.c.h.b16 %v7253
    %v7665 = vunpack.c.l.b16 %v7254
    %v7666 = vunpack.c.h.b16 %v7254
    %v7667 = vunpack.c.l.b16 %v7255
    %v7668 = vunpack.c.h.b16 %v7255
    %v7669 = vunpack.c.l.b16 %v7256
    %v7670 = vunpack.c.h.b16 %v7256
    %v7671 = vunpack.c.l.b16 %v7257
    %v7672 = vunpack.c.h.b16 %v7257
    %v7673 = vunpack.c.l.b16 %v7258
    %v7674 = vunpack.c.h.b16 %v7258
    %v7675 = vunpack.c.l.b16 %v7259
    %v7676 = vunpack.c.h.b16 %v7259
    %v7677 = vunpack.c.l.b16 %v7260
    %v7678 = vunpack.c.h.b16 %v7260
    %v7679 = vunpack.c.l.b16 %v7261
    %v7680 = vunpack.c.h.b16 %v7261
    %v7681 = vunpack.c.l.b16 %v7262
    %v7682 = vunpack.c.h.b16 %v7262
    %v7683 = vunpack.c.l.b16 %v7263
    %v7684 = vunpack.c.h.b16 %v7263
    %v7685 = vunpack.c.l.b16 %v7264
    %v7686 = vunpack.c.h.b16 %v7264
    %v7687 = vunpack.c.l.b16 %v7265
    %v7688 = vunpack.c.h.b16 %v7265
    %v7689 = vunpack.c.l.b16 %v7266
    %v7690 = vunpack.c.h.b16 %v7266
    %v7691 = vunpack.c.l.b16 %v7267
    %v7692 = vunpack.c.h.b16 %v7267
    %v7693 = vunpack.c.l.b16 %v7268
    %v7694 = vunpack.c.h.b16 %v7268
    %v7695 = vunpack.c.l.b16 %v7269
    %v7696 = vunpack.c.h.b16 %v7269
    %v7697 = vunpack.c.l.b16 %v7270
    %v7698 = vunpack.c.h.b16 %v7270
    %v7699 = vunpack.c.l.b16 %v7271
    %v7700 = vunpack.c.h.b16 %v7271
    %v7701 = vunpack.c.l.b16 %v7272
    %v7702 = vunpack.c.h.b16 %v7272
    %v7703 = vunpack.c.l.b16 %v7273
    %v7704 = vunpack.c.h.b16 %v7273
    %v7705 = vunpack.c.l.b16 %v7274
    %v7706 = vunpack.c.h.b16 %v7274
    %v7707 = vunpack.c.l.b16 %v7275
    %v7708 = vunpack.c.h.b16 %v7275
    %v7709 = vunpack.c.l.b16 %v7276
    %v7710 = vunpack.c.h.b16 %v7276
    %v7711 = vunpack.c.l.b16 %v7277
    %v7712 = vunpack.c.h.b16 %v7277
    %v7713 = vunpack.c.l.b16 %v7278
    %v7714 = vunpack.c.h.b16 %v7278
    %v7715 = vunpack.c.l.b16 %v7279
    %v7716 = vunpack.c.h.b16 %v7279
    %v7717 = vunpack.c.l.b16 %v7280
    %v7718 = vunpack.c.h.b16 %v7280
    %v7719 = vunpack.c.l.b16 %v7281
    %v7720 = vunpack.c.h.b16 %v7281
    %v7721 = vunpack.c.l.b16 %v7282
    %v7722 = vunpack.c.h.b16 %v7282
    %v7723 = vunpack.c.l.b16 %v7283
    %v7724 = vunpack.c.h.b16 %v7283
    %v7725 = vunpack.c.l.b16 %v7284
    %v7726 = vunpack.c.h.b16 %v7284
    %v7727 = vunpack.c.l.b16 %v7285
    %v7728 = vunpack.c.h.b16 %v7285
    %v7729 = vunpack.c.l.b16 %v7286
    %v7730 = vunpack.c.h.b16 %v7286
    %v7731 = vunpack.c.l.b16 %v7287
    %v7732 = vunpack.c.h.b16 %v7287
    %v7733 = vunpack.c.l.b16 %v7288
    %v7734 = vunpack.c.h.b16 %v7288
    %v7735 = vunpack.c.l.b16 %v7289
    %v7736 = vunpack.c.h.b16 %v7289
    %v7737 = vunpack.c.l.b16 %v7290
    %v7738 = vunpack.c.h.b16 %v7290
    %v7739 = vunpack.c.l.b16 %v7291
    %v7740 = vunpack.c.h.b16 %v7291
    %v7741 = vunpack.c.l.b16 %v7292
    %v7742 = vunpack.c.h.b16 %v7292
    %v7743 = vunpack.c.l.b16 %v7293
    %v7744 = vunpack.c.h.b16 %v7293
    %v7745 = vunpack.c.l.b16 %v7294
    %v7746 = vunpack.c.h.b16 %v7294
    %v7747 = vunpack.c.l.b16 %v7295
    %v7748 = vunpack.c.h.b16 %v7295
    %v7749 = vunpack.c.l.b16 %v7296
    %v7750 = vunpack.c.h.b16 %v7296
    %v7751 = vunpack.c.l.b16 %v7297
    %v7752 = vunpack.c.h.b16 %v7297
    %v7753 = vunpack.c.l.b16 %v7298
    %v7754 = vunpack.c.h.b16 %v7298
    %v7755 = vunpack.c.l.b16 %v7299
    %v7756 = vunpack.c.h.b16 %v7299
    %v7757 = vunpack.c.l.b16 %v7300
    %v7758 = vunpack.c.h.b16 %v7300
    %v7759 = vunpack.c.l.b16 %v7301
    %v7760 = vunpack.c.h.b16 %v7301
    %v7761 = vunpack.c.l.b16 %v7302
    %v7762 = vunpack.c.h.b16 %v7302
    %v7763 = vunpack.c.l.b16 %v7303
    %v7764 = vunpack.c.h.b16 %v7303
    %v7765 = vunpack.c.l.b16 %v7304
    %v7766 = vunpack.c.h.b16 %v7304
    %v7767 = vunpack.c.l.b16 %v7305
    %v7768 = vunpack.c.h.b16 %v7305
    %v7769 = vunpack.c.l.b16 %v7306
    %v7770 = vunpack.c.h.b16 %v7306
    %v7771 = vunpack.c.l.b16 %v7307
    %v7772 = vunpack.c.h.b16 %v7307
    %v7773 = vunpack.c.l.b16 %v7308
    %v7774 = vunpack.c.h.b16 %v7308
    %v7775 = vunpack.c.l.b16 %v7309
    %v7776 = vunpack.c.h.b16 %v7309
    %v7777 = vunpack.c.l.b16 %v7310
    %v7778 = vunpack.c.h.b16 %v7310
    %v7779 = vunpack.c.l.b16 %v7311
    %v7780 = vunpack.c.h.b16 %v7311
    %v7781 = vunpack.c.l.b16 %v7312
    %v7782 = vunpack.c.h.b16 %v7312
    %v7783 = vunpack.c.l.b16 %v7313
    %v7784 = vunpack.c.h.b16 %v7313
    %v7785 = vunpack.c.l.b16 %v7314
    %v7786 = vunpack.c.h.b16 %v7314
    %v7787 = vpack.c.b16 %v7539, %v7531
    %v7788 = vpack.c.b16 %v7540, %v7532
    %v7789 = vpack.c.b16 %v7541, %v7533
    %v7790 = vpack.c.b16 %v7542, %v7534
    %v7791 = vpack.c.b16 %v7543, %v7535
    %v7792 = vpack.c.b16 %v7544, %v7536
    %v7793 = vpack.c.b16 %v7545, %v7537
    %v7794 = vpack.c.b16 %v7546, %v7538
    %v7795 = vpack.c.b16 %v7555, %v7547
    %v7796 = vpack.c.b16 %v7556, %v7548
    %v7797 = vpack.c.b16 %v7557, %v7549
    %v7798 = vpack.c.b16 %v7558, %v7550
    %v7799 = vpack.c.b16 %v7559, %v7551
    %v7800 = vpack.c.b16 %v7560, %v7552
    %v7801 = vpack.c.b16 %v7561, %v7553
    %v7802 = vpack.c.b16 %v7562, %v7554
    %v7803 = vpack.c.b16 %v7571, %v7563
    %v7804 = vpack.c.b16 %v7572, %v7564
    %v7805 = vpack.c.b16 %v7573, %v7565
    %v7806 = vpack.c.b16 %v7574, %v7566
    %v7807 = vpack.c.b16 %v7575, %v7567
    %v7808 = vpack.c.b16 %v7576, %v7568
    %v7809 = vpack.c.b16 %v7577, %v7569
    %v7810 = vpack.c.b16 %v7578, %v7570
    %v7811 = vpack.c.b16 %v7587, %v7579
    %v7812 = vpack.c.b16 %v7588, %v7580
    %v7813 = vpack.c.b16 %v7589, %v7581
    %v7814 = vpack.c.b16 %v7590, %v7582
    %v7815 = vpack.c.b16 %v7591, %v7583
    %v7816 = vpack.c.b16 %v7592, %v7584
    %v7817 = vpack.c.b16 %v7593, %v7585
    %v7818 = vpack.c.b16 %v7594, %v7586
    %v7819 = vpack.c.b16 %v7603, %v7595
    %v7820 = vpack.c.b16 %v7604, %v7596
    %v7821 = vpack.c.b16 %v7605, %v7597
    %v7822 = vpack.c.b16 %v7606, %v7598
    %v7823 = vpack.c.b16 %v7607, %v7599
    %v7824 = vpack.c.b16 %v7608, %v7600
    %v7825 = vpack.c.b16 %v7609, %v7601
    %v7826 = vpack.c.b16 %v7610, %v7602
    %v7827 = vpack.c.b16 %v7619, %v7611
    %v7828 = vpack.c.b16 %v7620, %v7612
    %v7829 = vpack.c.b16 %v7621, %v7613
    %v7830 = vpack.c.b16 %v7622, %v7614
    %v7831 = vpack.c.b16 %v7623, %v7615
    %v7832 = vpack.c.b16 %v7624, %v7616
    %v7833 = vpack.c.b16 %v7625, %v7617
    %v7834 = vpack.c.b16 %v7626, %v7618
    %v7835 = vpack.c.b16 %v7635, %v7627
    %v7836 = vpack.c.b16 %v7636, %v7628
    %v7837 = vpack.c.b16 %v7637, %v7629
    %v7838 = vpack.c.b16 %v7638, %v7630
    %v7839 = vpack.c.b16 %v7639, %v7631
    %v7840 = vpack.c.b16 %v7640, %v7632
    %v7841 = vpack.c.b16 %v7641, %v7633
    %v7842 = vpack.c.b16 %v7642, %v7634
    %v7843 = vpack.c.b16 %v7651, %v7643
    %v7844 = vpack.c.b16 %v7652, %v7644
    %v7845 = vpack.c.b16 %v7653, %v7645
    %v7846 = vpack.c.b16 %v7654, %v7646
    %v7847 = vpack.c.b16 %v7655, %v7647
    %v7848 = vpack.c.b16 %v7656, %v7648
    %v7849 = vpack.c.b16 %v7657, %v7649
    %v7850 = vpack.c.b16 %v7658, %v7650
    %v7851 = vpack.c.b16 %v7667, %v7659
    %v7852 = vpack.c.b16 %v7668, %v7660
    %v7853 = vpack.c.b16 %v7669, %v7661
    %v7854 = vpack.c.b16 %v7670, %v7662
    %v7855 = vpack.c.b16 %v7671, %v7663
    %v7856 = vpack.c.b16 %v7672, %v7664
    %v7857 = vpack.c.b16 %v7673, %v7665
    %v7858 = vpack.c.b16 %v7674, %v7666
    %v7859 = vpack.c.b16 %v7683, %v7675
    %v7860 = vpack.c.b16 %v7684, %v7676
    %v7861 = vpack.c.b16 %v7685, %v7677
    %v7862 = vpack.c.b16 %v7686, %v7678
    %v7863 = vpack.c.b16 %v7687, %v7679
    %v7864 = vpack.c.b16 %v7688, %v7680
    %v7865 = vpack.c.b16 %v7689, %v7681
    %v7866 = vpack.c.b16 %v7690, %v7682
    %v7867 = vpack.c.b16 %v7699, %v7691
    %v7868 = vpack.c.b16 %v7700, %v7692
    %v7869 = vpack.c.b16 %v7701, %v7693
    %v7870 = vpack.c.b16 %v7702, %v7694
    %v7871 = vpack.c.b16 %v7703, %v7695
    %v7872 = vpack.c.b16 %v7704, %v7696
    %v7873 = vpack.c.b16 %v7705, %v7697
    %v7874 = vpack.c.b16 %v7706, %v7698
    %v7875 = vpack.c.b16 %v7715, %v7707
    %v7876 = vpack.c.b16 %v7716, %v7708
    %v7877 = vpack.c.b16 %v7717, %v7709
    %v7878 = vpack.c.b16 %v7718, %v7710
    %v7879 = vpack.c.b16 %v7719, %v7711
    %v7880 = vpack.c.b16 %v7720, %v7712
    %v7881 = vpack.c.b16 %v7721, %v7713
    %v7882 = vpack.c.b16 %v7722, %v7714
    %v7883 = vpack.c.b16 %v7731, %v7723
    %v7884 = vpack.c.b16 %v7732, %v7724
    %v7885 = vpack.c.b16 %v7733, %v7725
    %v7886 = vpack.c.b16 %v7734, %v7726
    %v7887 = vpack.c.b16 %v7735, %v7727
    %v7888 = vpack.c.b16 %v7736, %v7728
    %v7889 = vpack.c.b16 %v7737, %v7729
    %v7890 = vpack.c.b16 %v7738, %v7730
    %v7891 = vpack.c.b16 %v7747, %v7739
    %v7892 = vpack.c.b16 %v7748, %v7740
    %v7893 = vpack.c.b16 %v7749, %v7741
    %v7894 = vpack.c.b16 %v7750, %v7742
    %v7895 = vpack.c.b16 %v7751, %v7743
    %v7896 = vpack.c.b16 %v7752, %v7744
    %v7897 = vpack.c.b16 %v7753, %v7745
    %v7898 = vpack.c.b16 %v7754, %v7746
    %v7899 = vpack.c.b16 %v7763, %v7755
    %v7900 = vpack.c.b16 %v7764, %v7756
    %v7901 = vpack.c.b16 %v7765, %v7757
    %v7902 = vpack.c.b16 %v7766, %v7758
    %v7903 = vpack.c.b16 %v7767, %v7759
    %v7904 = vpack.c.b16 %v7768, %v7760
    %v7905 = vpack.c.b16 %v7769, %v7761
    %v7906 = vpack.c.b16 %v7770, %v7762
    %v7907 = vpack.c.b16 %v7779, %v7771
    %v7908 = vpack.c.b16 %v7780, %v7772
    %v7909 = vpack.c.b16 %v7781, %v7773
    %v7910 = vpack.c.b16 %v7782, %v7774
    %v7911 = vpack.c.b16 %v7783, %v7775
    %v7912 = vpack.c.b16 %v7784, %v7776
    %v7913 = vpack.c.b16 %v7785, %v7777
    %v7914 = vpack.c.b16 %v7786, %v7778
    %8043 = vmatprep.subr.bf16.mxu0 %v7844
    %8044 = vmatpush1.bf16.msra.mxu0 %v7843
    %8045 = vmatprep.subr.bf16.mxu0 %v7836
    %8046 = vmatpush1.bf16.msra.mxu0 %v7835
    %8047 = vmatprep.subr.bf16.mxu0 %v7828
    %8048 = vmatpush1.bf16.msra.mxu0 %v7827
    %8049 = vmatprep.subr.bf16.mxu0 %v7820
    %8050 = vmatpush1.bf16.msra.mxu0 %v7819
    %8051 = vmatprep.subr.bf16.mxu0 %v7812
    %8052 = vmatpush1.bf16.msra.mxu0 %v7811
    %8053 = vmatprep.subr.bf16.mxu0 %v7804
    %8054 = vmatpush1.bf16.msra.mxu0 %v7803
    %8055 = vmatprep.subr.bf16.mxu0 %v7796
    %8056 = vmatpush1.bf16.msra.mxu0 %v7795
    %8057 = vmatprep.subr.bf16.mxu0 %v7788
    %8058 = vmatpush1.bf16.msra.mxu0 %v7787
    %8059 = vmatprep.subr.bf16.mxu0 %v7908
    %8060 = vmatpush2.bf16.msra.mxu0 %v7907
    %8061 = vmatprep.subr.bf16.mxu0 %v7900
    %8062 = vmatpush2.bf16.msra.mxu0 %v7899
    %8063 = vmatprep.subr.bf16.mxu0 %v7892
    %8064 = vmatpush2.bf16.msra.mxu0 %v7891
    %8065 = vmatprep.subr.bf16.mxu0 %v7884
    %8066 = vmatpush2.bf16.msra.mxu0 %v7883
    %8067 = vmatprep.subr.bf16.mxu0 %v7876
    %8068 = vmatpush2.bf16.msra.mxu0 %v7875
    %8069 = vmatprep.subr.bf16.mxu0 %v7868
    %8070 = vmatpush2.bf16.msra.mxu0 %v7867
    %8071 = vmatprep.subr.bf16.mxu0 %v7860
    %8072 = vmatpush2.bf16.msra.mxu0 %v7859
    %8073 = vmatprep.subr.bf16.mxu0 %v7852
    %8074 = vmatpush2.bf16.msra.mxu0 %v7851
    %8075 = vmatprep.mubr.bf16.mxu0 %v7400
    %8076 = vmatmul.mubr.bf16.gmra.mxu0 %v7399
    %v8077 = vpop.f32.mrf.mxu0
    %v8078 = vadd.f32 0.0, %v8077
    %v8079 = vpop.f32.mrf.mxu0
    %v8080 = vadd.f32 0.0, %v8079
    %v8081 = vpop.f32.mrf.mxu0
    %v8082 = vpop.f32.mrf.mxu0
    %8083 = vdwg.mxu0
    %8084 = vmatprep.subr.bf16.mxu0 %v7846
    %8085 = vmatpush1.bf16.msra.mxu0 %v7845
    %8086 = vmatprep.subr.bf16.mxu0 %v7838
    %8087 = vmatpush1.bf16.msra.mxu0 %v7837
    %8088 = vmatprep.subr.bf16.mxu0 %v7830
    %8089 = vmatpush1.bf16.msra.mxu0 %v7829
    %8090 = vmatprep.subr.bf16.mxu0 %v7822
    %8091 = vmatpush1.bf16.msra.mxu0 %v7821
    %8092 = vmatprep.subr.bf16.mxu0 %v7814
    %8093 = vmatpush1.bf16.msra.mxu0 %v7813
    %8094 = vmatprep.subr.bf16.mxu0 %v7806
    %8095 = vmatpush1.bf16.msra.mxu0 %v7805
    %8096 = vmatprep.subr.bf16.mxu0 %v7798
    %8097 = vmatpush1.bf16.msra.mxu0 %v7797
    %8098 = vmatprep.subr.bf16.mxu0 %v7790
    %8099 = vmatpush1.bf16.msra.mxu0 %v7789
    %8100 = vmatprep.subr.bf16.mxu0 %v7910
    %8101 = vmatpush2.bf16.msra.mxu0 %v7909
    %8102 = vmatprep.subr.bf16.mxu0 %v7902
    %8103 = vmatpush2.bf16.msra.mxu0 %v7901
    %8104 = vmatprep.subr.bf16.mxu0 %v7894
    %8105 = vmatpush2.bf16.msra.mxu0 %v7893
    %8106 = vmatprep.subr.bf16.mxu0 %v7886
    %8107 = vmatpush2.bf16.msra.mxu0 %v7885
    %8108 = vmatprep.subr.bf16.mxu0 %v7878
    %8109 = vmatpush2.bf16.msra.mxu0 %v7877
    %8110 = vmatprep.subr.bf16.mxu0 %v7870
    %8111 = vmatpush2.bf16.msra.mxu0 %v7869
    %8112 = vmatprep.subr.bf16.mxu0 %v7862
    %8113 = vmatpush2.bf16.msra.mxu0 %v7861
    %8114 = vmatprep.subr.bf16.mxu0 %v7854
    %8115 = vmatpush2.bf16.msra.mxu0 %v7853
    %8116 = vmatprep.mubr.bf16.mxu0 %v7400
    %8117 = vmatmul.mubr.bf16.gmra.mxu0 %v7399
    %v8118 = vpop.f32.mrf.mxu0
    %v8119 = vadd.f32 0.0, %v8118
    %v8120 = vpop.f32.mrf.mxu0
    %v8121 = vadd.f32 0.0, %v8120
    %v8122 = vpop.f32.mrf.mxu0
    %v8123 = vpop.f32.mrf.mxu0
    %8124 = vdwg.mxu0
    %8125 = vmatprep.subr.bf16.mxu0 %v7848
    %8126 = vmatpush1.bf16.msra.mxu0 %v7847
    %8127 = vmatprep.subr.bf16.mxu0 %v7840
    %8128 = vmatpush1.bf16.msra.mxu0 %v7839
    %8129 = vmatprep.subr.bf16.mxu0 %v7832
    %8130 = vmatpush1.bf16.msra.mxu0 %v7831
    %8131 = vmatprep.subr.bf16.mxu0 %v7824
    %8132 = vmatpush1.bf16.msra.mxu0 %v7823
    %8133 = vmatprep.subr.bf16.mxu0 %v7816
    %8134 = vmatpush1.bf16.msra.mxu0 %v7815
    %8135 = vmatprep.subr.bf16.mxu0 %v7808
    %8136 = vmatpush1.bf16.msra.mxu0 %v7807
    %8137 = vmatprep.subr.bf16.mxu0 %v7800
    %8138 = vmatpush1.bf16.msra.mxu0 %v7799
    %8139 = vmatprep.subr.bf16.mxu0 %v7792
    %8140 = vmatpush1.bf16.msra.mxu0 %v7791
    %8141 = vmatprep.subr.bf16.mxu0 %v7912
    %8142 = vmatpush2.bf16.msra.mxu0 %v7911
    %8143 = vmatprep.subr.bf16.mxu0 %v7904
    %8144 = vmatpush2.bf16.msra.mxu0 %v7903
    %8145 = vmatprep.subr.bf16.mxu0 %v7896
    %8146 = vmatpush2.bf16.msra.mxu0 %v7895
    %8147 = vmatprep.subr.bf16.mxu0 %v7888
    %8148 = vmatpush2.bf16.msra.mxu0 %v7887
    %8149 = vmatprep.subr.bf16.mxu0 %v7880
    %8150 = vmatpush2.bf16.msra.mxu0 %v7879
    %8151 = vmatprep.subr.bf16.mxu0 %v7872
    %8152 = vmatpush2.bf16.msra.mxu0 %v7871
    %8153 = vmatprep.subr.bf16.mxu0 %v7864
    %8154 = vmatpush2.bf16.msra.mxu0 %v7863
    %8155 = vmatprep.subr.bf16.mxu0 %v7856
    %8156 = vmatpush2.bf16.msra.mxu0 %v7855
    %8157 = vmatprep.mubr.bf16.mxu0 %v7400
    %8158 = vmatmul.mubr.bf16.gmra.mxu0 %v7399
    %v8159 = vpop.f32.mrf.mxu0
    %v8160 = vadd.f32 0.0, %v8159
    %v8161 = vpop.f32.mrf.mxu0
    %v8162 = vadd.f32 0.0, %v8161
    %v8163 = vpop.f32.mrf.mxu0
    %v8164 = vpop.f32.mrf.mxu0
    %8165 = vdwg.mxu0
    %8166 = vmatprep.subr.bf16.mxu0 %v7850
    %8167 = vmatpush1.bf16.msra.mxu0 %v7849
    %8168 = vmatprep.subr.bf16.mxu0 %v7842
    %8169 = vmatpush1.bf16.msra.mxu0 %v7841
    %8170 = vmatprep.subr.bf16.mxu0 %v7834
    %8171 = vmatpush1.bf16.msra.mxu0 %v7833
    %8172 = vmatprep.subr.bf16.mxu0 %v7826
    %8173 = vmatpush1.bf16.msra.mxu0 %v7825
    %8174 = vmatprep.subr.bf16.mxu0 %v7818
    %8175 = vmatpush1.bf16.msra.mxu0 %v7817
    %8176 = vmatprep.subr.bf16.mxu0 %v7810
    %8177 = vmatpush1.bf16.msra.mxu0 %v7809
    %8178 = vmatprep.subr.bf16.mxu0 %v7802
    %8179 = vmatpush1.bf16.msra.mxu0 %v7801
    %8180 = vmatprep.subr.bf16.mxu0 %v7794
    %8181 = vmatpush1.bf16.msra.mxu0 %v7793
    %8182 = vmatprep.subr.bf16.mxu0 %v7914
    %8183 = vmatpush2.bf16.msra.mxu0 %v7913
    %8184 = vmatprep.subr.bf16.mxu0 %v7906
    %8185 = vmatpush2.bf16.msra.mxu0 %v7905
    %8186 = vmatprep.subr.bf16.mxu0 %v7898
    %8187 = vmatpush2.bf16.msra.mxu0 %v7897
    %8188 = vmatprep.subr.bf16.mxu0 %v7890
    %8189 = vmatpush2.bf16.msra.mxu0 %v7889
    %8190 = vmatprep.subr.bf16.mxu0 %v7882
    %8191 = vmatpush2.bf16.msra.mxu0 %v7881
    %8192 = vmatprep.subr.bf16.mxu0 %v7874
    %8193 = vmatpush2.bf16.msra.mxu0 %v7873
    %8194 = vmatprep.subr.bf16.mxu0 %v7866
    %8195 = vmatpush2.bf16.msra.mxu0 %v7865
    %8196 = vmatprep.subr.bf16.mxu0 %v7858
    %8197 = vmatpush2.bf16.msra.mxu0 %v7857
    %8198 = vmatprep.mubr.bf16.mxu0 %v7400
    %8199 = vmatmul.mubr.bf16.gmra.mxu0 %v7399
    %v8200 = vpop.f32.mrf.mxu0
    %v8201 = vadd.f32 0.0, %v8200
    %v8202 = vpop.f32.mrf.mxu0
    %v8203 = vadd.f32 0.0, %v8202
    %v8204 = vpop.f32.mrf.mxu0
    %v8205 = vpop.f32.mrf.mxu0
    %8206 = vdwg.mxu0
    %v8207 = vadd.f32 %v7170, %v8078
    %v8208 = vadd.f32 %v7171, %v8080
    %v8209 = vadd.f32 %v7172, %v8119
    %v8210 = vadd.f32 %v7173, %v8121
    %v8211 = vadd.f32 %v7174, %v8160
    %v8212 = vadd.f32 %v7175, %v8162
    %v8213 = vadd.f32 %v7176, %v8201
    %v8214 = vadd.f32 %v7177, %v8203
    %8215 = vst [vmem:[#allocation3] sm:$0xff] %v8207
    %8216 = vst [vmem:[#allocation3 + $0x8] sm:$0xff] %v8208
    %8217 = vst [vmem:[#allocation3 + $0x10] sm:$0xff] %v8209
    %8218 = vst [vmem:[#allocation3 + $0x18] sm:$0xff] %v8210
    %8219 = vst [vmem:[#allocation3 + $0x20] sm:$0xff] %v8211
    %8220 = vst [vmem:[#allocation3 + $0x28] sm:$0xff] %v8212
    %8221 = vst [vmem:[#allocation3 + $0x30] sm:$0xff] %v8213
    %8222 = vst [vmem:[#allocation3 + $0x38] sm:$0xff] %v8214
    %v8223 = vld [vmem:[#allocation3] sm:$0xff]
    %v8224 = vld [vmem:[#allocation3 + $0x8] sm:$0xff]
    %v8225 = vld [vmem:[#allocation3 + $0x10] sm:$0xff]
    %v8226 = vld [vmem:[#allocation3 + $0x18] sm:$0xff]
    %v8227 = vld [vmem:[#allocation3 + $0x20] sm:$0xff]
    %v8228 = vld [vmem:[#allocation3 + $0x28] sm:$0xff]
    %v8229 = vld [vmem:[#allocation3 + $0x30] sm:$0xff]
    %v8230 = vld [vmem:[#allocation3 + $0x38] sm:$0xff]
    %v8231 = vld [vmem:[#allocation2] sm:$0x88]
    %v8232 = vld [vmem:[#allocation2 + $0x8] sm:$0x88]
    %v8233 = vld [vmem:[#allocation2 + $0x10] sm:$0x88]
    %v8234 = vld [vmem:[#allocation2 + $0x18] sm:$0x88]
    %v8235 = vld [vmem:[#allocation2 + $0x20] sm:$0x88]
    %v8236 = vld [vmem:[#allocation2 + $0x28] sm:$0x88]
    %v8237 = vld [vmem:[#allocation2 + $0x30] sm:$0x88]
    %v8238 = vld [vmem:[#allocation2 + $0x38] sm:$0x88]
    %s8239 = scalar_lea.vmem [#allocation6], 7168
    %v8240 = vld [vmem:[%s8239] sm:$0xff]
    %v8241 = vld [vmem:[%s8239 + $0x8] sm:$0xff]
    %v8242 = vld [vmem:[%s8239 + $0x10] sm:$0xff]
    %v8243 = vld [vmem:[%s8239 + $0x18] sm:$0xff]
    %v8244 = vld [vmem:[%s8239 + $0x20] sm:$0xff]
    %v8245 = vld [vmem:[%s8239 + $0x28] sm:$0xff]
    %v8246 = vld [vmem:[%s8239 + $0x30] sm:$0xff]
    %v8247 = vld [vmem:[%s8239 + $0x38] sm:$0xff]
    %v8248 = vld [vmem:[%s8239 + $0x40] sm:$0xff]
    %v8249 = vld [vmem:[%s8239 + $0x48] sm:$0xff]
    %v8250 = vld [vmem:[%s8239 + $0x50] sm:$0xff]
    %v8251 = vld [vmem:[%s8239 + $0x58] sm:$0xff]
    %v8252 = vld [vmem:[%s8239 + $0x60] sm:$0xff]
    %v8253 = vld [vmem:[%s8239 + $0x68] sm:$0xff]
    %v8254 = vld [vmem:[%s8239 + $0x70] sm:$0xff]
    %v8255 = vld [vmem:[%s8239 + $0x78] sm:$0xff]
    %v8256 = vld [vmem:[%s8239 + $0x80] sm:$0xff]
    %v8257 = vld [vmem:[%s8239 + $0x88] sm:$0xff]
    %v8258 = vld [vmem:[%s8239 + $0x90] sm:$0xff]
    %v8259 = vld [vmem:[%s8239 + $0x98] sm:$0xff]
    %v8260 = vld [vmem:[%s8239 + $0xa0] sm:$0xff]
    %v8261 = vld [vmem:[%s8239 + $0xa8] sm:$0xff]
    %v8262 = vld [vmem:[%s8239 + $0xb0] sm:$0xff]
    %v8263 = vld [vmem:[%s8239 + $0xb8] sm:$0xff]
    %v8264 = vld [vmem:[%s8239 + $0xc0] sm:$0xff]
    %v8265 = vld [vmem:[%s8239 + $0xc8] sm:$0xff]
    %v8266 = vld [vmem:[%s8239 + $0xd0] sm:$0xff]
    %v8267 = vld [vmem:[%s8239 + $0xd8] sm:$0xff]
    %v8268 = vld [vmem:[%s8239 + $0xe0] sm:$0xff]
    %v8269 = vld [vmem:[%s8239 + $0xe8] sm:$0xff]
    %v8270 = vld [vmem:[%s8239 + $0xf0] sm:$0xff]
    %v8271 = vld [vmem:[%s8239 + $0xf8] sm:$0xff]
    %v8272 = vld [vmem:[%s8239 + $0x100] sm:$0xff]
    %v8273 = vld [vmem:[%s8239 + $0x108] sm:$0xff]
    %v8274 = vld [vmem:[%s8239 + $0x110] sm:$0xff]
    %v8275 = vld [vmem:[%s8239 + $0x118] sm:$0xff]
    %v8276 = vld [vmem:[%s8239 + $0x120] sm:$0xff]
    %v8277 = vld [vmem:[%s8239 + $0x128] sm:$0xff]
    %v8278 = vld [vmem:[%s8239 + $0x130] sm:$0xff]
    %v8279 = vld [vmem:[%s8239 + $0x138] sm:$0xff]
    %v8280 = vld [vmem:[%s8239 + $0x140] sm:$0xff]
    %v8281 = vld [vmem:[%s8239 + $0x148] sm:$0xff]
    %v8282 = vld [vmem:[%s8239 + $0x150] sm:$0xff]
    %v8283 = vld [vmem:[%s8239 + $0x158] sm:$0xff]
    %v8284 = vld [vmem:[%s8239 + $0x160] sm:$0xff]
    %v8285 = vld [vmem:[%s8239 + $0x168] sm:$0xff]
    %v8286 = vld [vmem:[%s8239 + $0x170] sm:$0xff]
    %v8287 = vld [vmem:[%s8239 + $0x178] sm:$0xff]
    %v8288 = vld [vmem:[%s8239 + $0x180] sm:$0xff]
    %v8289 = vld [vmem:[%s8239 + $0x188] sm:$0xff]
    %v8290 = vld [vmem:[%s8239 + $0x190] sm:$0xff]
    %v8291 = vld [vmem:[%s8239 + $0x198] sm:$0xff]
    %v8292 = vld [vmem:[%s8239 + $0x1a0] sm:$0xff]
    %v8293 = vld [vmem:[%s8239 + $0x1a8] sm:$0xff]
    %v8294 = vld [vmem:[%s8239 + $0x1b0] sm:$0xff]
    %v8295 = vld [vmem:[%s8239 + $0x1b8] sm:$0xff]
    %v8296 = vld [vmem:[%s8239 + $0x1c0] sm:$0xff]
    %v8297 = vld [vmem:[%s8239 + $0x1c8] sm:$0xff]
    %v8298 = vld [vmem:[%s8239 + $0x1d0] sm:$0xff]
    %v8299 = vld [vmem:[%s8239 + $0x1d8] sm:$0xff]
    %v8300 = vld [vmem:[%s8239 + $0x1e0] sm:$0xff]
    %v8301 = vld [vmem:[%s8239 + $0x1e8] sm:$0xff]
    %v8302 = vld [vmem:[%s8239 + $0x1f0] sm:$0xff]
    %v8303 = vld [vmem:[%s8239 + $0x1f8] sm:$0xff]
    %v8304 = vld [vmem:[%s8239 + $0x200] sm:$0xff]
    %v8305 = vld [vmem:[%s8239 + $0x208] sm:$0xff]
    %v8306 = vld [vmem:[%s8239 + $0x210] sm:$0xff]
    %v8307 = vld [vmem:[%s8239 + $0x218] sm:$0xff]
    %v8308 = vld [vmem:[%s8239 + $0x220] sm:$0xff]
    %v8309 = vld [vmem:[%s8239 + $0x228] sm:$0xff]
    %v8310 = vld [vmem:[%s8239 + $0x230] sm:$0xff]
    %v8311 = vld [vmem:[%s8239 + $0x238] sm:$0xff]
    %v8312 = vld [vmem:[%s8239 + $0x240] sm:$0xff]
    %v8313 = vld [vmem:[%s8239 + $0x248] sm:$0xff]
    %v8314 = vld [vmem:[%s8239 + $0x250] sm:$0xff]
    %v8315 = vld [vmem:[%s8239 + $0x258] sm:$0xff]
    %v8316 = vld [vmem:[%s8239 + $0x260] sm:$0xff]
    %v8317 = vld [vmem:[%s8239 + $0x268] sm:$0xff]
    %v8318 = vld [vmem:[%s8239 + $0x270] sm:$0xff]
    %v8319 = vld [vmem:[%s8239 + $0x278] sm:$0xff]
    %v8320 = vld [vmem:[%s8239 + $0x280] sm:$0xff]
    %v8321 = vld [vmem:[%s8239 + $0x288] sm:$0xff]
    %v8322 = vld [vmem:[%s8239 + $0x290] sm:$0xff]
    %v8323 = vld [vmem:[%s8239 + $0x298] sm:$0xff]
    %v8324 = vld [vmem:[%s8239 + $0x2a0] sm:$0xff]
    %v8325 = vld [vmem:[%s8239 + $0x2a8] sm:$0xff]
    %v8326 = vld [vmem:[%s8239 + $0x2b0] sm:$0xff]
    %v8327 = vld [vmem:[%s8239 + $0x2b8] sm:$0xff]
    %v8328 = vld [vmem:[%s8239 + $0x2c0] sm:$0xff]
    %v8329 = vld [vmem:[%s8239 + $0x2c8] sm:$0xff]
    %v8330 = vld [vmem:[%s8239 + $0x2d0] sm:$0xff]
    %v8331 = vld [vmem:[%s8239 + $0x2d8] sm:$0xff]
    %v8332 = vld [vmem:[%s8239 + $0x2e0] sm:$0xff]
    %v8333 = vld [vmem:[%s8239 + $0x2e8] sm:$0xff]
    %v8334 = vld [vmem:[%s8239 + $0x2f0] sm:$0xff]
    %v8335 = vld [vmem:[%s8239 + $0x2f8] sm:$0xff]
    %v8336 = vld [vmem:[%s8239 + $0x300] sm:$0xff]
    %v8337 = vld [vmem:[%s8239 + $0x308] sm:$0xff]
    %v8338 = vld [vmem:[%s8239 + $0x310] sm:$0xff]
    %v8339 = vld [vmem:[%s8239 + $0x318] sm:$0xff]
    %v8340 = vld [vmem:[%s8239 + $0x320] sm:$0xff]
    %v8341 = vld [vmem:[%s8239 + $0x328] sm:$0xff]
    %v8342 = vld [vmem:[%s8239 + $0x330] sm:$0xff]
    %v8343 = vld [vmem:[%s8239 + $0x338] sm:$0xff]
    %v8344 = vld [vmem:[%s8239 + $0x340] sm:$0xff]
    %v8345 = vld [vmem:[%s8239 + $0x348] sm:$0xff]
    %v8346 = vld [vmem:[%s8239 + $0x350] sm:$0xff]
    %v8347 = vld [vmem:[%s8239 + $0x358] sm:$0xff]
    %v8348 = vld [vmem:[%s8239 + $0x360] sm:$0xff]
    %v8349 = vld [vmem:[%s8239 + $0x368] sm:$0xff]
    %v8350 = vld [vmem:[%s8239 + $0x370] sm:$0xff]
    %v8351 = vld [vmem:[%s8239 + $0x378] sm:$0xff]
    %v8352 = vld [vmem:[%s8239 + $0x380] sm:$0xff]
    %v8353 = vld [vmem:[%s8239 + $0x388] sm:$0xff]
    %v8354 = vld [vmem:[%s8239 + $0x390] sm:$0xff]
    %v8355 = vld [vmem:[%s8239 + $0x398] sm:$0xff]
    %v8356 = vld [vmem:[%s8239 + $0x3a0] sm:$0xff]
    %v8357 = vld [vmem:[%s8239 + $0x3a8] sm:$0xff]
    %v8358 = vld [vmem:[%s8239 + $0x3b0] sm:$0xff]
    %v8359 = vld [vmem:[%s8239 + $0x3b8] sm:$0xff]
    %v8360 = vld [vmem:[%s8239 + $0x3c0] sm:$0xff]
    %v8361 = vld [vmem:[%s8239 + $0x3c8] sm:$0xff]
    %v8362 = vld [vmem:[%s8239 + $0x3d0] sm:$0xff]
    %v8363 = vld [vmem:[%s8239 + $0x3d8] sm:$0xff]
    %v8364 = vld [vmem:[%s8239 + $0x3e0] sm:$0xff]
    %v8365 = vld [vmem:[%s8239 + $0x3e8] sm:$0xff]
    %v8366 = vld [vmem:[%s8239 + $0x3f0] sm:$0xff]
    %v8367 = vld [vmem:[%s8239 + $0x3f8] sm:$0xff]
    %v8376 = vunpack.c.l.b16 %v8231
    %v8377 = vunpack.c.h.b16 %v8231
    %v8378 = vunpack.c.l.b16 %v8232
    %v8379 = vunpack.c.h.b16 %v8232
    %v8380 = vunpack.c.l.b16 %v8233
    %v8381 = vunpack.c.h.b16 %v8233
    %v8382 = vunpack.c.l.b16 %v8234
    %v8383 = vunpack.c.h.b16 %v8234
    %v8384 = vunpack.c.l.b16 %v8235
    %v8385 = vunpack.c.h.b16 %v8235
    %v8386 = vunpack.c.l.b16 %v8236
    %v8387 = vunpack.c.h.b16 %v8236
    %v8388 = vunpack.c.l.b16 %v8237
    %v8389 = vunpack.c.h.b16 %v8237
    %v8390 = vunpack.c.l.b16 %v8238
    %v8391 = vunpack.c.h.b16 %v8238
    %v8392 = vpack.c.b16 %v8376, %v8376
    %v8393 = vpack.c.b16 %v8377, %v8377
    %v8394 = vpack.c.b16 %v8378, %v8378
    %v8395 = vpack.c.b16 %v8379, %v8379
    %v8396 = vpack.c.b16 %v8380, %v8380
    %v8397 = vpack.c.b16 %v8381, %v8381
    %v8398 = vpack.c.b16 %v8382, %v8382
    %v8399 = vpack.c.b16 %v8383, %v8383
    %v8400 = vpack.c.b16 %v8384, %v8384
    %v8401 = vpack.c.b16 %v8385, %v8385
    %v8402 = vpack.c.b16 %v8386, %v8386
    %v8403 = vpack.c.b16 %v8387, %v8387
    %v8404 = vpack.c.b16 %v8388, %v8388
    %v8405 = vpack.c.b16 %v8389, %v8389
    %v8406 = vpack.c.b16 %v8390, %v8390
    %v8407 = vpack.c.b16 %v8391, %v8391
    %v8408 = vunpack.c.l.b16 %v8392
    %v8409 = vunpack.c.l.b16 %v8393
    %v8410 = vunpack.c.l.b16 %v8394
    %v8411 = vunpack.c.l.b16 %v8395
    %v8412 = vunpack.c.l.b16 %v8396
    %v8413 = vunpack.c.l.b16 %v8397
    %v8414 = vunpack.c.l.b16 %v8398
    %v8415 = vunpack.c.l.b16 %v8399
    %v8416 = vunpack.c.l.b16 %v8400
    %v8417 = vunpack.c.l.b16 %v8401
    %v8418 = vunpack.c.l.b16 %v8402
    %v8419 = vunpack.c.l.b16 %v8403
    %v8420 = vunpack.c.l.b16 %v8404
    %v8421 = vunpack.c.l.b16 %v8405
    %v8422 = vunpack.c.l.b16 %v8406
    %v8423 = vunpack.c.l.b16 %v8407
    %v8424 = vrot.slane %v8408, 7
    %v8425 = vrot.slane %v8410, 6
    %v8426 = vsel %vm1047, %v8425, %v8424
    %v8427 = vrot.slane %v8412, 5
    %v8428 = vsel %vm1050, %v8427, %v8426
    %v8429 = vrot.slane %v8414, 4
    %v8430 = vsel %vm1053, %v8429, %v8428
    %v8431 = vrot.slane %v8416, 3
    %v8432 = vsel %vm1056, %v8431, %v8430
    %v8433 = vrot.slane %v8418, 2
    %v8434 = vsel %vm1059, %v8433, %v8432
    %v8435 = vrot.slane %v8420, 1
    %v8436 = vsel %vm1062, %v8435, %v8434
    %v8437 = vsel %vm1065, %v8422, %v8436
    %v8438 = vrot.slane %v8409, 7
    %v8439 = vrot.slane %v8411, 6
    %v8440 = vsel %vm1047, %v8439, %v8438
    %v8441 = vrot.slane %v8413, 5
    %v8442 = vsel %vm1050, %v8441, %v8440
    %v8443 = vrot.slane %v8415, 4
    %v8444 = vsel %vm1053, %v8443, %v8442
    %v8445 = vrot.slane %v8417, 3
    %v8446 = vsel %vm1056, %v8445, %v8444
    %v8447 = vrot.slane %v8419, 2
    %v8448 = vsel %vm1059, %v8447, %v8446
    %v8449 = vrot.slane %v8421, 1
    %v8450 = vsel %vm1062, %v8449, %v8448
    %v8451 = vsel %vm1065, %v8423, %v8450
    %v8452 = vpack.c.b16 %v8437, %v8437
    %v8453 = vpack.c.b16 %v8451, %v8451
    %v8584 = vunpack.c.l.b16 %v8240
    %v8585 = vunpack.c.h.b16 %v8240
    %v8586 = vunpack.c.l.b16 %v8241
    %v8587 = vunpack.c.h.b16 %v8241
    %v8588 = vunpack.c.l.b16 %v8242
    %v8589 = vunpack.c.h.b16 %v8242
    %v8590 = vunpack.c.l.b16 %v8243
    %v8591 = vunpack.c.h.b16 %v8243
    %v8592 = vunpack.c.l.b16 %v8244
    %v8593 = vunpack.c.h.b16 %v8244
    %v8594 = vunpack.c.l.b16 %v8245
    %v8595 = vunpack.c.h.b16 %v8245
    %v8596 = vunpack.c.l.b16 %v8246
    %v8597 = vunpack.c.h.b16 %v8246
    %v8598 = vunpack.c.l.b16 %v8247
    %v8599 = vunpack.c.h.b16 %v8247
    %v8600 = vunpack.c.l.b16 %v8248
    %v8601 = vunpack.c.h.b16 %v8248
    %v8602 = vunpack.c.l.b16 %v8249
    %v8603 = vunpack.c.h.b16 %v8249
    %v8604 = vunpack.c.l.b16 %v8250
    %v8605 = vunpack.c.h.b16 %v8250
    %v8606 = vunpack.c.l.b16 %v8251
    %v8607 = vunpack.c.h.b16 %v8251
    %v8608 = vunpack.c.l.b16 %v8252
    %v8609 = vunpack.c.h.b16 %v8252
    %v8610 = vunpack.c.l.b16 %v8253
    %v8611 = vunpack.c.h.b16 %v8253
    %v8612 = vunpack.c.l.b16 %v8254
    %v8613 = vunpack.c.h.b16 %v8254
    %v8614 = vunpack.c.l.b16 %v8255
    %v8615 = vunpack.c.h.b16 %v8255
    %v8616 = vunpack.c.l.b16 %v8256
    %v8617 = vunpack.c.h.b16 %v8256
    %v8618 = vunpack.c.l.b16 %v8257
    %v8619 = vunpack.c.h.b16 %v8257
    %v8620 = vunpack.c.l.b16 %v8258
    %v8621 = vunpack.c.h.b16 %v8258
    %v8622 = vunpack.c.l.b16 %v8259
    %v8623 = vunpack.c.h.b16 %v8259
    %v8624 = vunpack.c.l.b16 %v8260
    %v8625 = vunpack.c.h.b16 %v8260
    %v8626 = vunpack.c.l.b16 %v8261
    %v8627 = vunpack.c.h.b16 %v8261
    %v8628 = vunpack.c.l.b16 %v8262
    %v8629 = vunpack.c.h.b16 %v8262
    %v8630 = vunpack.c.l.b16 %v8263
    %v8631 = vunpack.c.h.b16 %v8263
    %v8632 = vunpack.c.l.b16 %v8264
    %v8633 = vunpack.c.h.b16 %v8264
    %v8634 = vunpack.c.l.b16 %v8265
    %v8635 = vunpack.c.h.b16 %v8265
    %v8636 = vunpack.c.l.b16 %v8266
    %v8637 = vunpack.c.h.b16 %v8266
    %v8638 = vunpack.c.l.b16 %v8267
    %v8639 = vunpack.c.h.b16 %v8267
    %v8640 = vunpack.c.l.b16 %v8268
    %v8641 = vunpack.c.h.b16 %v8268
    %v8642 = vunpack.c.l.b16 %v8269
    %v8643 = vunpack.c.h.b16 %v8269
    %v8644 = vunpack.c.l.b16 %v8270
    %v8645 = vunpack.c.h.b16 %v8270
    %v8646 = vunpack.c.l.b16 %v8271
    %v8647 = vunpack.c.h.b16 %v8271
    %v8648 = vunpack.c.l.b16 %v8272
    %v8649 = vunpack.c.h.b16 %v8272
    %v8650 = vunpack.c.l.b16 %v8273
    %v8651 = vunpack.c.h.b16 %v8273
    %v8652 = vunpack.c.l.b16 %v8274
    %v8653 = vunpack.c.h.b16 %v8274
    %v8654 = vunpack.c.l.b16 %v8275
    %v8655 = vunpack.c.h.b16 %v8275
    %v8656 = vunpack.c.l.b16 %v8276
    %v8657 = vunpack.c.h.b16 %v8276
    %v8658 = vunpack.c.l.b16 %v8277
    %v8659 = vunpack.c.h.b16 %v8277
    %v8660 = vunpack.c.l.b16 %v8278
    %v8661 = vunpack.c.h.b16 %v8278
    %v8662 = vunpack.c.l.b16 %v8279
    %v8663 = vunpack.c.h.b16 %v8279
    %v8664 = vunpack.c.l.b16 %v8280
    %v8665 = vunpack.c.h.b16 %v8280
    %v8666 = vunpack.c.l.b16 %v8281
    %v8667 = vunpack.c.h.b16 %v8281
    %v8668 = vunpack.c.l.b16 %v8282
    %v8669 = vunpack.c.h.b16 %v8282
    %v8670 = vunpack.c.l.b16 %v8283
    %v8671 = vunpack.c.h.b16 %v8283
    %v8672 = vunpack.c.l.b16 %v8284
    %v8673 = vunpack.c.h.b16 %v8284
    %v8674 = vunpack.c.l.b16 %v8285
    %v8675 = vunpack.c.h.b16 %v8285
    %v8676 = vunpack.c.l.b16 %v8286
    %v8677 = vunpack.c.h.b16 %v8286
    %v8678 = vunpack.c.l.b16 %v8287
    %v8679 = vunpack.c.h.b16 %v8287
    %v8680 = vunpack.c.l.b16 %v8288
    %v8681 = vunpack.c.h.b16 %v8288
    %v8682 = vunpack.c.l.b16 %v8289
    %v8683 = vunpack.c.h.b16 %v8289
    %v8684 = vunpack.c.l.b16 %v8290
    %v8685 = vunpack.c.h.b16 %v8290
    %v8686 = vunpack.c.l.b16 %v8291
    %v8687 = vunpack.c.h.b16 %v8291
    %v8688 = vunpack.c.l.b16 %v8292
    %v8689 = vunpack.c.h.b16 %v8292
    %v8690 = vunpack.c.l.b16 %v8293
    %v8691 = vunpack.c.h.b16 %v8293
    %v8692 = vunpack.c.l.b16 %v8294
    %v8693 = vunpack.c.h.b16 %v8294
    %v8694 = vunpack.c.l.b16 %v8295
    %v8695 = vunpack.c.h.b16 %v8295
    %v8696 = vunpack.c.l.b16 %v8296
    %v8697 = vunpack.c.h.b16 %v8296
    %v8698 = vunpack.c.l.b16 %v8297
    %v8699 = vunpack.c.h.b16 %v8297
    %v8700 = vunpack.c.l.b16 %v8298
    %v8701 = vunpack.c.h.b16 %v8298
    %v8702 = vunpack.c.l.b16 %v8299
    %v8703 = vunpack.c.h.b16 %v8299
    %v8704 = vunpack.c.l.b16 %v8300
    %v8705 = vunpack.c.h.b16 %v8300
    %v8706 = vunpack.c.l.b16 %v8301
    %v8707 = vunpack.c.h.b16 %v8301
    %v8708 = vunpack.c.l.b16 %v8302
    %v8709 = vunpack.c.h.b16 %v8302
    %v8710 = vunpack.c.l.b16 %v8303
    %v8711 = vunpack.c.h.b16 %v8303
    %v8712 = vunpack.c.l.b16 %v8304
    %v8713 = vunpack.c.h.b16 %v8304
    %v8714 = vunpack.c.l.b16 %v8305
    %v8715 = vunpack.c.h.b16 %v8305
    %v8716 = vunpack.c.l.b16 %v8306
    %v8717 = vunpack.c.h.b16 %v8306
    %v8718 = vunpack.c.l.b16 %v8307
    %v8719 = vunpack.c.h.b16 %v8307
    %v8720 = vunpack.c.l.b16 %v8308
    %v8721 = vunpack.c.h.b16 %v8308
    %v8722 = vunpack.c.l.b16 %v8309
    %v8723 = vunpack.c.h.b16 %v8309
    %v8724 = vunpack.c.l.b16 %v8310
    %v8725 = vunpack.c.h.b16 %v8310
    %v8726 = vunpack.c.l.b16 %v8311
    %v8727 = vunpack.c.h.b16 %v8311
    %v8728 = vunpack.c.l.b16 %v8312
    %v8729 = vunpack.c.h.b16 %v8312
    %v8730 = vunpack.c.l.b16 %v8313
    %v8731 = vunpack.c.h.b16 %v8313
    %v8732 = vunpack.c.l.b16 %v8314
    %v8733 = vunpack.c.h.b16 %v8314
    %v8734 = vunpack.c.l.b16 %v8315
    %v8735 = vunpack.c.h.b16 %v8315
    %v8736 = vunpack.c.l.b16 %v8316
    %v8737 = vunpack.c.h.b16 %v8316
    %v8738 = vunpack.c.l.b16 %v8317
    %v8739 = vunpack.c.h.b16 %v8317
    %v8740 = vunpack.c.l.b16 %v8318
    %v8741 = vunpack.c.h.b16 %v8318
    %v8742 = vunpack.c.l.b16 %v8319
    %v8743 = vunpack.c.h.b16 %v8319
    %v8744 = vunpack.c.l.b16 %v8320
    %v8745 = vunpack.c.h.b16 %v8320
    %v8746 = vunpack.c.l.b16 %v8321
    %v8747 = vunpack.c.h.b16 %v8321
    %v8748 = vunpack.c.l.b16 %v8322
    %v8749 = vunpack.c.h.b16 %v8322
    %v8750 = vunpack.c.l.b16 %v8323
    %v8751 = vunpack.c.h.b16 %v8323
    %v8752 = vunpack.c.l.b16 %v8324
    %v8753 = vunpack.c.h.b16 %v8324
    %v8754 = vunpack.c.l.b16 %v8325
    %v8755 = vunpack.c.h.b16 %v8325
    %v8756 = vunpack.c.l.b16 %v8326
    %v8757 = vunpack.c.h.b16 %v8326
    %v8758 = vunpack.c.l.b16 %v8327
    %v8759 = vunpack.c.h.b16 %v8327
    %v8760 = vunpack.c.l.b16 %v8328
    %v8761 = vunpack.c.h.b16 %v8328
    %v8762 = vunpack.c.l.b16 %v8329
    %v8763 = vunpack.c.h.b16 %v8329
    %v8764 = vunpack.c.l.b16 %v8330
    %v8765 = vunpack.c.h.b16 %v8330
    %v8766 = vunpack.c.l.b16 %v8331
    %v8767 = vunpack.c.h.b16 %v8331
    %v8768 = vunpack.c.l.b16 %v8332
    %v8769 = vunpack.c.h.b16 %v8332
    %v8770 = vunpack.c.l.b16 %v8333
    %v8771 = vunpack.c.h.b16 %v8333
    %v8772 = vunpack.c.l.b16 %v8334
    %v8773 = vunpack.c.h.b16 %v8334
    %v8774 = vunpack.c.l.b16 %v8335
    %v8775 = vunpack.c.h.b16 %v8335
    %v8776 = vunpack.c.l.b16 %v8336
    %v8777 = vunpack.c.h.b16 %v8336
    %v8778 = vunpack.c.l.b16 %v8337
    %v8779 = vunpack.c.h.b16 %v8337
    %v8780 = vunpack.c.l.b16 %v8338
    %v8781 = vunpack.c.h.b16 %v8338
    %v8782 = vunpack.c.l.b16 %v8339
    %v8783 = vunpack.c.h.b16 %v8339
    %v8784 = vunpack.c.l.b16 %v8340
    %v8785 = vunpack.c.h.b16 %v8340
    %v8786 = vunpack.c.l.b16 %v8341
    %v8787 = vunpack.c.h.b16 %v8341
    %v8788 = vunpack.c.l.b16 %v8342
    %v8789 = vunpack.c.h.b16 %v8342
    %v8790 = vunpack.c.l.b16 %v8343
    %v8791 = vunpack.c.h.b16 %v8343
    %v8792 = vunpack.c.l.b16 %v8344
    %v8793 = vunpack.c.h.b16 %v8344
    %v8794 = vunpack.c.l.b16 %v8345
    %v8795 = vunpack.c.h.b16 %v8345
    %v8796 = vunpack.c.l.b16 %v8346
    %v8797 = vunpack.c.h.b16 %v8346
    %v8798 = vunpack.c.l.b16 %v8347
    %v8799 = vunpack.c.h.b16 %v8347
    %v8800 = vunpack.c.l.b16 %v8348
    %v8801 = vunpack.c.h.b16 %v8348
    %v8802 = vunpack.c.l.b16 %v8349
    %v8803 = vunpack.c.h.b16 %v8349
    %v8804 = vunpack.c.l.b16 %v8350
    %v8805 = vunpack.c.h.b16 %v8350
    %v8806 = vunpack.c.l.b16 %v8351
    %v8807 = vunpack.c.h.b16 %v8351
    %v8808 = vunpack.c.l.b16 %v8352
    %v8809 = vunpack.c.h.b16 %v8352
    %v8810 = vunpack.c.l.b16 %v8353
    %v8811 = vunpack.c.h.b16 %v8353
    %v8812 = vunpack.c.l.b16 %v8354
    %v8813 = vunpack.c.h.b16 %v8354
    %v8814 = vunpack.c.l.b16 %v8355
    %v8815 = vunpack.c.h.b16 %v8355
    %v8816 = vunpack.c.l.b16 %v8356
    %v8817 = vunpack.c.h.b16 %v8356
    %v8818 = vunpack.c.l.b16 %v8357
    %v8819 = vunpack.c.h.b16 %v8357
    %v8820 = vunpack.c.l.b16 %v8358
    %v8821 = vunpack.c.h.b16 %v8358
    %v8822 = vunpack.c.l.b16 %v8359
    %v8823 = vunpack.c.h.b16 %v8359
    %v8824 = vunpack.c.l.b16 %v8360
    %v8825 = vunpack.c.h.b16 %v8360
    %v8826 = vunpack.c.l.b16 %v8361
    %v8827 = vunpack.c.h.b16 %v8361
    %v8828 = vunpack.c.l.b16 %v8362
    %v8829 = vunpack.c.h.b16 %v8362
    %v8830 = vunpack.c.l.b16 %v8363
    %v8831 = vunpack.c.h.b16 %v8363
    %v8832 = vunpack.c.l.b16 %v8364
    %v8833 = vunpack.c.h.b16 %v8364
    %v8834 = vunpack.c.l.b16 %v8365
    %v8835 = vunpack.c.h.b16 %v8365
    %v8836 = vunpack.c.l.b16 %v8366
    %v8837 = vunpack.c.h.b16 %v8366
    %v8838 = vunpack.c.l.b16 %v8367
    %v8839 = vunpack.c.h.b16 %v8367
    %v8840 = vpack.c.b16 %v8592, %v8584
    %v8841 = vpack.c.b16 %v8593, %v8585
    %v8842 = vpack.c.b16 %v8594, %v8586
    %v8843 = vpack.c.b16 %v8595, %v8587
    %v8844 = vpack.c.b16 %v8596, %v8588
    %v8845 = vpack.c.b16 %v8597, %v8589
    %v8846 = vpack.c.b16 %v8598, %v8590
    %v8847 = vpack.c.b16 %v8599, %v8591
    %v8848 = vpack.c.b16 %v8608, %v8600
    %v8849 = vpack.c.b16 %v8609, %v8601
    %v8850 = vpack.c.b16 %v8610, %v8602
    %v8851 = vpack.c.b16 %v8611, %v8603
    %v8852 = vpack.c.b16 %v8612, %v8604
    %v8853 = vpack.c.b16 %v8613, %v8605
    %v8854 = vpack.c.b16 %v8614, %v8606
    %v8855 = vpack.c.b16 %v8615, %v8607
    %v8856 = vpack.c.b16 %v8624, %v8616
    %v8857 = vpack.c.b16 %v8625, %v8617
    %v8858 = vpack.c.b16 %v8626, %v8618
    %v8859 = vpack.c.b16 %v8627, %v8619
    %v8860 = vpack.c.b16 %v8628, %v8620
    %v8861 = vpack.c.b16 %v8629, %v8621
    %v8862 = vpack.c.b16 %v8630, %v8622
    %v8863 = vpack.c.b16 %v8631, %v8623
    %v8864 = vpack.c.b16 %v8640, %v8632
    %v8865 = vpack.c.b16 %v8641, %v8633
    %v8866 = vpack.c.b16 %v8642, %v8634
    %v8867 = vpack.c.b16 %v8643, %v8635
    %v8868 = vpack.c.b16 %v8644, %v8636
    %v8869 = vpack.c.b16 %v8645, %v8637
    %v8870 = vpack.c.b16 %v8646, %v8638
    %v8871 = vpack.c.b16 %v8647, %v8639
    %v8872 = vpack.c.b16 %v8656, %v8648
    %v8873 = vpack.c.b16 %v8657, %v8649
    %v8874 = vpack.c.b16 %v8658, %v8650
    %v8875 = vpack.c.b16 %v8659, %v8651
    %v8876 = vpack.c.b16 %v8660, %v8652
    %v8877 = vpack.c.b16 %v8661, %v8653
    %v8878 = vpack.c.b16 %v8662, %v8654
    %v8879 = vpack.c.b16 %v8663, %v8655
    %v8880 = vpack.c.b16 %v8672, %v8664
    %v8881 = vpack.c.b16 %v8673, %v8665
    %v8882 = vpack.c.b16 %v8674, %v8666
    %v8883 = vpack.c.b16 %v8675, %v8667
    %v8884 = vpack.c.b16 %v8676, %v8668
    %v8885 = vpack.c.b16 %v8677, %v8669
    %v8886 = vpack.c.b16 %v8678, %v8670
    %v8887 = vpack.c.b16 %v8679, %v8671
    %v8888 = vpack.c.b16 %v8688, %v8680
    %v8889 = vpack.c.b16 %v8689, %v8681
    %v8890 = vpack.c.b16 %v8690, %v8682
    %v8891 = vpack.c.b16 %v8691, %v8683
    %v8892 = vpack.c.b16 %v8692, %v8684
    %v8893 = vpack.c.b16 %v8693, %v8685
    %v8894 = vpack.c.b16 %v8694, %v8686
    %v8895 = vpack.c.b16 %v8695, %v8687
    %v8896 = vpack.c.b16 %v8704, %v8696
    %v8897 = vpack.c.b16 %v8705, %v8697
    %v8898 = vpack.c.b16 %v8706, %v8698
    %v8899 = vpack.c.b16 %v8707, %v8699
    %v8900 = vpack.c.b16 %v8708, %v8700
    %v8901 = vpack.c.b16 %v8709, %v8701
    %v8902 = vpack.c.b16 %v8710, %v8702
    %v8903 = vpack.c.b16 %v8711, %v8703
    %v8904 = vpack.c.b16 %v8720, %v8712
    %v8905 = vpack.c.b16 %v8721, %v8713
    %v8906 = vpack.c.b16 %v8722, %v8714
    %v8907 = vpack.c.b16 %v8723, %v8715
    %v8908 = vpack.c.b16 %v8724, %v8716
    %v8909 = vpack.c.b16 %v8725, %v8717
    %v8910 = vpack.c.b16 %v8726, %v8718
    %v8911 = vpack.c.b16 %v8727, %v8719
    %v8912 = vpack.c.b16 %v8736, %v8728
    %v8913 = vpack.c.b16 %v8737, %v8729
    %v8914 = vpack.c.b16 %v8738, %v8730
    %v8915 = vpack.c.b16 %v8739, %v8731
    %v8916 = vpack.c.b16 %v8740, %v8732
    %v8917 = vpack.c.b16 %v8741, %v8733
    %v8918 = vpack.c.b16 %v8742, %v8734
    %v8919 = vpack.c.b16 %v8743, %v8735
    %v8920 = vpack.c.b16 %v8752, %v8744
    %v8921 = vpack.c.b16 %v8753, %v8745
    %v8922 = vpack.c.b16 %v8754, %v8746
    %v8923 = vpack.c.b16 %v8755, %v8747
    %v8924 = vpack.c.b16 %v8756, %v8748
    %v8925 = vpack.c.b16 %v8757, %v8749
    %v8926 = vpack.c.b16 %v8758, %v8750
    %v8927 = vpack.c.b16 %v8759, %v8751
    %v8928 = vpack.c.b16 %v8768, %v8760
    %v8929 = vpack.c.b16 %v8769, %v8761
    %v8930 = vpack.c.b16 %v8770, %v8762
    %v8931 = vpack.c.b16 %v8771, %v8763
    %v8932 = vpack.c.b16 %v8772, %v8764
    %v8933 = vpack.c.b16 %v8773, %v8765
    %v8934 = vpack.c.b16 %v8774, %v8766
    %v8935 = vpack.c.b16 %v8775, %v8767
    %v8936 = vpack.c.b16 %v8784, %v8776
    %v8937 = vpack.c.b16 %v8785, %v8777
    %v8938 = vpack.c.b16 %v8786, %v8778
    %v8939 = vpack.c.b16 %v8787, %v8779
    %v8940 = vpack.c.b16 %v8788, %v8780
    %v8941 = vpack.c.b16 %v8789, %v8781
    %v8942 = vpack.c.b16 %v8790, %v8782
    %v8943 = vpack.c.b16 %v8791, %v8783
    %v8944 = vpack.c.b16 %v8800, %v8792
    %v8945 = vpack.c.b16 %v8801, %v8793
    %v8946 = vpack.c.b16 %v8802, %v8794
    %v8947 = vpack.c.b16 %v8803, %v8795
    %v8948 = vpack.c.b16 %v8804, %v8796
    %v8949 = vpack.c.b16 %v8805, %v8797
    %v8950 = vpack.c.b16 %v8806, %v8798
    %v8951 = vpack.c.b16 %v8807, %v8799
    %v8952 = vpack.c.b16 %v8816, %v8808
    %v8953 = vpack.c.b16 %v8817, %v8809
    %v8954 = vpack.c.b16 %v8818, %v8810
    %v8955 = vpack.c.b16 %v8819, %v8811
    %v8956 = vpack.c.b16 %v8820, %v8812
    %v8957 = vpack.c.b16 %v8821, %v8813
    %v8958 = vpack.c.b16 %v8822, %v8814
    %v8959 = vpack.c.b16 %v8823, %v8815
    %v8960 = vpack.c.b16 %v8832, %v8824
    %v8961 = vpack.c.b16 %v8833, %v8825
    %v8962 = vpack.c.b16 %v8834, %v8826
    %v8963 = vpack.c.b16 %v8835, %v8827
    %v8964 = vpack.c.b16 %v8836, %v8828
    %v8965 = vpack.c.b16 %v8837, %v8829
    %v8966 = vpack.c.b16 %v8838, %v8830
    %v8967 = vpack.c.b16 %v8839, %v8831
    %9096 = vmatprep.subr.bf16.mxu0 %v8897
    %9097 = vmatpush1.bf16.msra.mxu0 %v8896
    %9098 = vmatprep.subr.bf16.mxu0 %v8889
    %9099 = vmatpush1.bf16.msra.mxu0 %v8888
    %9100 = vmatprep.subr.bf16.mxu0 %v8881
    %9101 = vmatpush1.bf16.msra.mxu0 %v8880
    %9102 = vmatprep.subr.bf16.mxu0 %v8873
    %9103 = vmatpush1.bf16.msra.mxu0 %v8872
    %9104 = vmatprep.subr.bf16.mxu0 %v8865
    %9105 = vmatpush1.bf16.msra.mxu0 %v8864
    %9106 = vmatprep.subr.bf16.mxu0 %v8857
    %9107 = vmatpush1.bf16.msra.mxu0 %v8856
    %9108 = vmatprep.subr.bf16.mxu0 %v8849
    %9109 = vmatpush1.bf16.msra.mxu0 %v8848
    %9110 = vmatprep.subr.bf16.mxu0 %v8841
    %9111 = vmatpush1.bf16.msra.mxu0 %v8840
    %9112 = vmatprep.subr.bf16.mxu0 %v8961
    %9113 = vmatpush2.bf16.msra.mxu0 %v8960
    %9114 = vmatprep.subr.bf16.mxu0 %v8953
    %9115 = vmatpush2.bf16.msra.mxu0 %v8952
    %9116 = vmatprep.subr.bf16.mxu0 %v8945
    %9117 = vmatpush2.bf16.msra.mxu0 %v8944
    %9118 = vmatprep.subr.bf16.mxu0 %v8937
    %9119 = vmatpush2.bf16.msra.mxu0 %v8936
    %9120 = vmatprep.subr.bf16.mxu0 %v8929
    %9121 = vmatpush2.bf16.msra.mxu0 %v8928
    %9122 = vmatprep.subr.bf16.mxu0 %v8921
    %9123 = vmatpush2.bf16.msra.mxu0 %v8920
    %9124 = vmatprep.subr.bf16.mxu0 %v8913
    %9125 = vmatpush2.bf16.msra.mxu0 %v8912
    %9126 = vmatprep.subr.bf16.mxu0 %v8905
    %9127 = vmatpush2.bf16.msra.mxu0 %v8904
    %9128 = vmatprep.mubr.bf16.mxu0 %v8453
    %9129 = vmatmul.mubr.bf16.gmra.mxu0 %v8452
    %v9130 = vpop.f32.mrf.mxu0
    %v9131 = vadd.f32 0.0, %v9130
    %v9132 = vpop.f32.mrf.mxu0
    %v9133 = vadd.f32 0.0, %v9132
    %v9134 = vpop.f32.mrf.mxu0
    %v9135 = vpop.f32.mrf.mxu0
    %9136 = vdwg.mxu0
    %9137 = vmatprep.subr.bf16.mxu0 %v8899
    %9138 = vmatpush1.bf16.msra.mxu0 %v8898
    %9139 = vmatprep.subr.bf16.mxu0 %v8891
    %9140 = vmatpush1.bf16.msra.mxu0 %v8890
    %9141 = vmatprep.subr.bf16.mxu0 %v8883
    %9142 = vmatpush1.bf16.msra.mxu0 %v8882
    %9143 = vmatprep.subr.bf16.mxu0 %v8875
    %9144 = vmatpush1.bf16.msra.mxu0 %v8874
    %9145 = vmatprep.subr.bf16.mxu0 %v8867
    %9146 = vmatpush1.bf16.msra.mxu0 %v8866
    %9147 = vmatprep.subr.bf16.mxu0 %v8859
    %9148 = vmatpush1.bf16.msra.mxu0 %v8858
    %9149 = vmatprep.subr.bf16.mxu0 %v8851
    %9150 = vmatpush1.bf16.msra.mxu0 %v8850
    %9151 = vmatprep.subr.bf16.mxu0 %v8843
    %9152 = vmatpush1.bf16.msra.mxu0 %v8842
    %9153 = vmatprep.subr.bf16.mxu0 %v8963
    %9154 = vmatpush2.bf16.msra.mxu0 %v8962
    %9155 = vmatprep.subr.bf16.mxu0 %v8955
    %9156 = vmatpush2.bf16.msra.mxu0 %v8954
    %9157 = vmatprep.subr.bf16.mxu0 %v8947
    %9158 = vmatpush2.bf16.msra.mxu0 %v8946
    %9159 = vmatprep.subr.bf16.mxu0 %v8939
    %9160 = vmatpush2.bf16.msra.mxu0 %v8938
    %9161 = vmatprep.subr.bf16.mxu0 %v8931
    %9162 = vmatpush2.bf16.msra.mxu0 %v8930
    %9163 = vmatprep.subr.bf16.mxu0 %v8923
    %9164 = vmatpush2.bf16.msra.mxu0 %v8922
    %9165 = vmatprep.subr.bf16.mxu0 %v8915
    %9166 = vmatpush2.bf16.msra.mxu0 %v8914
    %9167 = vmatprep.subr.bf16.mxu0 %v8907
    %9168 = vmatpush2.bf16.msra.mxu0 %v8906
    %9169 = vmatprep.mubr.bf16.mxu0 %v8453
    %9170 = vmatmul.mubr.bf16.gmra.mxu0 %v8452
    %v9171 = vpop.f32.mrf.mxu0
    %v9172 = vadd.f32 0.0, %v9171
    %v9173 = vpop.f32.mrf.mxu0
    %v9174 = vadd.f32 0.0, %v9173
    %v9175 = vpop.f32.mrf.mxu0
    %v9176 = vpop.f32.mrf.mxu0
    %9177 = vdwg.mxu0
    %9178 = vmatprep.subr.bf16.mxu0 %v8901
    %9179 = vmatpush1.bf16.msra.mxu0 %v8900
    %9180 = vmatprep.subr.bf16.mxu0 %v8893
    %9181 = vmatpush1.bf16.msra.mxu0 %v8892
    %9182 = vmatprep.subr.bf16.mxu0 %v8885
    %9183 = vmatpush1.bf16.msra.mxu0 %v8884
    %9184 = vmatprep.subr.bf16.mxu0 %v8877
    %9185 = vmatpush1.bf16.msra.mxu0 %v8876
    %9186 = vmatprep.subr.bf16.mxu0 %v8869
    %9187 = vmatpush1.bf16.msra.mxu0 %v8868
    %9188 = vmatprep.subr.bf16.mxu0 %v8861
    %9189 = vmatpush1.bf16.msra.mxu0 %v8860
    %9190 = vmatprep.subr.bf16.mxu0 %v8853
    %9191 = vmatpush1.bf16.msra.mxu0 %v8852
    %9192 = vmatprep.subr.bf16.mxu0 %v8845
    %9193 = vmatpush1.bf16.msra.mxu0 %v8844
    %9194 = vmatprep.subr.bf16.mxu0 %v8965
    %9195 = vmatpush2.bf16.msra.mxu0 %v8964
    %9196 = vmatprep.subr.bf16.mxu0 %v8957
    %9197 = vmatpush2.bf16.msra.mxu0 %v8956
    %9198 = vmatprep.subr.bf16.mxu0 %v8949
    %9199 = vmatpush2.bf16.msra.mxu0 %v8948
    %9200 = vmatprep.subr.bf16.mxu0 %v8941
    %9201 = vmatpush2.bf16.msra.mxu0 %v8940
    %9202 = vmatprep.subr.bf16.mxu0 %v8933
    %9203 = vmatpush2.bf16.msra.mxu0 %v8932
    %9204 = vmatprep.subr.bf16.mxu0 %v8925
    %9205 = vmatpush2.bf16.msra.mxu0 %v8924
    %9206 = vmatprep.subr.bf16.mxu0 %v8917
    %9207 = vmatpush2.bf16.msra.mxu0 %v8916
    %9208 = vmatprep.subr.bf16.mxu0 %v8909
    %9209 = vmatpush2.bf16.msra.mxu0 %v8908
    %9210 = vmatprep.mubr.bf16.mxu0 %v8453
    %9211 = vmatmul.mubr.bf16.gmra.mxu0 %v8452
    %v9212 = vpop.f32.mrf.mxu0
    %v9213 = vadd.f32 0.0, %v9212
    %v9214 = vpop.f32.mrf.mxu0
    %v9215 = vadd.f32 0.0, %v9214
    %v9216 = vpop.f32.mrf.mxu0
    %v9217 = vpop.f32.mrf.mxu0
    %9218 = vdwg.mxu0
    %9219 = vmatprep.subr.bf16.mxu0 %v8903
    %9220 = vmatpush1.bf16.msra.mxu0 %v8902
    %9221 = vmatprep.subr.bf16.mxu0 %v8895
    %9222 = vmatpush1.bf16.msra.mxu0 %v8894
    %9223 = vmatprep.subr.bf16.mxu0 %v8887
    %9224 = vmatpush1.bf16.msra.mxu0 %v8886
    %9225 = vmatprep.subr.bf16.mxu0 %v8879
    %9226 = vmatpush1.bf16.msra.mxu0 %v8878
    %9227 = vmatprep.subr.bf16.mxu0 %v8871
    %9228 = vmatpush1.bf16.msra.mxu0 %v8870
    %9229 = vmatprep.subr.bf16.mxu0 %v8863
    %9230 = vmatpush1.bf16.msra.mxu0 %v8862
    %9231 = vmatprep.subr.bf16.mxu0 %v8855
    %9232 = vmatpush1.bf16.msra.mxu0 %v8854
    %9233 = vmatprep.subr.bf16.mxu0 %v8847
    %9234 = vmatpush1.bf16.msra.mxu0 %v8846
    %9235 = vmatprep.subr.bf16.mxu0 %v8967
    %9236 = vmatpush2.bf16.msra.mxu0 %v8966
    %9237 = vmatprep.subr.bf16.mxu0 %v8959
    %9238 = vmatpush2.bf16.msra.mxu0 %v8958
    %9239 = vmatprep.subr.bf16.mxu0 %v8951
    %9240 = vmatpush2.bf16.msra.mxu0 %v8950
    %9241 = vmatprep.subr.bf16.mxu0 %v8943
    %9242 = vmatpush2.bf16.msra.mxu0 %v8942
    %9243 = vmatprep.subr.bf16.mxu0 %v8935
    %9244 = vmatpush2.bf16.msra.mxu0 %v8934
    %9245 = vmatprep.subr.bf16.mxu0 %v8927
    %9246 = vmatpush2.bf16.msra.mxu0 %v8926
    %9247 = vmatprep.subr.bf16.mxu0 %v8919
    %9248 = vmatpush2.bf16.msra.mxu0 %v8918
    %9249 = vmatprep.subr.bf16.mxu0 %v8911
    %9250 = vmatpush2.bf16.msra.mxu0 %v8910
    %9251 = vmatprep.mubr.bf16.mxu0 %v8453
    %9252 = vmatmul.mubr.bf16.gmra.mxu0 %v8452
    %v9253 = vpop.f32.mrf.mxu0
    %v9254 = vadd.f32 0.0, %v9253
    %v9255 = vpop.f32.mrf.mxu0
    %v9256 = vadd.f32 0.0, %v9255
    %v9257 = vpop.f32.mrf.mxu0
    %v9258 = vpop.f32.mrf.mxu0
    %9259 = vdwg.mxu0
    %v9260 = vadd.f32 %v8223, %v9131
    %v9261 = vadd.f32 %v8224, %v9133
    %v9262 = vadd.f32 %v8225, %v9172
    %v9263 = vadd.f32 %v8226, %v9174
    %v9264 = vadd.f32 %v8227, %v9213
    %v9265 = vadd.f32 %v8228, %v9215
    %v9266 = vadd.f32 %v8229, %v9254
    %v9267 = vadd.f32 %v8230, %v9256
    %9268 = vst [vmem:[#allocation3] sm:$0xff] %v9260
    %9269 = vst [vmem:[#allocation3 + $0x8] sm:$0xff] %v9261
    %9270 = vst [vmem:[#allocation3 + $0x10] sm:$0xff] %v9262
    %9271 = vst [vmem:[#allocation3 + $0x18] sm:$0xff] %v9263
    %9272 = vst [vmem:[#allocation3 + $0x20] sm:$0xff] %v9264
    %9273 = vst [vmem:[#allocation3 + $0x28] sm:$0xff] %v9265
    %9274 = vst [vmem:[#allocation3 + $0x30] sm:$0xff] %v9266
    %9275 = vst [vmem:[#allocation3 + $0x38] sm:$0xff] %v9267
    %v9276 = vld [vmem:[#allocation3] sm:$0xff]
    %v9277 = vld [vmem:[#allocation3 + $0x8] sm:$0xff]
    %v9278 = vld [vmem:[#allocation3 + $0x10] sm:$0xff]
    %v9279 = vld [vmem:[#allocation3 + $0x18] sm:$0xff]
    %v9280 = vld [vmem:[#allocation3 + $0x20] sm:$0xff]
    %v9281 = vld [vmem:[#allocation3 + $0x28] sm:$0xff]
    %v9282 = vld [vmem:[#allocation3 + $0x30] sm:$0xff]
    %v9283 = vld [vmem:[#allocation3 + $0x38] sm:$0xff]
    %v9284 = vmax.f32 %v9276, 0.0
    %v9285 = vmax.f32 %v9277, 0.0
    %v9286 = vmax.f32 %v9278, 0.0
    %v9287 = vmax.f32 %v9279, 0.0
    %v9288 = vmax.f32 %v9280, 0.0
    %v9289 = vmax.f32 %v9281, 0.0
    %v9290 = vmax.f32 %v9282, 0.0
    %v9291 = vmax.f32 %v9283, 0.0
    %v9292 = vld [vmem:[#allocation9] sm:$0xff]
    %v9293 = vld [vmem:[#allocation9 + $0x8] sm:$0xff]
    %v9294 = vld [vmem:[#allocation9 + $0x10] sm:$0xff]
    %v9295 = vld [vmem:[#allocation9 + $0x18] sm:$0xff]
    %v9296 = vld [vmem:[#allocation9 + $0x20] sm:$0xff]
    %v9297 = vld [vmem:[#allocation9 + $0x28] sm:$0xff]
    %v9298 = vld [vmem:[#allocation9 + $0x30] sm:$0xff]
    %v9299 = vld [vmem:[#allocation9 + $0x38] sm:$0xff]
    %v9300 = vld [vmem:[#allocation9 + $0x40] sm:$0xff]
    %v9301 = vld [vmem:[#allocation9 + $0x48] sm:$0xff]
    %v9302 = vld [vmem:[#allocation9 + $0x50] sm:$0xff]
    %v9303 = vld [vmem:[#allocation9 + $0x58] sm:$0xff]
    %v9304 = vld [vmem:[#allocation9 + $0x60] sm:$0xff]
    %v9305 = vld [vmem:[#allocation9 + $0x68] sm:$0xff]
    %v9306 = vld [vmem:[#allocation9 + $0x70] sm:$0xff]
    %v9307 = vld [vmem:[#allocation9 + $0x78] sm:$0xff]
    %v9308 = vld [vmem:[#allocation9 + $0x80] sm:$0xff]
    %v9309 = vld [vmem:[#allocation9 + $0x88] sm:$0xff]
    %v9310 = vld [vmem:[#allocation9 + $0x90] sm:$0xff]
    %v9311 = vld [vmem:[#allocation9 + $0x98] sm:$0xff]
    %v9312 = vld [vmem:[#allocation9 + $0xa0] sm:$0xff]
    %v9313 = vld [vmem:[#allocation9 + $0xa8] sm:$0xff]
    %v9314 = vld [vmem:[#allocation9 + $0xb0] sm:$0xff]
    %v9315 = vld [vmem:[#allocation9 + $0xb8] sm:$0xff]
    %v9316 = vld [vmem:[#allocation9 + $0xc0] sm:$0xff]
    %v9317 = vld [vmem:[#allocation9 + $0xc8] sm:$0xff]
    %v9318 = vld [vmem:[#allocation9 + $0xd0] sm:$0xff]
    %v9319 = vld [vmem:[#allocation9 + $0xd8] sm:$0xff]
    %v9320 = vld [vmem:[#allocation9 + $0xe0] sm:$0xff]
    %v9321 = vld [vmem:[#allocation9 + $0xe8] sm:$0xff]
    %v9322 = vld [vmem:[#allocation9 + $0xf0] sm:$0xff]
    %v9323 = vld [vmem:[#allocation9 + $0xf8] sm:$0xff]
    %v9324 = vld [vmem:[#allocation9 + $0x100] sm:$0xff]
    %v9325 = vld [vmem:[#allocation9 + $0x108] sm:$0xff]
    %v9326 = vld [vmem:[#allocation9 + $0x110] sm:$0xff]
    %v9327 = vld [vmem:[#allocation9 + $0x118] sm:$0xff]
    %v9328 = vld [vmem:[#allocation9 + $0x120] sm:$0xff]
    %v9329 = vld [vmem:[#allocation9 + $0x128] sm:$0xff]
    %v9330 = vld [vmem:[#allocation9 + $0x130] sm:$0xff]
    %v9331 = vld [vmem:[#allocation9 + $0x138] sm:$0xff]
    %v9332 = vld [vmem:[#allocation9 + $0x140] sm:$0xff]
    %v9333 = vld [vmem:[#allocation9 + $0x148] sm:$0xff]
    %v9334 = vld [vmem:[#allocation9 + $0x150] sm:$0xff]
    %v9335 = vld [vmem:[#allocation9 + $0x158] sm:$0xff]
    %v9336 = vld [vmem:[#allocation9 + $0x160] sm:$0xff]
    %v9337 = vld [vmem:[#allocation9 + $0x168] sm:$0xff]
    %v9338 = vld [vmem:[#allocation9 + $0x170] sm:$0xff]
    %v9339 = vld [vmem:[#allocation9 + $0x178] sm:$0xff]
    %v9340 = vld [vmem:[#allocation9 + $0x180] sm:$0xff]
    %v9341 = vld [vmem:[#allocation9 + $0x188] sm:$0xff]
    %v9342 = vld [vmem:[#allocation9 + $0x190] sm:$0xff]
    %v9343 = vld [vmem:[#allocation9 + $0x198] sm:$0xff]
    %v9344 = vld [vmem:[#allocation9 + $0x1a0] sm:$0xff]
    %v9345 = vld [vmem:[#allocation9 + $0x1a8] sm:$0xff]
    %v9346 = vld [vmem:[#allocation9 + $0x1b0] sm:$0xff]
    %v9347 = vld [vmem:[#allocation9 + $0x1b8] sm:$0xff]
    %v9348 = vld [vmem:[#allocation9 + $0x1c0] sm:$0xff]
    %v9349 = vld [vmem:[#allocation9 + $0x1c8] sm:$0xff]
    %v9350 = vld [vmem:[#allocation9 + $0x1d0] sm:$0xff]
    %v9351 = vld [vmem:[#allocation9 + $0x1d8] sm:$0xff]
    %v9352 = vld [vmem:[#allocation9 + $0x1e0] sm:$0xff]
    %v9353 = vld [vmem:[#allocation9 + $0x1e8] sm:$0xff]
    %v9354 = vld [vmem:[#allocation9 + $0x1f0] sm:$0xff]
    %v9355 = vld [vmem:[#allocation9 + $0x1f8] sm:$0xff]
    %v9356 = vld [vmem:[#allocation9 + $0x200] sm:$0xff]
    %v9357 = vld [vmem:[#allocation9 + $0x208] sm:$0xff]
    %v9358 = vld [vmem:[#allocation9 + $0x210] sm:$0xff]
    %v9359 = vld [vmem:[#allocation9 + $0x218] sm:$0xff]
    %v9360 = vld [vmem:[#allocation9 + $0x220] sm:$0xff]
    %v9361 = vld [vmem:[#allocation9 + $0x228] sm:$0xff]
    %v9362 = vld [vmem:[#allocation9 + $0x230] sm:$0xff]
    %v9363 = vld [vmem:[#allocation9 + $0x238] sm:$0xff]
    %v9364 = vld [vmem:[#allocation9 + $0x240] sm:$0xff]
    %v9365 = vld [vmem:[#allocation9 + $0x248] sm:$0xff]
    %v9366 = vld [vmem:[#allocation9 + $0x250] sm:$0xff]
    %v9367 = vld [vmem:[#allocation9 + $0x258] sm:$0xff]
    %v9368 = vld [vmem:[#allocation9 + $0x260] sm:$0xff]
    %v9369 = vld [vmem:[#allocation9 + $0x268] sm:$0xff]
    %v9370 = vld [vmem:[#allocation9 + $0x270] sm:$0xff]
    %v9371 = vld [vmem:[#allocation9 + $0x278] sm:$0xff]
    %v9372 = vld [vmem:[#allocation9 + $0x280] sm:$0xff]
    %v9373 = vld [vmem:[#allocation9 + $0x288] sm:$0xff]
    %v9374 = vld [vmem:[#allocation9 + $0x290] sm:$0xff]
    %v9375 = vld [vmem:[#allocation9 + $0x298] sm:$0xff]
    %v9376 = vld [vmem:[#allocation9 + $0x2a0] sm:$0xff]
    %v9377 = vld [vmem:[#allocation9 + $0x2a8] sm:$0xff]
    %v9378 = vld [vmem:[#allocation9 + $0x2b0] sm:$0xff]
    %v9379 = vld [vmem:[#allocation9 + $0x2b8] sm:$0xff]
    %v9380 = vld [vmem:[#allocation9 + $0x2c0] sm:$0xff]
    %v9381 = vld [vmem:[#allocation9 + $0x2c8] sm:$0xff]
    %v9382 = vld [vmem:[#allocation9 + $0x2d0] sm:$0xff]
    %v9383 = vld [vmem:[#allocation9 + $0x2d8] sm:$0xff]
    %v9384 = vld [vmem:[#allocation9 + $0x2e0] sm:$0xff]
    %v9385 = vld [vmem:[#allocation9 + $0x2e8] sm:$0xff]
    %v9386 = vld [vmem:[#allocation9 + $0x2f0] sm:$0xff]
    %v9387 = vld [vmem:[#allocation9 + $0x2f8] sm:$0xff]
    %v9388 = vld [vmem:[#allocation9 + $0x300] sm:$0xff]
    %v9389 = vld [vmem:[#allocation9 + $0x308] sm:$0xff]
    %v9390 = vld [vmem:[#allocation9 + $0x310] sm:$0xff]
    %v9391 = vld [vmem:[#allocation9 + $0x318] sm:$0xff]
    %v9392 = vld [vmem:[#allocation9 + $0x320] sm:$0xff]
    %v9393 = vld [vmem:[#allocation9 + $0x328] sm:$0xff]
    %v9394 = vld [vmem:[#allocation9 + $0x330] sm:$0xff]
    %v9395 = vld [vmem:[#allocation9 + $0x338] sm:$0xff]
    %v9396 = vld [vmem:[#allocation9 + $0x340] sm:$0xff]
    %v9397 = vld [vmem:[#allocation9 + $0x348] sm:$0xff]
    %v9398 = vld [vmem:[#allocation9 + $0x350] sm:$0xff]
    %v9399 = vld [vmem:[#allocation9 + $0x358] sm:$0xff]
    %v9400 = vld [vmem:[#allocation9 + $0x360] sm:$0xff]
    %v9401 = vld [vmem:[#allocation9 + $0x368] sm:$0xff]
    %v9402 = vld [vmem:[#allocation9 + $0x370] sm:$0xff]
    %v9403 = vld [vmem:[#allocation9 + $0x378] sm:$0xff]
    %v9404 = vld [vmem:[#allocation9 + $0x380] sm:$0xff]
    %v9405 = vld [vmem:[#allocation9 + $0x388] sm:$0xff]
    %v9406 = vld [vmem:[#allocation9 + $0x390] sm:$0xff]
    %v9407 = vld [vmem:[#allocation9 + $0x398] sm:$0xff]
    %v9408 = vld [vmem:[#allocation9 + $0x3a0] sm:$0xff]
    %v9409 = vld [vmem:[#allocation9 + $0x3a8] sm:$0xff]
    %v9410 = vld [vmem:[#allocation9 + $0x3b0] sm:$0xff]
    %v9411 = vld [vmem:[#allocation9 + $0x3b8] sm:$0xff]
    %v9412 = vld [vmem:[#allocation9 + $0x3c0] sm:$0xff]
    %v9413 = vld [vmem:[#allocation9 + $0x3c8] sm:$0xff]
    %v9414 = vld [vmem:[#allocation9 + $0x3d0] sm:$0xff]
    %v9415 = vld [vmem:[#allocation9 + $0x3d8] sm:$0xff]
    %v9416 = vld [vmem:[#allocation9 + $0x3e0] sm:$0xff]
    %v9417 = vld [vmem:[#allocation9 + $0x3e8] sm:$0xff]
    %v9418 = vld [vmem:[#allocation9 + $0x3f0] sm:$0xff]
    %v9419 = vld [vmem:[#allocation9 + $0x3f8] sm:$0xff]
    %v9420 = vld [vmem:[#allocation11] sm:$0x1]
    %v9422 = vlaneseq
    %v9423 = vshrl.u32 %v9422, 7
    %v9424 = vsub.s32 0, %v9423
    %v9425 = vrot.slane %v9420, %v9424
    %9427 = vmatprep.subr.mxu0 0.0
    %9428 = vmatpush1.msra.mxu0 %v9307
    %9429 = vmatprep.subr.mxu0 0.0
    %9430 = vmatpush1.msra.mxu0 %v9306
    %9431 = vmatprep.subr.mxu0 0.0
    %9432 = vmatpush1.msra.mxu0 %v9305
    %9433 = vmatprep.subr.mxu0 0.0
    %9434 = vmatpush1.msra.mxu0 %v9304
    %9435 = vmatprep.subr.mxu0 0.0
    %9436 = vmatpush1.msra.mxu0 %v9303
    %9437 = vmatprep.subr.mxu0 0.0
    %9438 = vmatpush1.msra.mxu0 %v9302
    %9439 = vmatprep.subr.mxu0 0.0
    %9440 = vmatpush1.msra.mxu0 %v9301
    %9441 = vmatprep.subr.mxu0 0.0
    %9442 = vmatpush1.msra.mxu0 %v9300
    %9443 = vmatprep.subr.mxu0 0.0
    %9444 = vmatpush1.msra.mxu0 %v9299
    %9445 = vmatprep.subr.mxu0 0.0
    %9446 = vmatpush1.msra.mxu0 %v9298
    %9447 = vmatprep.subr.mxu0 0.0
    %9448 = vmatpush1.msra.mxu0 %v9297
    %9449 = vmatprep.subr.mxu0 0.0
    %9450 = vmatpush1.msra.mxu0 %v9296
    %9451 = vmatprep.subr.mxu0 0.0
    %9452 = vmatpush1.msra.mxu0 %v9295
    %9453 = vmatprep.subr.mxu0 0.0
    %9454 = vmatpush1.msra.mxu0 %v9294
    %9455 = vmatprep.subr.mxu0 0.0
    %9456 = vmatpush1.msra.mxu0 %v9293
    %9457 = vmatprep.subr.mxu0 0.0
    %9458 = vmatpush1.msra.mxu0 %v9292
    %9459 = vmatprep.subr.mxu0 0.0
    %9460 = vmatpush2.msra.mxu0 %v9323
    %9461 = vmatprep.subr.mxu0 0.0
    %9462 = vmatpush2.msra.mxu0 %v9322
    %9463 = vmatprep.subr.mxu0 0.0
    %9464 = vmatpush2.msra.mxu0 %v9321
    %9465 = vmatprep.subr.mxu0 0.0
    %9466 = vmatpush2.msra.mxu0 %v9320
    %9467 = vmatprep.subr.mxu0 0.0
    %9468 = vmatpush2.msra.mxu0 %v9319
    %9469 = vmatprep.subr.mxu0 0.0
    %9470 = vmatpush2.msra.mxu0 %v9318
    %9471 = vmatprep.subr.mxu0 0.0
    %9472 = vmatpush2.msra.mxu0 %v9317
    %9473 = vmatprep.subr.mxu0 0.0
    %9474 = vmatpush2.msra.mxu0 %v9316
    %9475 = vmatprep.subr.mxu0 0.0
    %9476 = vmatpush2.msra.mxu0 %v9315
    %9477 = vmatprep.subr.mxu0 0.0
    %9478 = vmatpush2.msra.mxu0 %v9314
    %9479 = vmatprep.subr.mxu0 0.0
    %9480 = vmatpush2.msra.mxu0 %v9313
    %9481 = vmatprep.subr.mxu0 0.0
    %9482 = vmatpush2.msra.mxu0 %v9312
    %9483 = vmatprep.subr.mxu0 0.0
    %9484 = vmatpush2.msra.mxu0 %v9311
    %9485 = vmatprep.subr.mxu0 0.0
    %9486 = vmatpush2.msra.mxu0 %v9310
    %9487 = vmatprep.subr.mxu0 0.0
    %9488 = vmatpush2.msra.mxu0 %v9309
    %9489 = vmatprep.subr.mxu0 0.0
    %9490 = vmatpush2.msra.mxu0 %v9308
    %9491 = vmatprep.mubr.f32.mxu0 %v9285
    %9492 = vmatmul.mubr.f32.gmra.mxu0 %v9284
    %v9493 = vpop.f32.mrf.mxu0
    %v9494 = vadd.f32 %v9425, %v9493
    %v9495 = vpop.f32.mrf.mxu0
    %9496 = vdwg.mxu0
    %9497 = vmatprep.subr.mxu0 0.0
    %9498 = vmatpush1.msra.mxu0 %v9339
    %9499 = vmatprep.subr.mxu0 0.0
    %9500 = vmatpush1.msra.mxu0 %v9338
    %9501 = vmatprep.subr.mxu0 0.0
    %9502 = vmatpush1.msra.mxu0 %v9337
    %9503 = vmatprep.subr.mxu0 0.0
    %9504 = vmatpush1.msra.mxu0 %v9336
    %9505 = vmatprep.subr.mxu0 0.0
    %9506 = vmatpush1.msra.mxu0 %v9335
    %9507 = vmatprep.subr.mxu0 0.0
    %9508 = vmatpush1.msra.mxu0 %v9334
    %9509 = vmatprep.subr.mxu0 0.0
    %9510 = vmatpush1.msra.mxu0 %v9333
    %9511 = vmatprep.subr.mxu0 0.0
    %9512 = vmatpush1.msra.mxu0 %v9332
    %9513 = vmatprep.subr.mxu0 0.0
    %9514 = vmatpush1.msra.mxu0 %v9331
    %9515 = vmatprep.subr.mxu0 0.0
    %9516 = vmatpush1.msra.mxu0 %v9330
    %9517 = vmatprep.subr.mxu0 0.0
    %9518 = vmatpush1.msra.mxu0 %v9329
    %9519 = vmatprep.subr.mxu0 0.0
    %9520 = vmatpush1.msra.mxu0 %v9328
    %9521 = vmatprep.subr.mxu0 0.0
    %9522 = vmatpush1.msra.mxu0 %v9327
    %9523 = vmatprep.subr.mxu0 0.0
    %9524 = vmatpush1.msra.mxu0 %v9326
    %9525 = vmatprep.subr.mxu0 0.0
    %9526 = vmatpush1.msra.mxu0 %v9325
    %9527 = vmatprep.subr.mxu0 0.0
    %9528 = vmatpush1.msra.mxu0 %v9324
    %9529 = vmatprep.subr.mxu0 0.0
    %9530 = vmatpush2.msra.mxu0 %v9355
    %9531 = vmatprep.subr.mxu0 0.0
    %9532 = vmatpush2.msra.mxu0 %v9354
    %9533 = vmatprep.subr.mxu0 0.0
    %9534 = vmatpush2.msra.mxu0 %v9353
    %9535 = vmatprep.subr.mxu0 0.0
    %9536 = vmatpush2.msra.mxu0 %v9352
    %9537 = vmatprep.subr.mxu0 0.0
    %9538 = vmatpush2.msra.mxu0 %v9351
    %9539 = vmatprep.subr.mxu0 0.0
    %9540 = vmatpush2.msra.mxu0 %v9350
    %9541 = vmatprep.subr.mxu0 0.0
    %9542 = vmatpush2.msra.mxu0 %v9349
    %9543 = vmatprep.subr.mxu0 0.0
    %9544 = vmatpush2.msra.mxu0 %v9348
    %9545 = vmatprep.subr.mxu0 0.0
    %9546 = vmatpush2.msra.mxu0 %v9347
    %9547 = vmatprep.subr.mxu0 0.0
    %9548 = vmatpush2.msra.mxu0 %v9346
    %9549 = vmatprep.subr.mxu0 0.0
    %9550 = vmatpush2.msra.mxu0 %v9345
    %9551 = vmatprep.subr.mxu0 0.0
    %9552 = vmatpush2.msra.mxu0 %v9344
    %9553 = vmatprep.subr.mxu0 0.0
    %9554 = vmatpush2.msra.mxu0 %v9343
    %9555 = vmatprep.subr.mxu0 0.0
    %9556 = vmatpush2.msra.mxu0 %v9342
    %9557 = vmatprep.subr.mxu0 0.0
    %9558 = vmatpush2.msra.mxu0 %v9341
    %9559 = vmatprep.subr.mxu0 0.0
    %9560 = vmatpush2.msra.mxu0 %v9340
    %9561 = vmatprep.mubr.f32.mxu0 %v9287
    %9562 = vmatmul.mubr.f32.gmra.mxu0 %v9286
    %v9563 = vpop.f32.mrf.mxu0
    %v9564 = vadd.f32 %v9494, %v9563
    %v9565 = vpop.f32.mrf.mxu0
    %9566 = vdwg.mxu0
    %9567 = vmatprep.subr.mxu0 0.0
    %9568 = vmatpush1.msra.mxu0 %v9371
    %9569 = vmatprep.subr.mxu0 0.0
    %9570 = vmatpush1.msra.mxu0 %v9370
    %9571 = vmatprep.subr.mxu0 0.0
    %9572 = vmatpush1.msra.mxu0 %v9369
    %9573 = vmatprep.subr.mxu0 0.0
    %9574 = vmatpush1.msra.mxu0 %v9368
    %9575 = vmatprep.subr.mxu0 0.0
    %9576 = vmatpush1.msra.mxu0 %v9367
    %9577 = vmatprep.subr.mxu0 0.0
    %9578 = vmatpush1.msra.mxu0 %v9366
    %9579 = vmatprep.subr.mxu0 0.0
    %9580 = vmatpush1.msra.mxu0 %v9365
    %9581 = vmatprep.subr.mxu0 0.0
    %9582 = vmatpush1.msra.mxu0 %v9364
    %9583 = vmatprep.subr.mxu0 0.0
    %9584 = vmatpush1.msra.mxu0 %v9363
    %9585 = vmatprep.subr.mxu0 0.0
    %9586 = vmatpush1.msra.mxu0 %v9362
    %9587 = vmatprep.subr.mxu0 0.0
    %9588 = vmatpush1.msra.mxu0 %v9361
    %9589 = vmatprep.subr.mxu0 0.0
    %9590 = vmatpush1.msra.mxu0 %v9360
    %9591 = vmatprep.subr.mxu0 0.0
    %9592 = vmatpush1.msra.mxu0 %v9359
    %9593 = vmatprep.subr.mxu0 0.0
    %9594 = vmatpush1.msra.mxu0 %v9358
    %9595 = vmatprep.subr.mxu0 0.0
    %9596 = vmatpush1.msra.mxu0 %v9357
    %9597 = vmatprep.subr.mxu0 0.0
    %9598 = vmatpush1.msra.mxu0 %v9356
    %9599 = vmatprep.subr.mxu0 0.0
    %9600 = vmatpush2.msra.mxu0 %v9387
    %9601 = vmatprep.subr.mxu0 0.0
    %9602 = vmatpush2.msra.mxu0 %v9386
    %9603 = vmatprep.subr.mxu0 0.0
    %9604 = vmatpush2.msra.mxu0 %v9385
    %9605 = vmatprep.subr.mxu0 0.0
    %9606 = vmatpush2.msra.mxu0 %v9384
    %9607 = vmatprep.subr.mxu0 0.0
    %9608 = vmatpush2.msra.mxu0 %v9383
    %9609 = vmatprep.subr.mxu0 0.0
    %9610 = vmatpush2.msra.mxu0 %v9382
    %9611 = vmatprep.subr.mxu0 0.0
    %9612 = vmatpush2.msra.mxu0 %v9381
    %9613 = vmatprep.subr.mxu0 0.0
    %9614 = vmatpush2.msra.mxu0 %v9380
    %9615 = vmatprep.subr.mxu0 0.0
    %9616 = vmatpush2.msra.mxu0 %v9379
    %9617 = vmatprep.subr.mxu0 0.0
    %9618 = vmatpush2.msra.mxu0 %v9378
    %9619 = vmatprep.subr.mxu0 0.0
    %9620 = vmatpush2.msra.mxu0 %v9377
    %9621 = vmatprep.subr.mxu0 0.0
    %9622 = vmatpush2.msra.mxu0 %v9376
    %9623 = vmatprep.subr.mxu0 0.0
    %9624 = vmatpush2.msra.mxu0 %v9375
    %9625 = vmatprep.subr.mxu0 0.0
    %9626 = vmatpush2.msra.mxu0 %v9374
    %9627 = vmatprep.subr.mxu0 0.0
    %9628 = vmatpush2.msra.mxu0 %v9373
    %9629 = vmatprep.subr.mxu0 0.0
    %9630 = vmatpush2.msra.mxu0 %v9372
    %9631 = vmatprep.mubr.f32.mxu0 %v9289
    %9632 = vmatmul.mubr.f32.gmra.mxu0 %v9288
    %v9633 = vpop.f32.mrf.mxu0
    %v9634 = vadd.f32 %v9564, %v9633
    %v9635 = vpop.f32.mrf.mxu0
    %9636 = vdwg.mxu0
    %9637 = vmatprep.subr.mxu0 0.0
    %9638 = vmatpush1.msra.mxu0 %v9403
    %9639 = vmatprep.subr.mxu0 0.0
    %9640 = vmatpush1.msra.mxu0 %v9402
    %9641 = vmatprep.subr.mxu0 0.0
    %9642 = vmatpush1.msra.mxu0 %v9401
    %9643 = vmatprep.subr.mxu0 0.0
    %9644 = vmatpush1.msra.mxu0 %v9400
    %9645 = vmatprep.subr.mxu0 0.0
    %9646 = vmatpush1.msra.mxu0 %v9399
    %9647 = vmatprep.subr.mxu0 0.0
    %9648 = vmatpush1.msra.mxu0 %v9398
    %9649 = vmatprep.subr.mxu0 0.0
    %9650 = vmatpush1.msra.mxu0 %v9397
    %9651 = vmatprep.subr.mxu0 0.0
    %9652 = vmatpush1.msra.mxu0 %v9396
    %9653 = vmatprep.subr.mxu0 0.0
    %9654 = vmatpush1.msra.mxu0 %v9395
    %9655 = vmatprep.subr.mxu0 0.0
    %9656 = vmatpush1.msra.mxu0 %v9394
    %9657 = vmatprep.subr.mxu0 0.0
    %9658 = vmatpush1.msra.mxu0 %v9393
    %9659 = vmatprep.subr.mxu0 0.0
    %9660 = vmatpush1.msra.mxu0 %v9392
    %9661 = vmatprep.subr.mxu0 0.0
    %9662 = vmatpush1.msra.mxu0 %v9391
    %9663 = vmatprep.subr.mxu0 0.0
    %9664 = vmatpush1.msra.mxu0 %v9390
    %9665 = vmatprep.subr.mxu0 0.0
    %9666 = vmatpush1.msra.mxu0 %v9389
    %9667 = vmatprep.subr.mxu0 0.0
    %9668 = vmatpush1.msra.mxu0 %v9388
    %9669 = vmatprep.subr.mxu0 0.0
    %9670 = vmatpush2.msra.mxu0 %v9419
    %9671 = vmatprep.subr.mxu0 0.0
    %9672 = vmatpush2.msra.mxu0 %v9418
    %9673 = vmatprep.subr.mxu0 0.0
    %9674 = vmatpush2.msra.mxu0 %v9417
    %9675 = vmatprep.subr.mxu0 0.0
    %9676 = vmatpush2.msra.mxu0 %v9416
    %9677 = vmatprep.subr.mxu0 0.0
    %9678 = vmatpush2.msra.mxu0 %v9415
    %9679 = vmatprep.subr.mxu0 0.0
    %9680 = vmatpush2.msra.mxu0 %v9414
    %9681 = vmatprep.subr.mxu0 0.0
    %9682 = vmatpush2.msra.mxu0 %v9413
    %9683 = vmatprep.subr.mxu0 0.0
    %9684 = vmatpush2.msra.mxu0 %v9412
    %9685 = vmatprep.subr.mxu0 0.0
    %9686 = vmatpush2.msra.mxu0 %v9411
    %9687 = vmatprep.subr.mxu0 0.0
    %9688 = vmatpush2.msra.mxu0 %v9410
    %9689 = vmatprep.subr.mxu0 0.0
    %9690 = vmatpush2.msra.mxu0 %v9409
    %9691 = vmatprep.subr.mxu0 0.0
    %9692 = vmatpush2.msra.mxu0 %v9408
    %9693 = vmatprep.subr.mxu0 0.0
    %9694 = vmatpush2.msra.mxu0 %v9407
    %9695 = vmatprep.subr.mxu0 0.0
    %9696 = vmatpush2.msra.mxu0 %v9406
    %9697 = vmatprep.subr.mxu0 0.0
    %9698 = vmatpush2.msra.mxu0 %v9405
    %9699 = vmatprep.subr.mxu0 0.0
    %9700 = vmatpush2.msra.mxu0 %v9404
    %9701 = vmatprep.mubr.f32.mxu0 %v9291
    %9702 = vmatmul.mubr.f32.gmra.mxu0 %v9290
    %v9703 = vpop.f32.mrf.mxu0
    %v9704 = vadd.f32 %v9634, %v9703
    %v9705 = vpop.f32.mrf.mxu0
    %9706 = vdwg.mxu0
    %9707 = vst [vmem:[%s6] sm:$0xff] %v9704
    // Predicated region
    $region46: #{dueling_dqn_forward.1} parent=1 // pred_check
      _
    $region47: #{dueling_dqn_forward.1} parent=1 // pred_check_branch
      %9709 = sbr.rel (0) target = $region49
    $region48: #{dueling_dqn_forward.1} parent=1 // pred_region
      _
    $region49: #{dueling_dqn_forward.1} parent=1 // pred_fallthru
      _
    // Predicated region
    $region50: #{dueling_dqn_forward.1} parent=1 // pred_check
      _
    $region51: #{dueling_dqn_forward.1} parent=1 // pred_check_branch
      %9711 = sbr.rel (0) target = $region53
    $region52: #{dueling_dqn_forward.1} parent=1 // pred_region
      _
    $region53: #{dueling_dqn_forward.1} parent=1 // pred_fallthru
      _
    %9712 = vsyncpa [#allocation5], 1
    %9713 = vsyncpa [#allocation7], 1
    %9714 = vsyncpa [#allocation10], 1

</llo_original>
